<compile_context>
chip_gen: v7x
topology: tpu7x:2x2x1
jax: 0.10.0
libtpu: 0.0.40
codegen_flags: <defaults>
</compile_context>

<pallas_src>
import functools

import jax
import jax.numpy as jnp
from jax import lax
from jax.experimental import pallas as pl
from jax.experimental.pallas import tpu as pltpu

EPS = 1e-5


def _split_f32_to_bf16(x):
    """Exact hi/lo bf16 split of an f32 array (x ~= hi + lo)."""
    hi = x.astype(jnp.bfloat16)
    lo = (x - hi.astype(jnp.float32)).astype(jnp.bfloat16)
    return hi, lo


def _mm_f32(x, w_hi, w_lo):
    """f32-accurate matmul as 3 bf16 MXU passes: x@w ~= x_hi@w_hi + x_lo@w_hi + x_hi@w_lo.

    Standard TPU f32 contraction (the x_lo@w_lo term, ~2^-18 relative, is dropped).
    Keeps native bf16 MXU inputs with f32 accumulation while matching PyTorch's f32
    matmul numerics; result is well-defined on every lowering path.
    Production bf16 fast path: keep only the first pass.
    """
    x_hi, x_lo = _split_f32_to_bf16(x)
    acc = jnp.dot(x_hi, w_hi, preferred_element_type=jnp.float32)
    acc = acc + jnp.dot(x_lo, w_hi, preferred_element_type=jnp.float32)
    acc = acc + jnp.dot(x_hi, w_lo, preferred_element_type=jnp.float32)
    return acc


def _bn_relu(x, gamma, beta, n_inv):
    """Training-mode BatchNorm1d (biased batch variance, eps=1e-5) + ReLU, all in f32.

    Mean-centered two-pass variance (no E[x^2]-E[x]^2 cancellation) and one Newton-Raphson
    refinement of rsqrt so the scale is f32-accurate regardless of EUP approximation quality.
    """
    mean = jnp.sum(x, axis=0, keepdims=True) * n_inv            # (1, H)
    xc = x - mean
    v = jnp.sum(xc * xc, axis=0, keepdims=True) * n_inv + EPS   # biased variance + eps
    r = lax.rsqrt(v)
    r = r * (1.5 - 0.5 * v * r * r)                              # one NR step -> ~f32 exact
    return jnp.maximum(xc * (gamma * r) + beta, 0.0)


def _decoder_kernel(n_blocks,
                    p_ref, zc_ref, wp_ref, wzc_hi_ref, wzc_lo_ref,
                    g0_ref, be0_ref, w0_hi_ref, w0_lo_ref,
                    g1_ref, be1_ref, w1_hi_ref, w1_lo_ref,
                    gf_ref, bef_ref, wout_ref, bout_ref,
                    out_ref, net_ref):
    B, T, D = p_ref.shape
    H = wp_ref.shape[1]
    N = B * T
    n_inv = 1.0 / N

    # ---- head: fused conditioning (fc_z + fc_c) + fc_p --------------------------------
    # fc_z/fc_c fused into one [z,c] @ [Wz;Wc] projection, computed once, broadcast over T.
    # fc_p (K=3) done as 3 rank-1 VPU FMAs instead of a lane-padded MXU matmul.
    # fc_p/fc_z/fc_c biases are per-channel constants over the BN reduction axis -> dropped
    # (exactly cancelled by the downstream training-mode BatchNorms).
    zc_proj = _mm_f32(zc_ref[...], wzc_hi_ref[...], wzc_lo_ref[...])       # (B, H) f32
    pc = p_ref[...]                                                        # (B, T, D) f32
    wp = wp_ref[...]                                                       # (D, H) f32
    net3 = zc_proj[:, None, :] + pc[:, :, 0:1] * wp[0:1, :][None]
    for d in range(1, D):                                                  # D = 3, static
        net3 = net3 + pc[:, :, d:d + 1] * wp[d:d + 1, :][None]
    net_ref[...] = net3.reshape(N, H)                                      # (B*T, H) f32

    # ---- 5x ResnetBlockConv1d (identity shortcut), rolled fori_loop -------------------
    # Per-block params are stacked on a leading NB axis and indexed with the traced k, so
    # the rolled loop bounds the live ranges of the (N, H) f32 activations.
    # fc_0 / fc_1 biases are dead under the following training-mode BN -> dropped.
    def block(k, carry):
        x = net_ref[...]
        h0 = _bn_relu(x, g0_ref[k], be0_ref[k], n_inv)
        h = _mm_f32(h0, w0_hi_ref[k], w0_lo_ref[k])
        h1 = _bn_relu(h, g1_ref[k], be1_ref[k], n_inv)
        net_ref[...] = x + _mm_f32(h1, w1_hi_ref[k], w1_lo_ref[k])
        return carry

    lax.fori_loop(0, n_blocks, block, 0)

    # ---- final BN + ReLU + fc_out (H -> 1) + squeeze -----------------------------------
    # Kept as elementwise-mul + lane reduce emitting a lane-dense (B, T) slab; an (N, 1)
    # MXU matmul would regress to masked lane-width-1 stores.
    hf = _bn_relu(net_ref[...], gf_ref[...], bef_ref[...], n_inv)          # (N, H) f32
    out = jnp.sum(hf.reshape(B, T, H) * wout_ref[...][None], axis=-1)      # (B, T)
    out_ref[...] = out + bout_ref[0]                                       # scalar from SMEM


def decoder_batchnorm(p, z, c, params, n_blocks):
    B, T, D = p.shape
    H = params["fc_p_w"].shape[1]
    f32 = jnp.float32

    # ---------- host-side layout plumbing (outside the kernel) ----------
    # Conv1d(k=1)/Linear weights are stored pre-transposed as (in_ch, out_ch); the HxH and
    # conditioning weights are hi/lo bf16-split host-side for the 3-pass f32 contraction.
    zc = jnp.concatenate([z, c], axis=1).astype(f32)                       # (B, Z+C)
    w_zc = jnp.concatenate([params["fc_z_w"], params["fc_c_w"]], axis=0)   # (Z+C, H)
    wzc_hi, wzc_lo = _split_f32_to_bf16(w_zc)
    w0_hi, w0_lo = _split_f32_to_bf16(params["fc0_w"])
    w1_hi, w1_lo = _split_f32_to_bf16(params["fc1_w"])

    # fc_p / fc_z / fc_c / fc_0 / fc_1 biases are not passed: per-channel constants over
    # the BN reduction axis cancel exactly in training-mode BatchNorm.
    args = [
        p.astype(f32), zc, params["fc_p_w"].astype(f32),
        wzc_hi, wzc_lo,
        params["bn0_g"], params["bn0_b"], w0_hi, w0_lo,
        params["bn1_g"], params["bn1_b"], w1_hi, w1_lo,
        params["bnf_g"], params["bnf_b"],
        params["fc_out_w"].astype(f32),
        params["fc_out_b"].reshape(1).astype(f32),   # true scalar -> 1-D SMEM array
    ]

    def full_spec(a):
        nd = a.ndim
        return pl.BlockSpec(a.shape, lambda i, _nd=nd: (0,) * _nd)

    in_specs = [full_spec(a) for a in args[:-1]]
    in_specs.append(pl.BlockSpec(memory_space=pltpu.MemorySpace.SMEM))

    kernel = functools.partial(_decoder_kernel, n_blocks)
    return pl.pallas_call(
        kernel,
        out_shape=jax.ShapeDtypeStruct((B, T), jnp.float32),
        grid=(1,),
        in_specs=in_specs,
        out_specs=pl.BlockSpec((B, T), lambda i: (0, 0)),
        scratch_shapes=[pltpu.VMEM((B * T, H), jnp.float32)],   # residual-stream accumulator
        compiler_params=pltpu.CompilerParams(
            dimension_semantics=("arbitrary",),
            # Test shapes are fully VMEM-resident (~7 MiB incl. scratch); keep the scoped
            # limit modest so it is valid on v7x (64 MiB physical) as well as v5e/v6e.
            # TODO(synk): derive per-generation in the tiled production version.
            vmem_limit_bytes=32 * 1024 * 1024,
        ),
    )(*args)


def init_params(key, dim, z_dim, c_dim, hidden, n_blocks):
    ks = iter(jax.random.split(key, 24))

    def nrm(shape, scale=0.1):
        return scale * jax.random.normal(next(ks), shape, dtype=jnp.float32)

    H, NB = hidden, n_blocks
    return dict(
        # Conv1d(kernel=1) / Linear weights stored pre-transposed as (in_ch, out_ch).
        fc_p_w=nrm((dim, H)), fc_p_b=nrm((1, H)),
        fc_z_w=nrm((z_dim, H)), fc_z_b=nrm((1, H)),
        fc_c_w=nrm((c_dim, H)), fc_c_b=nrm((1, H)),
        # per-block BatchNorm1d affine params (PyTorch init 1/0, perturbed to exercise them)
        bn0_g=1.0 + nrm((NB, 1, H), 0.05), bn0_b=nrm((NB, 1, H), 0.05),
        fc0_w=nrm((NB, H, H)), fc0_b=nrm((NB, 1, H)),
        bn1_g=1.0 + nrm((NB, 1, H), 0.05), bn1_b=nrm((NB, 1, H), 0.05),
        # PyTorch zero-inits fc_1 weights; random here so the residual path is exercised.
        fc1_w=nrm((NB, H, H)), fc1_b=nrm((NB, 1, H)),
        # final BN + fc_out (Conv1d(H, 1, 1)); fc_out weight kept as a (1, H) row.
        bnf_g=1.0 + nrm((1, H), 0.05), bnf_b=nrm((1, H), 0.05),
        fc_out_w=nrm((1, H)), fc_out_b=nrm((1, 1)),
    )


def reference(p, z, c, params, n_blocks):
    """Pure-JAX mirror of the PyTorch forward: f32 matmuls (precision=HIGHEST), all biases,
    training-mode BatchNorm with biased batch variance."""
    B, T, D = p.shape
    H = params["fc_p_w"].shape[1]
    n_inv = 1.0 / (B * T)
    hp = jax.lax.Precision.HIGHEST

    def mm(x, w):
        return jnp.dot(x, w, preferred_element_type=jnp.float32, precision=hp)

    def bn_relu(x, gamma, beta):
        mean = jnp.sum(x, axis=0, keepdims=True) * n_inv
        xc = x - mean
        var = jnp.sum(xc * xc, axis=0, keepdims=True) * n_inv
        return jnp.maximum(xc * (gamma * lax.rsqrt(var + EPS)) + beta, 0.0)

    net = mm(p.reshape(B * T, D), params["fc_p_w"]) + params["fc_p_b"]
    zc = (mm(z, params["fc_z_w"]) + params["fc_z_b"]
          + mm(c, params["fc_c_w"]) + params["fc_c_b"])                    # (B, H)
    net = (net.reshape(B, T, H) + zc[:, None, :]).reshape(B * T, H)

    for k in range(n_blocks):
        h0 = bn_relu(net, params["bn0_g"][k], params["bn0_b"][k])
        h = mm(h0, params["fc0_w"][k]) + params["fc0_b"][k]
        h1 = bn_relu(h, params["bn1_g"][k], params["bn1_b"][k])
        net = net + mm(h1, params["fc1_w"][k]) + params["fc1_b"][k]

    hf = bn_relu(net, params["bnf_g"], params["bnf_b"])
    out = jnp.sum(hf.reshape(B, T, H) * params["fc_out_w"][None, :, :], axis=-1)
    return out + params["fc_out_b"][0, 0]


if __name__ == "__main__":
    # Module defaults: dim=3, z_dim=128, c_dim=128, hidden_size=256, 5 resnet blocks.
    # T = 128 keeps the activations and the (B, T) output lane-dense.
    B, T, D = 2, 128, 3            # batch, n_points, point dim
    Z, C, H, NB = 128, 128, 256, 5  # z_dim, c_dim, hidden_size, n_blocks

    key = jax.random.PRNGKey(0)
    kp, kz, kc, kpar = jax.random.split(key, 4)
    p = jax.random.normal(kp, (B, T, D), dtype=jnp.float32)   # module receives p as (B, T, dim)
    z = jax.random.normal(kz, (B, Z), dtype=jnp.float32)      # latent code z
    c = jax.random.normal(kc, (B, C), dtype=jnp.float32)      # conditioning code c
    params = init_params(kpar, D, Z, C, H, NB)

    out = jax.block_until_ready(decoder_batchnorm(p, z, c, params, NB))
    ref = reference(p, z, c, params, NB)

    assert out.shape == (B, T)
    max_err = float(jnp.max(jnp.abs(out - ref)))
    # f32-accurate 3-pass matmuls keep kernel-vs-reference divergence at the ~1e-4 level;
    # 5e-3 leaves margin while still catching any semantic error (those show up at >1e-1).
    assert max_err < 5e-3, f"mismatch vs reference (max abs err {max_err})"
    print("KERNEL_OK")
</pallas_src>

<mosaic_0001>
module attributes {stable_mosaic.version = 11 : i64} {
  func.func @_decoder_kernel(%arg0: i32, %arg1: memref<2x128x3xf32, #tpu.memory_space<vmem>>, %arg2: memref<2x256xf32, #tpu.memory_space<vmem>>, %arg3: memref<3x256xf32, #tpu.memory_space<vmem>>, %arg4: memref<256x256xbf16, #tpu.memory_space<vmem>>, %arg5: memref<256x256xbf16, #tpu.memory_space<vmem>>, %arg6: memref<5x1x256xf32, #tpu.memory_space<vmem>>, %arg7: memref<5x1x256xf32, #tpu.memory_space<vmem>>, %arg8: memref<5x256x256xbf16, #tpu.memory_space<vmem>>, %arg9: memref<5x256x256xbf16, #tpu.memory_space<vmem>>, %arg10: memref<5x1x256xf32, #tpu.memory_space<vmem>>, %arg11: memref<5x1x256xf32, #tpu.memory_space<vmem>>, %arg12: memref<5x256x256xbf16, #tpu.memory_space<vmem>>, %arg13: memref<5x256x256xbf16, #tpu.memory_space<vmem>>, %arg14: memref<1x256xf32, #tpu.memory_space<vmem>>, %arg15: memref<1x256xf32, #tpu.memory_space<vmem>>, %arg16: memref<1x256xf32, #tpu.memory_space<vmem>>, %arg17: memref<1xf32, #tpu.memory_space<smem>>, %arg18: memref<2x128xf32, #tpu.memory_space<vmem>>, %arg19: memref<256x256xf32, #tpu.memory_space<vmem>>) attributes {dimension_semantics = [#tpu.dimension_semantics<arbitrary>], iteration_bounds = array<i64: 1>, scalar_prefetch = 0 : i64, scratch_operands = 1 : i64, tpu.core_type = #tpu.core_type<tc>, window_params = [{pipeline_mode = #tpu.pipeline_mode<synchronous>, transform_indices = @transform_0, window_bounds = array<i64: 2, 128, 3>}, {pipeline_mode = #tpu.pipeline_mode<synchronous>, transform_indices = @transform_1, window_bounds = array<i64: 2, 256>}, {pipeline_mode = #tpu.pipeline_mode<synchronous>, transform_indices = @transform_2, window_bounds = array<i64: 3, 256>}, {pipeline_mode = #tpu.pipeline_mode<synchronous>, transform_indices = @transform_3, window_bounds = array<i64: 256, 256>}, {pipeline_mode = #tpu.pipeline_mode<synchronous>, transform_indices = @transform_4, window_bounds = array<i64: 256, 256>}, {pipeline_mode = #tpu.pipeline_mode<synchronous>, transform_indices = @transform_5, window_bounds = array<i64: 5, 1, 256>}, {pipeline_mode = #tpu.pipeline_mode<synchronous>, transform_indices = @transform_6, window_bounds = array<i64: 5, 1, 256>}, {pipeline_mode = #tpu.pipeline_mode<synchronous>, transform_indices = @transform_7, window_bounds = array<i64: 5, 256, 256>}, {pipeline_mode = #tpu.pipeline_mode<synchronous>, transform_indices = @transform_8, window_bounds = array<i64: 5, 256, 256>}, {pipeline_mode = #tpu.pipeline_mode<synchronous>, transform_indices = @transform_9, window_bounds = array<i64: 5, 1, 256>}, {pipeline_mode = #tpu.pipeline_mode<synchronous>, transform_indices = @transform_10, window_bounds = array<i64: 5, 1, 256>}, {pipeline_mode = #tpu.pipeline_mode<synchronous>, transform_indices = @transform_11, window_bounds = array<i64: 5, 256, 256>}, {pipeline_mode = #tpu.pipeline_mode<synchronous>, transform_indices = @transform_12, window_bounds = array<i64: 5, 256, 256>}, {pipeline_mode = #tpu.pipeline_mode<synchronous>, transform_indices = @transform_13, window_bounds = array<i64: 1, 256>}, {pipeline_mode = #tpu.pipeline_mode<synchronous>, transform_indices = @transform_14, window_bounds = array<i64: 1, 256>}, {pipeline_mode = #tpu.pipeline_mode<synchronous>, transform_indices = @transform_15, window_bounds = array<i64: 1, 256>}, {transform_indices = @transform_16, window_bounds = array<i64: 1>}, {pipeline_mode = #tpu.pipeline_mode<synchronous>, transform_indices = @transform_17, window_bounds = array<i64: 2, 128>}]} {
    %c0 = arith.constant 0 : index
    %c0_0 = arith.constant 0 : index
    %0 = vector.load %arg2[%c0, %c0_0] : memref<2x256xf32, #tpu.memory_space<vmem>>, vector<2x256xf32>
    %c0_1 = arith.constant 0 : index
    %c0_2 = arith.constant 0 : index
    %1 = vector.load %arg4[%c0_1, %c0_2] : memref<256x256xbf16, #tpu.memory_space<vmem>>, vector<256x256xbf16>
    %c0_3 = arith.constant 0 : index
    %c0_4 = arith.constant 0 : index
    %2 = vector.load %arg5[%c0_3, %c0_4] : memref<256x256xbf16, #tpu.memory_space<vmem>>, vector<256x256xbf16>
    %3 = arith.truncf %0 : vector<2x256xf32> to vector<2x256xbf16>
    %4 = arith.extf %3 : vector<2x256xbf16> to vector<2x256xf32>
    %5 = arith.subf %0, %4 : vector<2x256xf32>
    %6 = arith.truncf %5 : vector<2x256xf32> to vector<2x256xbf16>
    %cst = arith.constant dense<0.000000e+00> : vector<2x256xf32>
    %7 = tpu.matmul %3, %1, %cst {dimension_numbers = #tpu.dot_dimension_numbers<[1], [0], [0], [1], [0, 0, 1, 1], [], []>} : vector<2x256xbf16>, vector<256x256xbf16>, vector<2x256xf32> -> vector<2x256xf32>
    %cst_5 = arith.constant dense<0.000000e+00> : vector<2x256xf32>
    %8 = tpu.matmul %6, %1, %cst_5 {dimension_numbers = #tpu.dot_dimension_numbers<[1], [0], [0], [1], [0, 0, 1, 1], [], []>} : vector<2x256xbf16>, vector<256x256xbf16>, vector<2x256xf32> -> vector<2x256xf32>
    %9 = arith.addf %7, %8 : vector<2x256xf32>
    %cst_6 = arith.constant dense<0.000000e+00> : vector<2x256xf32>
    %10 = tpu.matmul %3, %2, %cst_6 {dimension_numbers = #tpu.dot_dimension_numbers<[1], [0], [0], [1], [0, 0, 1, 1], [], []>} : vector<2x256xbf16>, vector<256x256xbf16>, vector<2x256xf32> -> vector<2x256xf32>
    %11 = arith.addf %9, %10 : vector<2x256xf32>
    %c0_7 = arith.constant 0 : index
    %c0_8 = arith.constant 0 : index
    %c0_9 = arith.constant 0 : index
    %12 = vector.load %arg1[%c0_7, %c0_8, %c0_9] : memref<2x128x3xf32, #tpu.memory_space<vmem>>, vector<2x128x3xf32>
    %c0_10 = arith.constant 0 : index
    %c0_11 = arith.constant 0 : index
    %13 = vector.load %arg3[%c0_10, %c0_11] : memref<3x256xf32, #tpu.memory_space<vmem>>, vector<3x256xf32>
    %14 = vector.shape_cast %11 : vector<2x256xf32> to vector<2x1x256xf32>
    %15 = vector.extract_strided_slice %12 {offsets = [0, 0, 0], sizes = [2, 128, 1], strides = [1, 1, 1]} : vector<2x128x3xf32> to vector<2x128x1xf32>
    %16 = vector.extract_strided_slice %13 {offsets = [0, 0], sizes = [1, 256], strides = [1, 1]} : vector<3x256xf32> to vector<1x256xf32>
    %17 = vector.shape_cast %16 : vector<1x256xf32> to vector<1x1x256xf32>
    %18 = vector.broadcast %15 : vector<2x128x1xf32> to vector<2x128x256xf32>
    %19 = vector.broadcast %17 : vector<1x1x256xf32> to vector<2x128x256xf32>
    %20 = arith.mulf %18, %19 : vector<2x128x256xf32>
    %21 = vector.broadcast %14 : vector<2x1x256xf32> to vector<2x128x256xf32>
    %22 = arith.addf %21, %20 : vector<2x128x256xf32>
    %23 = vector.extract_strided_slice %12 {offsets = [0, 0, 1], sizes = [2, 128, 1], strides = [1, 1, 1]} : vector<2x128x3xf32> to vector<2x128x1xf32>
    %24 = vector.extract_strided_slice %13 {offsets = [1, 0], sizes = [1, 256], strides = [1, 1]} : vector<3x256xf32> to vector<1x256xf32>
    %25 = vector.shape_cast %24 : vector<1x256xf32> to vector<1x1x256xf32>
    %26 = vector.broadcast %23 : vector<2x128x1xf32> to vector<2x128x256xf32>
    %27 = vector.broadcast %25 : vector<1x1x256xf32> to vector<2x128x256xf32>
    %28 = arith.mulf %26, %27 : vector<2x128x256xf32>
    %29 = arith.addf %22, %28 : vector<2x128x256xf32>
    %30 = vector.extract_strided_slice %12 {offsets = [0, 0, 2], sizes = [2, 128, 1], strides = [1, 1, 1]} : vector<2x128x3xf32> to vector<2x128x1xf32>
    %31 = vector.extract_strided_slice %13 {offsets = [2, 0], sizes = [1, 256], strides = [1, 1]} : vector<3x256xf32> to vector<1x256xf32>
    %32 = vector.shape_cast %31 : vector<1x256xf32> to vector<1x1x256xf32>
    %33 = vector.broadcast %30 : vector<2x128x1xf32> to vector<2x128x256xf32>
    %34 = vector.broadcast %32 : vector<1x1x256xf32> to vector<2x128x256xf32>
    %35 = arith.mulf %33, %34 : vector<2x128x256xf32>
    %36 = arith.addf %29, %35 : vector<2x128x256xf32>
    %37 = vector.shape_cast %36 : vector<2x128x256xf32> to vector<256x256xf32>
    %c0_12 = arith.constant 0 : index
    %c0_13 = arith.constant 0 : index
    %38 = vector.load %arg19[%c0_12, %c0_13] : memref<256x256xf32, #tpu.memory_space<vmem>>, vector<256x256xf32>
    tpu.vector_store %arg19[%c0_12, %c0_13], %37 {strides = array<i32>} : memref<256x256xf32, #tpu.memory_space<vmem>>, vector<256x256xf32>,
    %c0_i32 = arith.constant 0 : i32
    %c5_i32 = arith.constant 5 : i32
    %39 = arith.addi %c0_i32, %c5_i32 : i32
    %c1_i32 = arith.constant 1 : i32
    scf.for %arg20 = %c0_i32 to %39 step %c1_i32  : i32 {
      %c0_35 = arith.constant 0 : index
      %c0_36 = arith.constant 0 : index
      %81 = vector.load %arg19[%c0_35, %c0_36] : memref<256x256xf32, #tpu.memory_space<vmem>>, vector<256x256xf32>
      %82 = arith.index_cast %arg20 : i32 to index
      %c0_37 = arith.constant 0 : index
      %c0_38 = arith.constant 0 : index
      %83 = vector.load %arg6[%82, %c0_37, %c0_38] : memref<5x1x256xf32, #tpu.memory_space<vmem>>, vector<1x1x256xf32>
      %84 = vector.shape_cast %83 : vector<1x1x256xf32> to vector<1x256xf32>
      %85 = arith.index_cast %arg20 : i32 to index
      %c0_39 = arith.constant 0 : index
      %c0_40 = arith.constant 0 : index
      %86 = vector.load %arg7[%85, %c0_39, %c0_40] : memref<5x1x256xf32, #tpu.memory_space<vmem>>, vector<1x1x256xf32>
      %87 = vector.shape_cast %86 : vector<1x1x256xf32> to vector<1x256xf32>
      %cst_41 = arith.constant dense<0.000000e+00> : vector<256xf32>
      %88 = vector.multi_reduction <add>, %81, %cst_41 [0] : vector<256x256xf32> to vector<256xf32>
      %89 = vector.shape_cast %88 : vector<256xf32> to vector<1x256xf32>
      %cst_42 = arith.constant 3.906250e-03 : f32
      %90 = vector.broadcast %cst_42 : f32 to vector<1x256xf32>
      %91 = arith.mulf %89, %90 : vector<1x256xf32>
      %92 = vector.broadcast %91 : vector<1x256xf32> to vector<256x256xf32>
      %93 = arith.subf %81, %92 : vector<256x256xf32>
      %94 = arith.mulf %93, %93 : vector<256x256xf32>
      %cst_43 = arith.constant dense<0.000000e+00> : vector<256xf32>
      %95 = vector.multi_reduction <add>, %94, %cst_43 [0] : vector<256x256xf32> to vector<256xf32>
      %96 = vector.shape_cast %95 : vector<256xf32> to vector<1x256xf32>
      %cst_44 = arith.constant 3.906250e-03 : f32
      %97 = vector.broadcast %cst_44 : f32 to vector<1x256xf32>
      %98 = arith.mulf %96, %97 : vector<1x256xf32>
      %cst_45 = arith.constant 9.99999974E-6 : f32
      %99 = vector.broadcast %cst_45 : f32 to vector<1x256xf32>
      %100 = arith.addf %98, %99 : vector<1x256xf32>
      %101 = math.rsqrt %100 : vector<1x256xf32>
      %cst_46 = arith.constant 5.000000e-01 : f32
      %102 = vector.broadcast %cst_46 : f32 to vector<1x256xf32>
      %103 = arith.mulf %102, %100 : vector<1x256xf32>
      %104 = arith.mulf %103, %101 : vector<1x256xf32>
      %105 = arith.mulf %104, %101 : vector<1x256xf32>
      %cst_47 = arith.constant 1.500000e+00 : f32
      %106 = vector.broadcast %cst_47 : f32 to vector<1x256xf32>
      %107 = arith.subf %106, %105 : vector<1x256xf32>
      %108 = arith.mulf %101, %107 : vector<1x256xf32>
      %109 = arith.mulf %84, %108 : vector<1x256xf32>
      %110 = vector.broadcast %109 : vector<1x256xf32> to vector<256x256xf32>
      %111 = arith.mulf %93, %110 : vector<256x256xf32>
      %112 = vector.broadcast %87 : vector<1x256xf32> to vector<256x256xf32>
      %113 = arith.addf %111, %112 : vector<256x256xf32>
      %cst_48 = arith.constant 0.000000e+00 : f32
      %114 = vector.broadcast %cst_48 : f32 to vector<256x256xf32>
      %115 = arith.maximumf %113, %114 : vector<256x256xf32>
      %116 = arith.index_cast %arg20 : i32 to index
      %c0_49 = arith.constant 0 : index
      %c0_50 = arith.constant 0 : index
      %117 = vector.load %arg8[%116, %c0_49, %c0_50] : memref<5x256x256xbf16, #tpu.memory_space<vmem>>, vector<1x256x256xbf16>
      %118 = vector.shape_cast %117 : vector<1x256x256xbf16> to vector<256x256xbf16>
      %119 = arith.index_cast %arg20 : i32 to index
      %c0_51 = arith.constant 0 : index
      %c0_52 = arith.constant 0 : index
      %120 = vector.load %arg9[%119, %c0_51, %c0_52] : memref<5x256x256xbf16, #tpu.memory_space<vmem>>, vector<1x256x256xbf16>
      %121 = vector.shape_cast %120 : vector<1x256x256xbf16> to vector<256x256xbf16>
      %122 = arith.truncf %115 : vector<256x256xf32> to vector<256x256xbf16>
      %123 = arith.extf %122 : vector<256x256xbf16> to vector<256x256xf32>
      %124 = arith.subf %115, %123 : vector<256x256xf32>
      %125 = arith.truncf %124 : vector<256x256xf32> to vector<256x256xbf16>
      %cst_53 = arith.constant dense<0.000000e+00> : vector<256x256xf32>
      %126 = tpu.matmul %122, %118, %cst_53 {dimension_numbers = #tpu.dot_dimension_numbers<[1], [0], [0], [1], [0, 0, 1, 1], [], []>} : vector<256x256xbf16>, vector<256x256xbf16>, vector<256x256xf32> -> vector<256x256xf32>
      %cst_54 = arith.constant dense<0.000000e+00> : vector<256x256xf32>
      %127 = tpu.matmul %125, %118, %cst_54 {dimension_numbers = #tpu.dot_dimension_numbers<[1], [0], [0], [1], [0, 0, 1, 1], [], []>} : vector<256x256xbf16>, vector<256x256xbf16>, vector<256x256xf32> -> vector<256x256xf32>
      %128 = arith.addf %126, %127 : vector<256x256xf32>
      %cst_55 = arith.constant dense<0.000000e+00> : vector<256x256xf32>
      %129 = tpu.matmul %122, %121, %cst_55 {dimension_numbers = #tpu.dot_dimension_numbers<[1], [0], [0], [1], [0, 0, 1, 1], [], []>} : vector<256x256xbf16>, vector<256x256xbf16>, vector<256x256xf32> -> vector<256x256xf32>
      %130 = arith.addf %128, %129 : vector<256x256xf32>
      %131 = arith.index_cast %arg20 : i32 to index
      %c0_56 = arith.constant 0 : index
      %c0_57 = arith.constant 0 : index
      %132 = vector.load %arg10[%131, %c0_56, %c0_57] : memref<5x1x256xf32, #tpu.memory_space<vmem>>, vector<1x1x256xf32>
      %133 = vector.shape_cast %132 : vector<1x1x256xf32> to vector<1x256xf32>
      %134 = arith.index_cast %arg20 : i32 to index
      %c0_58 = arith.constant 0 : index
      %c0_59 = arith.constant 0 : index
      %135 = vector.load %arg11[%134, %c0_58, %c0_59] : memref<5x1x256xf32, #tpu.memory_space<vmem>>, vector<1x1x256xf32>
      %136 = vector.shape_cast %135 : vector<1x1x256xf32> to vector<1x256xf32>
      %cst_60 = arith.constant dense<0.000000e+00> : vector<256xf32>
      %137 = vector.multi_reduction <add>, %130, %cst_60 [0] : vector<256x256xf32> to vector<256xf32>
      %138 = vector.shape_cast %137 : vector<256xf32> to vector<1x256xf32>
      %cst_61 = arith.constant 3.906250e-03 : f32
      %139 = vector.broadcast %cst_61 : f32 to vector<1x256xf32>
      %140 = arith.mulf %138, %139 : vector<1x256xf32>
      %141 = vector.broadcast %140 : vector<1x256xf32> to vector<256x256xf32>
      %142 = arith.subf %130, %141 : vector<256x256xf32>
      %143 = arith.mulf %142, %142 : vector<256x256xf32>
      %cst_62 = arith.constant dense<0.000000e+00> : vector<256xf32>
      %144 = vector.multi_reduction <add>, %143, %cst_62 [0] : vector<256x256xf32> to vector<256xf32>
      %145 = vector.shape_cast %144 : vector<256xf32> to vector<1x256xf32>
      %cst_63 = arith.constant 3.906250e-03 : f32
      %146 = vector.broadcast %cst_63 : f32 to vector<1x256xf32>
      %147 = arith.mulf %145, %146 : vector<1x256xf32>
      %cst_64 = arith.constant 9.99999974E-6 : f32
      %148 = vector.broadcast %cst_64 : f32 to vector<1x256xf32>
      %149 = arith.addf %147, %148 : vector<1x256xf32>
      %150 = math.rsqrt %149 : vector<1x256xf32>
      %cst_65 = arith.constant 5.000000e-01 : f32
      %151 = vector.broadcast %cst_65 : f32 to vector<1x256xf32>
      %152 = arith.mulf %151, %149 : vector<1x256xf32>
      %153 = arith.mulf %152, %150 : vector<1x256xf32>
      %154 = arith.mulf %153, %150 : vector<1x256xf32>
      %cst_66 = arith.constant 1.500000e+00 : f32
      %155 = vector.broadcast %cst_66 : f32 to vector<1x256xf32>
      %156 = arith.subf %155, %154 : vector<1x256xf32>
      %157 = arith.mulf %150, %156 : vector<1x256xf32>
      %158 = arith.mulf %133, %157 : vector<1x256xf32>
      %159 = vector.broadcast %158 : vector<1x256xf32> to vector<256x256xf32>
      %160 = arith.mulf %142, %159 : vector<256x256xf32>
      %161 = vector.broadcast %136 : vector<1x256xf32> to vector<256x256xf32>
      %162 = arith.addf %160, %161 : vector<256x256xf32>
      %cst_67 = arith.constant 0.000000e+00 : f32
      %163 = vector.broadcast %cst_67 : f32 to vector<256x256xf32>
      %164 = arith.maximumf %162, %163 : vector<256x256xf32>
      %165 = arith.index_cast %arg20 : i32 to index
      %c0_68 = arith.constant 0 : index
      %c0_69 = arith.constant 0 : index
      %166 = vector.load %arg12[%165, %c0_68, %c0_69] : memref<5x256x256xbf16, #tpu.memory_space<vmem>>, vector<1x256x256xbf16>
      %167 = vector.shape_cast %166 : vector<1x256x256xbf16> to vector<256x256xbf16>
      %168 = arith.index_cast %arg20 : i32 to index
      %c0_70 = arith.constant 0 : index
      %c0_71 = arith.constant 0 : index
      %169 = vector.load %arg13[%168, %c0_70, %c0_71] : memref<5x256x256xbf16, #tpu.memory_space<vmem>>, vector<1x256x256xbf16>
      %170 = vector.shape_cast %169 : vector<1x256x256xbf16> to vector<256x256xbf16>
      %171 = arith.truncf %164 : vector<256x256xf32> to vector<256x256xbf16>
      %172 = arith.extf %171 : vector<256x256xbf16> to vector<256x256xf32>
      %173 = arith.subf %164, %172 : vector<256x256xf32>
      %174 = arith.truncf %173 : vector<256x256xf32> to vector<256x256xbf16>
      %cst_72 = arith.constant dense<0.000000e+00> : vector<256x256xf32>
      %175 = tpu.matmul %171, %167, %cst_72 {dimension_numbers = #tpu.dot_dimension_numbers<[1], [0], [0], [1], [0, 0, 1, 1], [], []>} : vector<256x256xbf16>, vector<256x256xbf16>, vector<256x256xf32> -> vector<256x256xf32>
      %cst_73 = arith.constant dense<0.000000e+00> : vector<256x256xf32>
      %176 = tpu.matmul %174, %167, %cst_73 {dimension_numbers = #tpu.dot_dimension_numbers<[1], [0], [0], [1], [0, 0, 1, 1], [], []>} : vector<256x256xbf16>, vector<256x256xbf16>, vector<256x256xf32> -> vector<256x256xf32>
      %177 = arith.addf %175, %176 : vector<256x256xf32>
      %cst_74 = arith.constant dense<0.000000e+00> : vector<256x256xf32>
      %178 = tpu.matmul %171, %170, %cst_74 {dimension_numbers = #tpu.dot_dimension_numbers<[1], [0], [0], [1], [0, 0, 1, 1], [], []>} : vector<256x256xbf16>, vector<256x256xbf16>, vector<256x256xf32> -> vector<256x256xf32>
      %179 = arith.addf %177, %178 : vector<256x256xf32>
      %180 = arith.addf %81, %179 : vector<256x256xf32>
      %c0_75 = arith.constant 0 : index
      %c0_76 = arith.constant 0 : index
      %181 = vector.load %arg19[%c0_75, %c0_76] : memref<256x256xf32, #tpu.memory_space<vmem>>, vector<256x256xf32>
      tpu.vector_store %arg19[%c0_75, %c0_76], %180 {strides = array<i32>} : memref<256x256xf32, #tpu.memory_space<vmem>>, vector<256x256xf32>,
    }
    %c5_i32_14 = arith.constant 5 : i32
    %c0_15 = arith.constant 0 : index
    %c0_16 = arith.constant 0 : index
    %40 = vector.load %arg19[%c0_15, %c0_16] : memref<256x256xf32, #tpu.memory_space<vmem>>, vector<256x256xf32>
    %c0_17 = arith.constant 0 : index
    %c0_18 = arith.constant 0 : index
    %41 = vector.load %arg14[%c0_17, %c0_18] : memref<1x256xf32, #tpu.memory_space<vmem>>, vector<1x256xf32>
    %c0_19 = arith.constant 0 : index
    %c0_20 = arith.constant 0 : index
    %42 = vector.load %arg15[%c0_19, %c0_20] : memref<1x256xf32, #tpu.memory_space<vmem>>, vector<1x256xf32>
    %cst_21 = arith.constant dense<0.000000e+00> : vector<256xf32>
    %43 = vector.multi_reduction <add>, %40, %cst_21 [0] : vector<256x256xf32> to vector<256xf32>
    %44 = vector.shape_cast %43 : vector<256xf32> to vector<1x256xf32>
    %cst_22 = arith.constant 3.906250e-03 : f32
    %45 = vector.broadcast %cst_22 : f32 to vector<1x256xf32>
    %46 = arith.mulf %44, %45 : vector<1x256xf32>
    %47 = vector.broadcast %46 : vector<1x256xf32> to vector<256x256xf32>
    %48 = arith.subf %40, %47 : vector<256x256xf32>
    %49 = arith.mulf %48, %48 : vector<256x256xf32>
    %cst_23 = arith.constant dense<0.000000e+00> : vector<256xf32>
    %50 = vector.multi_reduction <add>, %49, %cst_23 [0] : vector<256x256xf32> to vector<256xf32>
    %51 = vector.shape_cast %50 : vector<256xf32> to vector<1x256xf32>
    %cst_24 = arith.constant 3.906250e-03 : f32
    %52 = vector.broadcast %cst_24 : f32 to vector<1x256xf32>
    %53 = arith.mulf %51, %52 : vector<1x256xf32>
    %cst_25 = arith.constant 9.99999974E-6 : f32
    %54 = vector.broadcast %cst_25 : f32 to vector<1x256xf32>
    %55 = arith.addf %53, %54 : vector<1x256xf32>
    %56 = math.rsqrt %55 : vector<1x256xf32>
    %cst_26 = arith.constant 5.000000e-01 : f32
    %57 = vector.broadcast %cst_26 : f32 to vector<1x256xf32>
    %58 = arith.mulf %57, %55 : vector<1x256xf32>
    %59 = arith.mulf %58, %56 : vector<1x256xf32>
    %60 = arith.mulf %59, %56 : vector<1x256xf32>
    %cst_27 = arith.constant 1.500000e+00 : f32
    %61 = vector.broadcast %cst_27 : f32 to vector<1x256xf32>
    %62 = arith.subf %61, %60 : vector<1x256xf32>
    %63 = arith.mulf %56, %62 : vector<1x256xf32>
    %64 = arith.mulf %41, %63 : vector<1x256xf32>
    %65 = vector.broadcast %64 : vector<1x256xf32> to vector<256x256xf32>
    %66 = arith.mulf %48, %65 : vector<256x256xf32>
    %67 = vector.broadcast %42 : vector<1x256xf32> to vector<256x256xf32>
    %68 = arith.addf %66, %67 : vector<256x256xf32>
    %cst_28 = arith.constant 0.000000e+00 : f32
    %69 = vector.broadcast %cst_28 : f32 to vector<256x256xf32>
    %70 = arith.maximumf %68, %69 : vector<256x256xf32>
    %71 = vector.shape_cast %70 : vector<256x256xf32> to vector<2x128x256xf32>
    %c0_29 = arith.constant 0 : index
    %c0_30 = arith.constant 0 : index
    %72 = vector.load %arg16[%c0_29, %c0_30] : memref<1x256xf32, #tpu.memory_space<vmem>>, vector<1x256xf32>
    %73 = vector.shape_cast %72 : vector<1x256xf32> to vector<1x1x256xf32>
    %74 = vector.broadcast %73 : vector<1x1x256xf32> to vector<2x128x256xf32>
    %75 = arith.mulf %71, %74 : vector<2x128x256xf32>
    %cst_31 = arith.constant dense<0.000000e+00> : vector<2x128xf32>
    %76 = vector.multi_reduction <add>, %75, %cst_31 [2] : vector<2x128x256xf32> to vector<2x128xf32>
    %c0_32 = arith.constant 0 : index
    %77 = memref.load %arg17[%c0_32] : memref<1xf32, #tpu.memory_space<smem>>
    %78 = vector.broadcast %77 : f32 to vector<2x128xf32>
    %79 = arith.addf %76, %78 : vector<2x128xf32>
    %c0_33 = arith.constant 0 : index
    %c0_34 = arith.constant 0 : index
    %80 = vector.load %arg18[%c0_33, %c0_34] : memref<2x128xf32, #tpu.memory_space<vmem>>, vector<2x128xf32>
    tpu.vector_store %arg18[%c0_33, %c0_34], %79 {strides = array<i32>} : memref<2x128xf32, #tpu.memory_space<vmem>>, vector<2x128xf32>,
    return
  }
  func.func @transform_0(%arg0: i32) -> (i32, i32, i32) {
    %c0_i32 = arith.constant 0 : i32
    %c0_i32_0 = arith.constant 0 : i32
    %c0_i32_1 = arith.constant 0 : i32
    %c0_i32_2 = arith.constant 0 : i32
    return %c0_i32, %c0_i32_0, %c0_i32_1 : i32, i32, i32
  }
  func.func @transform_1(%arg0: i32) -> (i32, i32) {
    %c0_i32 = arith.constant 0 : i32
    %c0_i32_0 = arith.constant 0 : i32
    %c0_i32_1 = arith.constant 0 : i32
    return %c0_i32, %c0_i32_0 : i32, i32
  }
  func.func @transform_2(%arg0: i32) -> (i32, i32) {
    %c0_i32 = arith.constant 0 : i32
    %c0_i32_0 = arith.constant 0 : i32
    %c0_i32_1 = arith.constant 0 : i32
    return %c0_i32, %c0_i32_0 : i32, i32
  }
  func.func @transform_3(%arg0: i32) -> (i32, i32) {
    %c0_i32 = arith.constant 0 : i32
    %c0_i32_0 = arith.constant 0 : i32
    %c0_i32_1 = arith.constant 0 : i32
    return %c0_i32, %c0_i32_0 : i32, i32
  }
  func.func @transform_4(%arg0: i32) -> (i32, i32) {
    %c0_i32 = arith.constant 0 : i32
    %c0_i32_0 = arith.constant 0 : i32
    %c0_i32_1 = arith.constant 0 : i32
    return %c0_i32, %c0_i32_0 : i32, i32
  }
  func.func @transform_5(%arg0: i32) -> (i32, i32, i32) {
    %c0_i32 = arith.constant 0 : i32
    %c0_i32_0 = arith.constant 0 : i32
    %c0_i32_1 = arith.constant 0 : i32
    %c0_i32_2 = arith.constant 0 : i32
    return %c0_i32, %c0_i32_0, %c0_i32_1 : i32, i32, i32
  }
  func.func @transform_6(%arg0: i32) -> (i32, i32, i32) {
    %c0_i32 = arith.constant 0 : i32
    %c0_i32_0 = arith.constant 0 : i32
    %c0_i32_1 = arith.constant 0 : i32
    %c0_i32_2 = arith.constant 0 : i32
    return %c0_i32, %c0_i32_0, %c0_i32_1 : i32, i32, i32
  }
  func.func @transform_7(%arg0: i32) -> (i32, i32, i32) {
    %c0_i32 = arith.constant 0 : i32
    %c0_i32_0 = arith.constant 0 : i32
    %c0_i32_1 = arith.constant 0 : i32
    %c0_i32_2 = arith.constant 0 : i32
    return %c0_i32, %c0_i32_0, %c0_i32_1 : i32, i32, i32
  }
  func.func @transform_8(%arg0: i32) -> (i32, i32, i32) {
    %c0_i32 = arith.constant 0 : i32
    %c0_i32_0 = arith.constant 0 : i32
    %c0_i32_1 = arith.constant 0 : i32
    %c0_i32_2 = arith.constant 0 : i32
    return %c0_i32, %c0_i32_0, %c0_i32_1 : i32, i32, i32
  }
  func.func @transform_9(%arg0: i32) -> (i32, i32, i32) {
    %c0_i32 = arith.constant 0 : i32
    %c0_i32_0 = arith.constant 0 : i32
    %c0_i32_1 = arith.constant 0 : i32
    %c0_i32_2 = arith.constant 0 : i32
    return %c0_i32, %c0_i32_0, %c0_i32_1 : i32, i32, i32
  }
  func.func @transform_10(%arg0: i32) -> (i32, i32, i32) {
    %c0_i32 = arith.constant 0 : i32
    %c0_i32_0 = arith.constant 0 : i32
    %c0_i32_1 = arith.constant 0 : i32
    %c0_i32_2 = arith.constant 0 : i32
    return %c0_i32, %c0_i32_0, %c0_i32_1 : i32, i32, i32
  }
  func.func @transform_11(%arg0: i32) -> (i32, i32, i32) {
    %c0_i32 = arith.constant 0 : i32
    %c0_i32_0 = arith.constant 0 : i32
    %c0_i32_1 = arith.constant 0 : i32
    %c0_i32_2 = arith.constant 0 : i32
    return %c0_i32, %c0_i32_0, %c0_i32_1 : i32, i32, i32
  }
  func.func @transform_12(%arg0: i32) -> (i32, i32, i32) {
    %c0_i32 = arith.constant 0 : i32
    %c0_i32_0 = arith.constant 0 : i32
    %c0_i32_1 = arith.constant 0 : i32
    %c0_i32_2 = arith.constant 0 : i32
    return %c0_i32, %c0_i32_0, %c0_i32_1 : i32, i32, i32
  }
  func.func @transform_13(%arg0: i32) -> (i32, i32) {
    %c0_i32 = arith.constant 0 : i32
    %c0_i32_0 = arith.constant 0 : i32
    %c0_i32_1 = arith.constant 0 : i32
    return %c0_i32, %c0_i32_0 : i32, i32
  }
  func.func @transform_14(%arg0: i32) -> (i32, i32) {
    %c0_i32 = arith.constant 0 : i32
    %c0_i32_0 = arith.constant 0 : i32
    %c0_i32_1 = arith.constant 0 : i32
    return %c0_i32, %c0_i32_0 : i32, i32
  }
  func.func @transform_15(%arg0: i32) -> (i32, i32) {
    %c0_i32 = arith.constant 0 : i32
    %c0_i32_0 = arith.constant 0 : i32
    %c0_i32_1 = arith.constant 0 : i32
    return %c0_i32, %c0_i32_0 : i32, i32
  }
  func.func @transform_16(%arg0: i32) -> i32 {
    %c0_i32 = arith.constant 0 : i32
    %c0_i32_0 = arith.constant 0 : i32
    return %c0_i32 : i32
  }
  func.func @transform_17(%arg0: i32) -> (i32, i32) {
    %c0_i32 = arith.constant 0 : i32
    %c0_i32_0 = arith.constant 0 : i32
    %c0_i32_1 = arith.constant 0 : i32
    return %c0_i32, %c0_i32_0 : i32, i32
  }
}

</mosaic_0001>

<llo_original>
// kernel: tpu_custom_call.1
$region0: #{tpu_custom_call.1}
  #allocation0 [shape = 'u32[]', space=smem, size = 0x4, offset = 0x4, fixed_abs, tag = 'smem constant byte address 0x4 - core index']
  #allocation1 [shape = 'u32[144,128]{1,0:T(1,128)}', space=vmem, size = 0x12000, scoped, tag = 'internal scratch']
  #allocation2 [shape = 'f32[256,256]{1,0:T(8,128)}', space=vmem, size = 0x40000, scoped, tag = 'scratch operand']
  #allocation3 [shape = 'f32[1]{0:T(128)S(6)}', space=smem, size = 0x200, scoped, tag = 'scoped memory for tpu_custom_call.1']
  %s0 = inlined_call_operand.vmem [shape: f32[2,128,3], index: 0, kind: input, shape index: {}]
  %s1 = inlined_call_operand.hbm [shape: f32[2,256], index: 1, kind: input, shape index: {}]
  %s2 = inlined_call_operand.hbm [shape: f32[3,256], index: 2, kind: input, shape index: {}]
  %s3 = inlined_call_operand.vmem [shape: bf16[256,256], index: 3, kind: input, shape index: {}]
  %s4 = inlined_call_operand.hbm [shape: bf16[256,256], index: 4, kind: input, shape index: {}]
  %s5 = inlined_call_operand.vmem [shape: f32[5,1,256], index: 5, kind: input, shape index: {}]
  %s6 = inlined_call_operand.vmem [shape: f32[5,1,256], index: 6, kind: input, shape index: {}]
  %s7 = inlined_call_operand.hbm [shape: bf16[5,256,256], index: 7, kind: input, shape index: {}]
  %s8 = inlined_call_operand.hbm [shape: bf16[5,256,256], index: 8, kind: input, shape index: {}]
  %s9 = inlined_call_operand.vmem [shape: f32[5,1,256], index: 9, kind: input, shape index: {}]
  %s10 = inlined_call_operand.vmem [shape: f32[5,1,256], index: 10, kind: input, shape index: {}]
  %s11 = inlined_call_operand.hbm [shape: bf16[5,256,256], index: 11, kind: input, shape index: {}]
  %s12 = inlined_call_operand.hbm [shape: bf16[5,256,256], index: 12, kind: input, shape index: {}]
  %s13 = inlined_call_operand.vmem [shape: f32[1,256], index: 13, kind: input, shape index: {}]
  %s14 = inlined_call_operand.vmem [shape: f32[1,256], index: 14, kind: input, shape index: {}]
  %s15 = inlined_call_operand.vmem [shape: f32[1,256], index: 15, kind: input, shape index: {}]
  %s16 = inlined_call_operand.<no memory space> [shape: f32[1], index: 16, kind: input, shape index: {}]
  %s17 = inlined_call_operand.hbm [shape: f32[2,128], index: 17, kind: output, shape index: {}]
  %s18 = sld [smem:[#allocation0]]
  $region113: #{tpu_custom_call.1} parent=0
    _
  %s20 = ssub.s32 1, %s18
  %s21 = scalar_select 0, %s20, %s18
  %22 = sst [smem:[#allocation3]] %s16
  $region1: #{tpu_custom_call.1} parent=0
    #allocation4 [shape = 'u8[2048]{0}', space=vmem, size = 0x800, scoped, tag = 'input window, operand 1, single buffered']
    #allocation5 [shape = 's32[1]{0}', space=sflag, size = 0x4, scoped, tag = 'scoped memory for tpu_custom_call.1']
    #allocation6 [shape = 's32[1]{0}', space=sflag, size = 0x4, scoped, tag = 'scoped memory for tpu_custom_call.1']
    #allocation7 [shape = 'u8[4096]{0}', space=vmem, size = 0x1000, scoped, tag = 'input window, operand 2, single buffered']
    #allocation8 [shape = 's32[1]{0}', space=sflag, size = 0x4, scoped, tag = 'scoped memory for tpu_custom_call.1']
    #allocation9 [shape = 'u8[131072]{0}', space=vmem, size = 0x20000, scoped, tag = 'input window, operand 4, single buffered']
    #allocation10 [shape = 'u8[655360]{0}', space=vmem, size = 0xa0000, scoped, tag = 'input window, operand 7, single buffered']
    #allocation11 [shape = 's32[1]{0}', space=sflag, size = 0x4, scoped, tag = 'scoped memory for tpu_custom_call.1']
    #allocation12 [shape = 'u8[655360]{0}', space=vmem, size = 0xa0000, scoped, tag = 'input window, operand 8, single buffered']
    #allocation13 [shape = 'u8[655360]{0}', space=vmem, size = 0xa0000, scoped, tag = 'input window, operand 11, single buffered']
    #allocation14 [shape = 's32[1]{0}', space=sflag, size = 0x4, scoped, tag = 'scoped memory for tpu_custom_call.1']
    #allocation15 [shape = 'u8[655360]{0}', space=vmem, size = 0xa0000, scoped, tag = 'input window, operand 12, single buffered']
    #allocation16 [shape = 'u8[1024]{0}', space=vmem, size = 0x400, scoped, tag = 'output window, operand 0, single buffered']
    %23 = vsyncpa [#allocation5], 0
    %24 = vsyncpa [#allocation8], 0
    %25 = vsyncpa [#allocation11], 0
    %26 = vsyncpa [#allocation14], 0
    %27 = vsyncpa [#allocation6], 0
    // Predicated region
    $region2: #{tpu_custom_call.1} parent=1 // pred_check
      _
    $region3: #{tpu_custom_call.1} parent=1 // pred_check_branch
      %29 = sbr.rel (0) target = $region5
    $region4: #{tpu_custom_call.1} parent=1 // pred_region
      _
    $region5: #{tpu_custom_call.1} parent=1 // pred_fallthru
      _
    // Predicated region
    $region6: #{tpu_custom_call.1} parent=1 // pred_check
      _
    $region7: #{tpu_custom_call.1} parent=1 // pred_check_branch
      %31 = sbr.rel (0) target = $region9
    $region8: #{tpu_custom_call.1} parent=1 // pred_region
      %s33 = ssub.s32 64, 64
      %34 = vsyncadd [#allocation5], %s33
      %s36 = sshll.u32 [#allocation4], 4
      %s37 = int_to_ptr.vmem [resolvable:$true] %s36
      %39 = dma.hbm_to_vmem [thread:$0]  %s1, 64, %s37, [#allocation5]
    $region9: #{tpu_custom_call.1} parent=1 // pred_fallthru
      _
    // Predicated region
    $region10: #{tpu_custom_call.1} parent=1 // pred_check
      _
    $region11: #{tpu_custom_call.1} parent=1 // pred_check_branch
      %41 = sbr.rel (0) target = $region13
    $region12: #{tpu_custom_call.1} parent=1 // pred_region
      %s43 = ssub.s32 128, 128
      %44 = vsyncadd [#allocation8], %s43
      %s46 = sshll.u32 [#allocation7], 4
      %s47 = int_to_ptr.vmem [resolvable:$true] %s46
      %49 = dma.hbm_to_vmem [thread:$0]  %s2, 128, %s47, [#allocation8]
    $region13: #{tpu_custom_call.1} parent=1 // pred_fallthru
      _
    // Predicated region
    $region14: #{tpu_custom_call.1} parent=1 // pred_check
      _
    $region15: #{tpu_custom_call.1} parent=1 // pred_check_branch
      %51 = sbr.rel (0) target = $region17
    $region16: #{tpu_custom_call.1} parent=1 // pred_region
      _
    $region17: #{tpu_custom_call.1} parent=1 // pred_fallthru
      _
    // Predicated region
    $region18: #{tpu_custom_call.1} parent=1 // pred_check
      _
    $region19: #{tpu_custom_call.1} parent=1 // pred_check_branch
      %53 = sbr.rel (0) target = $region21
    $region20: #{tpu_custom_call.1} parent=1 // pred_region
      %s55 = ssub.s32 4096, 4096
      %56 = vsyncadd [#allocation8], %s55
      %s57 = sshll.u32 [#allocation9], 4
      %s58 = int_to_ptr.vmem [resolvable:$true] %s57
      %63 = dma.hbm_to_vmem [thread:$0]  %s4, 4096, %s58, [#allocation8], 128, 128, 8
    $region21: #{tpu_custom_call.1} parent=1 // pred_fallthru
      _
    // Predicated region
    $region22: #{tpu_custom_call.1} parent=1 // pred_check
      _
    $region23: #{tpu_custom_call.1} parent=1 // pred_check_branch
      %65 = sbr.rel (0) target = $region25
    $region24: #{tpu_custom_call.1} parent=1 // pred_region
      _
    $region25: #{tpu_custom_call.1} parent=1 // pred_fallthru
      _
    // Predicated region
    $region26: #{tpu_custom_call.1} parent=1 // pred_check
      _
    $region27: #{tpu_custom_call.1} parent=1 // pred_check_branch
      %67 = sbr.rel (0) target = $region29
    $region28: #{tpu_custom_call.1} parent=1 // pred_region
      _
    $region29: #{tpu_custom_call.1} parent=1 // pred_fallthru
      _
    // Predicated region
    $region30: #{tpu_custom_call.1} parent=1 // pred_check
      _
    $region31: #{tpu_custom_call.1} parent=1 // pred_check_branch
      %69 = sbr.rel (0) target = $region33
    $region32: #{tpu_custom_call.1} parent=1 // pred_region
      %s71 = ssub.s32 20480, 20480
      %72 = vsyncadd [#allocation11], %s71
      %s73 = sshll.u32 [#allocation10], 4
      %s74 = int_to_ptr.vmem [resolvable:$true] %s73
      %79 = dma.hbm_to_vmem [thread:$0]  %s7, 20480, %s74, [#allocation11], 128, 128, 8
    $region33: #{tpu_custom_call.1} parent=1 // pred_fallthru
      _
    // Predicated region
    $region34: #{tpu_custom_call.1} parent=1 // pred_check
      _
    $region35: #{tpu_custom_call.1} parent=1 // pred_check_branch
      %81 = sbr.rel (0) target = $region37
    $region36: #{tpu_custom_call.1} parent=1 // pred_region
      %s83 = ssub.s32 20480, 20480
      %84 = vsyncadd [#allocation11], %s83
      %s85 = sshll.u32 [#allocation12], 4
      %s86 = int_to_ptr.vmem [resolvable:$true] %s85
      %91 = dma.hbm_to_vmem [thread:$0]  %s8, 20480, %s86, [#allocation11], 128, 128, 8
    $region37: #{tpu_custom_call.1} parent=1 // pred_fallthru
      _
    // Predicated region
    $region38: #{tpu_custom_call.1} parent=1 // pred_check
      _
    $region39: #{tpu_custom_call.1} parent=1 // pred_check_branch
      %93 = sbr.rel (0) target = $region41
    $region40: #{tpu_custom_call.1} parent=1 // pred_region
      _
    $region41: #{tpu_custom_call.1} parent=1 // pred_fallthru
      _
    // Predicated region
    $region42: #{tpu_custom_call.1} parent=1 // pred_check
      _
    $region43: #{tpu_custom_call.1} parent=1 // pred_check_branch
      %95 = sbr.rel (0) target = $region45
    $region44: #{tpu_custom_call.1} parent=1 // pred_region
      _
    $region45: #{tpu_custom_call.1} parent=1 // pred_fallthru
      _
    // Predicated region
    $region46: #{tpu_custom_call.1} parent=1 // pred_check
      _
    $region47: #{tpu_custom_call.1} parent=1 // pred_check_branch
      %97 = sbr.rel (0) target = $region49
    $region48: #{tpu_custom_call.1} parent=1 // pred_region
      %s99 = ssub.s32 20480, 20480
      %100 = vsyncadd [#allocation14], %s99
      %s101 = sshll.u32 [#allocation13], 4
      %s102 = int_to_ptr.vmem [resolvable:$true] %s101
      %107 = dma.hbm_to_vmem [thread:$0]  %s11, 20480, %s102, [#allocation14], 128, 128, 8
    $region49: #{tpu_custom_call.1} parent=1 // pred_fallthru
      _
    // Predicated region
    $region50: #{tpu_custom_call.1} parent=1 // pred_check
      _
    $region51: #{tpu_custom_call.1} parent=1 // pred_check_branch
      %109 = sbr.rel (0) target = $region53
    $region52: #{tpu_custom_call.1} parent=1 // pred_region
      %s111 = ssub.s32 20480, 20480
      %112 = vsyncadd [#allocation14], %s111
      %s113 = sshll.u32 [#allocation15], 4
      %s114 = int_to_ptr.vmem [resolvable:$true] %s113
      %119 = dma.hbm_to_vmem [thread:$0]  %s12, 20480, %s114, [#allocation14], 128, 128, 8
    $region53: #{tpu_custom_call.1} parent=1 // pred_fallthru
      _
    // Predicated region
    $region54: #{tpu_custom_call.1} parent=1 // pred_check
      _
    $region55: #{tpu_custom_call.1} parent=1 // pred_check_branch
      %121 = sbr.rel (0) target = $region57
    $region56: #{tpu_custom_call.1} parent=1 // pred_region
      _
    $region57: #{tpu_custom_call.1} parent=1 // pred_fallthru
      _
    // Predicated region
    $region58: #{tpu_custom_call.1} parent=1 // pred_check
      _
    $region59: #{tpu_custom_call.1} parent=1 // pred_check_branch
      %123 = sbr.rel (0) target = $region61
    $region60: #{tpu_custom_call.1} parent=1 // pred_region
      _
    $region61: #{tpu_custom_call.1} parent=1 // pred_fallthru
      _
    // Predicated region
    $region62: #{tpu_custom_call.1} parent=1 // pred_check
      _
    $region63: #{tpu_custom_call.1} parent=1 // pred_check_branch
      %125 = sbr.rel (0) target = $region65
    $region64: #{tpu_custom_call.1} parent=1 // pred_region
      _
    $region65: #{tpu_custom_call.1} parent=1 // pred_fallthru
      _
    // Predicated region
    $region66: #{tpu_custom_call.1} parent=1 // pred_check
      _
    $region67: #{tpu_custom_call.1} parent=1 // pred_check_branch
      %127 = sbr.rel (0) target = $region69
    $region68: #{tpu_custom_call.1} parent=1 // pred_region
      _
    $region69: #{tpu_custom_call.1} parent=1 // pred_fallthru
      _
    // Predicated region
    $region70: #{tpu_custom_call.1} parent=1 // pred_check
      _
    $region71: #{tpu_custom_call.1} parent=1 // pred_check_branch
      %129 = sbr.rel (0) target = $region73
    $region72: #{tpu_custom_call.1} parent=1 // pred_region
      %130 = dma.done [#allocation5], 64
    $region73: #{tpu_custom_call.1} parent=1 // pred_fallthru
      _
    // Predicated region
    $region74: #{tpu_custom_call.1} parent=1 // pred_check
      _
    $region75: #{tpu_custom_call.1} parent=1 // pred_check_branch
      %132 = sbr.rel (0) target = $region77
    $region76: #{tpu_custom_call.1} parent=1 // pred_region
      %133 = dma.done [#allocation8], 128
    $region77: #{tpu_custom_call.1} parent=1 // pred_fallthru
      _
    // Predicated region
    $region78: #{tpu_custom_call.1} parent=1 // pred_check
      _
    $region79: #{tpu_custom_call.1} parent=1 // pred_check_branch
      %135 = sbr.rel (0) target = $region81
    $region80: #{tpu_custom_call.1} parent=1 // pred_region
      %136 = dma.done [#allocation8], 4096
    $region81: #{tpu_custom_call.1} parent=1 // pred_fallthru
      _
    // Predicated region
    $region82: #{tpu_custom_call.1} parent=1 // pred_check
      _
    $region83: #{tpu_custom_call.1} parent=1 // pred_check_branch
      %138 = sbr.rel (0) target = $region85
    $region84: #{tpu_custom_call.1} parent=1 // pred_region
      %139 = dma.done [#allocation11], 20480
    $region85: #{tpu_custom_call.1} parent=1 // pred_fallthru
      _
    // Predicated region
    $region86: #{tpu_custom_call.1} parent=1 // pred_check
      _
    $region87: #{tpu_custom_call.1} parent=1 // pred_check_branch
      %141 = sbr.rel (0) target = $region89
    $region88: #{tpu_custom_call.1} parent=1 // pred_region
      %142 = dma.done [#allocation11], 20480
    $region89: #{tpu_custom_call.1} parent=1 // pred_fallthru
      _
    // Predicated region
    $region90: #{tpu_custom_call.1} parent=1 // pred_check
      _
    $region91: #{tpu_custom_call.1} parent=1 // pred_check_branch
      %144 = sbr.rel (0) target = $region93
    $region92: #{tpu_custom_call.1} parent=1 // pred_region
      %145 = dma.done [#allocation14], 20480
    $region93: #{tpu_custom_call.1} parent=1 // pred_fallthru
      _
    // Predicated region
    $region94: #{tpu_custom_call.1} parent=1 // pred_check
      _
    $region95: #{tpu_custom_call.1} parent=1 // pred_check_branch
      %147 = sbr.rel (0) target = $region97
    $region96: #{tpu_custom_call.1} parent=1 // pred_region
      %148 = dma.done [#allocation14], 20480
    $region97: #{tpu_custom_call.1} parent=1 // pred_fallthru
      _
    %v149 = vld [vmem:[#allocation4] sm:$0xf]
    %v150 = vld [vmem:[%s3] sm:$0xff]
    %v151 = vld [vmem:[%s3 + $0x8] sm:$0xff]
    %v152 = vld [vmem:[%s3 + $0x10] sm:$0xff]
    %v153 = vld [vmem:[%s3 + $0x18] sm:$0xff]
    %v154 = vld [vmem:[%s3 + $0x20] sm:$0xff]
    %v155 = vld [vmem:[%s3 + $0x28] sm:$0xff]
    %v156 = vld [vmem:[%s3 + $0x30] sm:$0xff]
    %v157 = vld [vmem:[%s3 + $0x38] sm:$0xff]
    %v158 = vld [vmem:[%s3 + $0x40] sm:$0xff]
    %v159 = vld [vmem:[%s3 + $0x48] sm:$0xff]
    %v160 = vld [vmem:[%s3 + $0x50] sm:$0xff]
    %v161 = vld [vmem:[%s3 + $0x58] sm:$0xff]
    %v162 = vld [vmem:[%s3 + $0x60] sm:$0xff]
    %v163 = vld [vmem:[%s3 + $0x68] sm:$0xff]
    %v164 = vld [vmem:[%s3 + $0x70] sm:$0xff]
    %v165 = vld [vmem:[%s3 + $0x78] sm:$0xff]
    %v166 = vld [vmem:[%s3 + $0x80] sm:$0xff]
    %v167 = vld [vmem:[%s3 + $0x88] sm:$0xff]
    %v168 = vld [vmem:[%s3 + $0x90] sm:$0xff]
    %v169 = vld [vmem:[%s3 + $0x98] sm:$0xff]
    %v170 = vld [vmem:[%s3 + $0xa0] sm:$0xff]
    %v171 = vld [vmem:[%s3 + $0xa8] sm:$0xff]
    %v172 = vld [vmem:[%s3 + $0xb0] sm:$0xff]
    %v173 = vld [vmem:[%s3 + $0xb8] sm:$0xff]
    %v174 = vld [vmem:[%s3 + $0xc0] sm:$0xff]
    %v175 = vld [vmem:[%s3 + $0xc8] sm:$0xff]
    %v176 = vld [vmem:[%s3 + $0xd0] sm:$0xff]
    %v177 = vld [vmem:[%s3 + $0xd8] sm:$0xff]
    %v178 = vld [vmem:[%s3 + $0xe0] sm:$0xff]
    %v179 = vld [vmem:[%s3 + $0xe8] sm:$0xff]
    %v180 = vld [vmem:[%s3 + $0xf0] sm:$0xff]
    %v181 = vld [vmem:[%s3 + $0xf8] sm:$0xff]
    %v182 = vld [vmem:[#allocation9] sm:$0xff]
    %v183 = vld [vmem:[#allocation9 + $0x8] sm:$0xff]
    %v184 = vld [vmem:[#allocation9 + $0x10] sm:$0xff]
    %v185 = vld [vmem:[#allocation9 + $0x18] sm:$0xff]
    %v186 = vld [vmem:[#allocation9 + $0x20] sm:$0xff]
    %v187 = vld [vmem:[#allocation9 + $0x28] sm:$0xff]
    %v188 = vld [vmem:[#allocation9 + $0x30] sm:$0xff]
    %v189 = vld [vmem:[#allocation9 + $0x38] sm:$0xff]
    %v190 = vld [vmem:[#allocation9 + $0x40] sm:$0xff]
    %v191 = vld [vmem:[#allocation9 + $0x48] sm:$0xff]
    %v192 = vld [vmem:[#allocation9 + $0x50] sm:$0xff]
    %v193 = vld [vmem:[#allocation9 + $0x58] sm:$0xff]
    %v194 = vld [vmem:[#allocation9 + $0x60] sm:$0xff]
    %v195 = vld [vmem:[#allocation9 + $0x68] sm:$0xff]
    %v196 = vld [vmem:[#allocation9 + $0x70] sm:$0xff]
    %v197 = vld [vmem:[#allocation9 + $0x78] sm:$0xff]
    %v198 = vld [vmem:[#allocation9 + $0x80] sm:$0xff]
    %v199 = vld [vmem:[#allocation9 + $0x88] sm:$0xff]
    %v200 = vld [vmem:[#allocation9 + $0x90] sm:$0xff]
    %v201 = vld [vmem:[#allocation9 + $0x98] sm:$0xff]
    %v202 = vld [vmem:[#allocation9 + $0xa0] sm:$0xff]
    %v203 = vld [vmem:[#allocation9 + $0xa8] sm:$0xff]
    %v204 = vld [vmem:[#allocation9 + $0xb0] sm:$0xff]
    %v205 = vld [vmem:[#allocation9 + $0xb8] sm:$0xff]
    %v206 = vld [vmem:[#allocation9 + $0xc0] sm:$0xff]
    %v207 = vld [vmem:[#allocation9 + $0xc8] sm:$0xff]
    %v208 = vld [vmem:[#allocation9 + $0xd0] sm:$0xff]
    %v209 = vld [vmem:[#allocation9 + $0xd8] sm:$0xff]
    %v210 = vld [vmem:[#allocation9 + $0xe0] sm:$0xff]
    %v211 = vld [vmem:[#allocation9 + $0xe8] sm:$0xff]
    %v212 = vld [vmem:[#allocation9 + $0xf0] sm:$0xff]
    %v213 = vld [vmem:[#allocation9 + $0xf8] sm:$0xff]
    %v216 = vunpack.c.l.s4 1983009808
    %v217 = vunpack.c.0.s8 %v216
    %v218 = vlaneseq
    %v219 = vshrl.u32 %v218, 7
    %v220 = vsub.s32 %v217, %v219
    %v221 = vrot.slane %v149, %v220
    %v222 = vcombine.high %v221, %v221
    %v225 = vpack.c.bf16 %v221, %v221
    %v226 = vpack.c.bf16 %v222, %v222
    %v227 = vunpack.c.l.bf16 %v225
    %v228 = vunpack.c.l.bf16 %v226
    %v231 = vcombine.low %v227, %v228
    %v233 = vunpack.c.l.s4 1983009808
    %v234 = vunpack.c.0.s8 %v233
    %v235 = vlaneseq
    %v236 = vshrl.u32 %v235, 7
    %v237 = vsub.s32 %v234, %v236
    %v238 = vrot.slane %v231, %v237
    %v240 = vsub.f32 %v149, %v238
    %v243 = vunpack.c.l.s4 1983009808
    %v244 = vunpack.c.0.s8 %v243
    %v245 = vlaneseq
    %v246 = vshrl.u32 %v245, 7
    %v247 = vsub.s32 %v244, %v246
    %v248 = vrot.slane %v240, %v247
    %v249 = vcombine.high %v248, %v248
    %v252 = vpack.c.bf16 %v248, %v248
    %v253 = vpack.c.bf16 %v249, %v249
    %v286 = vunpack.c.l.b16 %v150
    %v287 = vunpack.c.h.b16 %v150
    %v288 = vunpack.c.l.b16 %v151
    %v289 = vunpack.c.h.b16 %v151
    %v290 = vunpack.c.l.b16 %v152
    %v291 = vunpack.c.h.b16 %v152
    %v292 = vunpack.c.l.b16 %v153
    %v293 = vunpack.c.h.b16 %v153
    %v294 = vunpack.c.l.b16 %v154
    %v295 = vunpack.c.h.b16 %v154
    %v296 = vunpack.c.l.b16 %v155
    %v297 = vunpack.c.h.b16 %v155
    %v298 = vunpack.c.l.b16 %v156
    %v299 = vunpack.c.h.b16 %v156
    %v300 = vunpack.c.l.b16 %v157
    %v301 = vunpack.c.h.b16 %v157
    %v302 = vunpack.c.l.b16 %v158
    %v303 = vunpack.c.h.b16 %v158
    %v304 = vunpack.c.l.b16 %v159
    %v305 = vunpack.c.h.b16 %v159
    %v306 = vunpack.c.l.b16 %v160
    %v307 = vunpack.c.h.b16 %v160
    %v308 = vunpack.c.l.b16 %v161
    %v309 = vunpack.c.h.b16 %v161
    %v310 = vunpack.c.l.b16 %v162
    %v311 = vunpack.c.h.b16 %v162
    %v312 = vunpack.c.l.b16 %v163
    %v313 = vunpack.c.h.b16 %v163
    %v314 = vunpack.c.l.b16 %v164
    %v315 = vunpack.c.h.b16 %v164
    %v316 = vunpack.c.l.b16 %v165
    %v317 = vunpack.c.h.b16 %v165
    %v318 = vunpack.c.l.b16 %v166
    %v319 = vunpack.c.h.b16 %v166
    %v320 = vunpack.c.l.b16 %v167
    %v321 = vunpack.c.h.b16 %v167
    %v322 = vunpack.c.l.b16 %v168
    %v323 = vunpack.c.h.b16 %v168
    %v324 = vunpack.c.l.b16 %v169
    %v325 = vunpack.c.h.b16 %v169
    %v326 = vunpack.c.l.b16 %v170
    %v327 = vunpack.c.h.b16 %v170
    %v328 = vunpack.c.l.b16 %v171
    %v329 = vunpack.c.h.b16 %v171
    %v330 = vunpack.c.l.b16 %v172
    %v331 = vunpack.c.h.b16 %v172
    %v332 = vunpack.c.l.b16 %v173
    %v333 = vunpack.c.h.b16 %v173
    %v334 = vunpack.c.l.b16 %v174
    %v335 = vunpack.c.h.b16 %v174
    %v336 = vunpack.c.l.b16 %v175
    %v337 = vunpack.c.h.b16 %v175
    %v338 = vunpack.c.l.b16 %v176
    %v339 = vunpack.c.h.b16 %v176
    %v340 = vunpack.c.l.b16 %v177
    %v341 = vunpack.c.h.b16 %v177
    %v342 = vunpack.c.l.b16 %v178
    %v343 = vunpack.c.h.b16 %v178
    %v344 = vunpack.c.l.b16 %v179
    %v345 = vunpack.c.h.b16 %v179
    %v346 = vunpack.c.l.b16 %v180
    %v347 = vunpack.c.h.b16 %v180
    %v348 = vunpack.c.l.b16 %v181
    %v349 = vunpack.c.h.b16 %v181
    %v350 = vpack.c.b16 %v288, %v286
    %v351 = vpack.c.b16 %v289, %v287
    %v352 = vpack.c.b16 %v292, %v290
    %v353 = vpack.c.b16 %v293, %v291
    %v354 = vpack.c.b16 %v296, %v294
    %v355 = vpack.c.b16 %v297, %v295
    %v356 = vpack.c.b16 %v300, %v298
    %v357 = vpack.c.b16 %v301, %v299
    %v358 = vpack.c.b16 %v304, %v302
    %v359 = vpack.c.b16 %v305, %v303
    %v360 = vpack.c.b16 %v308, %v306
    %v361 = vpack.c.b16 %v309, %v307
    %v362 = vpack.c.b16 %v312, %v310
    %v363 = vpack.c.b16 %v313, %v311
    %v364 = vpack.c.b16 %v316, %v314
    %v365 = vpack.c.b16 %v317, %v315
    %v366 = vpack.c.b16 %v320, %v318
    %v367 = vpack.c.b16 %v321, %v319
    %v368 = vpack.c.b16 %v324, %v322
    %v369 = vpack.c.b16 %v325, %v323
    %v370 = vpack.c.b16 %v328, %v326
    %v371 = vpack.c.b16 %v329, %v327
    %v372 = vpack.c.b16 %v332, %v330
    %v373 = vpack.c.b16 %v333, %v331
    %v374 = vpack.c.b16 %v336, %v334
    %v375 = vpack.c.b16 %v337, %v335
    %v376 = vpack.c.b16 %v340, %v338
    %v377 = vpack.c.b16 %v341, %v339
    %v378 = vpack.c.b16 %v344, %v342
    %v379 = vpack.c.b16 %v345, %v343
    %v380 = vpack.c.b16 %v348, %v346
    %v381 = vpack.c.b16 %v349, %v347
    %414 = vmatprep.subr.bf16.mxu0 %v351
    %415 = vmatpush1.bf16.msra.mxu0 %v350
    %416 = vmatprep.subr.bf16.mxu0 %v353
    %417 = vmatpush1.bf16.msra.mxu0 %v352
    %418 = vmatprep.subr.bf16.mxu0 %v355
    %419 = vmatpush1.bf16.msra.mxu0 %v354
    %420 = vmatprep.subr.bf16.mxu0 %v357
    %421 = vmatpush1.bf16.msra.mxu0 %v356
    %422 = vmatprep.subr.bf16.mxu0 %v359
    %423 = vmatpush1.bf16.msra.mxu0 %v358
    %424 = vmatprep.subr.bf16.mxu0 %v361
    %425 = vmatpush1.bf16.msra.mxu0 %v360
    %426 = vmatprep.subr.bf16.mxu0 %v363
    %427 = vmatpush1.bf16.msra.mxu0 %v362
    %428 = vmatprep.subr.bf16.mxu0 %v365
    %429 = vmatpush1.bf16.msra.mxu0 %v364
    %430 = vmatprep.subr.bf16.mxu0 %v367
    %431 = vmatpush1.bf16.msra.mxu0 %v366
    %432 = vmatprep.subr.bf16.mxu0 %v369
    %433 = vmatpush1.bf16.msra.mxu0 %v368
    %434 = vmatprep.subr.bf16.mxu0 %v371
    %435 = vmatpush1.bf16.msra.mxu0 %v370
    %436 = vmatprep.subr.bf16.mxu0 %v373
    %437 = vmatpush1.bf16.msra.mxu0 %v372
    %438 = vmatprep.subr.bf16.mxu0 %v375
    %439 = vmatpush1.bf16.msra.mxu0 %v374
    %440 = vmatprep.subr.bf16.mxu0 %v377
    %441 = vmatpush1.bf16.msra.mxu0 %v376
    %442 = vmatprep.subr.bf16.mxu0 %v379
    %443 = vmatpush1.bf16.msra.mxu0 %v378
    %444 = vmatprep.subr.bf16.mxu0 %v381
    %445 = vmatpush1.bf16.msra.mxu0 %v380
    %446 = vmatprep.mubr.bf16.mxu0 %v253
    %447 = vmatmul.mubr.bf16.gmra.mrb[0].mxu0 %v252
    %v448 = vpop.f32.mrb[0].mxu0
    %v449 = vadd.f32 0.0, %v448
    %v450 = vpop.f32.mrb[0].mxu0
    %v451 = vadd.f32 0.0, %v450
    %v452 = vpop.f32.mrb[0].mxu0
    %v453 = vpop.f32.mrb[0].mxu0
    %454 = vdwg.mxu0
    %455 = vmatprep.subr.bf16.mxu0 %v351
    %456 = vmatpush1.bf16.msra.mxu0 %v350
    %457 = vmatprep.subr.bf16.mxu0 %v353
    %458 = vmatpush1.bf16.msra.mxu0 %v352
    %459 = vmatprep.subr.bf16.mxu0 %v355
    %460 = vmatpush1.bf16.msra.mxu0 %v354
    %461 = vmatprep.subr.bf16.mxu0 %v357
    %462 = vmatpush1.bf16.msra.mxu0 %v356
    %463 = vmatprep.subr.bf16.mxu0 %v359
    %464 = vmatpush1.bf16.msra.mxu0 %v358
    %465 = vmatprep.subr.bf16.mxu0 %v361
    %466 = vmatpush1.bf16.msra.mxu0 %v360
    %467 = vmatprep.subr.bf16.mxu0 %v363
    %468 = vmatpush1.bf16.msra.mxu0 %v362
    %469 = vmatprep.subr.bf16.mxu0 %v365
    %470 = vmatpush1.bf16.msra.mxu0 %v364
    %471 = vmatprep.subr.bf16.mxu0 %v367
    %472 = vmatpush1.bf16.msra.mxu0 %v366
    %473 = vmatprep.subr.bf16.mxu0 %v369
    %474 = vmatpush1.bf16.msra.mxu0 %v368
    %475 = vmatprep.subr.bf16.mxu0 %v371
    %476 = vmatpush1.bf16.msra.mxu0 %v370
    %477 = vmatprep.subr.bf16.mxu0 %v373
    %478 = vmatpush1.bf16.msra.mxu0 %v372
    %479 = vmatprep.subr.bf16.mxu0 %v375
    %480 = vmatpush1.bf16.msra.mxu0 %v374
    %481 = vmatprep.subr.bf16.mxu0 %v377
    %482 = vmatpush1.bf16.msra.mxu0 %v376
    %483 = vmatprep.subr.bf16.mxu0 %v379
    %484 = vmatpush1.bf16.msra.mxu0 %v378
    %485 = vmatprep.subr.bf16.mxu0 %v381
    %486 = vmatpush1.bf16.msra.mxu0 %v380
    %487 = vmatprep.mubr.bf16.mxu0 %v226
    %488 = vmatmul.mubr.bf16.gmra.mrb[0].mxu0 %v225
    %v489 = vpop.f32.mrb[0].mxu0
    %v490 = vadd.f32 %v449, %v489
    %v491 = vpop.f32.mrb[0].mxu0
    %v492 = vadd.f32 %v451, %v491
    %v493 = vpop.f32.mrb[0].mxu0
    %v494 = vpop.f32.mrb[0].mxu0
    %495 = vdwg.mxu0
    %v528 = vunpack.c.l.b16 %v182
    %v529 = vunpack.c.h.b16 %v182
    %v530 = vunpack.c.l.b16 %v183
    %v531 = vunpack.c.h.b16 %v183
    %v532 = vunpack.c.l.b16 %v184
    %v533 = vunpack.c.h.b16 %v184
    %v534 = vunpack.c.l.b16 %v185
    %v535 = vunpack.c.h.b16 %v185
    %v536 = vunpack.c.l.b16 %v186
    %v537 = vunpack.c.h.b16 %v186
    %v538 = vunpack.c.l.b16 %v187
    %v539 = vunpack.c.h.b16 %v187
    %v540 = vunpack.c.l.b16 %v188
    %v541 = vunpack.c.h.b16 %v188
    %v542 = vunpack.c.l.b16 %v189
    %v543 = vunpack.c.h.b16 %v189
    %v544 = vunpack.c.l.b16 %v190
    %v545 = vunpack.c.h.b16 %v190
    %v546 = vunpack.c.l.b16 %v191
    %v547 = vunpack.c.h.b16 %v191
    %v548 = vunpack.c.l.b16 %v192
    %v549 = vunpack.c.h.b16 %v192
    %v550 = vunpack.c.l.b16 %v193
    %v551 = vunpack.c.h.b16 %v193
    %v552 = vunpack.c.l.b16 %v194
    %v553 = vunpack.c.h.b16 %v194
    %v554 = vunpack.c.l.b16 %v195
    %v555 = vunpack.c.h.b16 %v195
    %v556 = vunpack.c.l.b16 %v196
    %v557 = vunpack.c.h.b16 %v196
    %v558 = vunpack.c.l.b16 %v197
    %v559 = vunpack.c.h.b16 %v197
    %v560 = vunpack.c.l.b16 %v198
    %v561 = vunpack.c.h.b16 %v198
    %v562 = vunpack.c.l.b16 %v199
    %v563 = vunpack.c.h.b16 %v199
    %v564 = vunpack.c.l.b16 %v200
    %v565 = vunpack.c.h.b16 %v200
    %v566 = vunpack.c.l.b16 %v201
    %v567 = vunpack.c.h.b16 %v201
    %v568 = vunpack.c.l.b16 %v202
    %v569 = vunpack.c.h.b16 %v202
    %v570 = vunpack.c.l.b16 %v203
    %v571 = vunpack.c.h.b16 %v203
    %v572 = vunpack.c.l.b16 %v204
    %v573 = vunpack.c.h.b16 %v204
    %v574 = vunpack.c.l.b16 %v205
    %v575 = vunpack.c.h.b16 %v205
    %v576 = vunpack.c.l.b16 %v206
    %v577 = vunpack.c.h.b16 %v206
    %v578 = vunpack.c.l.b16 %v207
    %v579 = vunpack.c.h.b16 %v207
    %v580 = vunpack.c.l.b16 %v208
    %v581 = vunpack.c.h.b16 %v208
    %v582 = vunpack.c.l.b16 %v209
    %v583 = vunpack.c.h.b16 %v209
    %v584 = vunpack.c.l.b16 %v210
    %v585 = vunpack.c.h.b16 %v210
    %v586 = vunpack.c.l.b16 %v211
    %v587 = vunpack.c.h.b16 %v211
    %v588 = vunpack.c.l.b16 %v212
    %v589 = vunpack.c.h.b16 %v212
    %v590 = vunpack.c.l.b16 %v213
    %v591 = vunpack.c.h.b16 %v213
    %v592 = vpack.c.b16 %v530, %v528
    %v593 = vpack.c.b16 %v531, %v529
    %v594 = vpack.c.b16 %v534, %v532
    %v595 = vpack.c.b16 %v535, %v533
    %v596 = vpack.c.b16 %v538, %v536
    %v597 = vpack.c.b16 %v539, %v537
    %v598 = vpack.c.b16 %v542, %v540
    %v599 = vpack.c.b16 %v543, %v541
    %v600 = vpack.c.b16 %v546, %v544
    %v601 = vpack.c.b16 %v547, %v545
    %v602 = vpack.c.b16 %v550, %v548
    %v603 = vpack.c.b16 %v551, %v549
    %v604 = vpack.c.b16 %v554, %v552
    %v605 = vpack.c.b16 %v555, %v553
    %v606 = vpack.c.b16 %v558, %v556
    %v607 = vpack.c.b16 %v559, %v557
    %v608 = vpack.c.b16 %v562, %v560
    %v609 = vpack.c.b16 %v563, %v561
    %v610 = vpack.c.b16 %v566, %v564
    %v611 = vpack.c.b16 %v567, %v565
    %v612 = vpack.c.b16 %v570, %v568
    %v613 = vpack.c.b16 %v571, %v569
    %v614 = vpack.c.b16 %v574, %v572
    %v615 = vpack.c.b16 %v575, %v573
    %v616 = vpack.c.b16 %v578, %v576
    %v617 = vpack.c.b16 %v579, %v577
    %v618 = vpack.c.b16 %v582, %v580
    %v619 = vpack.c.b16 %v583, %v581
    %v620 = vpack.c.b16 %v586, %v584
    %v621 = vpack.c.b16 %v587, %v585
    %v622 = vpack.c.b16 %v590, %v588
    %v623 = vpack.c.b16 %v591, %v589
    %656 = vmatprep.subr.bf16.mxu0 %v593
    %657 = vmatpush1.bf16.msra.mxu0 %v592
    %658 = vmatprep.subr.bf16.mxu0 %v595
    %659 = vmatpush1.bf16.msra.mxu0 %v594
    %660 = vmatprep.subr.bf16.mxu0 %v597
    %661 = vmatpush1.bf16.msra.mxu0 %v596
    %662 = vmatprep.subr.bf16.mxu0 %v599
    %663 = vmatpush1.bf16.msra.mxu0 %v598
    %664 = vmatprep.subr.bf16.mxu0 %v601
    %665 = vmatpush1.bf16.msra.mxu0 %v600
    %666 = vmatprep.subr.bf16.mxu0 %v603
    %667 = vmatpush1.bf16.msra.mxu0 %v602
    %668 = vmatprep.subr.bf16.mxu0 %v605
    %669 = vmatpush1.bf16.msra.mxu0 %v604
    %670 = vmatprep.subr.bf16.mxu0 %v607
    %671 = vmatpush1.bf16.msra.mxu0 %v606
    %672 = vmatprep.subr.bf16.mxu0 %v609
    %673 = vmatpush1.bf16.msra.mxu0 %v608
    %674 = vmatprep.subr.bf16.mxu0 %v611
    %675 = vmatpush1.bf16.msra.mxu0 %v610
    %676 = vmatprep.subr.bf16.mxu0 %v613
    %677 = vmatpush1.bf16.msra.mxu0 %v612
    %678 = vmatprep.subr.bf16.mxu0 %v615
    %679 = vmatpush1.bf16.msra.mxu0 %v614
    %680 = vmatprep.subr.bf16.mxu0 %v617
    %681 = vmatpush1.bf16.msra.mxu0 %v616
    %682 = vmatprep.subr.bf16.mxu0 %v619
    %683 = vmatpush1.bf16.msra.mxu0 %v618
    %684 = vmatprep.subr.bf16.mxu0 %v621
    %685 = vmatpush1.bf16.msra.mxu0 %v620
    %686 = vmatprep.subr.bf16.mxu0 %v623
    %687 = vmatpush1.bf16.msra.mxu0 %v622
    %688 = vmatprep.mubr.bf16.mxu0 %v226
    %689 = vmatmul.mubr.bf16.gmra.mrb[0].mxu0 %v225
    %v690 = vpop.f32.mrb[0].mxu0
    %v691 = vadd.f32 0.0, %v690
    %v692 = vpop.f32.mrb[0].mxu0
    %v693 = vadd.f32 0.0, %v692
    %v694 = vpop.f32.mrb[0].mxu0
    %v695 = vpop.f32.mrb[0].mxu0
    %696 = vdwg.mxu0
    %v697 = vadd.f32 %v490, %v691
    %v698 = vadd.f32 %v492, %v693
    %v699 = vld [vmem:[%s0] sm:$0xff]
    %v700 = vld [vmem:[%s0 + $0x8] sm:$0xff]
    %v701 = vld [vmem:[%s0 + $0x10] sm:$0xff]
    %v702 = vld [vmem:[%s0 + $0x18] sm:$0xff]
    %v703 = vld [vmem:[%s0 + $0x20] sm:$0xff]
    %v704 = vld [vmem:[%s0 + $0x28] sm:$0xff]
    %v705 = vld [vmem:[%s0 + $0x30] sm:$0xff]
    %v706 = vld [vmem:[%s0 + $0x38] sm:$0xff]
    %v707 = vld [vmem:[%s0 + $0x40] sm:$0xff]
    %v708 = vld [vmem:[%s0 + $0x48] sm:$0xff]
    %v709 = vld [vmem:[%s0 + $0x50] sm:$0xff]
    %v710 = vld [vmem:[%s0 + $0x58] sm:$0xff]
    %v711 = vld [vmem:[%s0 + $0x60] sm:$0xff]
    %v712 = vld [vmem:[%s0 + $0x68] sm:$0xff]
    %v713 = vld [vmem:[%s0 + $0x70] sm:$0xff]
    %v714 = vld [vmem:[%s0 + $0x78] sm:$0xff]
    %v715 = vld [vmem:[%s0 + $0x80] sm:$0xff]
    %v716 = vld [vmem:[%s0 + $0x88] sm:$0xff]
    %v717 = vld [vmem:[%s0 + $0x90] sm:$0xff]
    %v718 = vld [vmem:[%s0 + $0x98] sm:$0xff]
    %v719 = vld [vmem:[%s0 + $0xa0] sm:$0xff]
    %v720 = vld [vmem:[%s0 + $0xa8] sm:$0xff]
    %v721 = vld [vmem:[%s0 + $0xb0] sm:$0xff]
    %v722 = vld [vmem:[%s0 + $0xb8] sm:$0xff]
    %v723 = vld [vmem:[%s0 + $0xc0] sm:$0xff]
    %v724 = vld [vmem:[%s0 + $0xc8] sm:$0xff]
    %v725 = vld [vmem:[%s0 + $0xd0] sm:$0xff]
    %v726 = vld [vmem:[%s0 + $0xd8] sm:$0xff]
    %v727 = vld [vmem:[%s0 + $0xe0] sm:$0xff]
    %v728 = vld [vmem:[%s0 + $0xe8] sm:$0xff]
    %v729 = vld [vmem:[%s0 + $0xf0] sm:$0xff]
    %v730 = vld [vmem:[%s0 + $0xf8] sm:$0xff]
    %v731 = vld [vmem:[#allocation7] sm:$0x77]
    %v734 = vcombine.low %v697, %v698
    %v736 = vunpack.c.l.s4 1966171168
    %v737 = vunpack.c.0.s8 %v736
    %v738 = vlaneseq
    %v739 = vshrl.u32 %v738, 7
    %v740 = vsub.s32 %v737, %v739
    %v741 = vrot.slane %v734, %v740
    %v742 = vcombine.high %v741, %v741
    %v744 = vunpack.c.l.s4 1966171168
    %v745 = vunpack.c.0.s8 %v744
    %v746 = vlaneseq
    %v747 = vshrl.u32 %v746, 7
    %v748 = vsub.s32 %v745, %v747
    %v749 = vrot.slane %v741, %v748
    %v751 = vunpack.c.l.s4 1966171168
    %v752 = vunpack.c.0.s8 %v751
    %v753 = vlaneseq
    %v754 = vshrl.u32 %v753, 7
    %v755 = vsub.s32 %v752, %v754
    %v756 = vrot.slane %v742, %v755
    %758 = vset.pattern.permute.xlu0 0
    %759 = vperm.xlu0 %758, %v699
    %v760 = vpop.permute.xlu0 %759
    %763 = vset.pattern.permute.xlu0 0
    %764 = vperm.xlu0 %763, %v700
    %v765 = vpop.permute.xlu0 %764
    %768 = vset.pattern.permute.xlu0 0
    %769 = vperm.xlu0 %768, %v701
    %v770 = vpop.permute.xlu0 %769
    %773 = vset.pattern.permute.xlu0 0
    %774 = vperm.xlu0 %773, %v702
    %v775 = vpop.permute.xlu0 %774
    %778 = vset.pattern.permute.xlu0 0
    %779 = vperm.xlu0 %778, %v703
    %v780 = vpop.permute.xlu0 %779
    %783 = vset.pattern.permute.xlu0 0
    %784 = vperm.xlu0 %783, %v704
    %v785 = vpop.permute.xlu0 %784
    %788 = vset.pattern.permute.xlu0 0
    %789 = vperm.xlu0 %788, %v705
    %v790 = vpop.permute.xlu0 %789
    %793 = vset.pattern.permute.xlu0 0
    %794 = vperm.xlu0 %793, %v706
    %v795 = vpop.permute.xlu0 %794
    %798 = vset.pattern.permute.xlu0 0
    %799 = vperm.xlu0 %798, %v707
    %v800 = vpop.permute.xlu0 %799
    %803 = vset.pattern.permute.xlu0 0
    %804 = vperm.xlu0 %803, %v708
    %v805 = vpop.permute.xlu0 %804
    %808 = vset.pattern.permute.xlu0 0
    %809 = vperm.xlu0 %808, %v709
    %v810 = vpop.permute.xlu0 %809
    %813 = vset.pattern.permute.xlu0 0
    %814 = vperm.xlu0 %813, %v710
    %v815 = vpop.permute.xlu0 %814
    %818 = vset.pattern.permute.xlu0 0
    %819 = vperm.xlu0 %818, %v711
    %v820 = vpop.permute.xlu0 %819
    %823 = vset.pattern.permute.xlu0 0
    %824 = vperm.xlu0 %823, %v712
    %v825 = vpop.permute.xlu0 %824
    %828 = vset.pattern.permute.xlu0 0
    %829 = vperm.xlu0 %828, %v713
    %v830 = vpop.permute.xlu0 %829
    %833 = vset.pattern.permute.xlu0 0
    %834 = vperm.xlu0 %833, %v714
    %v835 = vpop.permute.xlu0 %834
    %838 = vset.pattern.permute.xlu0 0
    %839 = vperm.xlu0 %838, %v715
    %v840 = vpop.permute.xlu0 %839
    %843 = vset.pattern.permute.xlu0 0
    %844 = vperm.xlu0 %843, %v716
    %v845 = vpop.permute.xlu0 %844
    %848 = vset.pattern.permute.xlu0 0
    %849 = vperm.xlu0 %848, %v717
    %v850 = vpop.permute.xlu0 %849
    %853 = vset.pattern.permute.xlu0 0
    %854 = vperm.xlu0 %853, %v718
    %v855 = vpop.permute.xlu0 %854
    %858 = vset.pattern.permute.xlu0 0
    %859 = vperm.xlu0 %858, %v719
    %v860 = vpop.permute.xlu0 %859
    %863 = vset.pattern.permute.xlu0 0
    %864 = vperm.xlu0 %863, %v720
    %v865 = vpop.permute.xlu0 %864
    %868 = vset.pattern.permute.xlu0 0
    %869 = vperm.xlu0 %868, %v721
    %v870 = vpop.permute.xlu0 %869
    %873 = vset.pattern.permute.xlu0 0
    %874 = vperm.xlu0 %873, %v722
    %v875 = vpop.permute.xlu0 %874
    %878 = vset.pattern.permute.xlu0 0
    %879 = vperm.xlu0 %878, %v723
    %v880 = vpop.permute.xlu0 %879
    %883 = vset.pattern.permute.xlu0 0
    %884 = vperm.xlu0 %883, %v724
    %v885 = vpop.permute.xlu0 %884
    %888 = vset.pattern.permute.xlu0 0
    %889 = vperm.xlu0 %888, %v725
    %v890 = vpop.permute.xlu0 %889
    %893 = vset.pattern.permute.xlu0 0
    %894 = vperm.xlu0 %893, %v726
    %v895 = vpop.permute.xlu0 %894
    %898 = vset.pattern.permute.xlu0 0
    %899 = vperm.xlu0 %898, %v727
    %v900 = vpop.permute.xlu0 %899
    %903 = vset.pattern.permute.xlu0 0
    %904 = vperm.xlu0 %903, %v728
    %v905 = vpop.permute.xlu0 %904
    %908 = vset.pattern.permute.xlu0 0
    %909 = vperm.xlu0 %908, %v729
    %v910 = vpop.permute.xlu0 %909
    %913 = vset.pattern.permute.xlu0 0
    %914 = vperm.xlu0 %913, %v730
    %v915 = vpop.permute.xlu0 %914
    %v918 = vlaneseq
    %v919 = vshrl.u32 %v918, 7
    %v920 = vsub.s32 0, %v919
    %v921 = vrot.slane %v731, %v920
    %v922 = vlaneseq
    %v923 = vshrl.u32 %v922, 7
    %v924 = vsub.s32 4, %v923
    %v925 = vrot.slane %v731, %v924
    %v928 = vlaneseq
    %v929 = vshrl.u32 %v928, 7
    %v930 = vsub.s32 0, %v929
    %v931 = vrot.slane %v921, %v930
    %v932 = vlaneseq
    %v933 = vshrl.u32 %v932, 7
    %v934 = vsub.s32 0, %v933
    %v935 = vrot.slane %v925, %v934
    %v936 = vmul.f32 %v760, %v931
    %v937 = vmul.f32 %v760, %v935
    %v938 = vmul.f32 %v765, %v931
    %v939 = vmul.f32 %v765, %v935
    %v940 = vmul.f32 %v770, %v931
    %v941 = vmul.f32 %v770, %v935
    %v942 = vmul.f32 %v775, %v931
    %v943 = vmul.f32 %v775, %v935
    %v944 = vmul.f32 %v780, %v931
    %v945 = vmul.f32 %v780, %v935
    %v946 = vmul.f32 %v785, %v931
    %v947 = vmul.f32 %v785, %v935
    %v948 = vmul.f32 %v790, %v931
    %v949 = vmul.f32 %v790, %v935
    %v950 = vmul.f32 %v795, %v931
    %v951 = vmul.f32 %v795, %v935
    %v952 = vmul.f32 %v800, %v931
    %v953 = vmul.f32 %v800, %v935
    %v954 = vmul.f32 %v805, %v931
    %v955 = vmul.f32 %v805, %v935
    %v956 = vmul.f32 %v810, %v931
    %v957 = vmul.f32 %v810, %v935
    %v958 = vmul.f32 %v815, %v931
    %v959 = vmul.f32 %v815, %v935
    %v960 = vmul.f32 %v820, %v931
    %v961 = vmul.f32 %v820, %v935
    %v962 = vmul.f32 %v825, %v931
    %v963 = vmul.f32 %v825, %v935
    %v964 = vmul.f32 %v830, %v931
    %v965 = vmul.f32 %v830, %v935
    %v966 = vmul.f32 %v835, %v931
    %v967 = vmul.f32 %v835, %v935
    %v968 = vmul.f32 %v840, %v931
    %v969 = vmul.f32 %v840, %v935
    %v970 = vmul.f32 %v845, %v931
    %v971 = vmul.f32 %v845, %v935
    %v972 = vmul.f32 %v850, %v931
    %v973 = vmul.f32 %v850, %v935
    %v974 = vmul.f32 %v855, %v931
    %v975 = vmul.f32 %v855, %v935
    %v976 = vmul.f32 %v860, %v931
    %v977 = vmul.f32 %v860, %v935
    %v978 = vmul.f32 %v865, %v931
    %v979 = vmul.f32 %v865, %v935
    %v980 = vmul.f32 %v870, %v931
    %v981 = vmul.f32 %v870, %v935
    %v982 = vmul.f32 %v875, %v931
    %v983 = vmul.f32 %v875, %v935
    %v984 = vmul.f32 %v880, %v931
    %v985 = vmul.f32 %v880, %v935
    %v986 = vmul.f32 %v885, %v931
    %v987 = vmul.f32 %v885, %v935
    %v988 = vmul.f32 %v890, %v931
    %v989 = vmul.f32 %v890, %v935
    %v990 = vmul.f32 %v895, %v931
    %v991 = vmul.f32 %v895, %v935
    %v992 = vmul.f32 %v900, %v931
    %v993 = vmul.f32 %v900, %v935
    %v994 = vmul.f32 %v905, %v931
    %v995 = vmul.f32 %v905, %v935
    %v996 = vmul.f32 %v910, %v931
    %v997 = vmul.f32 %v910, %v935
    %v998 = vmul.f32 %v915, %v931
    %v999 = vmul.f32 %v915, %v935
    %v1000 = vlaneseq
    %v1001 = vshrl.u32 %v1000, 7
    %v1002 = vsub.s32 0, %v1001
    %v1003 = vrot.slane %v749, %v1002
    %v1004 = vlaneseq
    %v1005 = vshrl.u32 %v1004, 7
    %v1006 = vsub.s32 1, %v1005
    %v1007 = vrot.slane %v749, %v1006
    %v1008 = vlaneseq
    %v1009 = vshrl.u32 %v1008, 7
    %v1010 = vsub.s32 0, %v1009
    %v1011 = vrot.slane %v756, %v1010
    %v1012 = vlaneseq
    %v1013 = vshrl.u32 %v1012, 7
    %v1014 = vsub.s32 1, %v1013
    %v1015 = vrot.slane %v756, %v1014
    %v1020 = vadd.f32 %v1003, %v936
    %v1021 = vadd.f32 %v1007, %v937
    %v1022 = vadd.f32 %v1003, %v938
    %v1023 = vadd.f32 %v1007, %v939
    %v1024 = vadd.f32 %v1003, %v940
    %v1025 = vadd.f32 %v1007, %v941
    %v1026 = vadd.f32 %v1003, %v942
    %v1027 = vadd.f32 %v1007, %v943
    %v1028 = vadd.f32 %v1003, %v944
    %v1029 = vadd.f32 %v1007, %v945
    %v1030 = vadd.f32 %v1003, %v946
    %v1031 = vadd.f32 %v1007, %v947
    %v1032 = vadd.f32 %v1003, %v948
    %v1033 = vadd.f32 %v1007, %v949
    %v1034 = vadd.f32 %v1003, %v950
    %v1035 = vadd.f32 %v1007, %v951
    %v1036 = vadd.f32 %v1003, %v952
    %v1037 = vadd.f32 %v1007, %v953
    %v1038 = vadd.f32 %v1003, %v954
    %v1039 = vadd.f32 %v1007, %v955
    %v1040 = vadd.f32 %v1003, %v956
    %v1041 = vadd.f32 %v1007, %v957
    %v1042 = vadd.f32 %v1003, %v958
    %v1043 = vadd.f32 %v1007, %v959
    %v1044 = vadd.f32 %v1003, %v960
    %v1045 = vadd.f32 %v1007, %v961
    %v1046 = vadd.f32 %v1003, %v962
    %v1047 = vadd.f32 %v1007, %v963
    %v1048 = vadd.f32 %v1003, %v964
    %v1049 = vadd.f32 %v1007, %v965
    %v1050 = vadd.f32 %v1003, %v966
    %v1051 = vadd.f32 %v1007, %v967
    %v1052 = vadd.f32 %v1011, %v968
    %v1053 = vadd.f32 %v1015, %v969
    %v1054 = vadd.f32 %v1011, %v970
    %v1055 = vadd.f32 %v1015, %v971
    %v1056 = vadd.f32 %v1011, %v972
    %v1057 = vadd.f32 %v1015, %v973
    %v1058 = vadd.f32 %v1011, %v974
    %v1059 = vadd.f32 %v1015, %v975
    %v1060 = vadd.f32 %v1011, %v976
    %v1061 = vadd.f32 %v1015, %v977
    %v1062 = vadd.f32 %v1011, %v978
    %v1063 = vadd.f32 %v1015, %v979
    %v1064 = vadd.f32 %v1011, %v980
    %v1065 = vadd.f32 %v1015, %v981
    %v1066 = vadd.f32 %v1011, %v982
    %v1067 = vadd.f32 %v1015, %v983
    %v1068 = vadd.f32 %v1011, %v984
    %v1069 = vadd.f32 %v1015, %v985
    %v1070 = vadd.f32 %v1011, %v986
    %v1071 = vadd.f32 %v1015, %v987
    %v1072 = vadd.f32 %v1011, %v988
    %v1073 = vadd.f32 %v1015, %v989
    %v1074 = vadd.f32 %v1011, %v990
    %v1075 = vadd.f32 %v1015, %v991
    %v1076 = vadd.f32 %v1011, %v992
    %v1077 = vadd.f32 %v1015, %v993
    %v1078 = vadd.f32 %v1011, %v994
    %v1079 = vadd.f32 %v1015, %v995
    %v1080 = vadd.f32 %v1011, %v996
    %v1081 = vadd.f32 %v1015, %v997
    %v1082 = vadd.f32 %v1011, %v998
    %v1083 = vadd.f32 %v1015, %v999
    %1084 = vset.pattern.permute.xlu0 1
    %1085 = vperm.xlu0 %1084, %v699
    %v1086 = vpop.permute.xlu0 %1085
    %1088 = vset.pattern.permute.xlu0 1
    %1089 = vperm.xlu0 %1088, %v700
    %v1090 = vpop.permute.xlu0 %1089
    %1092 = vset.pattern.permute.xlu0 1
    %1093 = vperm.xlu0 %1092, %v701
    %v1094 = vpop.permute.xlu0 %1093
    %1096 = vset.pattern.permute.xlu0 1
    %1097 = vperm.xlu0 %1096, %v702
    %v1098 = vpop.permute.xlu0 %1097
    %1100 = vset.pattern.permute.xlu0 1
    %1101 = vperm.xlu0 %1100, %v703
    %v1102 = vpop.permute.xlu0 %1101
    %1104 = vset.pattern.permute.xlu0 1
    %1105 = vperm.xlu0 %1104, %v704
    %v1106 = vpop.permute.xlu0 %1105
    %1108 = vset.pattern.permute.xlu0 1
    %1109 = vperm.xlu0 %1108, %v705
    %v1110 = vpop.permute.xlu0 %1109
    %1112 = vset.pattern.permute.xlu0 1
    %1113 = vperm.xlu0 %1112, %v706
    %v1114 = vpop.permute.xlu0 %1113
    %1116 = vset.pattern.permute.xlu0 1
    %1117 = vperm.xlu0 %1116, %v707
    %v1118 = vpop.permute.xlu0 %1117
    %1120 = vset.pattern.permute.xlu0 1
    %1121 = vperm.xlu0 %1120, %v708
    %v1122 = vpop.permute.xlu0 %1121
    %1124 = vset.pattern.permute.xlu0 1
    %1125 = vperm.xlu0 %1124, %v709
    %v1126 = vpop.permute.xlu0 %1125
    %1128 = vset.pattern.permute.xlu0 1
    %1129 = vperm.xlu0 %1128, %v710
    %v1130 = vpop.permute.xlu0 %1129
    %1132 = vset.pattern.permute.xlu0 1
    %1133 = vperm.xlu0 %1132, %v711
    %v1134 = vpop.permute.xlu0 %1133
    %1136 = vset.pattern.permute.xlu0 1
    %1137 = vperm.xlu0 %1136, %v712
    %v1138 = vpop.permute.xlu0 %1137
    %1140 = vset.pattern.permute.xlu0 1
    %1141 = vperm.xlu0 %1140, %v713
    %v1142 = vpop.permute.xlu0 %1141
    %1144 = vset.pattern.permute.xlu0 1
    %1145 = vperm.xlu0 %1144, %v714
    %v1146 = vpop.permute.xlu0 %1145
    %1148 = vset.pattern.permute.xlu0 1
    %1149 = vperm.xlu0 %1148, %v715
    %v1150 = vpop.permute.xlu0 %1149
    %1152 = vset.pattern.permute.xlu0 1
    %1153 = vperm.xlu0 %1152, %v716
    %v1154 = vpop.permute.xlu0 %1153
    %1156 = vset.pattern.permute.xlu0 1
    %1157 = vperm.xlu0 %1156, %v717
    %v1158 = vpop.permute.xlu0 %1157
    %1160 = vset.pattern.permute.xlu0 1
    %1161 = vperm.xlu0 %1160, %v718
    %v1162 = vpop.permute.xlu0 %1161
    %1164 = vset.pattern.permute.xlu0 1
    %1165 = vperm.xlu0 %1164, %v719
    %v1166 = vpop.permute.xlu0 %1165
    %1168 = vset.pattern.permute.xlu0 1
    %1169 = vperm.xlu0 %1168, %v720
    %v1170 = vpop.permute.xlu0 %1169
    %1172 = vset.pattern.permute.xlu0 1
    %1173 = vperm.xlu0 %1172, %v721
    %v1174 = vpop.permute.xlu0 %1173
    %1176 = vset.pattern.permute.xlu0 1
    %1177 = vperm.xlu0 %1176, %v722
    %v1178 = vpop.permute.xlu0 %1177
    %1180 = vset.pattern.permute.xlu0 1
    %1181 = vperm.xlu0 %1180, %v723
    %v1182 = vpop.permute.xlu0 %1181
    %1184 = vset.pattern.permute.xlu0 1
    %1185 = vperm.xlu0 %1184, %v724
    %v1186 = vpop.permute.xlu0 %1185
    %1188 = vset.pattern.permute.xlu0 1
    %1189 = vperm.xlu0 %1188, %v725
    %v1190 = vpop.permute.xlu0 %1189
    %1192 = vset.pattern.permute.xlu0 1
    %1193 = vperm.xlu0 %1192, %v726
    %v1194 = vpop.permute.xlu0 %1193
    %1196 = vset.pattern.permute.xlu0 1
    %1197 = vperm.xlu0 %1196, %v727
    %v1198 = vpop.permute.xlu0 %1197
    %1200 = vset.pattern.permute.xlu0 1
    %1201 = vperm.xlu0 %1200, %v728
    %v1202 = vpop.permute.xlu0 %1201
    %1204 = vset.pattern.permute.xlu0 1
    %1205 = vperm.xlu0 %1204, %v729
    %v1206 = vpop.permute.xlu0 %1205
    %1208 = vset.pattern.permute.xlu0 1
    %1209 = vperm.xlu0 %1208, %v730
    %v1210 = vpop.permute.xlu0 %1209
    %v1212 = vlaneseq
    %v1213 = vshrl.u32 %v1212, 7
    %v1214 = vsub.s32 1, %v1213
    %v1215 = vrot.slane %v731, %v1214
    %v1216 = vlaneseq
    %v1217 = vshrl.u32 %v1216, 7
    %v1218 = vsub.s32 5, %v1217
    %v1219 = vrot.slane %v731, %v1218
    %v1222 = vlaneseq
    %v1223 = vshrl.u32 %v1222, 7
    %v1224 = vsub.s32 1, %v1223
    %v1225 = vrot.slane %v1215, %v1224
    %v1226 = vlaneseq
    %v1227 = vshrl.u32 %v1226, 7
    %v1228 = vsub.s32 1, %v1227
    %v1229 = vrot.slane %v1219, %v1228
    %v1230 = vmul.f32 %v1086, %v1225
    %v1231 = vmul.f32 %v1086, %v1229
    %v1232 = vmul.f32 %v1090, %v1225
    %v1233 = vmul.f32 %v1090, %v1229
    %v1234 = vmul.f32 %v1094, %v1225
    %v1235 = vmul.f32 %v1094, %v1229
    %v1236 = vmul.f32 %v1098, %v1225
    %v1237 = vmul.f32 %v1098, %v1229
    %v1238 = vmul.f32 %v1102, %v1225
    %v1239 = vmul.f32 %v1102, %v1229
    %v1240 = vmul.f32 %v1106, %v1225
    %v1241 = vmul.f32 %v1106, %v1229
    %v1242 = vmul.f32 %v1110, %v1225
    %v1243 = vmul.f32 %v1110, %v1229
    %v1244 = vmul.f32 %v1114, %v1225
    %v1245 = vmul.f32 %v1114, %v1229
    %v1246 = vmul.f32 %v1118, %v1225
    %v1247 = vmul.f32 %v1118, %v1229
    %v1248 = vmul.f32 %v1122, %v1225
    %v1249 = vmul.f32 %v1122, %v1229
    %v1250 = vmul.f32 %v1126, %v1225
    %v1251 = vmul.f32 %v1126, %v1229
    %v1252 = vmul.f32 %v1130, %v1225
    %v1253 = vmul.f32 %v1130, %v1229
    %v1254 = vmul.f32 %v1134, %v1225
    %v1255 = vmul.f32 %v1134, %v1229
    %v1256 = vmul.f32 %v1138, %v1225
    %v1257 = vmul.f32 %v1138, %v1229
    %v1258 = vmul.f32 %v1142, %v1225
    %v1259 = vmul.f32 %v1142, %v1229
    %v1260 = vmul.f32 %v1146, %v1225
    %v1261 = vmul.f32 %v1146, %v1229
    %v1262 = vmul.f32 %v1150, %v1225
    %v1263 = vmul.f32 %v1150, %v1229
    %v1264 = vmul.f32 %v1154, %v1225
    %v1265 = vmul.f32 %v1154, %v1229
    %v1266 = vmul.f32 %v1158, %v1225
    %v1267 = vmul.f32 %v1158, %v1229
    %v1268 = vmul.f32 %v1162, %v1225
    %v1269 = vmul.f32 %v1162, %v1229
    %v1270 = vmul.f32 %v1166, %v1225
    %v1271 = vmul.f32 %v1166, %v1229
    %v1272 = vmul.f32 %v1170, %v1225
    %v1273 = vmul.f32 %v1170, %v1229
    %v1274 = vmul.f32 %v1174, %v1225
    %v1275 = vmul.f32 %v1174, %v1229
    %v1276 = vmul.f32 %v1178, %v1225
    %v1277 = vmul.f32 %v1178, %v1229
    %v1278 = vmul.f32 %v1182, %v1225
    %v1279 = vmul.f32 %v1182, %v1229
    %v1280 = vmul.f32 %v1186, %v1225
    %v1281 = vmul.f32 %v1186, %v1229
    %v1282 = vmul.f32 %v1190, %v1225
    %v1283 = vmul.f32 %v1190, %v1229
    %v1284 = vmul.f32 %v1194, %v1225
    %v1285 = vmul.f32 %v1194, %v1229
    %v1286 = vmul.f32 %v1198, %v1225
    %v1287 = vmul.f32 %v1198, %v1229
    %v1288 = vmul.f32 %v1202, %v1225
    %v1289 = vmul.f32 %v1202, %v1229
    %v1290 = vmul.f32 %v1206, %v1225
    %v1291 = vmul.f32 %v1206, %v1229
    %v1292 = vmul.f32 %v1210, %v1225
    %v1293 = vmul.f32 %v1210, %v1229
    %v1294 = vadd.f32 %v1020, %v1230
    %v1295 = vadd.f32 %v1021, %v1231
    %v1296 = vadd.f32 %v1022, %v1232
    %v1297 = vadd.f32 %v1023, %v1233
    %v1298 = vadd.f32 %v1024, %v1234
    %v1299 = vadd.f32 %v1025, %v1235
    %v1300 = vadd.f32 %v1026, %v1236
    %v1301 = vadd.f32 %v1027, %v1237
    %v1302 = vadd.f32 %v1028, %v1238
    %v1303 = vadd.f32 %v1029, %v1239
    %v1304 = vadd.f32 %v1030, %v1240
    %v1305 = vadd.f32 %v1031, %v1241
    %v1306 = vadd.f32 %v1032, %v1242
    %v1307 = vadd.f32 %v1033, %v1243
    %v1308 = vadd.f32 %v1034, %v1244
    %v1309 = vadd.f32 %v1035, %v1245
    %v1310 = vadd.f32 %v1036, %v1246
    %v1311 = vadd.f32 %v1037, %v1247
    %v1312 = vadd.f32 %v1038, %v1248
    %v1313 = vadd.f32 %v1039, %v1249
    %v1314 = vadd.f32 %v1040, %v1250
    %v1315 = vadd.f32 %v1041, %v1251
    %v1316 = vadd.f32 %v1042, %v1252
    %v1317 = vadd.f32 %v1043, %v1253
    %v1318 = vadd.f32 %v1044, %v1254
    %v1319 = vadd.f32 %v1045, %v1255
    %v1320 = vadd.f32 %v1046, %v1256
    %v1321 = vadd.f32 %v1047, %v1257
    %v1322 = vadd.f32 %v1048, %v1258
    %v1323 = vadd.f32 %v1049, %v1259
    %v1324 = vadd.f32 %v1050, %v1260
    %v1325 = vadd.f32 %v1051, %v1261
    %v1326 = vadd.f32 %v1052, %v1262
    %v1327 = vadd.f32 %v1053, %v1263
    %v1328 = vadd.f32 %v1054, %v1264
    %v1329 = vadd.f32 %v1055, %v1265
    %v1330 = vadd.f32 %v1056, %v1266
    %v1331 = vadd.f32 %v1057, %v1267
    %v1332 = vadd.f32 %v1058, %v1268
    %v1333 = vadd.f32 %v1059, %v1269
    %v1334 = vadd.f32 %v1060, %v1270
    %v1335 = vadd.f32 %v1061, %v1271
    %v1336 = vadd.f32 %v1062, %v1272
    %v1337 = vadd.f32 %v1063, %v1273
    %v1338 = vadd.f32 %v1064, %v1274
    %v1339 = vadd.f32 %v1065, %v1275
    %v1340 = vadd.f32 %v1066, %v1276
    %v1341 = vadd.f32 %v1067, %v1277
    %v1342 = vadd.f32 %v1068, %v1278
    %v1343 = vadd.f32 %v1069, %v1279
    %v1344 = vadd.f32 %v1070, %v1280
    %v1345 = vadd.f32 %v1071, %v1281
    %v1346 = vadd.f32 %v1072, %v1282
    %v1347 = vadd.f32 %v1073, %v1283
    %v1348 = vadd.f32 %v1074, %v1284
    %v1349 = vadd.f32 %v1075, %v1285
    %v1350 = vadd.f32 %v1076, %v1286
    %v1351 = vadd.f32 %v1077, %v1287
    %v1352 = vadd.f32 %v1078, %v1288
    %v1353 = vadd.f32 %v1079, %v1289
    %v1354 = vadd.f32 %v1080, %v1290
    %v1355 = vadd.f32 %v1081, %v1291
    %v1356 = vadd.f32 %v1082, %v1292
    %v1357 = vadd.f32 %v1083, %v1293
    %1358 = vset.pattern.permute.xlu0 2
    %1359 = vperm.xlu0 %1358, %v699
    %v1360 = vpop.permute.xlu0 %1359
    %1362 = vset.pattern.permute.xlu0 2
    %1363 = vperm.xlu0 %1362, %v700
    %v1364 = vpop.permute.xlu0 %1363
    %1366 = vset.pattern.permute.xlu0 2
    %1367 = vperm.xlu0 %1366, %v701
    %v1368 = vpop.permute.xlu0 %1367
    %1370 = vset.pattern.permute.xlu0 2
    %1371 = vperm.xlu0 %1370, %v702
    %v1372 = vpop.permute.xlu0 %1371
    %1374 = vset.pattern.permute.xlu0 2
    %1375 = vperm.xlu0 %1374, %v703
    %v1376 = vpop.permute.xlu0 %1375
    %1378 = vset.pattern.permute.xlu0 2
    %1379 = vperm.xlu0 %1378, %v704
    %v1380 = vpop.permute.xlu0 %1379
    %1382 = vset.pattern.permute.xlu0 2
    %1383 = vperm.xlu0 %1382, %v705
    %v1384 = vpop.permute.xlu0 %1383
    %1386 = vset.pattern.permute.xlu0 2
    %1387 = vperm.xlu0 %1386, %v706
    %v1388 = vpop.permute.xlu0 %1387
    %1390 = vset.pattern.permute.xlu0 2
    %1391 = vperm.xlu0 %1390, %v707
    %v1392 = vpop.permute.xlu0 %1391
    %1394 = vset.pattern.permute.xlu0 2
    %1395 = vperm.xlu0 %1394, %v708
    %v1396 = vpop.permute.xlu0 %1395
    %1398 = vset.pattern.permute.xlu0 2
    %1399 = vperm.xlu0 %1398, %v709
    %v1400 = vpop.permute.xlu0 %1399
    %1402 = vset.pattern.permute.xlu0 2
    %1403 = vperm.xlu0 %1402, %v710
    %v1404 = vpop.permute.xlu0 %1403
    %1406 = vset.pattern.permute.xlu0 2
    %1407 = vperm.xlu0 %1406, %v711
    %v1408 = vpop.permute.xlu0 %1407
    %1410 = vset.pattern.permute.xlu0 2
    %1411 = vperm.xlu0 %1410, %v712
    %v1412 = vpop.permute.xlu0 %1411
    %1414 = vset.pattern.permute.xlu0 2
    %1415 = vperm.xlu0 %1414, %v713
    %v1416 = vpop.permute.xlu0 %1415
    %1418 = vset.pattern.permute.xlu0 2
    %1419 = vperm.xlu0 %1418, %v714
    %v1420 = vpop.permute.xlu0 %1419
    %1422 = vset.pattern.permute.xlu0 2
    %1423 = vperm.xlu0 %1422, %v715
    %v1424 = vpop.permute.xlu0 %1423
    %1426 = vset.pattern.permute.xlu0 2
    %1427 = vperm.xlu0 %1426, %v716
    %v1428 = vpop.permute.xlu0 %1427
    %1430 = vset.pattern.permute.xlu0 2
    %1431 = vperm.xlu0 %1430, %v717
    %v1432 = vpop.permute.xlu0 %1431
    %1434 = vset.pattern.permute.xlu0 2
    %1435 = vperm.xlu0 %1434, %v718
    %v1436 = vpop.permute.xlu0 %1435
    %1438 = vset.pattern.permute.xlu0 2
    %1439 = vperm.xlu0 %1438, %v719
    %v1440 = vpop.permute.xlu0 %1439
    %1442 = vset.pattern.permute.xlu0 2
    %1443 = vperm.xlu0 %1442, %v720
    %v1444 = vpop.permute.xlu0 %1443
    %1446 = vset.pattern.permute.xlu0 2
    %1447 = vperm.xlu0 %1446, %v721
    %v1448 = vpop.permute.xlu0 %1447
    %1450 = vset.pattern.permute.xlu0 2
    %1451 = vperm.xlu0 %1450, %v722
    %v1452 = vpop.permute.xlu0 %1451
    %1454 = vset.pattern.permute.xlu0 2
    %1455 = vperm.xlu0 %1454, %v723
    %v1456 = vpop.permute.xlu0 %1455
    %1458 = vset.pattern.permute.xlu0 2
    %1459 = vperm.xlu0 %1458, %v724
    %v1460 = vpop.permute.xlu0 %1459
    %1462 = vset.pattern.permute.xlu0 2
    %1463 = vperm.xlu0 %1462, %v725
    %v1464 = vpop.permute.xlu0 %1463
    %1466 = vset.pattern.permute.xlu0 2
    %1467 = vperm.xlu0 %1466, %v726
    %v1468 = vpop.permute.xlu0 %1467
    %1470 = vset.pattern.permute.xlu0 2
    %1471 = vperm.xlu0 %1470, %v727
    %v1472 = vpop.permute.xlu0 %1471
    %1474 = vset.pattern.permute.xlu0 2
    %1475 = vperm.xlu0 %1474, %v728
    %v1476 = vpop.permute.xlu0 %1475
    %1478 = vset.pattern.permute.xlu0 2
    %1479 = vperm.xlu0 %1478, %v729
    %v1480 = vpop.permute.xlu0 %1479
    %1482 = vset.pattern.permute.xlu0 2
    %1483 = vperm.xlu0 %1482, %v730
    %v1484 = vpop.permute.xlu0 %1483
    %v1486 = vlaneseq
    %v1487 = vshrl.u32 %v1486, 7
    %v1488 = vsub.s32 2, %v1487
    %v1489 = vrot.slane %v731, %v1488
    %v1490 = vlaneseq
    %v1491 = vshrl.u32 %v1490, 7
    %v1492 = vsub.s32 6, %v1491
    %v1493 = vrot.slane %v731, %v1492
    %v1496 = vlaneseq
    %v1497 = vshrl.u32 %v1496, 7
    %v1498 = vsub.s32 2, %v1497
    %v1499 = vrot.slane %v1489, %v1498
    %v1500 = vlaneseq
    %v1501 = vshrl.u32 %v1500, 7
    %v1502 = vsub.s32 2, %v1501
    %v1503 = vrot.slane %v1493, %v1502
    %v1504 = vmul.f32 %v1360, %v1499
    %v1505 = vmul.f32 %v1360, %v1503
    %v1506 = vmul.f32 %v1364, %v1499
    %v1507 = vmul.f32 %v1364, %v1503
    %v1508 = vmul.f32 %v1368, %v1499
    %v1509 = vmul.f32 %v1368, %v1503
    %v1510 = vmul.f32 %v1372, %v1499
    %v1511 = vmul.f32 %v1372, %v1503
    %v1512 = vmul.f32 %v1376, %v1499
    %v1513 = vmul.f32 %v1376, %v1503
    %v1514 = vmul.f32 %v1380, %v1499
    %v1515 = vmul.f32 %v1380, %v1503
    %v1516 = vmul.f32 %v1384, %v1499
    %v1517 = vmul.f32 %v1384, %v1503
    %v1518 = vmul.f32 %v1388, %v1499
    %v1519 = vmul.f32 %v1388, %v1503
    %v1520 = vmul.f32 %v1392, %v1499
    %v1521 = vmul.f32 %v1392, %v1503
    %v1522 = vmul.f32 %v1396, %v1499
    %v1523 = vmul.f32 %v1396, %v1503
    %v1524 = vmul.f32 %v1400, %v1499
    %v1525 = vmul.f32 %v1400, %v1503
    %v1526 = vmul.f32 %v1404, %v1499
    %v1527 = vmul.f32 %v1404, %v1503
    %v1528 = vmul.f32 %v1408, %v1499
    %v1529 = vmul.f32 %v1408, %v1503
    %v1530 = vmul.f32 %v1412, %v1499
    %v1531 = vmul.f32 %v1412, %v1503
    %v1532 = vmul.f32 %v1416, %v1499
    %v1533 = vmul.f32 %v1416, %v1503
    %v1534 = vmul.f32 %v1420, %v1499
    %v1535 = vmul.f32 %v1420, %v1503
    %v1536 = vmul.f32 %v1424, %v1499
    %v1537 = vmul.f32 %v1424, %v1503
    %v1538 = vmul.f32 %v1428, %v1499
    %v1539 = vmul.f32 %v1428, %v1503
    %v1540 = vmul.f32 %v1432, %v1499
    %v1541 = vmul.f32 %v1432, %v1503
    %v1542 = vmul.f32 %v1436, %v1499
    %v1543 = vmul.f32 %v1436, %v1503
    %v1544 = vmul.f32 %v1440, %v1499
    %v1545 = vmul.f32 %v1440, %v1503
    %v1546 = vmul.f32 %v1444, %v1499
    %v1547 = vmul.f32 %v1444, %v1503
    %v1548 = vmul.f32 %v1448, %v1499
    %v1549 = vmul.f32 %v1448, %v1503
    %v1550 = vmul.f32 %v1452, %v1499
    %v1551 = vmul.f32 %v1452, %v1503
    %v1552 = vmul.f32 %v1456, %v1499
    %v1553 = vmul.f32 %v1456, %v1503
    %v1554 = vmul.f32 %v1460, %v1499
    %v1555 = vmul.f32 %v1460, %v1503
    %v1556 = vmul.f32 %v1464, %v1499
    %v1557 = vmul.f32 %v1464, %v1503
    %v1558 = vmul.f32 %v1468, %v1499
    %v1559 = vmul.f32 %v1468, %v1503
    %v1560 = vmul.f32 %v1472, %v1499
    %v1561 = vmul.f32 %v1472, %v1503
    %v1562 = vmul.f32 %v1476, %v1499
    %v1563 = vmul.f32 %v1476, %v1503
    %v1564 = vmul.f32 %v1480, %v1499
    %v1565 = vmul.f32 %v1480, %v1503
    %v1566 = vmul.f32 %v1484, %v1499
    %v1567 = vmul.f32 %v1484, %v1503
    %v1568 = vadd.f32 %v1294, %v1504
    %v1569 = vadd.f32 %v1295, %v1505
    %v1570 = vadd.f32 %v1296, %v1506
    %v1571 = vadd.f32 %v1297, %v1507
    %v1572 = vadd.f32 %v1298, %v1508
    %v1573 = vadd.f32 %v1299, %v1509
    %v1574 = vadd.f32 %v1300, %v1510
    %v1575 = vadd.f32 %v1301, %v1511
    %v1576 = vadd.f32 %v1302, %v1512
    %v1577 = vadd.f32 %v1303, %v1513
    %v1578 = vadd.f32 %v1304, %v1514
    %v1579 = vadd.f32 %v1305, %v1515
    %v1580 = vadd.f32 %v1306, %v1516
    %v1581 = vadd.f32 %v1307, %v1517
    %v1582 = vadd.f32 %v1308, %v1518
    %v1583 = vadd.f32 %v1309, %v1519
    %v1584 = vadd.f32 %v1310, %v1520
    %v1585 = vadd.f32 %v1311, %v1521
    %v1586 = vadd.f32 %v1312, %v1522
    %v1587 = vadd.f32 %v1313, %v1523
    %v1588 = vadd.f32 %v1314, %v1524
    %v1589 = vadd.f32 %v1315, %v1525
    %v1590 = vadd.f32 %v1316, %v1526
    %v1591 = vadd.f32 %v1317, %v1527
    %v1592 = vadd.f32 %v1318, %v1528
    %v1593 = vadd.f32 %v1319, %v1529
    %v1594 = vadd.f32 %v1320, %v1530
    %v1595 = vadd.f32 %v1321, %v1531
    %v1596 = vadd.f32 %v1322, %v1532
    %v1597 = vadd.f32 %v1323, %v1533
    %v1598 = vadd.f32 %v1324, %v1534
    %v1599 = vadd.f32 %v1325, %v1535
    %v1600 = vadd.f32 %v1326, %v1536
    %v1601 = vadd.f32 %v1327, %v1537
    %v1602 = vadd.f32 %v1328, %v1538
    %v1603 = vadd.f32 %v1329, %v1539
    %v1604 = vadd.f32 %v1330, %v1540
    %v1605 = vadd.f32 %v1331, %v1541
    %v1606 = vadd.f32 %v1332, %v1542
    %v1607 = vadd.f32 %v1333, %v1543
    %v1608 = vadd.f32 %v1334, %v1544
    %v1609 = vadd.f32 %v1335, %v1545
    %v1610 = vadd.f32 %v1336, %v1546
    %v1611 = vadd.f32 %v1337, %v1547
    %v1612 = vadd.f32 %v1338, %v1548
    %v1613 = vadd.f32 %v1339, %v1549
    %v1614 = vadd.f32 %v1340, %v1550
    %v1615 = vadd.f32 %v1341, %v1551
    %v1616 = vadd.f32 %v1342, %v1552
    %v1617 = vadd.f32 %v1343, %v1553
    %v1618 = vadd.f32 %v1344, %v1554
    %v1619 = vadd.f32 %v1345, %v1555
    %v1620 = vadd.f32 %v1346, %v1556
    %v1621 = vadd.f32 %v1347, %v1557
    %v1622 = vadd.f32 %v1348, %v1558
    %v1623 = vadd.f32 %v1349, %v1559
    %v1624 = vadd.f32 %v1350, %v1560
    %v1625 = vadd.f32 %v1351, %v1561
    %v1626 = vadd.f32 %v1352, %v1562
    %v1627 = vadd.f32 %v1353, %v1563
    %v1628 = vadd.f32 %v1354, %v1564
    %v1629 = vadd.f32 %v1355, %v1565
    %v1630 = vadd.f32 %v1356, %v1566
    %v1631 = vadd.f32 %v1357, %v1567
    %1632 = vst [vmem:[#allocation2] sm:$0xff] %v1568
    %1633 = vst [vmem:[#allocation2 + $0x8] sm:$0xff] %v1569
    %1634 = vst [vmem:[#allocation2 + $0x10] sm:$0xff] %v1570
    %1635 = vst [vmem:[#allocation2 + $0x18] sm:$0xff] %v1571
    %1636 = vst [vmem:[#allocation2 + $0x20] sm:$0xff] %v1572
    %1637 = vst [vmem:[#allocation2 + $0x28] sm:$0xff] %v1573
    %1638 = vst [vmem:[#allocation2 + $0x30] sm:$0xff] %v1574
    %1639 = vst [vmem:[#allocation2 + $0x38] sm:$0xff] %v1575
    %1640 = vst [vmem:[#allocation2 + $0x40] sm:$0xff] %v1576
    %1641 = vst [vmem:[#allocation2 + $0x48] sm:$0xff] %v1577
    %1642 = vst [vmem:[#allocation2 + $0x50] sm:$0xff] %v1578
    %1643 = vst [vmem:[#allocation2 + $0x58] sm:$0xff] %v1579
    %1644 = vst [vmem:[#allocation2 + $0x60] sm:$0xff] %v1580
    %1645 = vst [vmem:[#allocation2 + $0x68] sm:$0xff] %v1581
    %1646 = vst [vmem:[#allocation2 + $0x70] sm:$0xff] %v1582
    %1647 = vst [vmem:[#allocation2 + $0x78] sm:$0xff] %v1583
    %1648 = vst [vmem:[#allocation2 + $0x80] sm:$0xff] %v1584
    %1649 = vst [vmem:[#allocation2 + $0x88] sm:$0xff] %v1585
    %1650 = vst [vmem:[#allocation2 + $0x90] sm:$0xff] %v1586
    %1651 = vst [vmem:[#allocation2 + $0x98] sm:$0xff] %v1587
    %1652 = vst [vmem:[#allocation2 + $0xa0] sm:$0xff] %v1588
    %1653 = vst [vmem:[#allocation2 + $0xa8] sm:$0xff] %v1589
    %1654 = vst [vmem:[#allocation2 + $0xb0] sm:$0xff] %v1590
    %1655 = vst [vmem:[#allocation2 + $0xb8] sm:$0xff] %v1591
    %1656 = vst [vmem:[#allocation2 + $0xc0] sm:$0xff] %v1592
    %1657 = vst [vmem:[#allocation2 + $0xc8] sm:$0xff] %v1593
    %1658 = vst [vmem:[#allocation2 + $0xd0] sm:$0xff] %v1594
    %1659 = vst [vmem:[#allocation2 + $0xd8] sm:$0xff] %v1595
    %1660 = vst [vmem:[#allocation2 + $0xe0] sm:$0xff] %v1596
    %1661 = vst [vmem:[#allocation2 + $0xe8] sm:$0xff] %v1597
    %1662 = vst [vmem:[#allocation2 + $0xf0] sm:$0xff] %v1598
    %1663 = vst [vmem:[#allocation2 + $0xf8] sm:$0xff] %v1599
    %1664 = vst [vmem:[#allocation2 + $0x100] sm:$0xff] %v1600
    %1665 = vst [vmem:[#allocation2 + $0x108] sm:$0xff] %v1601
    %1666 = vst [vmem:[#allocation2 + $0x110] sm:$0xff] %v1602
    %1667 = vst [vmem:[#allocation2 + $0x118] sm:$0xff] %v1603
    %1668 = vst [vmem:[#allocation2 + $0x120] sm:$0xff] %v1604
    %1669 = vst [vmem:[#allocation2 + $0x128] sm:$0xff] %v1605
    %1670 = vst [vmem:[#allocation2 + $0x130] sm:$0xff] %v1606
    %1671 = vst [vmem:[#allocation2 + $0x138] sm:$0xff] %v1607
    %1672 = vst [vmem:[#allocation2 + $0x140] sm:$0xff] %v1608
    %1673 = vst [vmem:[#allocation2 + $0x148] sm:$0xff] %v1609
    %1674 = vst [vmem:[#allocation2 + $0x150] sm:$0xff] %v1610
    %1675 = vst [vmem:[#allocation2 + $0x158] sm:$0xff] %v1611
    %1676 = vst [vmem:[#allocation2 + $0x160] sm:$0xff] %v1612
    %1677 = vst [vmem:[#allocation2 + $0x168] sm:$0xff] %v1613
    %1678 = vst [vmem:[#allocation2 + $0x170] sm:$0xff] %v1614
    %1679 = vst [vmem:[#allocation2 + $0x178] sm:$0xff] %v1615
    %1680 = vst [vmem:[#allocation2 + $0x180] sm:$0xff] %v1616
    %1681 = vst [vmem:[#allocation2 + $0x188] sm:$0xff] %v1617
    %1682 = vst [vmem:[#allocation2 + $0x190] sm:$0xff] %v1618
    %1683 = vst [vmem:[#allocation2 + $0x198] sm:$0xff] %v1619
    %1684 = vst [vmem:[#allocation2 + $0x1a0] sm:$0xff] %v1620
    %1685 = vst [vmem:[#allocation2 + $0x1a8] sm:$0xff] %v1621
    %1686 = vst [vmem:[#allocation2 + $0x1b0] sm:$0xff] %v1622
    %1687 = vst [vmem:[#allocation2 + $0x1b8] sm:$0xff] %v1623
    %1688 = vst [vmem:[#allocation2 + $0x1c0] sm:$0xff] %v1624
    %1689 = vst [vmem:[#allocation2 + $0x1c8] sm:$0xff] %v1625
    %1690 = vst [vmem:[#allocation2 + $0x1d0] sm:$0xff] %v1626
    %1691 = vst [vmem:[#allocation2 + $0x1d8] sm:$0xff] %v1627
    %1692 = vst [vmem:[#allocation2 + $0x1e0] sm:$0xff] %v1628
    %1693 = vst [vmem:[#allocation2 + $0x1e8] sm:$0xff] %v1629
    %1694 = vst [vmem:[#allocation2 + $0x1f0] sm:$0xff] %v1630
    %1695 = vst [vmem:[#allocation2 + $0x1f8] sm:$0xff] %v1631
    loop: start=0, step=1, limit=5
    $region98: #{tpu_custom_call.1} parent=1 // loop_pre_header
      _
    $region99: #{tpu_custom_call.1} parent=1 // loop_header
      %s1697 = sphi 0, %s1701
      %p1698 = scmp.ge.s32.totalorder %s1697, 5
    $region100: #{tpu_custom_call.1} parent=1 // loop_header_branch
      %1700 = sbr.rel (%p1698) target = $region104
    $region101: #{tpu_custom_call.1} parent=1 // loop_body
      %v1702 = vld [vmem:[#allocation2] sm:$0xff]
      %v1703 = vld [vmem:[#allocation2 + $0x8] sm:$0xff]
      %v1704 = vld [vmem:[#allocation2 + $0x10] sm:$0xff]
      %v1705 = vld [vmem:[#allocation2 + $0x18] sm:$0xff]
      %v1706 = vld [vmem:[#allocation2 + $0x20] sm:$0xff]
      %v1707 = vld [vmem:[#allocation2 + $0x28] sm:$0xff]
      %v1708 = vld [vmem:[#allocation2 + $0x30] sm:$0xff]
      %v1709 = vld [vmem:[#allocation2 + $0x38] sm:$0xff]
      %v1710 = vld [vmem:[#allocation2 + $0x40] sm:$0xff]
      %v1711 = vld [vmem:[#allocation2 + $0x48] sm:$0xff]
      %v1712 = vld [vmem:[#allocation2 + $0x50] sm:$0xff]
      %v1713 = vld [vmem:[#allocation2 + $0x58] sm:$0xff]
      %v1714 = vld [vmem:[#allocation2 + $0x60] sm:$0xff]
      %v1715 = vld [vmem:[#allocation2 + $0x68] sm:$0xff]
      %v1716 = vld [vmem:[#allocation2 + $0x70] sm:$0xff]
      %v1717 = vld [vmem:[#allocation2 + $0x78] sm:$0xff]
      %v1718 = vld [vmem:[#allocation2 + $0x80] sm:$0xff]
      %v1719 = vld [vmem:[#allocation2 + $0x88] sm:$0xff]
      %v1720 = vld [vmem:[#allocation2 + $0x90] sm:$0xff]
      %v1721 = vld [vmem:[#allocation2 + $0x98] sm:$0xff]
      %v1722 = vld [vmem:[#allocation2 + $0xa0] sm:$0xff]
      %v1723 = vld [vmem:[#allocation2 + $0xa8] sm:$0xff]
      %v1724 = vld [vmem:[#allocation2 + $0xb0] sm:$0xff]
      %v1725 = vld [vmem:[#allocation2 + $0xb8] sm:$0xff]
      %v1726 = vld [vmem:[#allocation2 + $0xc0] sm:$0xff]
      %v1727 = vld [vmem:[#allocation2 + $0xc8] sm:$0xff]
      %v1728 = vld [vmem:[#allocation2 + $0xd0] sm:$0xff]
      %v1729 = vld [vmem:[#allocation2 + $0xd8] sm:$0xff]
      %v1730 = vld [vmem:[#allocation2 + $0xe0] sm:$0xff]
      %v1731 = vld [vmem:[#allocation2 + $0xe8] sm:$0xff]
      %v1732 = vld [vmem:[#allocation2 + $0xf0] sm:$0xff]
      %v1733 = vld [vmem:[#allocation2 + $0xf8] sm:$0xff]
      %v1734 = vld [vmem:[#allocation2 + $0x100] sm:$0xff]
      %v1735 = vld [vmem:[#allocation2 + $0x108] sm:$0xff]
      %v1736 = vld [vmem:[#allocation2 + $0x110] sm:$0xff]
      %v1737 = vld [vmem:[#allocation2 + $0x118] sm:$0xff]
      %v1738 = vld [vmem:[#allocation2 + $0x120] sm:$0xff]
      %v1739 = vld [vmem:[#allocation2 + $0x128] sm:$0xff]
      %v1740 = vld [vmem:[#allocation2 + $0x130] sm:$0xff]
      %v1741 = vld [vmem:[#allocation2 + $0x138] sm:$0xff]
      %v1742 = vld [vmem:[#allocation2 + $0x140] sm:$0xff]
      %v1743 = vld [vmem:[#allocation2 + $0x148] sm:$0xff]
      %v1744 = vld [vmem:[#allocation2 + $0x150] sm:$0xff]
      %v1745 = vld [vmem:[#allocation2 + $0x158] sm:$0xff]
      %v1746 = vld [vmem:[#allocation2 + $0x160] sm:$0xff]
      %v1747 = vld [vmem:[#allocation2 + $0x168] sm:$0xff]
      %v1748 = vld [vmem:[#allocation2 + $0x170] sm:$0xff]
      %v1749 = vld [vmem:[#allocation2 + $0x178] sm:$0xff]
      %v1750 = vld [vmem:[#allocation2 + $0x180] sm:$0xff]
      %v1751 = vld [vmem:[#allocation2 + $0x188] sm:$0xff]
      %v1752 = vld [vmem:[#allocation2 + $0x190] sm:$0xff]
      %v1753 = vld [vmem:[#allocation2 + $0x198] sm:$0xff]
      %v1754 = vld [vmem:[#allocation2 + $0x1a0] sm:$0xff]
      %v1755 = vld [vmem:[#allocation2 + $0x1a8] sm:$0xff]
      %v1756 = vld [vmem:[#allocation2 + $0x1b0] sm:$0xff]
      %v1757 = vld [vmem:[#allocation2 + $0x1b8] sm:$0xff]
      %v1758 = vld [vmem:[#allocation2 + $0x1c0] sm:$0xff]
      %v1759 = vld [vmem:[#allocation2 + $0x1c8] sm:$0xff]
      %v1760 = vld [vmem:[#allocation2 + $0x1d0] sm:$0xff]
      %v1761 = vld [vmem:[#allocation2 + $0x1d8] sm:$0xff]
      %v1762 = vld [vmem:[#allocation2 + $0x1e0] sm:$0xff]
      %v1763 = vld [vmem:[#allocation2 + $0x1e8] sm:$0xff]
      %v1764 = vld [vmem:[#allocation2 + $0x1f0] sm:$0xff]
      %v1765 = vld [vmem:[#allocation2 + $0x1f8] sm:$0xff]
      %s1766 = smul.u32 %s1697, 2
      %s1767 = scalar_lea.vmem %s5, %s1766
      %v1768 = vld [vmem:[%s1767] sm:$0x3]
      %s1769 = scalar_lea.vmem %s6, %s1766
      %v1770 = vld [vmem:[%s1769] sm:$0x3]
      %v1771 = vadd.f32 %v1702, %v1704
      %v1772 = vadd.f32 %v1771, %v1706
      %v1773 = vadd.f32 %v1772, %v1708
      %v1774 = vadd.f32 %v1773, %v1710
      %v1775 = vadd.f32 %v1774, %v1712
      %v1776 = vadd.f32 %v1775, %v1714
      %v1777 = vadd.f32 %v1776, %v1716
      %v1778 = vadd.f32 %v1777, %v1718
      %v1779 = vadd.f32 %v1778, %v1720
      %v1780 = vadd.f32 %v1779, %v1722
      %v1781 = vadd.f32 %v1780, %v1724
      %v1782 = vadd.f32 %v1781, %v1726
      %v1783 = vadd.f32 %v1782, %v1728
      %v1784 = vadd.f32 %v1783, %v1730
      %v1785 = vadd.f32 %v1784, %v1732
      %v1786 = vadd.f32 %v1785, %v1734
      %v1787 = vadd.f32 %v1786, %v1736
      %v1788 = vadd.f32 %v1787, %v1738
      %v1789 = vadd.f32 %v1788, %v1740
      %v1790 = vadd.f32 %v1789, %v1742
      %v1791 = vadd.f32 %v1790, %v1744
      %v1792 = vadd.f32 %v1791, %v1746
      %v1793 = vadd.f32 %v1792, %v1748
      %v1794 = vadd.f32 %v1793, %v1750
      %v1795 = vadd.f32 %v1794, %v1752
      %v1796 = vadd.f32 %v1795, %v1754
      %v1797 = vadd.f32 %v1796, %v1756
      %v1798 = vadd.f32 %v1797, %v1758
      %v1799 = vadd.f32 %v1798, %v1760
      %v1800 = vadd.f32 %v1799, %v1762
      %v1801 = vadd.f32 %v1800, %v1764
      %v1802 = vrot.slane %v1801, 4
      %v1803 = vadd.f32 %v1801, %v1802
      %v1804 = vrot.slane %v1803, 2
      %v1805 = vadd.f32 %v1803, %v1804
      %v1806 = vrot.slane %v1805, 1
      %v1807 = vadd.f32 %v1805, %v1806
      %v1808 = vadd.f32 %v1703, %v1705
      %v1809 = vadd.f32 %v1808, %v1707
      %v1810 = vadd.f32 %v1809, %v1709
      %v1811 = vadd.f32 %v1810, %v1711
      %v1812 = vadd.f32 %v1811, %v1713
      %v1813 = vadd.f32 %v1812, %v1715
      %v1814 = vadd.f32 %v1813, %v1717
      %v1815 = vadd.f32 %v1814, %v1719
      %v1816 = vadd.f32 %v1815, %v1721
      %v1817 = vadd.f32 %v1816, %v1723
      %v1818 = vadd.f32 %v1817, %v1725
      %v1819 = vadd.f32 %v1818, %v1727
      %v1820 = vadd.f32 %v1819, %v1729
      %v1821 = vadd.f32 %v1820, %v1731
      %v1822 = vadd.f32 %v1821, %v1733
      %v1823 = vadd.f32 %v1822, %v1735
      %v1824 = vadd.f32 %v1823, %v1737
      %v1825 = vadd.f32 %v1824, %v1739
      %v1826 = vadd.f32 %v1825, %v1741
      %v1827 = vadd.f32 %v1826, %v1743
      %v1828 = vadd.f32 %v1827, %v1745
      %v1829 = vadd.f32 %v1828, %v1747
      %v1830 = vadd.f32 %v1829, %v1749
      %v1831 = vadd.f32 %v1830, %v1751
      %v1832 = vadd.f32 %v1831, %v1753
      %v1833 = vadd.f32 %v1832, %v1755
      %v1834 = vadd.f32 %v1833, %v1757
      %v1835 = vadd.f32 %v1834, %v1759
      %v1836 = vadd.f32 %v1835, %v1761
      %v1837 = vadd.f32 %v1836, %v1763
      %v1838 = vadd.f32 %v1837, %v1765
      %v1839 = vrot.slane %v1838, 4
      %v1840 = vadd.f32 %v1838, %v1839
      %v1841 = vrot.slane %v1840, 2
      %v1842 = vadd.f32 %v1840, %v1841
      %v1843 = vrot.slane %v1842, 1
      %v1844 = vadd.f32 %v1842, %v1843
      %v1845 = vmul.f32 %v1807, 0.00390625
      %v1846 = vmul.f32 %v1844, 0.00390625
      %v1847 = vsub.f32 %v1702, %v1845
      %v1848 = vsub.f32 %v1703, %v1846
      %v1849 = vsub.f32 %v1704, %v1845
      %v1850 = vsub.f32 %v1705, %v1846
      %v1851 = vsub.f32 %v1706, %v1845
      %v1852 = vsub.f32 %v1707, %v1846
      %v1853 = vsub.f32 %v1708, %v1845
      %v1854 = vsub.f32 %v1709, %v1846
      %v1855 = vsub.f32 %v1710, %v1845
      %v1856 = vsub.f32 %v1711, %v1846
      %v1857 = vsub.f32 %v1712, %v1845
      %v1858 = vsub.f32 %v1713, %v1846
      %v1859 = vsub.f32 %v1714, %v1845
      %v1860 = vsub.f32 %v1715, %v1846
      %v1861 = vsub.f32 %v1716, %v1845
      %v1862 = vsub.f32 %v1717, %v1846
      %v1863 = vsub.f32 %v1718, %v1845
      %v1864 = vsub.f32 %v1719, %v1846
      %v1865 = vsub.f32 %v1720, %v1845
      %v1866 = vsub.f32 %v1721, %v1846
      %v1867 = vsub.f32 %v1722, %v1845
      %v1868 = vsub.f32 %v1723, %v1846
      %v1869 = vsub.f32 %v1724, %v1845
      %v1870 = vsub.f32 %v1725, %v1846
      %v1871 = vsub.f32 %v1726, %v1845
      %v1872 = vsub.f32 %v1727, %v1846
      %v1873 = vsub.f32 %v1728, %v1845
      %v1874 = vsub.f32 %v1729, %v1846
      %v1875 = vsub.f32 %v1730, %v1845
      %v1876 = vsub.f32 %v1731, %v1846
      %v1877 = vsub.f32 %v1732, %v1845
      %v1878 = vsub.f32 %v1733, %v1846
      %v1879 = vsub.f32 %v1734, %v1845
      %v1880 = vsub.f32 %v1735, %v1846
      %v1881 = vsub.f32 %v1736, %v1845
      %v1882 = vsub.f32 %v1737, %v1846
      %v1883 = vsub.f32 %v1738, %v1845
      %v1884 = vsub.f32 %v1739, %v1846
      %v1885 = vsub.f32 %v1740, %v1845
      %v1886 = vsub.f32 %v1741, %v1846
      %v1887 = vsub.f32 %v1742, %v1845
      %v1888 = vsub.f32 %v1743, %v1846
      %v1889 = vsub.f32 %v1744, %v1845
      %v1890 = vsub.f32 %v1745, %v1846
      %v1891 = vsub.f32 %v1746, %v1845
      %v1892 = vsub.f32 %v1747, %v1846
      %v1893 = vsub.f32 %v1748, %v1845
      %v1894 = vsub.f32 %v1749, %v1846
      %v1895 = vsub.f32 %v1750, %v1845
      %v1896 = vsub.f32 %v1751, %v1846
      %v1897 = vsub.f32 %v1752, %v1845
      %v1898 = vsub.f32 %v1753, %v1846
      %v1899 = vsub.f32 %v1754, %v1845
      %v1900 = vsub.f32 %v1755, %v1846
      %v1901 = vsub.f32 %v1756, %v1845
      %v1902 = vsub.f32 %v1757, %v1846
      %v1903 = vsub.f32 %v1758, %v1845
      %v1904 = vsub.f32 %v1759, %v1846
      %v1905 = vsub.f32 %v1760, %v1845
      %v1906 = vsub.f32 %v1761, %v1846
      %v1907 = vsub.f32 %v1762, %v1845
      %v1908 = vsub.f32 %v1763, %v1846
      %v1909 = vsub.f32 %v1764, %v1845
      %v1910 = vsub.f32 %v1765, %v1846
      %v1911 = vmul.f32 %v1847, %v1847
      %v1912 = vmul.f32 %v1848, %v1848
      %v1913 = vmul.f32 %v1849, %v1849
      %v1914 = vmul.f32 %v1850, %v1850
      %v1915 = vmul.f32 %v1851, %v1851
      %v1916 = vmul.f32 %v1852, %v1852
      %v1917 = vmul.f32 %v1853, %v1853
      %v1918 = vmul.f32 %v1854, %v1854
      %v1919 = vmul.f32 %v1855, %v1855
      %v1920 = vmul.f32 %v1856, %v1856
      %v1921 = vmul.f32 %v1857, %v1857
      %v1922 = vmul.f32 %v1858, %v1858
      %v1923 = vmul.f32 %v1859, %v1859
      %v1924 = vmul.f32 %v1860, %v1860
      %v1925 = vmul.f32 %v1861, %v1861
      %v1926 = vmul.f32 %v1862, %v1862
      %v1927 = vmul.f32 %v1863, %v1863
      %v1928 = vmul.f32 %v1864, %v1864
      %v1929 = vmul.f32 %v1865, %v1865
      %v1930 = vmul.f32 %v1866, %v1866
      %v1931 = vmul.f32 %v1867, %v1867
      %v1932 = vmul.f32 %v1868, %v1868
      %v1933 = vmul.f32 %v1869, %v1869
      %v1934 = vmul.f32 %v1870, %v1870
      %v1935 = vmul.f32 %v1871, %v1871
      %v1936 = vmul.f32 %v1872, %v1872
      %v1937 = vmul.f32 %v1873, %v1873
      %v1938 = vmul.f32 %v1874, %v1874
      %v1939 = vmul.f32 %v1875, %v1875
      %v1940 = vmul.f32 %v1876, %v1876
      %v1941 = vmul.f32 %v1877, %v1877
      %v1942 = vmul.f32 %v1878, %v1878
      %v1943 = vmul.f32 %v1879, %v1879
      %v1944 = vmul.f32 %v1880, %v1880
      %v1945 = vmul.f32 %v1881, %v1881
      %v1946 = vmul.f32 %v1882, %v1882
      %v1947 = vmul.f32 %v1883, %v1883
      %v1948 = vmul.f32 %v1884, %v1884
      %v1949 = vmul.f32 %v1885, %v1885
      %v1950 = vmul.f32 %v1886, %v1886
      %v1951 = vmul.f32 %v1887, %v1887
      %v1952 = vmul.f32 %v1888, %v1888
      %v1953 = vmul.f32 %v1889, %v1889
      %v1954 = vmul.f32 %v1890, %v1890
      %v1955 = vmul.f32 %v1891, %v1891
      %v1956 = vmul.f32 %v1892, %v1892
      %v1957 = vmul.f32 %v1893, %v1893
      %v1958 = vmul.f32 %v1894, %v1894
      %v1959 = vmul.f32 %v1895, %v1895
      %v1960 = vmul.f32 %v1896, %v1896
      %v1961 = vmul.f32 %v1897, %v1897
      %v1962 = vmul.f32 %v1898, %v1898
      %v1963 = vmul.f32 %v1899, %v1899
      %v1964 = vmul.f32 %v1900, %v1900
      %v1965 = vmul.f32 %v1901, %v1901
      %v1966 = vmul.f32 %v1902, %v1902
      %v1967 = vmul.f32 %v1903, %v1903
      %v1968 = vmul.f32 %v1904, %v1904
      %v1969 = vmul.f32 %v1905, %v1905
      %v1970 = vmul.f32 %v1906, %v1906
      %v1971 = vmul.f32 %v1907, %v1907
      %v1972 = vmul.f32 %v1908, %v1908
      %v1973 = vmul.f32 %v1909, %v1909
      %v1974 = vmul.f32 %v1910, %v1910
      %v1975 = vadd.f32 %v1911, %v1913
      %v1976 = vadd.f32 %v1975, %v1915
      %v1977 = vadd.f32 %v1976, %v1917
      %v1978 = vadd.f32 %v1977, %v1919
      %v1979 = vadd.f32 %v1978, %v1921
      %v1980 = vadd.f32 %v1979, %v1923
      %v1981 = vadd.f32 %v1980, %v1925
      %v1982 = vadd.f32 %v1981, %v1927
      %v1983 = vadd.f32 %v1982, %v1929
      %v1984 = vadd.f32 %v1983, %v1931
      %v1985 = vadd.f32 %v1984, %v1933
      %v1986 = vadd.f32 %v1985, %v1935
      %v1987 = vadd.f32 %v1986, %v1937
      %v1988 = vadd.f32 %v1987, %v1939
      %v1989 = vadd.f32 %v1988, %v1941
      %v1990 = vadd.f32 %v1989, %v1943
      %v1991 = vadd.f32 %v1990, %v1945
      %v1992 = vadd.f32 %v1991, %v1947
      %v1993 = vadd.f32 %v1992, %v1949
      %v1994 = vadd.f32 %v1993, %v1951
      %v1995 = vadd.f32 %v1994, %v1953
      %v1996 = vadd.f32 %v1995, %v1955
      %v1997 = vadd.f32 %v1996, %v1957
      %v1998 = vadd.f32 %v1997, %v1959
      %v1999 = vadd.f32 %v1998, %v1961
      %v2000 = vadd.f32 %v1999, %v1963
      %v2001 = vadd.f32 %v2000, %v1965
      %v2002 = vadd.f32 %v2001, %v1967
      %v2003 = vadd.f32 %v2002, %v1969
      %v2004 = vadd.f32 %v2003, %v1971
      %v2005 = vadd.f32 %v2004, %v1973
      %v2006 = vrot.slane %v2005, 4
      %v2007 = vadd.f32 %v2005, %v2006
      %v2008 = vrot.slane %v2007, 2
      %v2009 = vadd.f32 %v2007, %v2008
      %v2010 = vrot.slane %v2009, 1
      %v2011 = vadd.f32 %v2009, %v2010
      %v2012 = vadd.f32 %v1912, %v1914
      %v2013 = vadd.f32 %v2012, %v1916
      %v2014 = vadd.f32 %v2013, %v1918
      %v2015 = vadd.f32 %v2014, %v1920
      %v2016 = vadd.f32 %v2015, %v1922
      %v2017 = vadd.f32 %v2016, %v1924
      %v2018 = vadd.f32 %v2017, %v1926
      %v2019 = vadd.f32 %v2018, %v1928
      %v2020 = vadd.f32 %v2019, %v1930
      %v2021 = vadd.f32 %v2020, %v1932
      %v2022 = vadd.f32 %v2021, %v1934
      %v2023 = vadd.f32 %v2022, %v1936
      %v2024 = vadd.f32 %v2023, %v1938
      %v2025 = vadd.f32 %v2024, %v1940
      %v2026 = vadd.f32 %v2025, %v1942
      %v2027 = vadd.f32 %v2026, %v1944
      %v2028 = vadd.f32 %v2027, %v1946
      %v2029 = vadd.f32 %v2028, %v1948
      %v2030 = vadd.f32 %v2029, %v1950
      %v2031 = vadd.f32 %v2030, %v1952
      %v2032 = vadd.f32 %v2031, %v1954
      %v2033 = vadd.f32 %v2032, %v1956
      %v2034 = vadd.f32 %v2033, %v1958
      %v2035 = vadd.f32 %v2034, %v1960
      %v2036 = vadd.f32 %v2035, %v1962
      %v2037 = vadd.f32 %v2036, %v1964
      %v2038 = vadd.f32 %v2037, %v1966
      %v2039 = vadd.f32 %v2038, %v1968
      %v2040 = vadd.f32 %v2039, %v1970
      %v2041 = vadd.f32 %v2040, %v1972
      %v2042 = vadd.f32 %v2041, %v1974
      %v2043 = vrot.slane %v2042, 4
      %v2044 = vadd.f32 %v2042, %v2043
      %v2045 = vrot.slane %v2044, 2
      %v2046 = vadd.f32 %v2044, %v2045
      %v2047 = vrot.slane %v2046, 1
      %v2048 = vadd.f32 %v2046, %v2047
      %v2049 = vmul.f32 %v2011, 0.00390625
      %v2050 = vmul.f32 %v2048, 0.00390625
      %v2051 = vadd.f32 %v2049, 1e-05
      %v2052 = vadd.f32 %v2050, 1e-05
      %v2053 = vrsqrt.pop %v2051
      %v2054 = vrsqrt.pop %v2052
      %v2055 = vmul.f32 %v2051, 0.5
      %v2056 = vmul.f32 %v2052, 0.5
      %v2057 = vmul.f32 %v2055, %v2053
      %v2058 = vmul.f32 %v2056, %v2054
      %v2059 = vmul.f32 %v2057, %v2053
      %v2060 = vmul.f32 %v2058, %v2054
      %v2061 = vsub.f32 1.5, %v2059
      %v2062 = vsub.f32 1.5, %v2060
      %v2063 = vmul.f32 %v2053, %v2061
      %v2064 = vmul.f32 %v2054, %v2062
      %v2067 = vcombine.low %v2063, %v2064
      %v2069 = vunpack.c.l.s4 1966171168
      %v2070 = vunpack.c.0.s8 %v2069
      %v2071 = vlaneseq
      %v2072 = vshrl.u32 %v2071, 7
      %v2073 = vsub.s32 %v2070, %v2072
      %v2074 = vrot.slane %v2067, %v2073
      %v2076 = vunpack.c.l.s4 1966171168
      %v2077 = vunpack.c.0.s8 %v2076
      %v2078 = vlaneseq
      %v2079 = vshrl.u32 %v2078, 7
      %v2080 = vsub.s32 %v2077, %v2079
      %v2081 = vrot.slane %v2074, %v2080
      %v2083 = vmul.f32 %v1768, %v2081
      %v2085 = vlaneseq
      %v2086 = vshrl.u32 %v2085, 7
      %v2087 = vsub.s32 0, %v2086
      %v2088 = vrot.slane %v2083, %v2087
      %v2089 = vlaneseq
      %v2090 = vshrl.u32 %v2089, 7
      %v2091 = vsub.s32 1, %v2090
      %v2092 = vrot.slane %v2083, %v2091
      %v2095 = vmul.f32 %v1847, %v2088
      %v2096 = vmul.f32 %v1848, %v2092
      %v2097 = vmul.f32 %v1849, %v2088
      %v2098 = vmul.f32 %v1850, %v2092
      %v2099 = vmul.f32 %v1851, %v2088
      %v2100 = vmul.f32 %v1852, %v2092
      %v2101 = vmul.f32 %v1853, %v2088
      %v2102 = vmul.f32 %v1854, %v2092
      %v2103 = vmul.f32 %v1855, %v2088
      %v2104 = vmul.f32 %v1856, %v2092
      %v2105 = vmul.f32 %v1857, %v2088
      %v2106 = vmul.f32 %v1858, %v2092
      %v2107 = vmul.f32 %v1859, %v2088
      %v2108 = vmul.f32 %v1860, %v2092
      %v2109 = vmul.f32 %v1861, %v2088
      %v2110 = vmul.f32 %v1862, %v2092
      %v2111 = vmul.f32 %v1863, %v2088
      %v2112 = vmul.f32 %v1864, %v2092
      %v2113 = vmul.f32 %v1865, %v2088
      %v2114 = vmul.f32 %v1866, %v2092
      %v2115 = vmul.f32 %v1867, %v2088
      %v2116 = vmul.f32 %v1868, %v2092
      %v2117 = vmul.f32 %v1869, %v2088
      %v2118 = vmul.f32 %v1870, %v2092
      %v2119 = vmul.f32 %v1871, %v2088
      %v2120 = vmul.f32 %v1872, %v2092
      %v2121 = vmul.f32 %v1873, %v2088
      %v2122 = vmul.f32 %v1874, %v2092
      %v2123 = vmul.f32 %v1875, %v2088
      %v2124 = vmul.f32 %v1876, %v2092
      %v2125 = vmul.f32 %v1877, %v2088
      %v2126 = vmul.f32 %v1878, %v2092
      %v2127 = vmul.f32 %v1879, %v2088
      %v2128 = vmul.f32 %v1880, %v2092
      %v2129 = vmul.f32 %v1881, %v2088
      %v2130 = vmul.f32 %v1882, %v2092
      %v2131 = vmul.f32 %v1883, %v2088
      %v2132 = vmul.f32 %v1884, %v2092
      %v2133 = vmul.f32 %v1885, %v2088
      %v2134 = vmul.f32 %v1886, %v2092
      %v2135 = vmul.f32 %v1887, %v2088
      %v2136 = vmul.f32 %v1888, %v2092
      %v2137 = vmul.f32 %v1889, %v2088
      %v2138 = vmul.f32 %v1890, %v2092
      %v2139 = vmul.f32 %v1891, %v2088
      %v2140 = vmul.f32 %v1892, %v2092
      %v2141 = vmul.f32 %v1893, %v2088
      %v2142 = vmul.f32 %v1894, %v2092
      %v2143 = vmul.f32 %v1895, %v2088
      %v2144 = vmul.f32 %v1896, %v2092
      %v2145 = vmul.f32 %v1897, %v2088
      %v2146 = vmul.f32 %v1898, %v2092
      %v2147 = vmul.f32 %v1899, %v2088
      %v2148 = vmul.f32 %v1900, %v2092
      %v2149 = vmul.f32 %v1901, %v2088
      %v2150 = vmul.f32 %v1902, %v2092
      %v2151 = vmul.f32 %v1903, %v2088
      %v2152 = vmul.f32 %v1904, %v2092
      %v2153 = vmul.f32 %v1905, %v2088
      %v2154 = vmul.f32 %v1906, %v2092
      %v2155 = vmul.f32 %v1907, %v2088
      %v2156 = vmul.f32 %v1908, %v2092
      %v2157 = vmul.f32 %v1909, %v2088
      %v2158 = vmul.f32 %v1910, %v2092
      %v2160 = vlaneseq
      %v2161 = vshrl.u32 %v2160, 7
      %v2162 = vsub.s32 0, %v2161
      %v2163 = vrot.slane %v1770, %v2162
      %v2164 = vlaneseq
      %v2165 = vshrl.u32 %v2164, 7
      %v2166 = vsub.s32 1, %v2165
      %v2167 = vrot.slane %v1770, %v2166
      %v2170 = vadd.f32 %v2095, %v2163
      %v2171 = vadd.f32 %v2096, %v2167
      %v2172 = vadd.f32 %v2097, %v2163
      %v2173 = vadd.f32 %v2098, %v2167
      %v2174 = vadd.f32 %v2099, %v2163
      %v2175 = vadd.f32 %v2100, %v2167
      %v2176 = vadd.f32 %v2101, %v2163
      %v2177 = vadd.f32 %v2102, %v2167
      %v2178 = vadd.f32 %v2103, %v2163
      %v2179 = vadd.f32 %v2104, %v2167
      %v2180 = vadd.f32 %v2105, %v2163
      %v2181 = vadd.f32 %v2106, %v2167
      %v2182 = vadd.f32 %v2107, %v2163
      %v2183 = vadd.f32 %v2108, %v2167
      %v2184 = vadd.f32 %v2109, %v2163
      %v2185 = vadd.f32 %v2110, %v2167
      %v2186 = vadd.f32 %v2111, %v2163
      %v2187 = vadd.f32 %v2112, %v2167
      %v2188 = vadd.f32 %v2113, %v2163
      %v2189 = vadd.f32 %v2114, %v2167
      %v2190 = vadd.f32 %v2115, %v2163
      %v2191 = vadd.f32 %v2116, %v2167
      %v2192 = vadd.f32 %v2117, %v2163
      %v2193 = vadd.f32 %v2118, %v2167
      %v2194 = vadd.f32 %v2119, %v2163
      %v2195 = vadd.f32 %v2120, %v2167
      %v2196 = vadd.f32 %v2121, %v2163
      %v2197 = vadd.f32 %v2122, %v2167
      %v2198 = vadd.f32 %v2123, %v2163
      %v2199 = vadd.f32 %v2124, %v2167
      %v2200 = vadd.f32 %v2125, %v2163
      %v2201 = vadd.f32 %v2126, %v2167
      %v2202 = vadd.f32 %v2127, %v2163
      %v2203 = vadd.f32 %v2128, %v2167
      %v2204 = vadd.f32 %v2129, %v2163
      %v2205 = vadd.f32 %v2130, %v2167
      %v2206 = vadd.f32 %v2131, %v2163
      %v2207 = vadd.f32 %v2132, %v2167
      %v2208 = vadd.f32 %v2133, %v2163
      %v2209 = vadd.f32 %v2134, %v2167
      %v2210 = vadd.f32 %v2135, %v2163
      %v2211 = vadd.f32 %v2136, %v2167
      %v2212 = vadd.f32 %v2137, %v2163
      %v2213 = vadd.f32 %v2138, %v2167
      %v2214 = vadd.f32 %v2139, %v2163
      %v2215 = vadd.f32 %v2140, %v2167
      %v2216 = vadd.f32 %v2141, %v2163
      %v2217 = vadd.f32 %v2142, %v2167
      %v2218 = vadd.f32 %v2143, %v2163
      %v2219 = vadd.f32 %v2144, %v2167
      %v2220 = vadd.f32 %v2145, %v2163
      %v2221 = vadd.f32 %v2146, %v2167
      %v2222 = vadd.f32 %v2147, %v2163
      %v2223 = vadd.f32 %v2148, %v2167
      %v2224 = vadd.f32 %v2149, %v2163
      %v2225 = vadd.f32 %v2150, %v2167
      %v2226 = vadd.f32 %v2151, %v2163
      %v2227 = vadd.f32 %v2152, %v2167
      %v2228 = vadd.f32 %v2153, %v2163
      %v2229 = vadd.f32 %v2154, %v2167
      %v2230 = vadd.f32 %v2155, %v2163
      %v2231 = vadd.f32 %v2156, %v2167
      %v2232 = vadd.f32 %v2157, %v2163
      %v2233 = vadd.f32 %v2158, %v2167
      %v2234 = vmax.f32 %v2170, 0.0
      %v2235 = vmax.f32 %v2171, 0.0
      %v2236 = vmax.f32 %v2172, 0.0
      %v2237 = vmax.f32 %v2173, 0.0
      %v2238 = vmax.f32 %v2174, 0.0
      %v2239 = vmax.f32 %v2175, 0.0
      %v2240 = vmax.f32 %v2176, 0.0
      %v2241 = vmax.f32 %v2177, 0.0
      %v2242 = vmax.f32 %v2178, 0.0
      %v2243 = vmax.f32 %v2179, 0.0
      %v2244 = vmax.f32 %v2180, 0.0
      %v2245 = vmax.f32 %v2181, 0.0
      %v2246 = vmax.f32 %v2182, 0.0
      %v2247 = vmax.f32 %v2183, 0.0
      %v2248 = vmax.f32 %v2184, 0.0
      %v2249 = vmax.f32 %v2185, 0.0
      %v2250 = vmax.f32 %v2186, 0.0
      %v2251 = vmax.f32 %v2187, 0.0
      %v2252 = vmax.f32 %v2188, 0.0
      %v2253 = vmax.f32 %v2189, 0.0
      %v2254 = vmax.f32 %v2190, 0.0
      %v2255 = vmax.f32 %v2191, 0.0
      %v2256 = vmax.f32 %v2192, 0.0
      %v2257 = vmax.f32 %v2193, 0.0
      %v2258 = vmax.f32 %v2194, 0.0
      %v2259 = vmax.f32 %v2195, 0.0
      %v2260 = vmax.f32 %v2196, 0.0
      %v2261 = vmax.f32 %v2197, 0.0
      %v2262 = vmax.f32 %v2198, 0.0
      %v2263 = vmax.f32 %v2199, 0.0
      %v2264 = vmax.f32 %v2200, 0.0
      %v2265 = vmax.f32 %v2201, 0.0
      %v2266 = vmax.f32 %v2202, 0.0
      %v2267 = vmax.f32 %v2203, 0.0
      %v2268 = vmax.f32 %v2204, 0.0
      %v2269 = vmax.f32 %v2205, 0.0
      %v2270 = vmax.f32 %v2206, 0.0
      %v2271 = vmax.f32 %v2207, 0.0
      %v2272 = vmax.f32 %v2208, 0.0
      %v2273 = vmax.f32 %v2209, 0.0
      %v2274 = vmax.f32 %v2210, 0.0
      %v2275 = vmax.f32 %v2211, 0.0
      %v2276 = vmax.f32 %v2212, 0.0
      %v2277 = vmax.f32 %v2213, 0.0
      %v2278 = vmax.f32 %v2214, 0.0
      %v2279 = vmax.f32 %v2215, 0.0
      %v2280 = vmax.f32 %v2216, 0.0
      %v2281 = vmax.f32 %v2217, 0.0
      %v2282 = vmax.f32 %v2218, 0.0
      %v2283 = vmax.f32 %v2219, 0.0
      %v2284 = vmax.f32 %v2220, 0.0
      %v2285 = vmax.f32 %v2221, 0.0
      %v2286 = vmax.f32 %v2222, 0.0
      %v2287 = vmax.f32 %v2223, 0.0
      %v2288 = vmax.f32 %v2224, 0.0
      %v2289 = vmax.f32 %v2225, 0.0
      %v2290 = vmax.f32 %v2226, 0.0
      %v2291 = vmax.f32 %v2227, 0.0
      %v2292 = vmax.f32 %v2228, 0.0
      %v2293 = vmax.f32 %v2229, 0.0
      %v2294 = vmax.f32 %v2230, 0.0
      %v2295 = vmax.f32 %v2231, 0.0
      %v2296 = vmax.f32 %v2232, 0.0
      %v2297 = vmax.f32 %v2233, 0.0
      %s2298 = smul.u32 %s1697, 64
      %s2299 = smul.addr %s2298, 4
      %s2300 = scalar_lea.vmem [#allocation10], %s2299
      %v2301 = vld [vmem:[%s2300] sm:$0xff]
      %v2302 = vld [vmem:[%s2300 + $0x8] sm:$0xff]
      %v2303 = vld [vmem:[%s2300 + $0x10] sm:$0xff]
      %v2304 = vld [vmem:[%s2300 + $0x18] sm:$0xff]
      %v2305 = vld [vmem:[%s2300 + $0x20] sm:$0xff]
      %v2306 = vld [vmem:[%s2300 + $0x28] sm:$0xff]
      %v2307 = vld [vmem:[%s2300 + $0x30] sm:$0xff]
      %v2308 = vld [vmem:[%s2300 + $0x38] sm:$0xff]
      %v2309 = vld [vmem:[%s2300 + $0x40] sm:$0xff]
      %v2310 = vld [vmem:[%s2300 + $0x48] sm:$0xff]
      %v2311 = vld [vmem:[%s2300 + $0x50] sm:$0xff]
      %v2312 = vld [vmem:[%s2300 + $0x58] sm:$0xff]
      %v2313 = vld [vmem:[%s2300 + $0x60] sm:$0xff]
      %v2314 = vld [vmem:[%s2300 + $0x68] sm:$0xff]
      %v2315 = vld [vmem:[%s2300 + $0x70] sm:$0xff]
      %v2316 = vld [vmem:[%s2300 + $0x78] sm:$0xff]
      %v2317 = vld [vmem:[%s2300 + $0x80] sm:$0xff]
      %v2318 = vld [vmem:[%s2300 + $0x88] sm:$0xff]
      %v2319 = vld [vmem:[%s2300 + $0x90] sm:$0xff]
      %v2320 = vld [vmem:[%s2300 + $0x98] sm:$0xff]
      %v2321 = vld [vmem:[%s2300 + $0xa0] sm:$0xff]
      %v2322 = vld [vmem:[%s2300 + $0xa8] sm:$0xff]
      %v2323 = vld [vmem:[%s2300 + $0xb0] sm:$0xff]
      %v2324 = vld [vmem:[%s2300 + $0xb8] sm:$0xff]
      %v2325 = vld [vmem:[%s2300 + $0xc0] sm:$0xff]
      %v2326 = vld [vmem:[%s2300 + $0xc8] sm:$0xff]
      %v2327 = vld [vmem:[%s2300 + $0xd0] sm:$0xff]
      %v2328 = vld [vmem:[%s2300 + $0xd8] sm:$0xff]
      %v2329 = vld [vmem:[%s2300 + $0xe0] sm:$0xff]
      %v2330 = vld [vmem:[%s2300 + $0xe8] sm:$0xff]
      %v2331 = vld [vmem:[%s2300 + $0xf0] sm:$0xff]
      %v2332 = vld [vmem:[%s2300 + $0xf8] sm:$0xff]
      %s2333 = smul.addr %s2298, 4
      %s2334 = scalar_lea.vmem [#allocation12], %s2333
      %v2335 = vld [vmem:[%s2334] sm:$0xff]
      %v2336 = vld [vmem:[%s2334 + $0x8] sm:$0xff]
      %v2337 = vld [vmem:[%s2334 + $0x10] sm:$0xff]
      %v2338 = vld [vmem:[%s2334 + $0x18] sm:$0xff]
      %v2339 = vld [vmem:[%s2334 + $0x20] sm:$0xff]
      %v2340 = vld [vmem:[%s2334 + $0x28] sm:$0xff]
      %v2341 = vld [vmem:[%s2334 + $0x30] sm:$0xff]
      %v2342 = vld [vmem:[%s2334 + $0x38] sm:$0xff]
      %v2343 = vld [vmem:[%s2334 + $0x40] sm:$0xff]
      %v2344 = vld [vmem:[%s2334 + $0x48] sm:$0xff]
      %v2345 = vld [vmem:[%s2334 + $0x50] sm:$0xff]
      %v2346 = vld [vmem:[%s2334 + $0x58] sm:$0xff]
      %v2347 = vld [vmem:[%s2334 + $0x60] sm:$0xff]
      %v2348 = vld [vmem:[%s2334 + $0x68] sm:$0xff]
      %v2349 = vld [vmem:[%s2334 + $0x70] sm:$0xff]
      %v2350 = vld [vmem:[%s2334 + $0x78] sm:$0xff]
      %v2351 = vld [vmem:[%s2334 + $0x80] sm:$0xff]
      %v2352 = vld [vmem:[%s2334 + $0x88] sm:$0xff]
      %v2353 = vld [vmem:[%s2334 + $0x90] sm:$0xff]
      %v2354 = vld [vmem:[%s2334 + $0x98] sm:$0xff]
      %v2355 = vld [vmem:[%s2334 + $0xa0] sm:$0xff]
      %v2356 = vld [vmem:[%s2334 + $0xa8] sm:$0xff]
      %v2357 = vld [vmem:[%s2334 + $0xb0] sm:$0xff]
      %v2358 = vld [vmem:[%s2334 + $0xb8] sm:$0xff]
      %v2359 = vld [vmem:[%s2334 + $0xc0] sm:$0xff]
      %v2360 = vld [vmem:[%s2334 + $0xc8] sm:$0xff]
      %v2361 = vld [vmem:[%s2334 + $0xd0] sm:$0xff]
      %v2362 = vld [vmem:[%s2334 + $0xd8] sm:$0xff]
      %v2363 = vld [vmem:[%s2334 + $0xe0] sm:$0xff]
      %v2364 = vld [vmem:[%s2334 + $0xe8] sm:$0xff]
      %v2365 = vld [vmem:[%s2334 + $0xf0] sm:$0xff]
      %v2366 = vld [vmem:[%s2334 + $0xf8] sm:$0xff]
      %v2367 = vpack.c.bf16 %v2236, %v2234
      %v2368 = vpack.c.bf16 %v2237, %v2235
      %v2369 = vpack.c.bf16 %v2240, %v2238
      %v2370 = vpack.c.bf16 %v2241, %v2239
      %v2371 = vpack.c.bf16 %v2244, %v2242
      %v2372 = vpack.c.bf16 %v2245, %v2243
      %v2373 = vpack.c.bf16 %v2248, %v2246
      %v2374 = vpack.c.bf16 %v2249, %v2247
      %v2375 = vpack.c.bf16 %v2252, %v2250
      %v2376 = vpack.c.bf16 %v2253, %v2251
      %v2377 = vpack.c.bf16 %v2256, %v2254
      %v2378 = vpack.c.bf16 %v2257, %v2255
      %v2379 = vpack.c.bf16 %v2260, %v2258
      %v2380 = vpack.c.bf16 %v2261, %v2259
      %v2381 = vpack.c.bf16 %v2264, %v2262
      %v2382 = vpack.c.bf16 %v2265, %v2263
      %v2383 = vpack.c.bf16 %v2268, %v2266
      %v2384 = vpack.c.bf16 %v2269, %v2267
      %v2385 = vpack.c.bf16 %v2272, %v2270
      %v2386 = vpack.c.bf16 %v2273, %v2271
      %v2387 = vpack.c.bf16 %v2276, %v2274
      %v2388 = vpack.c.bf16 %v2277, %v2275
      %v2389 = vpack.c.bf16 %v2280, %v2278
      %v2390 = vpack.c.bf16 %v2281, %v2279
      %v2391 = vpack.c.bf16 %v2284, %v2282
      %v2392 = vpack.c.bf16 %v2285, %v2283
      %v2393 = vpack.c.bf16 %v2288, %v2286
      %v2394 = vpack.c.bf16 %v2289, %v2287
      %v2395 = vpack.c.bf16 %v2292, %v2290
      %v2396 = vpack.c.bf16 %v2293, %v2291
      %v2397 = vpack.c.bf16 %v2296, %v2294
      %v2398 = vpack.c.bf16 %v2297, %v2295
      %v2399 = vunpack.c.l.bf16 %v2367
      %v2400 = vunpack.c.l.bf16 %v2368
      %v2401 = vunpack.c.h.bf16 %v2367
      %v2402 = vunpack.c.h.bf16 %v2368
      %v2403 = vunpack.c.l.bf16 %v2369
      %v2404 = vunpack.c.l.bf16 %v2370
      %v2405 = vunpack.c.h.bf16 %v2369
      %v2406 = vunpack.c.h.bf16 %v2370
      %v2407 = vunpack.c.l.bf16 %v2371
      %v2408 = vunpack.c.l.bf16 %v2372
      %v2409 = vunpack.c.h.bf16 %v2371
      %v2410 = vunpack.c.h.bf16 %v2372
      %v2411 = vunpack.c.l.bf16 %v2373
      %v2412 = vunpack.c.l.bf16 %v2374
      %v2413 = vunpack.c.h.bf16 %v2373
      %v2414 = vunpack.c.h.bf16 %v2374
      %v2415 = vunpack.c.l.bf16 %v2375
      %v2416 = vunpack.c.l.bf16 %v2376
      %v2417 = vunpack.c.h.bf16 %v2375
      %v2418 = vunpack.c.h.bf16 %v2376
      %v2419 = vunpack.c.l.bf16 %v2377
      %v2420 = vunpack.c.l.bf16 %v2378
      %v2421 = vunpack.c.h.bf16 %v2377
      %v2422 = vunpack.c.h.bf16 %v2378
      %v2423 = vunpack.c.l.bf16 %v2379
      %v2424 = vunpack.c.l.bf16 %v2380
      %v2425 = vunpack.c.h.bf16 %v2379
      %v2426 = vunpack.c.h.bf16 %v2380
      %v2427 = vunpack.c.l.bf16 %v2381
      %v2428 = vunpack.c.l.bf16 %v2382
      %v2429 = vunpack.c.h.bf16 %v2381
      %v2430 = vunpack.c.h.bf16 %v2382
      %v2431 = vunpack.c.l.bf16 %v2383
      %v2432 = vunpack.c.l.bf16 %v2384
      %v2433 = vunpack.c.h.bf16 %v2383
      %v2434 = vunpack.c.h.bf16 %v2384
      %v2435 = vunpack.c.l.bf16 %v2385
      %v2436 = vunpack.c.l.bf16 %v2386
      %v2437 = vunpack.c.h.bf16 %v2385
      %v2438 = vunpack.c.h.bf16 %v2386
      %v2439 = vunpack.c.l.bf16 %v2387
      %v2440 = vunpack.c.l.bf16 %v2388
      %v2441 = vunpack.c.h.bf16 %v2387
      %v2442 = vunpack.c.h.bf16 %v2388
      %v2443 = vunpack.c.l.bf16 %v2389
      %v2444 = vunpack.c.l.bf16 %v2390
      %v2445 = vunpack.c.h.bf16 %v2389
      %v2446 = vunpack.c.h.bf16 %v2390
      %v2447 = vunpack.c.l.bf16 %v2391
      %v2448 = vunpack.c.l.bf16 %v2392
      %v2449 = vunpack.c.h.bf16 %v2391
      %v2450 = vunpack.c.h.bf16 %v2392
      %v2451 = vunpack.c.l.bf16 %v2393
      %v2452 = vunpack.c.l.bf16 %v2394
      %v2453 = vunpack.c.h.bf16 %v2393
      %v2454 = vunpack.c.h.bf16 %v2394
      %v2455 = vunpack.c.l.bf16 %v2395
      %v2456 = vunpack.c.l.bf16 %v2396
      %v2457 = vunpack.c.h.bf16 %v2395
      %v2458 = vunpack.c.h.bf16 %v2396
      %v2459 = vunpack.c.l.bf16 %v2397
      %v2460 = vunpack.c.l.bf16 %v2398
      %v2461 = vunpack.c.h.bf16 %v2397
      %v2462 = vunpack.c.h.bf16 %v2398
      %v2463 = vsub.f32 %v2234, %v2399
      %v2464 = vsub.f32 %v2235, %v2400
      %v2465 = vsub.f32 %v2236, %v2401
      %v2466 = vsub.f32 %v2237, %v2402
      %v2467 = vsub.f32 %v2238, %v2403
      %v2468 = vsub.f32 %v2239, %v2404
      %v2469 = vsub.f32 %v2240, %v2405
      %v2470 = vsub.f32 %v2241, %v2406
      %v2471 = vsub.f32 %v2242, %v2407
      %v2472 = vsub.f32 %v2243, %v2408
      %v2473 = vsub.f32 %v2244, %v2409
      %v2474 = vsub.f32 %v2245, %v2410
      %v2475 = vsub.f32 %v2246, %v2411
      %v2476 = vsub.f32 %v2247, %v2412
      %v2477 = vsub.f32 %v2248, %v2413
      %v2478 = vsub.f32 %v2249, %v2414
      %v2479 = vsub.f32 %v2250, %v2415
      %v2480 = vsub.f32 %v2251, %v2416
      %v2481 = vsub.f32 %v2252, %v2417
      %v2482 = vsub.f32 %v2253, %v2418
      %v2483 = vsub.f32 %v2254, %v2419
      %v2484 = vsub.f32 %v2255, %v2420
      %v2485 = vsub.f32 %v2256, %v2421
      %v2486 = vsub.f32 %v2257, %v2422
      %v2487 = vsub.f32 %v2258, %v2423
      %v2488 = vsub.f32 %v2259, %v2424
      %v2489 = vsub.f32 %v2260, %v2425
      %v2490 = vsub.f32 %v2261, %v2426
      %v2491 = vsub.f32 %v2262, %v2427
      %v2492 = vsub.f32 %v2263, %v2428
      %v2493 = vsub.f32 %v2264, %v2429
      %v2494 = vsub.f32 %v2265, %v2430
      %v2495 = vsub.f32 %v2266, %v2431
      %v2496 = vsub.f32 %v2267, %v2432
      %v2497 = vsub.f32 %v2268, %v2433
      %v2498 = vsub.f32 %v2269, %v2434
      %v2499 = vsub.f32 %v2270, %v2435
      %v2500 = vsub.f32 %v2271, %v2436
      %v2501 = vsub.f32 %v2272, %v2437
      %v2502 = vsub.f32 %v2273, %v2438
      %v2503 = vsub.f32 %v2274, %v2439
      %v2504 = vsub.f32 %v2275, %v2440
      %v2505 = vsub.f32 %v2276, %v2441
      %v2506 = vsub.f32 %v2277, %v2442
      %v2507 = vsub.f32 %v2278, %v2443
      %v2508 = vsub.f32 %v2279, %v2444
      %v2509 = vsub.f32 %v2280, %v2445
      %v2510 = vsub.f32 %v2281, %v2446
      %v2511 = vsub.f32 %v2282, %v2447
      %v2512 = vsub.f32 %v2283, %v2448
      %v2513 = vsub.f32 %v2284, %v2449
      %v2514 = vsub.f32 %v2285, %v2450
      %v2515 = vsub.f32 %v2286, %v2451
      %v2516 = vsub.f32 %v2287, %v2452
      %v2517 = vsub.f32 %v2288, %v2453
      %v2518 = vsub.f32 %v2289, %v2454
      %v2519 = vsub.f32 %v2290, %v2455
      %v2520 = vsub.f32 %v2291, %v2456
      %v2521 = vsub.f32 %v2292, %v2457
      %v2522 = vsub.f32 %v2293, %v2458
      %v2523 = vsub.f32 %v2294, %v2459
      %v2524 = vsub.f32 %v2295, %v2460
      %v2525 = vsub.f32 %v2296, %v2461
      %v2526 = vsub.f32 %v2297, %v2462
      %v2527 = vpack.c.bf16 %v2465, %v2463
      %v2528 = vpack.c.bf16 %v2466, %v2464
      %v2529 = vpack.c.bf16 %v2469, %v2467
      %v2530 = vpack.c.bf16 %v2470, %v2468
      %v2531 = vpack.c.bf16 %v2473, %v2471
      %v2532 = vpack.c.bf16 %v2474, %v2472
      %v2533 = vpack.c.bf16 %v2477, %v2475
      %v2534 = vpack.c.bf16 %v2478, %v2476
      %v2535 = vpack.c.bf16 %v2481, %v2479
      %v2536 = vpack.c.bf16 %v2482, %v2480
      %v2537 = vpack.c.bf16 %v2485, %v2483
      %v2538 = vpack.c.bf16 %v2486, %v2484
      %v2539 = vpack.c.bf16 %v2489, %v2487
      %v2540 = vpack.c.bf16 %v2490, %v2488
      %v2541 = vpack.c.bf16 %v2493, %v2491
      %v2542 = vpack.c.bf16 %v2494, %v2492
      %v2543 = vpack.c.bf16 %v2497, %v2495
      %v2544 = vpack.c.bf16 %v2498, %v2496
      %v2545 = vpack.c.bf16 %v2501, %v2499
      %v2546 = vpack.c.bf16 %v2502, %v2500
      %v2547 = vpack.c.bf16 %v2505, %v2503
      %v2548 = vpack.c.bf16 %v2506, %v2504
      %v2549 = vpack.c.bf16 %v2509, %v2507
      %v2550 = vpack.c.bf16 %v2510, %v2508
      %v2551 = vpack.c.bf16 %v2513, %v2511
      %v2552 = vpack.c.bf16 %v2514, %v2512
      %v2553 = vpack.c.bf16 %v2517, %v2515
      %v2554 = vpack.c.bf16 %v2518, %v2516
      %v2555 = vpack.c.bf16 %v2521, %v2519
      %v2556 = vpack.c.bf16 %v2522, %v2520
      %v2557 = vpack.c.bf16 %v2525, %v2523
      %v2558 = vpack.c.bf16 %v2526, %v2524
      %v2591 = vunpack.c.l.b16 %v2301
      %v2592 = vunpack.c.h.b16 %v2301
      %v2593 = vunpack.c.l.b16 %v2302
      %v2594 = vunpack.c.h.b16 %v2302
      %v2595 = vunpack.c.l.b16 %v2303
      %v2596 = vunpack.c.h.b16 %v2303
      %v2597 = vunpack.c.l.b16 %v2304
      %v2598 = vunpack.c.h.b16 %v2304
      %v2599 = vunpack.c.l.b16 %v2305
      %v2600 = vunpack.c.h.b16 %v2305
      %v2601 = vunpack.c.l.b16 %v2306
      %v2602 = vunpack.c.h.b16 %v2306
      %v2603 = vunpack.c.l.b16 %v2307
      %v2604 = vunpack.c.h.b16 %v2307
      %v2605 = vunpack.c.l.b16 %v2308
      %v2606 = vunpack.c.h.b16 %v2308
      %v2607 = vunpack.c.l.b16 %v2309
      %v2608 = vunpack.c.h.b16 %v2309
      %v2609 = vunpack.c.l.b16 %v2310
      %v2610 = vunpack.c.h.b16 %v2310
      %v2611 = vunpack.c.l.b16 %v2311
      %v2612 = vunpack.c.h.b16 %v2311
      %v2613 = vunpack.c.l.b16 %v2312
      %v2614 = vunpack.c.h.b16 %v2312
      %v2615 = vunpack.c.l.b16 %v2313
      %v2616 = vunpack.c.h.b16 %v2313
      %v2617 = vunpack.c.l.b16 %v2314
      %v2618 = vunpack.c.h.b16 %v2314
      %v2619 = vunpack.c.l.b16 %v2315
      %v2620 = vunpack.c.h.b16 %v2315
      %v2621 = vunpack.c.l.b16 %v2316
      %v2622 = vunpack.c.h.b16 %v2316
      %v2623 = vunpack.c.l.b16 %v2317
      %v2624 = vunpack.c.h.b16 %v2317
      %v2625 = vunpack.c.l.b16 %v2318
      %v2626 = vunpack.c.h.b16 %v2318
      %v2627 = vunpack.c.l.b16 %v2319
      %v2628 = vunpack.c.h.b16 %v2319
      %v2629 = vunpack.c.l.b16 %v2320
      %v2630 = vunpack.c.h.b16 %v2320
      %v2631 = vunpack.c.l.b16 %v2321
      %v2632 = vunpack.c.h.b16 %v2321
      %v2633 = vunpack.c.l.b16 %v2322
      %v2634 = vunpack.c.h.b16 %v2322
      %v2635 = vunpack.c.l.b16 %v2323
      %v2636 = vunpack.c.h.b16 %v2323
      %v2637 = vunpack.c.l.b16 %v2324
      %v2638 = vunpack.c.h.b16 %v2324
      %v2639 = vunpack.c.l.b16 %v2325
      %v2640 = vunpack.c.h.b16 %v2325
      %v2641 = vunpack.c.l.b16 %v2326
      %v2642 = vunpack.c.h.b16 %v2326
      %v2643 = vunpack.c.l.b16 %v2327
      %v2644 = vunpack.c.h.b16 %v2327
      %v2645 = vunpack.c.l.b16 %v2328
      %v2646 = vunpack.c.h.b16 %v2328
      %v2647 = vunpack.c.l.b16 %v2329
      %v2648 = vunpack.c.h.b16 %v2329
      %v2649 = vunpack.c.l.b16 %v2330
      %v2650 = vunpack.c.h.b16 %v2330
      %v2651 = vunpack.c.l.b16 %v2331
      %v2652 = vunpack.c.h.b16 %v2331
      %v2653 = vunpack.c.l.b16 %v2332
      %v2654 = vunpack.c.h.b16 %v2332
      %v2655 = vpack.c.b16 %v2593, %v2591
      %v2656 = vpack.c.b16 %v2594, %v2592
      %v2657 = vpack.c.b16 %v2597, %v2595
      %v2658 = vpack.c.b16 %v2598, %v2596
      %v2659 = vpack.c.b16 %v2601, %v2599
      %v2660 = vpack.c.b16 %v2602, %v2600
      %v2661 = vpack.c.b16 %v2605, %v2603
      %v2662 = vpack.c.b16 %v2606, %v2604
      %v2663 = vpack.c.b16 %v2609, %v2607
      %v2664 = vpack.c.b16 %v2610, %v2608
      %v2665 = vpack.c.b16 %v2613, %v2611
      %v2666 = vpack.c.b16 %v2614, %v2612
      %v2667 = vpack.c.b16 %v2617, %v2615
      %v2668 = vpack.c.b16 %v2618, %v2616
      %v2669 = vpack.c.b16 %v2621, %v2619
      %v2670 = vpack.c.b16 %v2622, %v2620
      %v2671 = vpack.c.b16 %v2625, %v2623
      %v2672 = vpack.c.b16 %v2626, %v2624
      %v2673 = vpack.c.b16 %v2629, %v2627
      %v2674 = vpack.c.b16 %v2630, %v2628
      %v2675 = vpack.c.b16 %v2633, %v2631
      %v2676 = vpack.c.b16 %v2634, %v2632
      %v2677 = vpack.c.b16 %v2637, %v2635
      %v2678 = vpack.c.b16 %v2638, %v2636
      %v2679 = vpack.c.b16 %v2641, %v2639
      %v2680 = vpack.c.b16 %v2642, %v2640
      %v2681 = vpack.c.b16 %v2645, %v2643
      %v2682 = vpack.c.b16 %v2646, %v2644
      %v2683 = vpack.c.b16 %v2649, %v2647
      %v2684 = vpack.c.b16 %v2650, %v2648
      %v2685 = vpack.c.b16 %v2653, %v2651
      %v2686 = vpack.c.b16 %v2654, %v2652
      %2719 = vmatprep.subr.bf16.mxu0 %v2656
      %2720 = vmatpush1.bf16.msra.mxu0 %v2655
      %2721 = vmatprep.subr.bf16.mxu0 %v2658
      %2722 = vmatpush1.bf16.msra.mxu0 %v2657
      %2723 = vmatprep.subr.bf16.mxu0 %v2660
      %2724 = vmatpush1.bf16.msra.mxu0 %v2659
      %2725 = vmatprep.subr.bf16.mxu0 %v2662
      %2726 = vmatpush1.bf16.msra.mxu0 %v2661
      %2727 = vmatprep.subr.bf16.mxu0 %v2664
      %2728 = vmatpush1.bf16.msra.mxu0 %v2663
      %2729 = vmatprep.subr.bf16.mxu0 %v2666
      %2730 = vmatpush1.bf16.msra.mxu0 %v2665
      %2731 = vmatprep.subr.bf16.mxu0 %v2668
      %2732 = vmatpush1.bf16.msra.mxu0 %v2667
      %2733 = vmatprep.subr.bf16.mxu0 %v2670
      %2734 = vmatpush1.bf16.msra.mxu0 %v2669
      %2735 = vmatprep.subr.bf16.mxu0 %v2672
      %2736 = vmatpush1.bf16.msra.mxu0 %v2671
      %2737 = vmatprep.subr.bf16.mxu0 %v2674
      %2738 = vmatpush1.bf16.msra.mxu0 %v2673
      %2739 = vmatprep.subr.bf16.mxu0 %v2676
      %2740 = vmatpush1.bf16.msra.mxu0 %v2675
      %2741 = vmatprep.subr.bf16.mxu0 %v2678
      %2742 = vmatpush1.bf16.msra.mxu0 %v2677
      %2743 = vmatprep.subr.bf16.mxu0 %v2680
      %2744 = vmatpush1.bf16.msra.mxu0 %v2679
      %2745 = vmatprep.subr.bf16.mxu0 %v2682
      %2746 = vmatpush1.bf16.msra.mxu0 %v2681
      %2747 = vmatprep.subr.bf16.mxu0 %v2684
      %2748 = vmatpush1.bf16.msra.mxu0 %v2683
      %2749 = vmatprep.subr.bf16.mxu0 %v2686
      %2750 = vmatpush1.bf16.msra.mxu0 %v2685
      %2751 = vmatprep.mubr.bf16.mxu0 %v2528
      %2752 = vmatmul.mubr.bf16.gmra.mrb[0].mxu0 %v2527
      %v2753 = vpop.f32.mrb[0].mxu0
      %v2754 = vadd.f32 0.0, %v2753
      %v2755 = vpop.f32.mrb[0].mxu0
      %v2756 = vadd.f32 0.0, %v2755
      %v2757 = vpop.f32.mrb[0].mxu0
      %v2758 = vadd.f32 0.0, %v2757
      %v2759 = vpop.f32.mrb[0].mxu0
      %v2760 = vadd.f32 0.0, %v2759
      %2761 = vmatprep.mubr.bf16.mxu0 %v2530
      %2762 = vmatmul.mubr.bf16.gmra.mrb[0].mxu0 %v2529
      %v2763 = vpop.f32.mrb[0].mxu0
      %v2764 = vadd.f32 0.0, %v2763
      %v2765 = vpop.f32.mrb[0].mxu0
      %v2766 = vadd.f32 0.0, %v2765
      %v2767 = vpop.f32.mrb[0].mxu0
      %v2768 = vadd.f32 0.0, %v2767
      %v2769 = vpop.f32.mrb[0].mxu0
      %v2770 = vadd.f32 0.0, %v2769
      %2771 = vmatprep.mubr.bf16.mxu0 %v2532
      %2772 = vmatmul.mubr.bf16.gmra.mrb[0].mxu0 %v2531
      %v2773 = vpop.f32.mrb[0].mxu0
      %v2774 = vadd.f32 0.0, %v2773
      %v2775 = vpop.f32.mrb[0].mxu0
      %v2776 = vadd.f32 0.0, %v2775
      %v2777 = vpop.f32.mrb[0].mxu0
      %v2778 = vadd.f32 0.0, %v2777
      %v2779 = vpop.f32.mrb[0].mxu0
      %v2780 = vadd.f32 0.0, %v2779
      %2781 = vmatprep.mubr.bf16.mxu0 %v2534
      %2782 = vmatmul.mubr.bf16.gmra.mrb[0].mxu0 %v2533
      %v2783 = vpop.f32.mrb[0].mxu0
      %v2784 = vadd.f32 0.0, %v2783
      %v2785 = vpop.f32.mrb[0].mxu0
      %v2786 = vadd.f32 0.0, %v2785
      %v2787 = vpop.f32.mrb[0].mxu0
      %v2788 = vadd.f32 0.0, %v2787
      %v2789 = vpop.f32.mrb[0].mxu0
      %v2790 = vadd.f32 0.0, %v2789
      %2791 = vmatprep.mubr.bf16.mxu0 %v2536
      %2792 = vmatmul.mubr.bf16.gmra.mrb[0].mxu0 %v2535
      %v2793 = vpop.f32.mrb[0].mxu0
      %v2794 = vadd.f32 0.0, %v2793
      %v2795 = vpop.f32.mrb[0].mxu0
      %v2796 = vadd.f32 0.0, %v2795
      %v2797 = vpop.f32.mrb[0].mxu0
      %v2798 = vadd.f32 0.0, %v2797
      %v2799 = vpop.f32.mrb[0].mxu0
      %v2800 = vadd.f32 0.0, %v2799
      %2801 = vmatprep.mubr.bf16.mxu0 %v2538
      %2802 = vmatmul.mubr.bf16.gmra.mrb[0].mxu0 %v2537
      %v2803 = vpop.f32.mrb[0].mxu0
      %v2804 = vadd.f32 0.0, %v2803
      %v2805 = vpop.f32.mrb[0].mxu0
      %v2806 = vadd.f32 0.0, %v2805
      %v2807 = vpop.f32.mrb[0].mxu0
      %v2808 = vadd.f32 0.0, %v2807
      %v2809 = vpop.f32.mrb[0].mxu0
      %v2810 = vadd.f32 0.0, %v2809
      %2811 = vmatprep.mubr.bf16.mxu0 %v2540
      %2812 = vmatmul.mubr.bf16.gmra.mrb[0].mxu0 %v2539
      %v2813 = vpop.f32.mrb[0].mxu0
      %v2814 = vadd.f32 0.0, %v2813
      %v2815 = vpop.f32.mrb[0].mxu0
      %v2816 = vadd.f32 0.0, %v2815
      %v2817 = vpop.f32.mrb[0].mxu0
      %v2818 = vadd.f32 0.0, %v2817
      %v2819 = vpop.f32.mrb[0].mxu0
      %v2820 = vadd.f32 0.0, %v2819
      %2821 = vmatprep.mubr.bf16.mxu0 %v2542
      %2822 = vmatmul.mubr.bf16.gmra.mrb[0].mxu0 %v2541
      %v2823 = vpop.f32.mrb[0].mxu0
      %v2824 = vadd.f32 0.0, %v2823
      %v2825 = vpop.f32.mrb[0].mxu0
      %v2826 = vadd.f32 0.0, %v2825
      %v2827 = vpop.f32.mrb[0].mxu0
      %v2828 = vadd.f32 0.0, %v2827
      %v2829 = vpop.f32.mrb[0].mxu0
      %v2830 = vadd.f32 0.0, %v2829
      %2831 = vmatprep.mubr.bf16.mxu0 %v2544
      %2832 = vmatmul.mubr.bf16.gmra.mrb[0].mxu0 %v2543
      %v2833 = vpop.f32.mrb[0].mxu0
      %v2834 = vadd.f32 0.0, %v2833
      %v2835 = vpop.f32.mrb[0].mxu0
      %v2836 = vadd.f32 0.0, %v2835
      %v2837 = vpop.f32.mrb[0].mxu0
      %v2838 = vadd.f32 0.0, %v2837
      %v2839 = vpop.f32.mrb[0].mxu0
      %v2840 = vadd.f32 0.0, %v2839
      %2841 = vmatprep.mubr.bf16.mxu0 %v2546
      %2842 = vmatmul.mubr.bf16.gmra.mrb[0].mxu0 %v2545
      %v2843 = vpop.f32.mrb[0].mxu0
      %v2844 = vadd.f32 0.0, %v2843
      %v2845 = vpop.f32.mrb[0].mxu0
      %v2846 = vadd.f32 0.0, %v2845
      %v2847 = vpop.f32.mrb[0].mxu0
      %v2848 = vadd.f32 0.0, %v2847
      %v2849 = vpop.f32.mrb[0].mxu0
      %v2850 = vadd.f32 0.0, %v2849
      %2851 = vmatprep.mubr.bf16.mxu0 %v2548
      %2852 = vmatmul.mubr.bf16.gmra.mrb[0].mxu0 %v2547
      %v2853 = vpop.f32.mrb[0].mxu0
      %v2854 = vadd.f32 0.0, %v2853
      %v2855 = vpop.f32.mrb[0].mxu0
      %v2856 = vadd.f32 0.0, %v2855
      %v2857 = vpop.f32.mrb[0].mxu0
      %v2858 = vadd.f32 0.0, %v2857
      %v2859 = vpop.f32.mrb[0].mxu0
      %v2860 = vadd.f32 0.0, %v2859
      %2861 = vmatprep.mubr.bf16.mxu0 %v2550
      %2862 = vmatmul.mubr.bf16.gmra.mrb[0].mxu0 %v2549
      %v2863 = vpop.f32.mrb[0].mxu0
      %v2864 = vadd.f32 0.0, %v2863
      %v2865 = vpop.f32.mrb[0].mxu0
      %v2866 = vadd.f32 0.0, %v2865
      %v2867 = vpop.f32.mrb[0].mxu0
      %v2868 = vadd.f32 0.0, %v2867
      %v2869 = vpop.f32.mrb[0].mxu0
      %v2870 = vadd.f32 0.0, %v2869
      %2871 = vmatprep.mubr.bf16.mxu0 %v2552
      %2872 = vmatmul.mubr.bf16.gmra.mrb[0].mxu0 %v2551
      %v2873 = vpop.f32.mrb[0].mxu0
      %v2874 = vadd.f32 0.0, %v2873
      %v2875 = vpop.f32.mrb[0].mxu0
      %v2876 = vadd.f32 0.0, %v2875
      %v2877 = vpop.f32.mrb[0].mxu0
      %v2878 = vadd.f32 0.0, %v2877
      %v2879 = vpop.f32.mrb[0].mxu0
      %v2880 = vadd.f32 0.0, %v2879
      %2881 = vmatprep.mubr.bf16.mxu0 %v2554
      %2882 = vmatmul.mubr.bf16.gmra.mrb[0].mxu0 %v2553
      %v2883 = vpop.f32.mrb[0].mxu0
      %v2884 = vadd.f32 0.0, %v2883
      %v2885 = vpop.f32.mrb[0].mxu0
      %v2886 = vadd.f32 0.0, %v2885
      %v2887 = vpop.f32.mrb[0].mxu0
      %v2888 = vadd.f32 0.0, %v2887
      %v2889 = vpop.f32.mrb[0].mxu0
      %v2890 = vadd.f32 0.0, %v2889
      %2891 = vmatprep.mubr.bf16.mxu0 %v2556
      %2892 = vmatmul.mubr.bf16.gmra.mrb[0].mxu0 %v2555
      %v2893 = vpop.f32.mrb[0].mxu0
      %v2894 = vadd.f32 0.0, %v2893
      %v2895 = vpop.f32.mrb[0].mxu0
      %v2896 = vadd.f32 0.0, %v2895
      %v2897 = vpop.f32.mrb[0].mxu0
      %v2898 = vadd.f32 0.0, %v2897
      %v2899 = vpop.f32.mrb[0].mxu0
      %v2900 = vadd.f32 0.0, %v2899
      %2901 = vmatprep.mubr.bf16.mxu0 %v2558
      %2902 = vmatmul.mubr.bf16.gmra.mrb[0].mxu0 %v2557
      %v2903 = vpop.f32.mrb[0].mxu0
      %v2904 = vadd.f32 0.0, %v2903
      %v2905 = vpop.f32.mrb[0].mxu0
      %v2906 = vadd.f32 0.0, %v2905
      %v2907 = vpop.f32.mrb[0].mxu0
      %v2908 = vadd.f32 0.0, %v2907
      %v2909 = vpop.f32.mrb[0].mxu0
      %v2910 = vadd.f32 0.0, %v2909
      %2911 = vdwg.mxu0
      %2912 = vmatprep.subr.bf16.mxu0 %v2656
      %2913 = vmatpush1.bf16.msra.mxu0 %v2655
      %2914 = vmatprep.subr.bf16.mxu0 %v2658
      %2915 = vmatpush1.bf16.msra.mxu0 %v2657
      %2916 = vmatprep.subr.bf16.mxu0 %v2660
      %2917 = vmatpush1.bf16.msra.mxu0 %v2659
      %2918 = vmatprep.subr.bf16.mxu0 %v2662
      %2919 = vmatpush1.bf16.msra.mxu0 %v2661
      %2920 = vmatprep.subr.bf16.mxu0 %v2664
      %2921 = vmatpush1.bf16.msra.mxu0 %v2663
      %2922 = vmatprep.subr.bf16.mxu0 %v2666
      %2923 = vmatpush1.bf16.msra.mxu0 %v2665
      %2924 = vmatprep.subr.bf16.mxu0 %v2668
      %2925 = vmatpush1.bf16.msra.mxu0 %v2667
      %2926 = vmatprep.subr.bf16.mxu0 %v2670
      %2927 = vmatpush1.bf16.msra.mxu0 %v2669
      %2928 = vmatprep.subr.bf16.mxu0 %v2672
      %2929 = vmatpush1.bf16.msra.mxu0 %v2671
      %2930 = vmatprep.subr.bf16.mxu0 %v2674
      %2931 = vmatpush1.bf16.msra.mxu0 %v2673
      %2932 = vmatprep.subr.bf16.mxu0 %v2676
      %2933 = vmatpush1.bf16.msra.mxu0 %v2675
      %2934 = vmatprep.subr.bf16.mxu0 %v2678
      %2935 = vmatpush1.bf16.msra.mxu0 %v2677
      %2936 = vmatprep.subr.bf16.mxu0 %v2680
      %2937 = vmatpush1.bf16.msra.mxu0 %v2679
      %2938 = vmatprep.subr.bf16.mxu0 %v2682
      %2939 = vmatpush1.bf16.msra.mxu0 %v2681
      %2940 = vmatprep.subr.bf16.mxu0 %v2684
      %2941 = vmatpush1.bf16.msra.mxu0 %v2683
      %2942 = vmatprep.subr.bf16.mxu0 %v2686
      %2943 = vmatpush1.bf16.msra.mxu0 %v2685
      %2944 = vmatprep.mubr.bf16.mxu0 %v2368
      %2945 = vmatmul.mubr.bf16.gmra.mrb[0].mxu0 %v2367
      %v2946 = vpop.f32.mrb[0].mxu0
      %v2947 = vadd.f32 %v2754, %v2946
      %v2948 = vpop.f32.mrb[0].mxu0
      %v2949 = vadd.f32 %v2756, %v2948
      %v2950 = vpop.f32.mrb[0].mxu0
      %v2951 = vadd.f32 %v2758, %v2950
      %v2952 = vpop.f32.mrb[0].mxu0
      %v2953 = vadd.f32 %v2760, %v2952
      %2954 = vmatprep.mubr.bf16.mxu0 %v2370
      %2955 = vmatmul.mubr.bf16.gmra.mrb[0].mxu0 %v2369
      %v2956 = vpop.f32.mrb[0].mxu0
      %v2957 = vadd.f32 %v2764, %v2956
      %v2958 = vpop.f32.mrb[0].mxu0
      %v2959 = vadd.f32 %v2766, %v2958
      %v2960 = vpop.f32.mrb[0].mxu0
      %v2961 = vadd.f32 %v2768, %v2960
      %v2962 = vpop.f32.mrb[0].mxu0
      %v2963 = vadd.f32 %v2770, %v2962
      %2964 = vmatprep.mubr.bf16.mxu0 %v2372
      %2965 = vmatmul.mubr.bf16.gmra.mrb[0].mxu0 %v2371
      %v2966 = vpop.f32.mrb[0].mxu0
      %v2967 = vadd.f32 %v2774, %v2966
      %v2968 = vpop.f32.mrb[0].mxu0
      %v2969 = vadd.f32 %v2776, %v2968
      %v2970 = vpop.f32.mrb[0].mxu0
      %v2971 = vadd.f32 %v2778, %v2970
      %v2972 = vpop.f32.mrb[0].mxu0
      %v2973 = vadd.f32 %v2780, %v2972
      %2974 = vmatprep.mubr.bf16.mxu0 %v2374
      %2975 = vmatmul.mubr.bf16.gmra.mrb[0].mxu0 %v2373
      %v2976 = vpop.f32.mrb[0].mxu0
      %v2977 = vadd.f32 %v2784, %v2976
      %v2978 = vpop.f32.mrb[0].mxu0
      %v2979 = vadd.f32 %v2786, %v2978
      %v2980 = vpop.f32.mrb[0].mxu0
      %v2981 = vadd.f32 %v2788, %v2980
      %v2982 = vpop.f32.mrb[0].mxu0
      %v2983 = vadd.f32 %v2790, %v2982
      %2984 = vmatprep.mubr.bf16.mxu0 %v2376
      %2985 = vmatmul.mubr.bf16.gmra.mrb[0].mxu0 %v2375
      %v2986 = vpop.f32.mrb[0].mxu0
      %v2987 = vadd.f32 %v2794, %v2986
      %v2988 = vpop.f32.mrb[0].mxu0
      %v2989 = vadd.f32 %v2796, %v2988
      %v2990 = vpop.f32.mrb[0].mxu0
      %v2991 = vadd.f32 %v2798, %v2990
      %v2992 = vpop.f32.mrb[0].mxu0
      %v2993 = vadd.f32 %v2800, %v2992
      %2994 = vmatprep.mubr.bf16.mxu0 %v2378
      %2995 = vmatmul.mubr.bf16.gmra.mrb[0].mxu0 %v2377
      %v2996 = vpop.f32.mrb[0].mxu0
      %v2997 = vadd.f32 %v2804, %v2996
      %v2998 = vpop.f32.mrb[0].mxu0
      %v2999 = vadd.f32 %v2806, %v2998
      %v3000 = vpop.f32.mrb[0].mxu0
      %v3001 = vadd.f32 %v2808, %v3000
      %v3002 = vpop.f32.mrb[0].mxu0
      %v3003 = vadd.f32 %v2810, %v3002
      %3004 = vmatprep.mubr.bf16.mxu0 %v2380
      %3005 = vmatmul.mubr.bf16.gmra.mrb[0].mxu0 %v2379
      %v3006 = vpop.f32.mrb[0].mxu0
      %v3007 = vadd.f32 %v2814, %v3006
      %v3008 = vpop.f32.mrb[0].mxu0
      %v3009 = vadd.f32 %v2816, %v3008
      %v3010 = vpop.f32.mrb[0].mxu0
      %v3011 = vadd.f32 %v2818, %v3010
      %v3012 = vpop.f32.mrb[0].mxu0
      %v3013 = vadd.f32 %v2820, %v3012
      %3014 = vmatprep.mubr.bf16.mxu0 %v2382
      %3015 = vmatmul.mubr.bf16.gmra.mrb[0].mxu0 %v2381
      %v3016 = vpop.f32.mrb[0].mxu0
      %v3017 = vadd.f32 %v2824, %v3016
      %v3018 = vpop.f32.mrb[0].mxu0
      %v3019 = vadd.f32 %v2826, %v3018
      %v3020 = vpop.f32.mrb[0].mxu0
      %v3021 = vadd.f32 %v2828, %v3020
      %v3022 = vpop.f32.mrb[0].mxu0
      %v3023 = vadd.f32 %v2830, %v3022
      %3024 = vmatprep.mubr.bf16.mxu0 %v2384
      %3025 = vmatmul.mubr.bf16.gmra.mrb[0].mxu0 %v2383
      %v3026 = vpop.f32.mrb[0].mxu0
      %v3027 = vadd.f32 %v2834, %v3026
      %v3028 = vpop.f32.mrb[0].mxu0
      %v3029 = vadd.f32 %v2836, %v3028
      %v3030 = vpop.f32.mrb[0].mxu0
      %v3031 = vadd.f32 %v2838, %v3030
      %v3032 = vpop.f32.mrb[0].mxu0
      %v3033 = vadd.f32 %v2840, %v3032
      %3034 = vmatprep.mubr.bf16.mxu0 %v2386
      %3035 = vmatmul.mubr.bf16.gmra.mrb[0].mxu0 %v2385
      %v3036 = vpop.f32.mrb[0].mxu0
      %v3037 = vadd.f32 %v2844, %v3036
      %v3038 = vpop.f32.mrb[0].mxu0
      %v3039 = vadd.f32 %v2846, %v3038
      %v3040 = vpop.f32.mrb[0].mxu0
      %v3041 = vadd.f32 %v2848, %v3040
      %v3042 = vpop.f32.mrb[0].mxu0
      %v3043 = vadd.f32 %v2850, %v3042
      %3044 = vmatprep.mubr.bf16.mxu0 %v2388
      %3045 = vmatmul.mubr.bf16.gmra.mrb[0].mxu0 %v2387
      %v3046 = vpop.f32.mrb[0].mxu0
      %v3047 = vadd.f32 %v2854, %v3046
      %v3048 = vpop.f32.mrb[0].mxu0
      %v3049 = vadd.f32 %v2856, %v3048
      %v3050 = vpop.f32.mrb[0].mxu0
      %v3051 = vadd.f32 %v2858, %v3050
      %v3052 = vpop.f32.mrb[0].mxu0
      %v3053 = vadd.f32 %v2860, %v3052
      %3054 = vmatprep.mubr.bf16.mxu0 %v2390
      %3055 = vmatmul.mubr.bf16.gmra.mrb[0].mxu0 %v2389
      %v3056 = vpop.f32.mrb[0].mxu0
      %v3057 = vadd.f32 %v2864, %v3056
      %v3058 = vpop.f32.mrb[0].mxu0
      %v3059 = vadd.f32 %v2866, %v3058
      %v3060 = vpop.f32.mrb[0].mxu0
      %v3061 = vadd.f32 %v2868, %v3060
      %v3062 = vpop.f32.mrb[0].mxu0
      %v3063 = vadd.f32 %v2870, %v3062
      %3064 = vmatprep.mubr.bf16.mxu0 %v2392
      %3065 = vmatmul.mubr.bf16.gmra.mrb[0].mxu0 %v2391
      %v3066 = vpop.f32.mrb[0].mxu0
      %v3067 = vadd.f32 %v2874, %v3066
      %v3068 = vpop.f32.mrb[0].mxu0
      %v3069 = vadd.f32 %v2876, %v3068
      %v3070 = vpop.f32.mrb[0].mxu0
      %v3071 = vadd.f32 %v2878, %v3070
      %v3072 = vpop.f32.mrb[0].mxu0
      %v3073 = vadd.f32 %v2880, %v3072
      %3074 = vmatprep.mubr.bf16.mxu0 %v2394
      %3075 = vmatmul.mubr.bf16.gmra.mrb[0].mxu0 %v2393
      %v3076 = vpop.f32.mrb[0].mxu0
      %v3077 = vadd.f32 %v2884, %v3076
      %v3078 = vpop.f32.mrb[0].mxu0
      %v3079 = vadd.f32 %v2886, %v3078
      %v3080 = vpop.f32.mrb[0].mxu0
      %v3081 = vadd.f32 %v2888, %v3080
      %v3082 = vpop.f32.mrb[0].mxu0
      %v3083 = vadd.f32 %v2890, %v3082
      %3084 = vmatprep.mubr.bf16.mxu0 %v2396
      %3085 = vmatmul.mubr.bf16.gmra.mrb[0].mxu0 %v2395
      %v3086 = vpop.f32.mrb[0].mxu0
      %v3087 = vadd.f32 %v2894, %v3086
      %v3088 = vpop.f32.mrb[0].mxu0
      %v3089 = vadd.f32 %v2896, %v3088
      %v3090 = vpop.f32.mrb[0].mxu0
      %v3091 = vadd.f32 %v2898, %v3090
      %v3092 = vpop.f32.mrb[0].mxu0
      %v3093 = vadd.f32 %v2900, %v3092
      %3094 = vmatprep.mubr.bf16.mxu0 %v2398
      %3095 = vmatmul.mubr.bf16.gmra.mrb[0].mxu0 %v2397
      %v3096 = vpop.f32.mrb[0].mxu0
      %v3097 = vadd.f32 %v2904, %v3096
      %v3098 = vpop.f32.mrb[0].mxu0
      %v3099 = vadd.f32 %v2906, %v3098
      %v3100 = vpop.f32.mrb[0].mxu0
      %v3101 = vadd.f32 %v2908, %v3100
      %v3102 = vpop.f32.mrb[0].mxu0
      %v3103 = vadd.f32 %v2910, %v3102
      %3104 = vdwg.mxu0
      %v3137 = vunpack.c.l.b16 %v2335
      %v3138 = vunpack.c.h.b16 %v2335
      %v3139 = vunpack.c.l.b16 %v2336
      %v3140 = vunpack.c.h.b16 %v2336
      %v3141 = vunpack.c.l.b16 %v2337
      %v3142 = vunpack.c.h.b16 %v2337
      %v3143 = vunpack.c.l.b16 %v2338
      %v3144 = vunpack.c.h.b16 %v2338
      %v3145 = vunpack.c.l.b16 %v2339
      %v3146 = vunpack.c.h.b16 %v2339
      %v3147 = vunpack.c.l.b16 %v2340
      %v3148 = vunpack.c.h.b16 %v2340
      %v3149 = vunpack.c.l.b16 %v2341
      %v3150 = vunpack.c.h.b16 %v2341
      %v3151 = vunpack.c.l.b16 %v2342
      %v3152 = vunpack.c.h.b16 %v2342
      %v3153 = vunpack.c.l.b16 %v2343
      %v3154 = vunpack.c.h.b16 %v2343
      %v3155 = vunpack.c.l.b16 %v2344
      %v3156 = vunpack.c.h.b16 %v2344
      %v3157 = vunpack.c.l.b16 %v2345
      %v3158 = vunpack.c.h.b16 %v2345
      %v3159 = vunpack.c.l.b16 %v2346
      %v3160 = vunpack.c.h.b16 %v2346
      %v3161 = vunpack.c.l.b16 %v2347
      %v3162 = vunpack.c.h.b16 %v2347
      %v3163 = vunpack.c.l.b16 %v2348
      %v3164 = vunpack.c.h.b16 %v2348
      %v3165 = vunpack.c.l.b16 %v2349
      %v3166 = vunpack.c.h.b16 %v2349
      %v3167 = vunpack.c.l.b16 %v2350
      %v3168 = vunpack.c.h.b16 %v2350
      %v3169 = vunpack.c.l.b16 %v2351
      %v3170 = vunpack.c.h.b16 %v2351
      %v3171 = vunpack.c.l.b16 %v2352
      %v3172 = vunpack.c.h.b16 %v2352
      %v3173 = vunpack.c.l.b16 %v2353
      %v3174 = vunpack.c.h.b16 %v2353
      %v3175 = vunpack.c.l.b16 %v2354
      %v3176 = vunpack.c.h.b16 %v2354
      %v3177 = vunpack.c.l.b16 %v2355
      %v3178 = vunpack.c.h.b16 %v2355
      %v3179 = vunpack.c.l.b16 %v2356
      %v3180 = vunpack.c.h.b16 %v2356
      %v3181 = vunpack.c.l.b16 %v2357
      %v3182 = vunpack.c.h.b16 %v2357
      %v3183 = vunpack.c.l.b16 %v2358
      %v3184 = vunpack.c.h.b16 %v2358
      %v3185 = vunpack.c.l.b16 %v2359
      %v3186 = vunpack.c.h.b16 %v2359
      %v3187 = vunpack.c.l.b16 %v2360
      %v3188 = vunpack.c.h.b16 %v2360
      %v3189 = vunpack.c.l.b16 %v2361
      %v3190 = vunpack.c.h.b16 %v2361
      %v3191 = vunpack.c.l.b16 %v2362
      %v3192 = vunpack.c.h.b16 %v2362
      %v3193 = vunpack.c.l.b16 %v2363
      %v3194 = vunpack.c.h.b16 %v2363
      %v3195 = vunpack.c.l.b16 %v2364
      %v3196 = vunpack.c.h.b16 %v2364
      %v3197 = vunpack.c.l.b16 %v2365
      %v3198 = vunpack.c.h.b16 %v2365
      %v3199 = vunpack.c.l.b16 %v2366
      %v3200 = vunpack.c.h.b16 %v2366
      %v3201 = vpack.c.b16 %v3139, %v3137
      %v3202 = vpack.c.b16 %v3140, %v3138
      %v3203 = vpack.c.b16 %v3143, %v3141
      %v3204 = vpack.c.b16 %v3144, %v3142
      %v3205 = vpack.c.b16 %v3147, %v3145
      %v3206 = vpack.c.b16 %v3148, %v3146
      %v3207 = vpack.c.b16 %v3151, %v3149
      %v3208 = vpack.c.b16 %v3152, %v3150
      %v3209 = vpack.c.b16 %v3155, %v3153
      %v3210 = vpack.c.b16 %v3156, %v3154
      %v3211 = vpack.c.b16 %v3159, %v3157
      %v3212 = vpack.c.b16 %v3160, %v3158
      %v3213 = vpack.c.b16 %v3163, %v3161
      %v3214 = vpack.c.b16 %v3164, %v3162
      %v3215 = vpack.c.b16 %v3167, %v3165
      %v3216 = vpack.c.b16 %v3168, %v3166
      %v3217 = vpack.c.b16 %v3171, %v3169
      %v3218 = vpack.c.b16 %v3172, %v3170
      %v3219 = vpack.c.b16 %v3175, %v3173
      %v3220 = vpack.c.b16 %v3176, %v3174
      %v3221 = vpack.c.b16 %v3179, %v3177
      %v3222 = vpack.c.b16 %v3180, %v3178
      %v3223 = vpack.c.b16 %v3183, %v3181
      %v3224 = vpack.c.b16 %v3184, %v3182
      %v3225 = vpack.c.b16 %v3187, %v3185
      %v3226 = vpack.c.b16 %v3188, %v3186
      %v3227 = vpack.c.b16 %v3191, %v3189
      %v3228 = vpack.c.b16 %v3192, %v3190
      %v3229 = vpack.c.b16 %v3195, %v3193
      %v3230 = vpack.c.b16 %v3196, %v3194
      %v3231 = vpack.c.b16 %v3199, %v3197
      %v3232 = vpack.c.b16 %v3200, %v3198
      %3265 = vmatprep.subr.bf16.mxu0 %v3202
      %3266 = vmatpush1.bf16.msra.mxu0 %v3201
      %3267 = vmatprep.subr.bf16.mxu0 %v3204
      %3268 = vmatpush1.bf16.msra.mxu0 %v3203
      %3269 = vmatprep.subr.bf16.mxu0 %v3206
      %3270 = vmatpush1.bf16.msra.mxu0 %v3205
      %3271 = vmatprep.subr.bf16.mxu0 %v3208
      %3272 = vmatpush1.bf16.msra.mxu0 %v3207
      %3273 = vmatprep.subr.bf16.mxu0 %v3210
      %3274 = vmatpush1.bf16.msra.mxu0 %v3209
      %3275 = vmatprep.subr.bf16.mxu0 %v3212
      %3276 = vmatpush1.bf16.msra.mxu0 %v3211
      %3277 = vmatprep.subr.bf16.mxu0 %v3214
      %3278 = vmatpush1.bf16.msra.mxu0 %v3213
      %3279 = vmatprep.subr.bf16.mxu0 %v3216
      %3280 = vmatpush1.bf16.msra.mxu0 %v3215
      %3281 = vmatprep.subr.bf16.mxu0 %v3218
      %3282 = vmatpush1.bf16.msra.mxu0 %v3217
      %3283 = vmatprep.subr.bf16.mxu0 %v3220
      %3284 = vmatpush1.bf16.msra.mxu0 %v3219
      %3285 = vmatprep.subr.bf16.mxu0 %v3222
      %3286 = vmatpush1.bf16.msra.mxu0 %v3221
      %3287 = vmatprep.subr.bf16.mxu0 %v3224
      %3288 = vmatpush1.bf16.msra.mxu0 %v3223
      %3289 = vmatprep.subr.bf16.mxu0 %v3226
      %3290 = vmatpush1.bf16.msra.mxu0 %v3225
      %3291 = vmatprep.subr.bf16.mxu0 %v3228
      %3292 = vmatpush1.bf16.msra.mxu0 %v3227
      %3293 = vmatprep.subr.bf16.mxu0 %v3230
      %3294 = vmatpush1.bf16.msra.mxu0 %v3229
      %3295 = vmatprep.subr.bf16.mxu0 %v3232
      %3296 = vmatpush1.bf16.msra.mxu0 %v3231
      %3297 = vmatprep.mubr.bf16.mxu0 %v2368
      %3298 = vmatmul.mubr.bf16.gmra.mrb[0].mxu0 %v2367
      %v3299 = vpop.f32.mrb[0].mxu0
      %v3300 = vadd.f32 0.0, %v3299
      %v3301 = vpop.f32.mrb[0].mxu0
      %v3302 = vadd.f32 0.0, %v3301
      %v3303 = vpop.f32.mrb[0].mxu0
      %v3304 = vadd.f32 0.0, %v3303
      %v3305 = vpop.f32.mrb[0].mxu0
      %v3306 = vadd.f32 0.0, %v3305
      %3307 = vmatprep.mubr.bf16.mxu0 %v2370
      %3308 = vmatmul.mubr.bf16.gmra.mrb[0].mxu0 %v2369
      %v3309 = vpop.f32.mrb[0].mxu0
      %v3310 = vadd.f32 0.0, %v3309
      %v3311 = vpop.f32.mrb[0].mxu0
      %v3312 = vadd.f32 0.0, %v3311
      %v3313 = vpop.f32.mrb[0].mxu0
      %v3314 = vadd.f32 0.0, %v3313
      %v3315 = vpop.f32.mrb[0].mxu0
      %v3316 = vadd.f32 0.0, %v3315
      %3317 = vmatprep.mubr.bf16.mxu0 %v2372
      %3318 = vmatmul.mubr.bf16.gmra.mrb[0].mxu0 %v2371
      %v3319 = vpop.f32.mrb[0].mxu0
      %v3320 = vadd.f32 0.0, %v3319
      %v3321 = vpop.f32.mrb[0].mxu0
      %v3322 = vadd.f32 0.0, %v3321
      %v3323 = vpop.f32.mrb[0].mxu0
      %v3324 = vadd.f32 0.0, %v3323
      %v3325 = vpop.f32.mrb[0].mxu0
      %v3326 = vadd.f32 0.0, %v3325
      %3327 = vmatprep.mubr.bf16.mxu0 %v2374
      %3328 = vmatmul.mubr.bf16.gmra.mrb[0].mxu0 %v2373
      %v3329 = vpop.f32.mrb[0].mxu0
      %v3330 = vadd.f32 0.0, %v3329
      %v3331 = vpop.f32.mrb[0].mxu0
      %v3332 = vadd.f32 0.0, %v3331
      %v3333 = vpop.f32.mrb[0].mxu0
      %v3334 = vadd.f32 0.0, %v3333
      %v3335 = vpop.f32.mrb[0].mxu0
      %v3336 = vadd.f32 0.0, %v3335
      %3337 = vmatprep.mubr.bf16.mxu0 %v2376
      %3338 = vmatmul.mubr.bf16.gmra.mrb[0].mxu0 %v2375
      %v3339 = vpop.f32.mrb[0].mxu0
      %v3340 = vadd.f32 0.0, %v3339
      %v3341 = vpop.f32.mrb[0].mxu0
      %v3342 = vadd.f32 0.0, %v3341
      %v3343 = vpop.f32.mrb[0].mxu0
      %v3344 = vadd.f32 0.0, %v3343
      %v3345 = vpop.f32.mrb[0].mxu0
      %v3346 = vadd.f32 0.0, %v3345
      %3347 = vmatprep.mubr.bf16.mxu0 %v2378
      %3348 = vmatmul.mubr.bf16.gmra.mrb[0].mxu0 %v2377
      %v3349 = vpop.f32.mrb[0].mxu0
      %v3350 = vadd.f32 0.0, %v3349
      %v3351 = vpop.f32.mrb[0].mxu0
      %v3352 = vadd.f32 0.0, %v3351
      %v3353 = vpop.f32.mrb[0].mxu0
      %v3354 = vadd.f32 0.0, %v3353
      %v3355 = vpop.f32.mrb[0].mxu0
      %v3356 = vadd.f32 0.0, %v3355
      %3357 = vmatprep.mubr.bf16.mxu0 %v2380
      %3358 = vmatmul.mubr.bf16.gmra.mrb[0].mxu0 %v2379
      %v3359 = vpop.f32.mrb[0].mxu0
      %v3360 = vadd.f32 0.0, %v3359
      %v3361 = vpop.f32.mrb[0].mxu0
      %v3362 = vadd.f32 0.0, %v3361
      %v3363 = vpop.f32.mrb[0].mxu0
      %v3364 = vadd.f32 0.0, %v3363
      %v3365 = vpop.f32.mrb[0].mxu0
      %v3366 = vadd.f32 0.0, %v3365
      %3367 = vmatprep.mubr.bf16.mxu0 %v2382
      %3368 = vmatmul.mubr.bf16.gmra.mrb[0].mxu0 %v2381
      %v3369 = vpop.f32.mrb[0].mxu0
      %v3370 = vadd.f32 0.0, %v3369
      %v3371 = vpop.f32.mrb[0].mxu0
      %v3372 = vadd.f32 0.0, %v3371
      %v3373 = vpop.f32.mrb[0].mxu0
      %v3374 = vadd.f32 0.0, %v3373
      %v3375 = vpop.f32.mrb[0].mxu0
      %v3376 = vadd.f32 0.0, %v3375
      %3377 = vmatprep.mubr.bf16.mxu0 %v2384
      %3378 = vmatmul.mubr.bf16.gmra.mrb[0].mxu0 %v2383
      %v3379 = vpop.f32.mrb[0].mxu0
      %v3380 = vadd.f32 0.0, %v3379
      %v3381 = vpop.f32.mrb[0].mxu0
      %v3382 = vadd.f32 0.0, %v3381
      %v3383 = vpop.f32.mrb[0].mxu0
      %v3384 = vadd.f32 0.0, %v3383
      %v3385 = vpop.f32.mrb[0].mxu0
      %v3386 = vadd.f32 0.0, %v3385
      %3387 = vmatprep.mubr.bf16.mxu0 %v2386
      %3388 = vmatmul.mubr.bf16.gmra.mrb[0].mxu0 %v2385
      %v3389 = vpop.f32.mrb[0].mxu0
      %v3390 = vadd.f32 0.0, %v3389
      %v3391 = vpop.f32.mrb[0].mxu0
      %v3392 = vadd.f32 0.0, %v3391
      %v3393 = vpop.f32.mrb[0].mxu0
      %v3394 = vadd.f32 0.0, %v3393
      %v3395 = vpop.f32.mrb[0].mxu0
      %v3396 = vadd.f32 0.0, %v3395
      %3397 = vmatprep.mubr.bf16.mxu0 %v2388
      %3398 = vmatmul.mubr.bf16.gmra.mrb[0].mxu0 %v2387
      %v3399 = vpop.f32.mrb[0].mxu0
      %v3400 = vadd.f32 0.0, %v3399
      %v3401 = vpop.f32.mrb[0].mxu0
      %v3402 = vadd.f32 0.0, %v3401
      %v3403 = vpop.f32.mrb[0].mxu0
      %v3404 = vadd.f32 0.0, %v3403
      %v3405 = vpop.f32.mrb[0].mxu0
      %v3406 = vadd.f32 0.0, %v3405
      %3407 = vmatprep.mubr.bf16.mxu0 %v2390
      %3408 = vmatmul.mubr.bf16.gmra.mrb[0].mxu0 %v2389
      %v3409 = vpop.f32.mrb[0].mxu0
      %v3410 = vadd.f32 0.0, %v3409
      %v3411 = vpop.f32.mrb[0].mxu0
      %v3412 = vadd.f32 0.0, %v3411
      %v3413 = vpop.f32.mrb[0].mxu0
      %v3414 = vadd.f32 0.0, %v3413
      %v3415 = vpop.f32.mrb[0].mxu0
      %v3416 = vadd.f32 0.0, %v3415
      %3417 = vmatprep.mubr.bf16.mxu0 %v2392
      %3418 = vmatmul.mubr.bf16.gmra.mrb[0].mxu0 %v2391
      %v3419 = vpop.f32.mrb[0].mxu0
      %v3420 = vadd.f32 0.0, %v3419
      %v3421 = vpop.f32.mrb[0].mxu0
      %v3422 = vadd.f32 0.0, %v3421
      %v3423 = vpop.f32.mrb[0].mxu0
      %v3424 = vadd.f32 0.0, %v3423
      %v3425 = vpop.f32.mrb[0].mxu0
      %v3426 = vadd.f32 0.0, %v3425
      %3427 = vmatprep.mubr.bf16.mxu0 %v2394
      %3428 = vmatmul.mubr.bf16.gmra.mrb[0].mxu0 %v2393
      %v3429 = vpop.f32.mrb[0].mxu0
      %v3430 = vadd.f32 0.0, %v3429
      %v3431 = vpop.f32.mrb[0].mxu0
      %v3432 = vadd.f32 0.0, %v3431
      %v3433 = vpop.f32.mrb[0].mxu0
      %v3434 = vadd.f32 0.0, %v3433
      %v3435 = vpop.f32.mrb[0].mxu0
      %v3436 = vadd.f32 0.0, %v3435
      %3437 = vmatprep.mubr.bf16.mxu0 %v2396
      %3438 = vmatmul.mubr.bf16.gmra.mrb[0].mxu0 %v2395
      %v3439 = vpop.f32.mrb[0].mxu0
      %v3440 = vadd.f32 0.0, %v3439
      %v3441 = vpop.f32.mrb[0].mxu0
      %v3442 = vadd.f32 0.0, %v3441
      %v3443 = vpop.f32.mrb[0].mxu0
      %v3444 = vadd.f32 0.0, %v3443
      %v3445 = vpop.f32.mrb[0].mxu0
      %v3446 = vadd.f32 0.0, %v3445
      %3447 = vmatprep.mubr.bf16.mxu0 %v2398
      %3448 = vmatmul.mubr.bf16.gmra.mrb[0].mxu0 %v2397
      %v3449 = vpop.f32.mrb[0].mxu0
      %v3450 = vadd.f32 0.0, %v3449
      %v3451 = vpop.f32.mrb[0].mxu0
      %v3452 = vadd.f32 0.0, %v3451
      %v3453 = vpop.f32.mrb[0].mxu0
      %v3454 = vadd.f32 0.0, %v3453
      %v3455 = vpop.f32.mrb[0].mxu0
      %v3456 = vadd.f32 0.0, %v3455
      %3457 = vdwg.mxu0
      %v3458 = vadd.f32 %v2947, %v3300
      %v3459 = vadd.f32 %v2949, %v3302
      %v3460 = vadd.f32 %v2951, %v3304
      %v3461 = vadd.f32 %v2953, %v3306
      %v3462 = vadd.f32 %v2957, %v3310
      %v3463 = vadd.f32 %v2959, %v3312
      %v3464 = vadd.f32 %v2961, %v3314
      %v3465 = vadd.f32 %v2963, %v3316
      %v3466 = vadd.f32 %v2967, %v3320
      %v3467 = vadd.f32 %v2969, %v3322
      %v3468 = vadd.f32 %v2971, %v3324
      %v3469 = vadd.f32 %v2973, %v3326
      %v3470 = vadd.f32 %v2977, %v3330
      %v3471 = vadd.f32 %v2979, %v3332
      %v3472 = vadd.f32 %v2981, %v3334
      %v3473 = vadd.f32 %v2983, %v3336
      %v3474 = vadd.f32 %v2987, %v3340
      %v3475 = vadd.f32 %v2989, %v3342
      %v3476 = vadd.f32 %v2991, %v3344
      %v3477 = vadd.f32 %v2993, %v3346
      %v3478 = vadd.f32 %v2997, %v3350
      %v3479 = vadd.f32 %v2999, %v3352
      %v3480 = vadd.f32 %v3001, %v3354
      %v3481 = vadd.f32 %v3003, %v3356
      %v3482 = vadd.f32 %v3007, %v3360
      %v3483 = vadd.f32 %v3009, %v3362
      %v3484 = vadd.f32 %v3011, %v3364
      %v3485 = vadd.f32 %v3013, %v3366
      %v3486 = vadd.f32 %v3017, %v3370
      %v3487 = vadd.f32 %v3019, %v3372
      %v3488 = vadd.f32 %v3021, %v3374
      %v3489 = vadd.f32 %v3023, %v3376
      %v3490 = vadd.f32 %v3027, %v3380
      %v3491 = vadd.f32 %v3029, %v3382
      %v3492 = vadd.f32 %v3031, %v3384
      %v3493 = vadd.f32 %v3033, %v3386
      %v3494 = vadd.f32 %v3037, %v3390
      %v3495 = vadd.f32 %v3039, %v3392
      %v3496 = vadd.f32 %v3041, %v3394
      %v3497 = vadd.f32 %v3043, %v3396
      %v3498 = vadd.f32 %v3047, %v3400
      %v3499 = vadd.f32 %v3049, %v3402
      %v3500 = vadd.f32 %v3051, %v3404
      %v3501 = vadd.f32 %v3053, %v3406
      %v3502 = vadd.f32 %v3057, %v3410
      %v3503 = vadd.f32 %v3059, %v3412
      %v3504 = vadd.f32 %v3061, %v3414
      %v3505 = vadd.f32 %v3063, %v3416
      %v3506 = vadd.f32 %v3067, %v3420
      %v3507 = vadd.f32 %v3069, %v3422
      %v3508 = vadd.f32 %v3071, %v3424
      %v3509 = vadd.f32 %v3073, %v3426
      %v3510 = vadd.f32 %v3077, %v3430
      %v3511 = vadd.f32 %v3079, %v3432
      %v3512 = vadd.f32 %v3081, %v3434
      %v3513 = vadd.f32 %v3083, %v3436
      %v3514 = vadd.f32 %v3087, %v3440
      %v3515 = vadd.f32 %v3089, %v3442
      %v3516 = vadd.f32 %v3091, %v3444
      %v3517 = vadd.f32 %v3093, %v3446
      %v3518 = vadd.f32 %v3097, %v3450
      %v3519 = vadd.f32 %v3099, %v3452
      %v3520 = vadd.f32 %v3101, %v3454
      %v3521 = vadd.f32 %v3103, %v3456
      %s3522 = scalar_lea.vmem %s9, %s1766
      %v3523 = vld [vmem:[%s3522] sm:$0x3]
      %s3524 = scalar_lea.vmem %s10, %s1766
      %v3525 = vld [vmem:[%s3524] sm:$0x3]
      %v3526 = vadd.f32 %v3458, %v3460
      %v3527 = vadd.f32 %v3526, %v3462
      %v3528 = vadd.f32 %v3527, %v3464
      %v3529 = vadd.f32 %v3528, %v3466
      %v3530 = vadd.f32 %v3529, %v3468
      %v3531 = vadd.f32 %v3530, %v3470
      %v3532 = vadd.f32 %v3531, %v3472
      %v3533 = vadd.f32 %v3532, %v3474
      %v3534 = vadd.f32 %v3533, %v3476
      %v3535 = vadd.f32 %v3534, %v3478
      %v3536 = vadd.f32 %v3535, %v3480
      %v3537 = vadd.f32 %v3536, %v3482
      %v3538 = vadd.f32 %v3537, %v3484
      %v3539 = vadd.f32 %v3538, %v3486
      %v3540 = vadd.f32 %v3539, %v3488
      %v3541 = vadd.f32 %v3540, %v3490
      %v3542 = vadd.f32 %v3541, %v3492
      %v3543 = vadd.f32 %v3542, %v3494
      %v3544 = vadd.f32 %v3543, %v3496
      %v3545 = vadd.f32 %v3544, %v3498
      %v3546 = vadd.f32 %v3545, %v3500
      %v3547 = vadd.f32 %v3546, %v3502
      %v3548 = vadd.f32 %v3547, %v3504
      %v3549 = vadd.f32 %v3548, %v3506
      %v3550 = vadd.f32 %v3549, %v3508
      %v3551 = vadd.f32 %v3550, %v3510
      %v3552 = vadd.f32 %v3551, %v3512
      %v3553 = vadd.f32 %v3552, %v3514
      %v3554 = vadd.f32 %v3553, %v3516
      %v3555 = vadd.f32 %v3554, %v3518
      %v3556 = vadd.f32 %v3555, %v3520
      %v3557 = vrot.slane %v3556, 4
      %v3558 = vadd.f32 %v3556, %v3557
      %v3559 = vrot.slane %v3558, 2
      %v3560 = vadd.f32 %v3558, %v3559
      %v3561 = vrot.slane %v3560, 1
      %v3562 = vadd.f32 %v3560, %v3561
      %v3563 = vadd.f32 %v3459, %v3461
      %v3564 = vadd.f32 %v3563, %v3463
      %v3565 = vadd.f32 %v3564, %v3465
      %v3566 = vadd.f32 %v3565, %v3467
      %v3567 = vadd.f32 %v3566, %v3469
      %v3568 = vadd.f32 %v3567, %v3471
      %v3569 = vadd.f32 %v3568, %v3473
      %v3570 = vadd.f32 %v3569, %v3475
      %v3571 = vadd.f32 %v3570, %v3477
      %v3572 = vadd.f32 %v3571, %v3479
      %v3573 = vadd.f32 %v3572, %v3481
      %v3574 = vadd.f32 %v3573, %v3483
      %v3575 = vadd.f32 %v3574, %v3485
      %v3576 = vadd.f32 %v3575, %v3487
      %v3577 = vadd.f32 %v3576, %v3489
      %v3578 = vadd.f32 %v3577, %v3491
      %v3579 = vadd.f32 %v3578, %v3493
      %v3580 = vadd.f32 %v3579, %v3495
      %v3581 = vadd.f32 %v3580, %v3497
      %v3582 = vadd.f32 %v3581, %v3499
      %v3583 = vadd.f32 %v3582, %v3501
      %v3584 = vadd.f32 %v3583, %v3503
      %v3585 = vadd.f32 %v3584, %v3505
      %v3586 = vadd.f32 %v3585, %v3507
      %v3587 = vadd.f32 %v3586, %v3509
      %v3588 = vadd.f32 %v3587, %v3511
      %v3589 = vadd.f32 %v3588, %v3513
      %v3590 = vadd.f32 %v3589, %v3515
      %v3591 = vadd.f32 %v3590, %v3517
      %v3592 = vadd.f32 %v3591, %v3519
      %v3593 = vadd.f32 %v3592, %v3521
      %v3594 = vrot.slane %v3593, 4
      %v3595 = vadd.f32 %v3593, %v3594
      %v3596 = vrot.slane %v3595, 2
      %v3597 = vadd.f32 %v3595, %v3596
      %v3598 = vrot.slane %v3597, 1
      %v3599 = vadd.f32 %v3597, %v3598
      %v3600 = vmul.f32 %v3562, 0.00390625
      %v3601 = vmul.f32 %v3599, 0.00390625
      %v3602 = vsub.f32 %v3458, %v3600
      %v3603 = vsub.f32 %v3459, %v3601
      %v3604 = vsub.f32 %v3460, %v3600
      %v3605 = vsub.f32 %v3461, %v3601
      %v3606 = vsub.f32 %v3462, %v3600
      %v3607 = vsub.f32 %v3463, %v3601
      %v3608 = vsub.f32 %v3464, %v3600
      %v3609 = vsub.f32 %v3465, %v3601
      %v3610 = vsub.f32 %v3466, %v3600
      %v3611 = vsub.f32 %v3467, %v3601
      %v3612 = vsub.f32 %v3468, %v3600
      %v3613 = vsub.f32 %v3469, %v3601
      %v3614 = vsub.f32 %v3470, %v3600
      %v3615 = vsub.f32 %v3471, %v3601
      %v3616 = vsub.f32 %v3472, %v3600
      %v3617 = vsub.f32 %v3473, %v3601
      %v3618 = vsub.f32 %v3474, %v3600
      %v3619 = vsub.f32 %v3475, %v3601
      %v3620 = vsub.f32 %v3476, %v3600
      %v3621 = vsub.f32 %v3477, %v3601
      %v3622 = vsub.f32 %v3478, %v3600
      %v3623 = vsub.f32 %v3479, %v3601
      %v3624 = vsub.f32 %v3480, %v3600
      %v3625 = vsub.f32 %v3481, %v3601
      %v3626 = vsub.f32 %v3482, %v3600
      %v3627 = vsub.f32 %v3483, %v3601
      %v3628 = vsub.f32 %v3484, %v3600
      %v3629 = vsub.f32 %v3485, %v3601
      %v3630 = vsub.f32 %v3486, %v3600
      %v3631 = vsub.f32 %v3487, %v3601
      %v3632 = vsub.f32 %v3488, %v3600
      %v3633 = vsub.f32 %v3489, %v3601
      %v3634 = vsub.f32 %v3490, %v3600
      %v3635 = vsub.f32 %v3491, %v3601
      %v3636 = vsub.f32 %v3492, %v3600
      %v3637 = vsub.f32 %v3493, %v3601
      %v3638 = vsub.f32 %v3494, %v3600
      %v3639 = vsub.f32 %v3495, %v3601
      %v3640 = vsub.f32 %v3496, %v3600
      %v3641 = vsub.f32 %v3497, %v3601
      %v3642 = vsub.f32 %v3498, %v3600
      %v3643 = vsub.f32 %v3499, %v3601
      %v3644 = vsub.f32 %v3500, %v3600
      %v3645 = vsub.f32 %v3501, %v3601
      %v3646 = vsub.f32 %v3502, %v3600
      %v3647 = vsub.f32 %v3503, %v3601
      %v3648 = vsub.f32 %v3504, %v3600
      %v3649 = vsub.f32 %v3505, %v3601
      %v3650 = vsub.f32 %v3506, %v3600
      %v3651 = vsub.f32 %v3507, %v3601
      %v3652 = vsub.f32 %v3508, %v3600
      %v3653 = vsub.f32 %v3509, %v3601
      %v3654 = vsub.f32 %v3510, %v3600
      %v3655 = vsub.f32 %v3511, %v3601
      %v3656 = vsub.f32 %v3512, %v3600
      %v3657 = vsub.f32 %v3513, %v3601
      %v3658 = vsub.f32 %v3514, %v3600
      %v3659 = vsub.f32 %v3515, %v3601
      %v3660 = vsub.f32 %v3516, %v3600
      %v3661 = vsub.f32 %v3517, %v3601
      %v3662 = vsub.f32 %v3518, %v3600
      %v3663 = vsub.f32 %v3519, %v3601
      %v3664 = vsub.f32 %v3520, %v3600
      %v3665 = vsub.f32 %v3521, %v3601
      %v3666 = vmul.f32 %v3602, %v3602
      %v3667 = vmul.f32 %v3603, %v3603
      %v3668 = vmul.f32 %v3604, %v3604
      %v3669 = vmul.f32 %v3605, %v3605
      %v3670 = vmul.f32 %v3606, %v3606
      %v3671 = vmul.f32 %v3607, %v3607
      %v3672 = vmul.f32 %v3608, %v3608
      %v3673 = vmul.f32 %v3609, %v3609
      %v3674 = vmul.f32 %v3610, %v3610
      %v3675 = vmul.f32 %v3611, %v3611
      %v3676 = vmul.f32 %v3612, %v3612
      %v3677 = vmul.f32 %v3613, %v3613
      %v3678 = vmul.f32 %v3614, %v3614
      %v3679 = vmul.f32 %v3615, %v3615
      %v3680 = vmul.f32 %v3616, %v3616
      %v3681 = vmul.f32 %v3617, %v3617
      %v3682 = vmul.f32 %v3618, %v3618
      %v3683 = vmul.f32 %v3619, %v3619
      %v3684 = vmul.f32 %v3620, %v3620
      %v3685 = vmul.f32 %v3621, %v3621
      %v3686 = vmul.f32 %v3622, %v3622
      %v3687 = vmul.f32 %v3623, %v3623
      %v3688 = vmul.f32 %v3624, %v3624
      %v3689 = vmul.f32 %v3625, %v3625
      %v3690 = vmul.f32 %v3626, %v3626
      %v3691 = vmul.f32 %v3627, %v3627
      %v3692 = vmul.f32 %v3628, %v3628
      %v3693 = vmul.f32 %v3629, %v3629
      %v3694 = vmul.f32 %v3630, %v3630
      %v3695 = vmul.f32 %v3631, %v3631
      %v3696 = vmul.f32 %v3632, %v3632
      %v3697 = vmul.f32 %v3633, %v3633
      %v3698 = vmul.f32 %v3634, %v3634
      %v3699 = vmul.f32 %v3635, %v3635
      %v3700 = vmul.f32 %v3636, %v3636
      %v3701 = vmul.f32 %v3637, %v3637
      %v3702 = vmul.f32 %v3638, %v3638
      %v3703 = vmul.f32 %v3639, %v3639
      %v3704 = vmul.f32 %v3640, %v3640
      %v3705 = vmul.f32 %v3641, %v3641
      %v3706 = vmul.f32 %v3642, %v3642
      %v3707 = vmul.f32 %v3643, %v3643
      %v3708 = vmul.f32 %v3644, %v3644
      %v3709 = vmul.f32 %v3645, %v3645
      %v3710 = vmul.f32 %v3646, %v3646
      %v3711 = vmul.f32 %v3647, %v3647
      %v3712 = vmul.f32 %v3648, %v3648
      %v3713 = vmul.f32 %v3649, %v3649
      %v3714 = vmul.f32 %v3650, %v3650
      %v3715 = vmul.f32 %v3651, %v3651
      %v3716 = vmul.f32 %v3652, %v3652
      %v3717 = vmul.f32 %v3653, %v3653
      %v3718 = vmul.f32 %v3654, %v3654
      %v3719 = vmul.f32 %v3655, %v3655
      %v3720 = vmul.f32 %v3656, %v3656
      %v3721 = vmul.f32 %v3657, %v3657
      %v3722 = vmul.f32 %v3658, %v3658
      %v3723 = vmul.f32 %v3659, %v3659
      %v3724 = vmul.f32 %v3660, %v3660
      %v3725 = vmul.f32 %v3661, %v3661
      %v3726 = vmul.f32 %v3662, %v3662
      %v3727 = vmul.f32 %v3663, %v3663
      %v3728 = vmul.f32 %v3664, %v3664
      %v3729 = vmul.f32 %v3665, %v3665
      %v3730 = vadd.f32 %v3666, %v3668
      %v3731 = vadd.f32 %v3730, %v3670
      %v3732 = vadd.f32 %v3731, %v3672
      %v3733 = vadd.f32 %v3732, %v3674
      %v3734 = vadd.f32 %v3733, %v3676
      %v3735 = vadd.f32 %v3734, %v3678
      %v3736 = vadd.f32 %v3735, %v3680
      %v3737 = vadd.f32 %v3736, %v3682
      %v3738 = vadd.f32 %v3737, %v3684
      %v3739 = vadd.f32 %v3738, %v3686
      %v3740 = vadd.f32 %v3739, %v3688
      %v3741 = vadd.f32 %v3740, %v3690
      %v3742 = vadd.f32 %v3741, %v3692
      %v3743 = vadd.f32 %v3742, %v3694
      %v3744 = vadd.f32 %v3743, %v3696
      %v3745 = vadd.f32 %v3744, %v3698
      %v3746 = vadd.f32 %v3745, %v3700
      %v3747 = vadd.f32 %v3746, %v3702
      %v3748 = vadd.f32 %v3747, %v3704
      %v3749 = vadd.f32 %v3748, %v3706
      %v3750 = vadd.f32 %v3749, %v3708
      %v3751 = vadd.f32 %v3750, %v3710
      %v3752 = vadd.f32 %v3751, %v3712
      %v3753 = vadd.f32 %v3752, %v3714
      %v3754 = vadd.f32 %v3753, %v3716
      %v3755 = vadd.f32 %v3754, %v3718
      %v3756 = vadd.f32 %v3755, %v3720
      %v3757 = vadd.f32 %v3756, %v3722
      %v3758 = vadd.f32 %v3757, %v3724
      %v3759 = vadd.f32 %v3758, %v3726
      %v3760 = vadd.f32 %v3759, %v3728
      %v3761 = vrot.slane %v3760, 4
      %v3762 = vadd.f32 %v3760, %v3761
      %v3763 = vrot.slane %v3762, 2
      %v3764 = vadd.f32 %v3762, %v3763
      %v3765 = vrot.slane %v3764, 1
      %v3766 = vadd.f32 %v3764, %v3765
      %v3767 = vadd.f32 %v3667, %v3669
      %v3768 = vadd.f32 %v3767, %v3671
      %v3769 = vadd.f32 %v3768, %v3673
      %v3770 = vadd.f32 %v3769, %v3675
      %v3771 = vadd.f32 %v3770, %v3677
      %v3772 = vadd.f32 %v3771, %v3679
      %v3773 = vadd.f32 %v3772, %v3681
      %v3774 = vadd.f32 %v3773, %v3683
      %v3775 = vadd.f32 %v3774, %v3685
      %v3776 = vadd.f32 %v3775, %v3687
      %v3777 = vadd.f32 %v3776, %v3689
      %v3778 = vadd.f32 %v3777, %v3691
      %v3779 = vadd.f32 %v3778, %v3693
      %v3780 = vadd.f32 %v3779, %v3695
      %v3781 = vadd.f32 %v3780, %v3697
      %v3782 = vadd.f32 %v3781, %v3699
      %v3783 = vadd.f32 %v3782, %v3701
      %v3784 = vadd.f32 %v3783, %v3703
      %v3785 = vadd.f32 %v3784, %v3705
      %v3786 = vadd.f32 %v3785, %v3707
      %v3787 = vadd.f32 %v3786, %v3709
      %v3788 = vadd.f32 %v3787, %v3711
      %v3789 = vadd.f32 %v3788, %v3713
      %v3790 = vadd.f32 %v3789, %v3715
      %v3791 = vadd.f32 %v3790, %v3717
      %v3792 = vadd.f32 %v3791, %v3719
      %v3793 = vadd.f32 %v3792, %v3721
      %v3794 = vadd.f32 %v3793, %v3723
      %v3795 = vadd.f32 %v3794, %v3725
      %v3796 = vadd.f32 %v3795, %v3727
      %v3797 = vadd.f32 %v3796, %v3729
      %v3798 = vrot.slane %v3797, 4
      %v3799 = vadd.f32 %v3797, %v3798
      %v3800 = vrot.slane %v3799, 2
      %v3801 = vadd.f32 %v3799, %v3800
      %v3802 = vrot.slane %v3801, 1
      %v3803 = vadd.f32 %v3801, %v3802
      %v3804 = vmul.f32 %v3766, 0.00390625
      %v3805 = vmul.f32 %v3803, 0.00390625
      %v3806 = vadd.f32 %v3804, 1e-05
      %v3807 = vadd.f32 %v3805, 1e-05
      %v3808 = vrsqrt.pop %v3806
      %v3809 = vrsqrt.pop %v3807
      %v3810 = vmul.f32 %v3806, 0.5
      %v3811 = vmul.f32 %v3807, 0.5
      %v3812 = vmul.f32 %v3810, %v3808
      %v3813 = vmul.f32 %v3811, %v3809
      %v3814 = vmul.f32 %v3812, %v3808
      %v3815 = vmul.f32 %v3813, %v3809
      %v3816 = vsub.f32 1.5, %v3814
      %v3817 = vsub.f32 1.5, %v3815
      %v3818 = vmul.f32 %v3808, %v3816
      %v3819 = vmul.f32 %v3809, %v3817
      %v3822 = vcombine.low %v3818, %v3819
      %v3824 = vunpack.c.l.s4 1966171168
      %v3825 = vunpack.c.0.s8 %v3824
      %v3826 = vlaneseq
      %v3827 = vshrl.u32 %v3826, 7
      %v3828 = vsub.s32 %v3825, %v3827
      %v3829 = vrot.slane %v3822, %v3828
      %v3831 = vunpack.c.l.s4 1966171168
      %v3832 = vunpack.c.0.s8 %v3831
      %v3833 = vlaneseq
      %v3834 = vshrl.u32 %v3833, 7
      %v3835 = vsub.s32 %v3832, %v3834
      %v3836 = vrot.slane %v3829, %v3835
      %v3838 = vmul.f32 %v3523, %v3836
      %v3840 = vlaneseq
      %v3841 = vshrl.u32 %v3840, 7
      %v3842 = vsub.s32 0, %v3841
      %v3843 = vrot.slane %v3838, %v3842
      %v3844 = vlaneseq
      %v3845 = vshrl.u32 %v3844, 7
      %v3846 = vsub.s32 1, %v3845
      %v3847 = vrot.slane %v3838, %v3846
      %v3850 = vmul.f32 %v3602, %v3843
      %v3851 = vmul.f32 %v3603, %v3847
      %v3852 = vmul.f32 %v3604, %v3843
      %v3853 = vmul.f32 %v3605, %v3847
      %v3854 = vmul.f32 %v3606, %v3843
      %v3855 = vmul.f32 %v3607, %v3847
      %v3856 = vmul.f32 %v3608, %v3843
      %v3857 = vmul.f32 %v3609, %v3847
      %v3858 = vmul.f32 %v3610, %v3843
      %v3859 = vmul.f32 %v3611, %v3847
      %v3860 = vmul.f32 %v3612, %v3843
      %v3861 = vmul.f32 %v3613, %v3847
      %v3862 = vmul.f32 %v3614, %v3843
      %v3863 = vmul.f32 %v3615, %v3847
      %v3864 = vmul.f32 %v3616, %v3843
      %v3865 = vmul.f32 %v3617, %v3847
      %v3866 = vmul.f32 %v3618, %v3843
      %v3867 = vmul.f32 %v3619, %v3847
      %v3868 = vmul.f32 %v3620, %v3843
      %v3869 = vmul.f32 %v3621, %v3847
      %v3870 = vmul.f32 %v3622, %v3843
      %v3871 = vmul.f32 %v3623, %v3847
      %v3872 = vmul.f32 %v3624, %v3843
      %v3873 = vmul.f32 %v3625, %v3847
      %v3874 = vmul.f32 %v3626, %v3843
      %v3875 = vmul.f32 %v3627, %v3847
      %v3876 = vmul.f32 %v3628, %v3843
      %v3877 = vmul.f32 %v3629, %v3847
      %v3878 = vmul.f32 %v3630, %v3843
      %v3879 = vmul.f32 %v3631, %v3847
      %v3880 = vmul.f32 %v3632, %v3843
      %v3881 = vmul.f32 %v3633, %v3847
      %v3882 = vmul.f32 %v3634, %v3843
      %v3883 = vmul.f32 %v3635, %v3847
      %v3884 = vmul.f32 %v3636, %v3843
      %v3885 = vmul.f32 %v3637, %v3847
      %v3886 = vmul.f32 %v3638, %v3843
      %v3887 = vmul.f32 %v3639, %v3847
      %v3888 = vmul.f32 %v3640, %v3843
      %v3889 = vmul.f32 %v3641, %v3847
      %v3890 = vmul.f32 %v3642, %v3843
      %v3891 = vmul.f32 %v3643, %v3847
      %v3892 = vmul.f32 %v3644, %v3843
      %v3893 = vmul.f32 %v3645, %v3847
      %v3894 = vmul.f32 %v3646, %v3843
      %v3895 = vmul.f32 %v3647, %v3847
      %v3896 = vmul.f32 %v3648, %v3843
      %v3897 = vmul.f32 %v3649, %v3847
      %v3898 = vmul.f32 %v3650, %v3843
      %v3899 = vmul.f32 %v3651, %v3847
      %v3900 = vmul.f32 %v3652, %v3843
      %v3901 = vmul.f32 %v3653, %v3847
      %v3902 = vmul.f32 %v3654, %v3843
      %v3903 = vmul.f32 %v3655, %v3847
      %v3904 = vmul.f32 %v3656, %v3843
      %v3905 = vmul.f32 %v3657, %v3847
      %v3906 = vmul.f32 %v3658, %v3843
      %v3907 = vmul.f32 %v3659, %v3847
      %v3908 = vmul.f32 %v3660, %v3843
      %v3909 = vmul.f32 %v3661, %v3847
      %v3910 = vmul.f32 %v3662, %v3843
      %v3911 = vmul.f32 %v3663, %v3847
      %v3912 = vmul.f32 %v3664, %v3843
      %v3913 = vmul.f32 %v3665, %v3847
      %v3915 = vlaneseq
      %v3916 = vshrl.u32 %v3915, 7
      %v3917 = vsub.s32 0, %v3916
      %v3918 = vrot.slane %v3525, %v3917
      %v3919 = vlaneseq
      %v3920 = vshrl.u32 %v3919, 7
      %v3921 = vsub.s32 1, %v3920
      %v3922 = vrot.slane %v3525, %v3921
      %v3925 = vadd.f32 %v3850, %v3918
      %v3926 = vadd.f32 %v3851, %v3922
      %v3927 = vadd.f32 %v3852, %v3918
      %v3928 = vadd.f32 %v3853, %v3922
      %v3929 = vadd.f32 %v3854, %v3918
      %v3930 = vadd.f32 %v3855, %v3922
      %v3931 = vadd.f32 %v3856, %v3918
      %v3932 = vadd.f32 %v3857, %v3922
      %v3933 = vadd.f32 %v3858, %v3918
      %v3934 = vadd.f32 %v3859, %v3922
      %v3935 = vadd.f32 %v3860, %v3918
      %v3936 = vadd.f32 %v3861, %v3922
      %v3937 = vadd.f32 %v3862, %v3918
      %v3938 = vadd.f32 %v3863, %v3922
      %v3939 = vadd.f32 %v3864, %v3918
      %v3940 = vadd.f32 %v3865, %v3922
      %v3941 = vadd.f32 %v3866, %v3918
      %v3942 = vadd.f32 %v3867, %v3922
      %v3943 = vadd.f32 %v3868, %v3918
      %v3944 = vadd.f32 %v3869, %v3922
      %v3945 = vadd.f32 %v3870, %v3918
      %v3946 = vadd.f32 %v3871, %v3922
      %v3947 = vadd.f32 %v3872, %v3918
      %v3948 = vadd.f32 %v3873, %v3922
      %v3949 = vadd.f32 %v3874, %v3918
      %v3950 = vadd.f32 %v3875, %v3922
      %v3951 = vadd.f32 %v3876, %v3918
      %v3952 = vadd.f32 %v3877, %v3922
      %v3953 = vadd.f32 %v3878, %v3918
      %v3954 = vadd.f32 %v3879, %v3922
      %v3955 = vadd.f32 %v3880, %v3918
      %v3956 = vadd.f32 %v3881, %v3922
      %v3957 = vadd.f32 %v3882, %v3918
      %v3958 = vadd.f32 %v3883, %v3922
      %v3959 = vadd.f32 %v3884, %v3918
      %v3960 = vadd.f32 %v3885, %v3922
      %v3961 = vadd.f32 %v3886, %v3918
      %v3962 = vadd.f32 %v3887, %v3922
      %v3963 = vadd.f32 %v3888, %v3918
      %v3964 = vadd.f32 %v3889, %v3922
      %v3965 = vadd.f32 %v3890, %v3918
      %v3966 = vadd.f32 %v3891, %v3922
      %v3967 = vadd.f32 %v3892, %v3918
      %v3968 = vadd.f32 %v3893, %v3922
      %v3969 = vadd.f32 %v3894, %v3918
      %v3970 = vadd.f32 %v3895, %v3922
      %v3971 = vadd.f32 %v3896, %v3918
      %v3972 = vadd.f32 %v3897, %v3922
      %v3973 = vadd.f32 %v3898, %v3918
      %v3974 = vadd.f32 %v3899, %v3922
      %v3975 = vadd.f32 %v3900, %v3918
      %v3976 = vadd.f32 %v3901, %v3922
      %v3977 = vadd.f32 %v3902, %v3918
      %v3978 = vadd.f32 %v3903, %v3922
      %v3979 = vadd.f32 %v3904, %v3918
      %v3980 = vadd.f32 %v3905, %v3922
      %v3981 = vadd.f32 %v3906, %v3918
      %v3982 = vadd.f32 %v3907, %v3922
      %v3983 = vadd.f32 %v3908, %v3918
      %v3984 = vadd.f32 %v3909, %v3922
      %v3985 = vadd.f32 %v3910, %v3918
      %v3986 = vadd.f32 %v3911, %v3922
      %v3987 = vadd.f32 %v3912, %v3918
      %v3988 = vadd.f32 %v3913, %v3922
      %v3989 = vmax.f32 %v3925, 0.0
      %v3990 = vmax.f32 %v3926, 0.0
      %v3991 = vmax.f32 %v3927, 0.0
      %v3992 = vmax.f32 %v3928, 0.0
      %v3993 = vmax.f32 %v3929, 0.0
      %v3994 = vmax.f32 %v3930, 0.0
      %v3995 = vmax.f32 %v3931, 0.0
      %v3996 = vmax.f32 %v3932, 0.0
      %v3997 = vmax.f32 %v3933, 0.0
      %v3998 = vmax.f32 %v3934, 0.0
      %v3999 = vmax.f32 %v3935, 0.0
      %v4000 = vmax.f32 %v3936, 0.0
      %v4001 = vmax.f32 %v3937, 0.0
      %v4002 = vmax.f32 %v3938, 0.0
      %v4003 = vmax.f32 %v3939, 0.0
      %v4004 = vmax.f32 %v3940, 0.0
      %v4005 = vmax.f32 %v3941, 0.0
      %v4006 = vmax.f32 %v3942, 0.0
      %v4007 = vmax.f32 %v3943, 0.0
      %v4008 = vmax.f32 %v3944, 0.0
      %v4009 = vmax.f32 %v3945, 0.0
      %v4010 = vmax.f32 %v3946, 0.0
      %v4011 = vmax.f32 %v3947, 0.0
      %v4012 = vmax.f32 %v3948, 0.0
      %v4013 = vmax.f32 %v3949, 0.0
      %v4014 = vmax.f32 %v3950, 0.0
      %v4015 = vmax.f32 %v3951, 0.0
      %v4016 = vmax.f32 %v3952, 0.0
      %v4017 = vmax.f32 %v3953, 0.0
      %v4018 = vmax.f32 %v3954, 0.0
      %v4019 = vmax.f32 %v3955, 0.0
      %v4020 = vmax.f32 %v3956, 0.0
      %v4021 = vmax.f32 %v3957, 0.0
      %v4022 = vmax.f32 %v3958, 0.0
      %v4023 = vmax.f32 %v3959, 0.0
      %v4024 = vmax.f32 %v3960, 0.0
      %v4025 = vmax.f32 %v3961, 0.0
      %v4026 = vmax.f32 %v3962, 0.0
      %v4027 = vmax.f32 %v3963, 0.0
      %v4028 = vmax.f32 %v3964, 0.0
      %v4029 = vmax.f32 %v3965, 0.0
      %v4030 = vmax.f32 %v3966, 0.0
      %v4031 = vmax.f32 %v3967, 0.0
      %v4032 = vmax.f32 %v3968, 0.0
      %v4033 = vmax.f32 %v3969, 0.0
      %v4034 = vmax.f32 %v3970, 0.0
      %v4035 = vmax.f32 %v3971, 0.0
      %v4036 = vmax.f32 %v3972, 0.0
      %v4037 = vmax.f32 %v3973, 0.0
      %v4038 = vmax.f32 %v3974, 0.0
      %v4039 = vmax.f32 %v3975, 0.0
      %v4040 = vmax.f32 %v3976, 0.0
      %v4041 = vmax.f32 %v3977, 0.0
      %v4042 = vmax.f32 %v3978, 0.0
      %v4043 = vmax.f32 %v3979, 0.0
      %v4044 = vmax.f32 %v3980, 0.0
      %v4045 = vmax.f32 %v3981, 0.0
      %v4046 = vmax.f32 %v3982, 0.0
      %v4047 = vmax.f32 %v3983, 0.0
      %v4048 = vmax.f32 %v3984, 0.0
      %v4049 = vmax.f32 %v3985, 0.0
      %v4050 = vmax.f32 %v3986, 0.0
      %v4051 = vmax.f32 %v3987, 0.0
      %v4052 = vmax.f32 %v3988, 0.0
      %s4053 = smul.addr %s2298, 4
      %s4054 = scalar_lea.vmem [#allocation13], %s4053
      %v4055 = vld [vmem:[%s4054] sm:$0xff]
      %v4056 = vld [vmem:[%s4054 + $0x8] sm:$0xff]
      %v4057 = vld [vmem:[%s4054 + $0x10] sm:$0xff]
      %v4058 = vld [vmem:[%s4054 + $0x18] sm:$0xff]
      %v4059 = vld [vmem:[%s4054 + $0x20] sm:$0xff]
      %v4060 = vld [vmem:[%s4054 + $0x28] sm:$0xff]
      %v4061 = vld [vmem:[%s4054 + $0x30] sm:$0xff]
      %v4062 = vld [vmem:[%s4054 + $0x38] sm:$0xff]
      %v4063 = vld [vmem:[%s4054 + $0x40] sm:$0xff]
      %v4064 = vld [vmem:[%s4054 + $0x48] sm:$0xff]
      %v4065 = vld [vmem:[%s4054 + $0x50] sm:$0xff]
      %v4066 = vld [vmem:[%s4054 + $0x58] sm:$0xff]
      %v4067 = vld [vmem:[%s4054 + $0x60] sm:$0xff]
      %v4068 = vld [vmem:[%s4054 + $0x68] sm:$0xff]
      %v4069 = vld [vmem:[%s4054 + $0x70] sm:$0xff]
      %v4070 = vld [vmem:[%s4054 + $0x78] sm:$0xff]
      %v4071 = vld [vmem:[%s4054 + $0x80] sm:$0xff]
      %v4072 = vld [vmem:[%s4054 + $0x88] sm:$0xff]
      %v4073 = vld [vmem:[%s4054 + $0x90] sm:$0xff]
      %v4074 = vld [vmem:[%s4054 + $0x98] sm:$0xff]
      %v4075 = vld [vmem:[%s4054 + $0xa0] sm:$0xff]
      %v4076 = vld [vmem:[%s4054 + $0xa8] sm:$0xff]
      %v4077 = vld [vmem:[%s4054 + $0xb0] sm:$0xff]
      %v4078 = vld [vmem:[%s4054 + $0xb8] sm:$0xff]
      %v4079 = vld [vmem:[%s4054 + $0xc0] sm:$0xff]
      %v4080 = vld [vmem:[%s4054 + $0xc8] sm:$0xff]
      %v4081 = vld [vmem:[%s4054 + $0xd0] sm:$0xff]
      %v4082 = vld [vmem:[%s4054 + $0xd8] sm:$0xff]
      %v4083 = vld [vmem:[%s4054 + $0xe0] sm:$0xff]
      %v4084 = vld [vmem:[%s4054 + $0xe8] sm:$0xff]
      %v4085 = vld [vmem:[%s4054 + $0xf0] sm:$0xff]
      %v4086 = vld [vmem:[%s4054 + $0xf8] sm:$0xff]
      %s4087 = smul.addr %s2298, 4
      %s4088 = scalar_lea.vmem [#allocation15], %s4087
      %v4089 = vld [vmem:[%s4088] sm:$0xff]
      %v4090 = vld [vmem:[%s4088 + $0x8] sm:$0xff]
      %v4091 = vld [vmem:[%s4088 + $0x10] sm:$0xff]
      %v4092 = vld [vmem:[%s4088 + $0x18] sm:$0xff]
      %v4093 = vld [vmem:[%s4088 + $0x20] sm:$0xff]
      %v4094 = vld [vmem:[%s4088 + $0x28] sm:$0xff]
      %v4095 = vld [vmem:[%s4088 + $0x30] sm:$0xff]
      %v4096 = vld [vmem:[%s4088 + $0x38] sm:$0xff]
      %v4097 = vld [vmem:[%s4088 + $0x40] sm:$0xff]
      %v4098 = vld [vmem:[%s4088 + $0x48] sm:$0xff]
      %v4099 = vld [vmem:[%s4088 + $0x50] sm:$0xff]
      %v4100 = vld [vmem:[%s4088 + $0x58] sm:$0xff]
      %v4101 = vld [vmem:[%s4088 + $0x60] sm:$0xff]
      %v4102 = vld [vmem:[%s4088 + $0x68] sm:$0xff]
      %v4103 = vld [vmem:[%s4088 + $0x70] sm:$0xff]
      %v4104 = vld [vmem:[%s4088 + $0x78] sm:$0xff]
      %v4105 = vld [vmem:[%s4088 + $0x80] sm:$0xff]
      %v4106 = vld [vmem:[%s4088 + $0x88] sm:$0xff]
      %v4107 = vld [vmem:[%s4088 + $0x90] sm:$0xff]
      %v4108 = vld [vmem:[%s4088 + $0x98] sm:$0xff]
      %v4109 = vld [vmem:[%s4088 + $0xa0] sm:$0xff]
      %v4110 = vld [vmem:[%s4088 + $0xa8] sm:$0xff]
      %v4111 = vld [vmem:[%s4088 + $0xb0] sm:$0xff]
      %v4112 = vld [vmem:[%s4088 + $0xb8] sm:$0xff]
      %v4113 = vld [vmem:[%s4088 + $0xc0] sm:$0xff]
      %v4114 = vld [vmem:[%s4088 + $0xc8] sm:$0xff]
      %v4115 = vld [vmem:[%s4088 + $0xd0] sm:$0xff]
      %v4116 = vld [vmem:[%s4088 + $0xd8] sm:$0xff]
      %v4117 = vld [vmem:[%s4088 + $0xe0] sm:$0xff]
      %v4118 = vld [vmem:[%s4088 + $0xe8] sm:$0xff]
      %v4119 = vld [vmem:[%s4088 + $0xf0] sm:$0xff]
      %v4120 = vld [vmem:[%s4088 + $0xf8] sm:$0xff]
      %v4121 = vpack.c.bf16 %v3991, %v3989
      %v4122 = vpack.c.bf16 %v3992, %v3990
      %v4123 = vpack.c.bf16 %v3995, %v3993
      %v4124 = vpack.c.bf16 %v3996, %v3994
      %v4125 = vpack.c.bf16 %v3999, %v3997
      %v4126 = vpack.c.bf16 %v4000, %v3998
      %v4127 = vpack.c.bf16 %v4003, %v4001
      %v4128 = vpack.c.bf16 %v4004, %v4002
      %v4129 = vpack.c.bf16 %v4007, %v4005
      %v4130 = vpack.c.bf16 %v4008, %v4006
      %v4131 = vpack.c.bf16 %v4011, %v4009
      %v4132 = vpack.c.bf16 %v4012, %v4010
      %v4133 = vpack.c.bf16 %v4015, %v4013
      %v4134 = vpack.c.bf16 %v4016, %v4014
      %v4135 = vpack.c.bf16 %v4019, %v4017
      %v4136 = vpack.c.bf16 %v4020, %v4018
      %v4137 = vpack.c.bf16 %v4023, %v4021
      %v4138 = vpack.c.bf16 %v4024, %v4022
      %v4139 = vpack.c.bf16 %v4027, %v4025
      %v4140 = vpack.c.bf16 %v4028, %v4026
      %v4141 = vpack.c.bf16 %v4031, %v4029
      %v4142 = vpack.c.bf16 %v4032, %v4030
      %v4143 = vpack.c.bf16 %v4035, %v4033
      %v4144 = vpack.c.bf16 %v4036, %v4034
      %v4145 = vpack.c.bf16 %v4039, %v4037
      %v4146 = vpack.c.bf16 %v4040, %v4038
      %v4147 = vpack.c.bf16 %v4043, %v4041
      %v4148 = vpack.c.bf16 %v4044, %v4042
      %v4149 = vpack.c.bf16 %v4047, %v4045
      %v4150 = vpack.c.bf16 %v4048, %v4046
      %v4151 = vpack.c.bf16 %v4051, %v4049
      %v4152 = vpack.c.bf16 %v4052, %v4050
      %v4153 = vunpack.c.l.bf16 %v4121
      %v4154 = vunpack.c.l.bf16 %v4122
      %v4155 = vunpack.c.h.bf16 %v4121
      %v4156 = vunpack.c.h.bf16 %v4122
      %v4157 = vunpack.c.l.bf16 %v4123
      %v4158 = vunpack.c.l.bf16 %v4124
      %v4159 = vunpack.c.h.bf16 %v4123
      %v4160 = vunpack.c.h.bf16 %v4124
      %v4161 = vunpack.c.l.bf16 %v4125
      %v4162 = vunpack.c.l.bf16 %v4126
      %v4163 = vunpack.c.h.bf16 %v4125
      %v4164 = vunpack.c.h.bf16 %v4126
      %v4165 = vunpack.c.l.bf16 %v4127
      %v4166 = vunpack.c.l.bf16 %v4128
      %v4167 = vunpack.c.h.bf16 %v4127
      %v4168 = vunpack.c.h.bf16 %v4128
      %v4169 = vunpack.c.l.bf16 %v4129
      %v4170 = vunpack.c.l.bf16 %v4130
      %v4171 = vunpack.c.h.bf16 %v4129
      %v4172 = vunpack.c.h.bf16 %v4130
      %v4173 = vunpack.c.l.bf16 %v4131
      %v4174 = vunpack.c.l.bf16 %v4132
      %v4175 = vunpack.c.h.bf16 %v4131
      %v4176 = vunpack.c.h.bf16 %v4132
      %v4177 = vunpack.c.l.bf16 %v4133
      %v4178 = vunpack.c.l.bf16 %v4134
      %v4179 = vunpack.c.h.bf16 %v4133
      %v4180 = vunpack.c.h.bf16 %v4134
      %v4181 = vunpack.c.l.bf16 %v4135
      %v4182 = vunpack.c.l.bf16 %v4136
      %v4183 = vunpack.c.h.bf16 %v4135
      %v4184 = vunpack.c.h.bf16 %v4136
      %v4185 = vunpack.c.l.bf16 %v4137
      %v4186 = vunpack.c.l.bf16 %v4138
      %v4187 = vunpack.c.h.bf16 %v4137
      %v4188 = vunpack.c.h.bf16 %v4138
      %v4189 = vunpack.c.l.bf16 %v4139
      %v4190 = vunpack.c.l.bf16 %v4140
      %v4191 = vunpack.c.h.bf16 %v4139
      %v4192 = vunpack.c.h.bf16 %v4140
      %v4193 = vunpack.c.l.bf16 %v4141
      %v4194 = vunpack.c.l.bf16 %v4142
      %v4195 = vunpack.c.h.bf16 %v4141
      %v4196 = vunpack.c.h.bf16 %v4142
      %v4197 = vunpack.c.l.bf16 %v4143
      %v4198 = vunpack.c.l.bf16 %v4144
      %v4199 = vunpack.c.h.bf16 %v4143
      %v4200 = vunpack.c.h.bf16 %v4144
      %v4201 = vunpack.c.l.bf16 %v4145
      %v4202 = vunpack.c.l.bf16 %v4146
      %v4203 = vunpack.c.h.bf16 %v4145
      %v4204 = vunpack.c.h.bf16 %v4146
      %v4205 = vunpack.c.l.bf16 %v4147
      %v4206 = vunpack.c.l.bf16 %v4148
      %v4207 = vunpack.c.h.bf16 %v4147
      %v4208 = vunpack.c.h.bf16 %v4148
      %v4209 = vunpack.c.l.bf16 %v4149
      %v4210 = vunpack.c.l.bf16 %v4150
      %v4211 = vunpack.c.h.bf16 %v4149
      %v4212 = vunpack.c.h.bf16 %v4150
      %v4213 = vunpack.c.l.bf16 %v4151
      %v4214 = vunpack.c.l.bf16 %v4152
      %v4215 = vunpack.c.h.bf16 %v4151
      %v4216 = vunpack.c.h.bf16 %v4152
      %v4217 = vsub.f32 %v3989, %v4153
      %v4218 = vsub.f32 %v3990, %v4154
      %v4219 = vsub.f32 %v3991, %v4155
      %v4220 = vsub.f32 %v3992, %v4156
      %v4221 = vsub.f32 %v3993, %v4157
      %v4222 = vsub.f32 %v3994, %v4158
      %v4223 = vsub.f32 %v3995, %v4159
      %v4224 = vsub.f32 %v3996, %v4160
      %v4225 = vsub.f32 %v3997, %v4161
      %v4226 = vsub.f32 %v3998, %v4162
      %v4227 = vsub.f32 %v3999, %v4163
      %v4228 = vsub.f32 %v4000, %v4164
      %v4229 = vsub.f32 %v4001, %v4165
      %v4230 = vsub.f32 %v4002, %v4166
      %v4231 = vsub.f32 %v4003, %v4167
      %v4232 = vsub.f32 %v4004, %v4168
      %v4233 = vsub.f32 %v4005, %v4169
      %v4234 = vsub.f32 %v4006, %v4170
      %v4235 = vsub.f32 %v4007, %v4171
      %v4236 = vsub.f32 %v4008, %v4172
      %v4237 = vsub.f32 %v4009, %v4173
      %v4238 = vsub.f32 %v4010, %v4174
      %v4239 = vsub.f32 %v4011, %v4175
      %v4240 = vsub.f32 %v4012, %v4176
      %v4241 = vsub.f32 %v4013, %v4177
      %v4242 = vsub.f32 %v4014, %v4178
      %v4243 = vsub.f32 %v4015, %v4179
      %v4244 = vsub.f32 %v4016, %v4180
      %v4245 = vsub.f32 %v4017, %v4181
      %v4246 = vsub.f32 %v4018, %v4182
      %v4247 = vsub.f32 %v4019, %v4183
      %v4248 = vsub.f32 %v4020, %v4184
      %v4249 = vsub.f32 %v4021, %v4185
      %v4250 = vsub.f32 %v4022, %v4186
      %v4251 = vsub.f32 %v4023, %v4187
      %v4252 = vsub.f32 %v4024, %v4188
      %v4253 = vsub.f32 %v4025, %v4189
      %v4254 = vsub.f32 %v4026, %v4190
      %v4255 = vsub.f32 %v4027, %v4191
      %v4256 = vsub.f32 %v4028, %v4192
      %v4257 = vsub.f32 %v4029, %v4193
      %v4258 = vsub.f32 %v4030, %v4194
      %v4259 = vsub.f32 %v4031, %v4195
      %v4260 = vsub.f32 %v4032, %v4196
      %v4261 = vsub.f32 %v4033, %v4197
      %v4262 = vsub.f32 %v4034, %v4198
      %v4263 = vsub.f32 %v4035, %v4199
      %v4264 = vsub.f32 %v4036, %v4200
      %v4265 = vsub.f32 %v4037, %v4201
      %v4266 = vsub.f32 %v4038, %v4202
      %v4267 = vsub.f32 %v4039, %v4203
      %v4268 = vsub.f32 %v4040, %v4204
      %v4269 = vsub.f32 %v4041, %v4205
      %v4270 = vsub.f32 %v4042, %v4206
      %v4271 = vsub.f32 %v4043, %v4207
      %v4272 = vsub.f32 %v4044, %v4208
      %v4273 = vsub.f32 %v4045, %v4209
      %v4274 = vsub.f32 %v4046, %v4210
      %v4275 = vsub.f32 %v4047, %v4211
      %v4276 = vsub.f32 %v4048, %v4212
      %v4277 = vsub.f32 %v4049, %v4213
      %v4278 = vsub.f32 %v4050, %v4214
      %v4279 = vsub.f32 %v4051, %v4215
      %v4280 = vsub.f32 %v4052, %v4216
      %v4281 = vpack.c.bf16 %v4219, %v4217
      %v4282 = vpack.c.bf16 %v4220, %v4218
      %v4283 = vpack.c.bf16 %v4223, %v4221
      %v4284 = vpack.c.bf16 %v4224, %v4222
      %v4285 = vpack.c.bf16 %v4227, %v4225
      %v4286 = vpack.c.bf16 %v4228, %v4226
      %v4287 = vpack.c.bf16 %v4231, %v4229
      %v4288 = vpack.c.bf16 %v4232, %v4230
      %v4289 = vpack.c.bf16 %v4235, %v4233
      %v4290 = vpack.c.bf16 %v4236, %v4234
      %v4291 = vpack.c.bf16 %v4239, %v4237
      %v4292 = vpack.c.bf16 %v4240, %v4238
      %v4293 = vpack.c.bf16 %v4243, %v4241
      %v4294 = vpack.c.bf16 %v4244, %v4242
      %v4295 = vpack.c.bf16 %v4247, %v4245
      %v4296 = vpack.c.bf16 %v4248, %v4246
      %v4297 = vpack.c.bf16 %v4251, %v4249
      %v4298 = vpack.c.bf16 %v4252, %v4250
      %v4299 = vpack.c.bf16 %v4255, %v4253
      %v4300 = vpack.c.bf16 %v4256, %v4254
      %v4301 = vpack.c.bf16 %v4259, %v4257
      %v4302 = vpack.c.bf16 %v4260, %v4258
      %v4303 = vpack.c.bf16 %v4263, %v4261
      %v4304 = vpack.c.bf16 %v4264, %v4262
      %v4305 = vpack.c.bf16 %v4267, %v4265
      %v4306 = vpack.c.bf16 %v4268, %v4266
      %v4307 = vpack.c.bf16 %v4271, %v4269
      %v4308 = vpack.c.bf16 %v4272, %v4270
      %v4309 = vpack.c.bf16 %v4275, %v4273
      %v4310 = vpack.c.bf16 %v4276, %v4274
      %v4311 = vpack.c.bf16 %v4279, %v4277
      %v4312 = vpack.c.bf16 %v4280, %v4278
      %v4345 = vunpack.c.l.b16 %v4055
      %v4346 = vunpack.c.h.b16 %v4055
      %v4347 = vunpack.c.l.b16 %v4056
      %v4348 = vunpack.c.h.b16 %v4056
      %v4349 = vunpack.c.l.b16 %v4057
      %v4350 = vunpack.c.h.b16 %v4057
      %v4351 = vunpack.c.l.b16 %v4058
      %v4352 = vunpack.c.h.b16 %v4058
      %v4353 = vunpack.c.l.b16 %v4059
      %v4354 = vunpack.c.h.b16 %v4059
      %v4355 = vunpack.c.l.b16 %v4060
      %v4356 = vunpack.c.h.b16 %v4060
      %v4357 = vunpack.c.l.b16 %v4061
      %v4358 = vunpack.c.h.b16 %v4061
      %v4359 = vunpack.c.l.b16 %v4062
      %v4360 = vunpack.c.h.b16 %v4062
      %v4361 = vunpack.c.l.b16 %v4063
      %v4362 = vunpack.c.h.b16 %v4063
      %v4363 = vunpack.c.l.b16 %v4064
      %v4364 = vunpack.c.h.b16 %v4064
      %v4365 = vunpack.c.l.b16 %v4065
      %v4366 = vunpack.c.h.b16 %v4065
      %v4367 = vunpack.c.l.b16 %v4066
      %v4368 = vunpack.c.h.b16 %v4066
      %v4369 = vunpack.c.l.b16 %v4067
      %v4370 = vunpack.c.h.b16 %v4067
      %v4371 = vunpack.c.l.b16 %v4068
      %v4372 = vunpack.c.h.b16 %v4068
      %v4373 = vunpack.c.l.b16 %v4069
      %v4374 = vunpack.c.h.b16 %v4069
      %v4375 = vunpack.c.l.b16 %v4070
      %v4376 = vunpack.c.h.b16 %v4070
      %v4377 = vunpack.c.l.b16 %v4071
      %v4378 = vunpack.c.h.b16 %v4071
      %v4379 = vunpack.c.l.b16 %v4072
      %v4380 = vunpack.c.h.b16 %v4072
      %v4381 = vunpack.c.l.b16 %v4073
      %v4382 = vunpack.c.h.b16 %v4073
      %v4383 = vunpack.c.l.b16 %v4074
      %v4384 = vunpack.c.h.b16 %v4074
      %v4385 = vunpack.c.l.b16 %v4075
      %v4386 = vunpack.c.h.b16 %v4075
      %v4387 = vunpack.c.l.b16 %v4076
      %v4388 = vunpack.c.h.b16 %v4076
      %v4389 = vunpack.c.l.b16 %v4077
      %v4390 = vunpack.c.h.b16 %v4077
      %v4391 = vunpack.c.l.b16 %v4078
      %v4392 = vunpack.c.h.b16 %v4078
      %v4393 = vunpack.c.l.b16 %v4079
      %v4394 = vunpack.c.h.b16 %v4079
      %v4395 = vunpack.c.l.b16 %v4080
      %v4396 = vunpack.c.h.b16 %v4080
      %v4397 = vunpack.c.l.b16 %v4081
      %v4398 = vunpack.c.h.b16 %v4081
      %v4399 = vunpack.c.l.b16 %v4082
      %v4400 = vunpack.c.h.b16 %v4082
      %v4401 = vunpack.c.l.b16 %v4083
      %v4402 = vunpack.c.h.b16 %v4083
      %v4403 = vunpack.c.l.b16 %v4084
      %v4404 = vunpack.c.h.b16 %v4084
      %v4405 = vunpack.c.l.b16 %v4085
      %v4406 = vunpack.c.h.b16 %v4085
      %v4407 = vunpack.c.l.b16 %v4086
      %v4408 = vunpack.c.h.b16 %v4086
      %v4409 = vpack.c.b16 %v4347, %v4345
      %v4410 = vpack.c.b16 %v4348, %v4346
      %v4411 = vpack.c.b16 %v4351, %v4349
      %v4412 = vpack.c.b16 %v4352, %v4350
      %v4413 = vpack.c.b16 %v4355, %v4353
      %v4414 = vpack.c.b16 %v4356, %v4354
      %v4415 = vpack.c.b16 %v4359, %v4357
      %v4416 = vpack.c.b16 %v4360, %v4358
      %v4417 = vpack.c.b16 %v4363, %v4361
      %v4418 = vpack.c.b16 %v4364, %v4362
      %v4419 = vpack.c.b16 %v4367, %v4365
      %v4420 = vpack.c.b16 %v4368, %v4366
      %v4421 = vpack.c.b16 %v4371, %v4369
      %v4422 = vpack.c.b16 %v4372, %v4370
      %v4423 = vpack.c.b16 %v4375, %v4373
      %v4424 = vpack.c.b16 %v4376, %v4374
      %v4425 = vpack.c.b16 %v4379, %v4377
      %v4426 = vpack.c.b16 %v4380, %v4378
      %v4427 = vpack.c.b16 %v4383, %v4381
      %v4428 = vpack.c.b16 %v4384, %v4382
      %v4429 = vpack.c.b16 %v4387, %v4385
      %v4430 = vpack.c.b16 %v4388, %v4386
      %v4431 = vpack.c.b16 %v4391, %v4389
      %v4432 = vpack.c.b16 %v4392, %v4390
      %v4433 = vpack.c.b16 %v4395, %v4393
      %v4434 = vpack.c.b16 %v4396, %v4394
      %v4435 = vpack.c.b16 %v4399, %v4397
      %v4436 = vpack.c.b16 %v4400, %v4398
      %v4437 = vpack.c.b16 %v4403, %v4401
      %v4438 = vpack.c.b16 %v4404, %v4402
      %v4439 = vpack.c.b16 %v4407, %v4405
      %v4440 = vpack.c.b16 %v4408, %v4406
      %4473 = vmatprep.subr.bf16.mxu0 %v4410
      %4474 = vmatpush1.bf16.msra.mxu0 %v4409
      %4475 = vmatprep.subr.bf16.mxu0 %v4412
      %4476 = vmatpush1.bf16.msra.mxu0 %v4411
      %4477 = vmatprep.subr.bf16.mxu0 %v4414
      %4478 = vmatpush1.bf16.msra.mxu0 %v4413
      %4479 = vmatprep.subr.bf16.mxu0 %v4416
      %4480 = vmatpush1.bf16.msra.mxu0 %v4415
      %4481 = vmatprep.subr.bf16.mxu0 %v4418
      %4482 = vmatpush1.bf16.msra.mxu0 %v4417
      %4483 = vmatprep.subr.bf16.mxu0 %v4420
      %4484 = vmatpush1.bf16.msra.mxu0 %v4419
      %4485 = vmatprep.subr.bf16.mxu0 %v4422
      %4486 = vmatpush1.bf16.msra.mxu0 %v4421
      %4487 = vmatprep.subr.bf16.mxu0 %v4424
      %4488 = vmatpush1.bf16.msra.mxu0 %v4423
      %4489 = vmatprep.subr.bf16.mxu0 %v4426
      %4490 = vmatpush1.bf16.msra.mxu0 %v4425
      %4491 = vmatprep.subr.bf16.mxu0 %v4428
      %4492 = vmatpush1.bf16.msra.mxu0 %v4427
      %4493 = vmatprep.subr.bf16.mxu0 %v4430
      %4494 = vmatpush1.bf16.msra.mxu0 %v4429
      %4495 = vmatprep.subr.bf16.mxu0 %v4432
      %4496 = vmatpush1.bf16.msra.mxu0 %v4431
      %4497 = vmatprep.subr.bf16.mxu0 %v4434
      %4498 = vmatpush1.bf16.msra.mxu0 %v4433
      %4499 = vmatprep.subr.bf16.mxu0 %v4436
      %4500 = vmatpush1.bf16.msra.mxu0 %v4435
      %4501 = vmatprep.subr.bf16.mxu0 %v4438
      %4502 = vmatpush1.bf16.msra.mxu0 %v4437
      %4503 = vmatprep.subr.bf16.mxu0 %v4440
      %4504 = vmatpush1.bf16.msra.mxu0 %v4439
      %4505 = vmatprep.mubr.bf16.mxu0 %v4282
      %4506 = vmatmul.mubr.bf16.gmra.mrb[0].mxu0 %v4281
      %v4507 = vpop.f32.mrb[0].mxu0
      %v4508 = vadd.f32 0.0, %v4507
      %v4509 = vpop.f32.mrb[0].mxu0
      %v4510 = vadd.f32 0.0, %v4509
      %v4511 = vpop.f32.mrb[0].mxu0
      %v4512 = vadd.f32 0.0, %v4511
      %v4513 = vpop.f32.mrb[0].mxu0
      %v4514 = vadd.f32 0.0, %v4513
      %4515 = vmatprep.mubr.bf16.mxu0 %v4284
      %4516 = vmatmul.mubr.bf16.gmra.mrb[0].mxu0 %v4283
      %v4517 = vpop.f32.mrb[0].mxu0
      %v4518 = vadd.f32 0.0, %v4517
      %v4519 = vpop.f32.mrb[0].mxu0
      %v4520 = vadd.f32 0.0, %v4519
      %v4521 = vpop.f32.mrb[0].mxu0
      %v4522 = vadd.f32 0.0, %v4521
      %v4523 = vpop.f32.mrb[0].mxu0
      %v4524 = vadd.f32 0.0, %v4523
      %4525 = vmatprep.mubr.bf16.mxu0 %v4286
      %4526 = vmatmul.mubr.bf16.gmra.mrb[0].mxu0 %v4285
      %v4527 = vpop.f32.mrb[0].mxu0
      %v4528 = vadd.f32 0.0, %v4527
      %v4529 = vpop.f32.mrb[0].mxu0
      %v4530 = vadd.f32 0.0, %v4529
      %v4531 = vpop.f32.mrb[0].mxu0
      %v4532 = vadd.f32 0.0, %v4531
      %v4533 = vpop.f32.mrb[0].mxu0
      %v4534 = vadd.f32 0.0, %v4533
      %4535 = vmatprep.mubr.bf16.mxu0 %v4288
      %4536 = vmatmul.mubr.bf16.gmra.mrb[0].mxu0 %v4287
      %v4537 = vpop.f32.mrb[0].mxu0
      %v4538 = vadd.f32 0.0, %v4537
      %v4539 = vpop.f32.mrb[0].mxu0
      %v4540 = vadd.f32 0.0, %v4539
      %v4541 = vpop.f32.mrb[0].mxu0
      %v4542 = vadd.f32 0.0, %v4541
      %v4543 = vpop.f32.mrb[0].mxu0
      %v4544 = vadd.f32 0.0, %v4543
      %4545 = vmatprep.mubr.bf16.mxu0 %v4290
      %4546 = vmatmul.mubr.bf16.gmra.mrb[0].mxu0 %v4289
      %v4547 = vpop.f32.mrb[0].mxu0
      %v4548 = vadd.f32 0.0, %v4547
      %v4549 = vpop.f32.mrb[0].mxu0
      %v4550 = vadd.f32 0.0, %v4549
      %v4551 = vpop.f32.mrb[0].mxu0
      %v4552 = vadd.f32 0.0, %v4551
      %v4553 = vpop.f32.mrb[0].mxu0
      %v4554 = vadd.f32 0.0, %v4553
      %4555 = vmatprep.mubr.bf16.mxu0 %v4292
      %4556 = vmatmul.mubr.bf16.gmra.mrb[0].mxu0 %v4291
      %v4557 = vpop.f32.mrb[0].mxu0
      %v4558 = vadd.f32 0.0, %v4557
      %v4559 = vpop.f32.mrb[0].mxu0
      %v4560 = vadd.f32 0.0, %v4559
      %v4561 = vpop.f32.mrb[0].mxu0
      %v4562 = vadd.f32 0.0, %v4561
      %v4563 = vpop.f32.mrb[0].mxu0
      %v4564 = vadd.f32 0.0, %v4563
      %4565 = vmatprep.mubr.bf16.mxu0 %v4294
      %4566 = vmatmul.mubr.bf16.gmra.mrb[0].mxu0 %v4293
      %v4567 = vpop.f32.mrb[0].mxu0
      %v4568 = vadd.f32 0.0, %v4567
      %v4569 = vpop.f32.mrb[0].mxu0
      %v4570 = vadd.f32 0.0, %v4569
      %v4571 = vpop.f32.mrb[0].mxu0
      %v4572 = vadd.f32 0.0, %v4571
      %v4573 = vpop.f32.mrb[0].mxu0
      %v4574 = vadd.f32 0.0, %v4573
      %4575 = vmatprep.mubr.bf16.mxu0 %v4296
      %4576 = vmatmul.mubr.bf16.gmra.mrb[0].mxu0 %v4295
      %v4577 = vpop.f32.mrb[0].mxu0
      %v4578 = vadd.f32 0.0, %v4577
      %v4579 = vpop.f32.mrb[0].mxu0
      %v4580 = vadd.f32 0.0, %v4579
      %v4581 = vpop.f32.mrb[0].mxu0
      %v4582 = vadd.f32 0.0, %v4581
      %v4583 = vpop.f32.mrb[0].mxu0
      %v4584 = vadd.f32 0.0, %v4583
      %4585 = vmatprep.mubr.bf16.mxu0 %v4298
      %4586 = vmatmul.mubr.bf16.gmra.mrb[0].mxu0 %v4297
      %v4587 = vpop.f32.mrb[0].mxu0
      %v4588 = vadd.f32 0.0, %v4587
      %v4589 = vpop.f32.mrb[0].mxu0
      %v4590 = vadd.f32 0.0, %v4589
      %v4591 = vpop.f32.mrb[0].mxu0
      %v4592 = vadd.f32 0.0, %v4591
      %v4593 = vpop.f32.mrb[0].mxu0
      %v4594 = vadd.f32 0.0, %v4593
      %4595 = vmatprep.mubr.bf16.mxu0 %v4300
      %4596 = vmatmul.mubr.bf16.gmra.mrb[0].mxu0 %v4299
      %v4597 = vpop.f32.mrb[0].mxu0
      %v4598 = vadd.f32 0.0, %v4597
      %v4599 = vpop.f32.mrb[0].mxu0
      %v4600 = vadd.f32 0.0, %v4599
      %v4601 = vpop.f32.mrb[0].mxu0
      %v4602 = vadd.f32 0.0, %v4601
      %v4603 = vpop.f32.mrb[0].mxu0
      %v4604 = vadd.f32 0.0, %v4603
      %4605 = vmatprep.mubr.bf16.mxu0 %v4302
      %4606 = vmatmul.mubr.bf16.gmra.mrb[0].mxu0 %v4301
      %v4607 = vpop.f32.mrb[0].mxu0
      %v4608 = vadd.f32 0.0, %v4607
      %v4609 = vpop.f32.mrb[0].mxu0
      %v4610 = vadd.f32 0.0, %v4609
      %v4611 = vpop.f32.mrb[0].mxu0
      %v4612 = vadd.f32 0.0, %v4611
      %v4613 = vpop.f32.mrb[0].mxu0
      %v4614 = vadd.f32 0.0, %v4613
      %4615 = vmatprep.mubr.bf16.mxu0 %v4304
      %4616 = vmatmul.mubr.bf16.gmra.mrb[0].mxu0 %v4303
      %v4617 = vpop.f32.mrb[0].mxu0
      %v4618 = vadd.f32 0.0, %v4617
      %v4619 = vpop.f32.mrb[0].mxu0
      %v4620 = vadd.f32 0.0, %v4619
      %v4621 = vpop.f32.mrb[0].mxu0
      %v4622 = vadd.f32 0.0, %v4621
      %v4623 = vpop.f32.mrb[0].mxu0
      %v4624 = vadd.f32 0.0, %v4623
      %4625 = vmatprep.mubr.bf16.mxu0 %v4306
      %4626 = vmatmul.mubr.bf16.gmra.mrb[0].mxu0 %v4305
      %v4627 = vpop.f32.mrb[0].mxu0
      %v4628 = vadd.f32 0.0, %v4627
      %v4629 = vpop.f32.mrb[0].mxu0
      %v4630 = vadd.f32 0.0, %v4629
      %v4631 = vpop.f32.mrb[0].mxu0
      %v4632 = vadd.f32 0.0, %v4631
      %v4633 = vpop.f32.mrb[0].mxu0
      %v4634 = vadd.f32 0.0, %v4633
      %4635 = vmatprep.mubr.bf16.mxu0 %v4308
      %4636 = vmatmul.mubr.bf16.gmra.mrb[0].mxu0 %v4307
      %v4637 = vpop.f32.mrb[0].mxu0
      %v4638 = vadd.f32 0.0, %v4637
      %v4639 = vpop.f32.mrb[0].mxu0
      %v4640 = vadd.f32 0.0, %v4639
      %v4641 = vpop.f32.mrb[0].mxu0
      %v4642 = vadd.f32 0.0, %v4641
      %v4643 = vpop.f32.mrb[0].mxu0
      %v4644 = vadd.f32 0.0, %v4643
      %4645 = vmatprep.mubr.bf16.mxu0 %v4310
      %4646 = vmatmul.mubr.bf16.gmra.mrb[0].mxu0 %v4309
      %v4647 = vpop.f32.mrb[0].mxu0
      %v4648 = vadd.f32 0.0, %v4647
      %v4649 = vpop.f32.mrb[0].mxu0
      %v4650 = vadd.f32 0.0, %v4649
      %v4651 = vpop.f32.mrb[0].mxu0
      %v4652 = vadd.f32 0.0, %v4651
      %v4653 = vpop.f32.mrb[0].mxu0
      %v4654 = vadd.f32 0.0, %v4653
      %4655 = vmatprep.mubr.bf16.mxu0 %v4312
      %4656 = vmatmul.mubr.bf16.gmra.mrb[0].mxu0 %v4311
      %v4657 = vpop.f32.mrb[0].mxu0
      %v4658 = vadd.f32 0.0, %v4657
      %v4659 = vpop.f32.mrb[0].mxu0
      %v4660 = vadd.f32 0.0, %v4659
      %v4661 = vpop.f32.mrb[0].mxu0
      %v4662 = vadd.f32 0.0, %v4661
      %v4663 = vpop.f32.mrb[0].mxu0
      %v4664 = vadd.f32 0.0, %v4663
      %4665 = vdwg.mxu0
      %4666 = vmatprep.subr.bf16.mxu0 %v4410
      %4667 = vmatpush1.bf16.msra.mxu0 %v4409
      %4668 = vmatprep.subr.bf16.mxu0 %v4412
      %4669 = vmatpush1.bf16.msra.mxu0 %v4411
      %4670 = vmatprep.subr.bf16.mxu0 %v4414
      %4671 = vmatpush1.bf16.msra.mxu0 %v4413
      %4672 = vmatprep.subr.bf16.mxu0 %v4416
      %4673 = vmatpush1.bf16.msra.mxu0 %v4415
      %4674 = vmatprep.subr.bf16.mxu0 %v4418
      %4675 = vmatpush1.bf16.msra.mxu0 %v4417
      %4676 = vmatprep.subr.bf16.mxu0 %v4420
      %4677 = vmatpush1.bf16.msra.mxu0 %v4419
      %4678 = vmatprep.subr.bf16.mxu0 %v4422
      %4679 = vmatpush1.bf16.msra.mxu0 %v4421
      %4680 = vmatprep.subr.bf16.mxu0 %v4424
      %4681 = vmatpush1.bf16.msra.mxu0 %v4423
      %4682 = vmatprep.subr.bf16.mxu0 %v4426
      %4683 = vmatpush1.bf16.msra.mxu0 %v4425
      %4684 = vmatprep.subr.bf16.mxu0 %v4428
      %4685 = vmatpush1.bf16.msra.mxu0 %v4427
      %4686 = vmatprep.subr.bf16.mxu0 %v4430
      %4687 = vmatpush1.bf16.msra.mxu0 %v4429
      %4688 = vmatprep.subr.bf16.mxu0 %v4432
      %4689 = vmatpush1.bf16.msra.mxu0 %v4431
      %4690 = vmatprep.subr.bf16.mxu0 %v4434
      %4691 = vmatpush1.bf16.msra.mxu0 %v4433
      %4692 = vmatprep.subr.bf16.mxu0 %v4436
      %4693 = vmatpush1.bf16.msra.mxu0 %v4435
      %4694 = vmatprep.subr.bf16.mxu0 %v4438
      %4695 = vmatpush1.bf16.msra.mxu0 %v4437
      %4696 = vmatprep.subr.bf16.mxu0 %v4440
      %4697 = vmatpush1.bf16.msra.mxu0 %v4439
      %4698 = vmatprep.mubr.bf16.mxu0 %v4122
      %4699 = vmatmul.mubr.bf16.gmra.mrb[0].mxu0 %v4121
      %v4700 = vpop.f32.mrb[0].mxu0
      %v4701 = vadd.f32 %v4508, %v4700
      %v4702 = vpop.f32.mrb[0].mxu0
      %v4703 = vadd.f32 %v4510, %v4702
      %v4704 = vpop.f32.mrb[0].mxu0
      %v4705 = vadd.f32 %v4512, %v4704
      %v4706 = vpop.f32.mrb[0].mxu0
      %v4707 = vadd.f32 %v4514, %v4706
      %4708 = vmatprep.mubr.bf16.mxu0 %v4124
      %4709 = vmatmul.mubr.bf16.gmra.mrb[0].mxu0 %v4123
      %v4710 = vpop.f32.mrb[0].mxu0
      %v4711 = vadd.f32 %v4518, %v4710
      %v4712 = vpop.f32.mrb[0].mxu0
      %v4713 = vadd.f32 %v4520, %v4712
      %v4714 = vpop.f32.mrb[0].mxu0
      %v4715 = vadd.f32 %v4522, %v4714
      %v4716 = vpop.f32.mrb[0].mxu0
      %v4717 = vadd.f32 %v4524, %v4716
      %4718 = vmatprep.mubr.bf16.mxu0 %v4126
      %4719 = vmatmul.mubr.bf16.gmra.mrb[0].mxu0 %v4125
      %v4720 = vpop.f32.mrb[0].mxu0
      %v4721 = vadd.f32 %v4528, %v4720
      %v4722 = vpop.f32.mrb[0].mxu0
      %v4723 = vadd.f32 %v4530, %v4722
      %v4724 = vpop.f32.mrb[0].mxu0
      %v4725 = vadd.f32 %v4532, %v4724
      %v4726 = vpop.f32.mrb[0].mxu0
      %v4727 = vadd.f32 %v4534, %v4726
      %4728 = vmatprep.mubr.bf16.mxu0 %v4128
      %4729 = vmatmul.mubr.bf16.gmra.mrb[0].mxu0 %v4127
      %v4730 = vpop.f32.mrb[0].mxu0
      %v4731 = vadd.f32 %v4538, %v4730
      %v4732 = vpop.f32.mrb[0].mxu0
      %v4733 = vadd.f32 %v4540, %v4732
      %v4734 = vpop.f32.mrb[0].mxu0
      %v4735 = vadd.f32 %v4542, %v4734
      %v4736 = vpop.f32.mrb[0].mxu0
      %v4737 = vadd.f32 %v4544, %v4736
      %4738 = vmatprep.mubr.bf16.mxu0 %v4130
      %4739 = vmatmul.mubr.bf16.gmra.mrb[0].mxu0 %v4129
      %v4740 = vpop.f32.mrb[0].mxu0
      %v4741 = vadd.f32 %v4548, %v4740
      %v4742 = vpop.f32.mrb[0].mxu0
      %v4743 = vadd.f32 %v4550, %v4742
      %v4744 = vpop.f32.mrb[0].mxu0
      %v4745 = vadd.f32 %v4552, %v4744
      %v4746 = vpop.f32.mrb[0].mxu0
      %v4747 = vadd.f32 %v4554, %v4746
      %4748 = vmatprep.mubr.bf16.mxu0 %v4132
      %4749 = vmatmul.mubr.bf16.gmra.mrb[0].mxu0 %v4131
      %v4750 = vpop.f32.mrb[0].mxu0
      %v4751 = vadd.f32 %v4558, %v4750
      %v4752 = vpop.f32.mrb[0].mxu0
      %v4753 = vadd.f32 %v4560, %v4752
      %v4754 = vpop.f32.mrb[0].mxu0
      %v4755 = vadd.f32 %v4562, %v4754
      %v4756 = vpop.f32.mrb[0].mxu0
      %v4757 = vadd.f32 %v4564, %v4756
      %4758 = vmatprep.mubr.bf16.mxu0 %v4134
      %4759 = vmatmul.mubr.bf16.gmra.mrb[0].mxu0 %v4133
      %v4760 = vpop.f32.mrb[0].mxu0
      %v4761 = vadd.f32 %v4568, %v4760
      %v4762 = vpop.f32.mrb[0].mxu0
      %v4763 = vadd.f32 %v4570, %v4762
      %v4764 = vpop.f32.mrb[0].mxu0
      %v4765 = vadd.f32 %v4572, %v4764
      %v4766 = vpop.f32.mrb[0].mxu0
      %v4767 = vadd.f32 %v4574, %v4766
      %4768 = vmatprep.mubr.bf16.mxu0 %v4136
      %4769 = vmatmul.mubr.bf16.gmra.mrb[0].mxu0 %v4135
      %v4770 = vpop.f32.mrb[0].mxu0
      %v4771 = vadd.f32 %v4578, %v4770
      %v4772 = vpop.f32.mrb[0].mxu0
      %v4773 = vadd.f32 %v4580, %v4772
      %v4774 = vpop.f32.mrb[0].mxu0
      %v4775 = vadd.f32 %v4582, %v4774
      %v4776 = vpop.f32.mrb[0].mxu0
      %v4777 = vadd.f32 %v4584, %v4776
      %4778 = vmatprep.mubr.bf16.mxu0 %v4138
      %4779 = vmatmul.mubr.bf16.gmra.mrb[0].mxu0 %v4137
      %v4780 = vpop.f32.mrb[0].mxu0
      %v4781 = vadd.f32 %v4588, %v4780
      %v4782 = vpop.f32.mrb[0].mxu0
      %v4783 = vadd.f32 %v4590, %v4782
      %v4784 = vpop.f32.mrb[0].mxu0
      %v4785 = vadd.f32 %v4592, %v4784
      %v4786 = vpop.f32.mrb[0].mxu0
      %v4787 = vadd.f32 %v4594, %v4786
      %4788 = vmatprep.mubr.bf16.mxu0 %v4140
      %4789 = vmatmul.mubr.bf16.gmra.mrb[0].mxu0 %v4139
      %v4790 = vpop.f32.mrb[0].mxu0
      %v4791 = vadd.f32 %v4598, %v4790
      %v4792 = vpop.f32.mrb[0].mxu0
      %v4793 = vadd.f32 %v4600, %v4792
      %v4794 = vpop.f32.mrb[0].mxu0
      %v4795 = vadd.f32 %v4602, %v4794
      %v4796 = vpop.f32.mrb[0].mxu0
      %v4797 = vadd.f32 %v4604, %v4796
      %4798 = vmatprep.mubr.bf16.mxu0 %v4142
      %4799 = vmatmul.mubr.bf16.gmra.mrb[0].mxu0 %v4141
      %v4800 = vpop.f32.mrb[0].mxu0
      %v4801 = vadd.f32 %v4608, %v4800
      %v4802 = vpop.f32.mrb[0].mxu0
      %v4803 = vadd.f32 %v4610, %v4802
      %v4804 = vpop.f32.mrb[0].mxu0
      %v4805 = vadd.f32 %v4612, %v4804
      %v4806 = vpop.f32.mrb[0].mxu0
      %v4807 = vadd.f32 %v4614, %v4806
      %4808 = vmatprep.mubr.bf16.mxu0 %v4144
      %4809 = vmatmul.mubr.bf16.gmra.mrb[0].mxu0 %v4143
      %v4810 = vpop.f32.mrb[0].mxu0
      %v4811 = vadd.f32 %v4618, %v4810
      %v4812 = vpop.f32.mrb[0].mxu0
      %v4813 = vadd.f32 %v4620, %v4812
      %v4814 = vpop.f32.mrb[0].mxu0
      %v4815 = vadd.f32 %v4622, %v4814
      %v4816 = vpop.f32.mrb[0].mxu0
      %v4817 = vadd.f32 %v4624, %v4816
      %4818 = vmatprep.mubr.bf16.mxu0 %v4146
      %4819 = vmatmul.mubr.bf16.gmra.mrb[0].mxu0 %v4145
      %v4820 = vpop.f32.mrb[0].mxu0
      %v4821 = vadd.f32 %v4628, %v4820
      %v4822 = vpop.f32.mrb[0].mxu0
      %v4823 = vadd.f32 %v4630, %v4822
      %v4824 = vpop.f32.mrb[0].mxu0
      %v4825 = vadd.f32 %v4632, %v4824
      %v4826 = vpop.f32.mrb[0].mxu0
      %v4827 = vadd.f32 %v4634, %v4826
      %4828 = vmatprep.mubr.bf16.mxu0 %v4148
      %4829 = vmatmul.mubr.bf16.gmra.mrb[0].mxu0 %v4147
      %v4830 = vpop.f32.mrb[0].mxu0
      %v4831 = vadd.f32 %v4638, %v4830
      %v4832 = vpop.f32.mrb[0].mxu0
      %v4833 = vadd.f32 %v4640, %v4832
      %v4834 = vpop.f32.mrb[0].mxu0
      %v4835 = vadd.f32 %v4642, %v4834
      %v4836 = vpop.f32.mrb[0].mxu0
      %v4837 = vadd.f32 %v4644, %v4836
      %4838 = vmatprep.mubr.bf16.mxu0 %v4150
      %4839 = vmatmul.mubr.bf16.gmra.mrb[0].mxu0 %v4149
      %v4840 = vpop.f32.mrb[0].mxu0
      %v4841 = vadd.f32 %v4648, %v4840
      %v4842 = vpop.f32.mrb[0].mxu0
      %v4843 = vadd.f32 %v4650, %v4842
      %v4844 = vpop.f32.mrb[0].mxu0
      %v4845 = vadd.f32 %v4652, %v4844
      %v4846 = vpop.f32.mrb[0].mxu0
      %v4847 = vadd.f32 %v4654, %v4846
      %4848 = vmatprep.mubr.bf16.mxu0 %v4152
      %4849 = vmatmul.mubr.bf16.gmra.mrb[0].mxu0 %v4151
      %v4850 = vpop.f32.mrb[0].mxu0
      %v4851 = vadd.f32 %v4658, %v4850
      %v4852 = vpop.f32.mrb[0].mxu0
      %v4853 = vadd.f32 %v4660, %v4852
      %v4854 = vpop.f32.mrb[0].mxu0
      %v4855 = vadd.f32 %v4662, %v4854
      %v4856 = vpop.f32.mrb[0].mxu0
      %v4857 = vadd.f32 %v4664, %v4856
      %4858 = vdwg.mxu0
      %v4891 = vunpack.c.l.b16 %v4089
      %v4892 = vunpack.c.h.b16 %v4089
      %v4893 = vunpack.c.l.b16 %v4090
      %v4894 = vunpack.c.h.b16 %v4090
      %v4895 = vunpack.c.l.b16 %v4091
      %v4896 = vunpack.c.h.b16 %v4091
      %v4897 = vunpack.c.l.b16 %v4092
      %v4898 = vunpack.c.h.b16 %v4092
      %v4899 = vunpack.c.l.b16 %v4093
      %v4900 = vunpack.c.h.b16 %v4093
      %v4901 = vunpack.c.l.b16 %v4094
      %v4902 = vunpack.c.h.b16 %v4094
      %v4903 = vunpack.c.l.b16 %v4095
      %v4904 = vunpack.c.h.b16 %v4095
      %v4905 = vunpack.c.l.b16 %v4096
      %v4906 = vunpack.c.h.b16 %v4096
      %v4907 = vunpack.c.l.b16 %v4097
      %v4908 = vunpack.c.h.b16 %v4097
      %v4909 = vunpack.c.l.b16 %v4098
      %v4910 = vunpack.c.h.b16 %v4098
      %v4911 = vunpack.c.l.b16 %v4099
      %v4912 = vunpack.c.h.b16 %v4099
      %v4913 = vunpack.c.l.b16 %v4100
      %v4914 = vunpack.c.h.b16 %v4100
      %v4915 = vunpack.c.l.b16 %v4101
      %v4916 = vunpack.c.h.b16 %v4101
      %v4917 = vunpack.c.l.b16 %v4102
      %v4918 = vunpack.c.h.b16 %v4102
      %v4919 = vunpack.c.l.b16 %v4103
      %v4920 = vunpack.c.h.b16 %v4103
      %v4921 = vunpack.c.l.b16 %v4104
      %v4922 = vunpack.c.h.b16 %v4104
      %v4923 = vunpack.c.l.b16 %v4105
      %v4924 = vunpack.c.h.b16 %v4105
      %v4925 = vunpack.c.l.b16 %v4106
      %v4926 = vunpack.c.h.b16 %v4106
      %v4927 = vunpack.c.l.b16 %v4107
      %v4928 = vunpack.c.h.b16 %v4107
      %v4929 = vunpack.c.l.b16 %v4108
      %v4930 = vunpack.c.h.b16 %v4108
      %v4931 = vunpack.c.l.b16 %v4109
      %v4932 = vunpack.c.h.b16 %v4109
      %v4933 = vunpack.c.l.b16 %v4110
      %v4934 = vunpack.c.h.b16 %v4110
      %v4935 = vunpack.c.l.b16 %v4111
      %v4936 = vunpack.c.h.b16 %v4111
      %v4937 = vunpack.c.l.b16 %v4112
      %v4938 = vunpack.c.h.b16 %v4112
      %v4939 = vunpack.c.l.b16 %v4113
      %v4940 = vunpack.c.h.b16 %v4113
      %v4941 = vunpack.c.l.b16 %v4114
      %v4942 = vunpack.c.h.b16 %v4114
      %v4943 = vunpack.c.l.b16 %v4115
      %v4944 = vunpack.c.h.b16 %v4115
      %v4945 = vunpack.c.l.b16 %v4116
      %v4946 = vunpack.c.h.b16 %v4116
      %v4947 = vunpack.c.l.b16 %v4117
      %v4948 = vunpack.c.h.b16 %v4117
      %v4949 = vunpack.c.l.b16 %v4118
      %v4950 = vunpack.c.h.b16 %v4118
      %v4951 = vunpack.c.l.b16 %v4119
      %v4952 = vunpack.c.h.b16 %v4119
      %v4953 = vunpack.c.l.b16 %v4120
      %v4954 = vunpack.c.h.b16 %v4120
      %v4955 = vpack.c.b16 %v4893, %v4891
      %v4956 = vpack.c.b16 %v4894, %v4892
      %v4957 = vpack.c.b16 %v4897, %v4895
      %v4958 = vpack.c.b16 %v4898, %v4896
      %v4959 = vpack.c.b16 %v4901, %v4899
      %v4960 = vpack.c.b16 %v4902, %v4900
      %v4961 = vpack.c.b16 %v4905, %v4903
      %v4962 = vpack.c.b16 %v4906, %v4904
      %v4963 = vpack.c.b16 %v4909, %v4907
      %v4964 = vpack.c.b16 %v4910, %v4908
      %v4965 = vpack.c.b16 %v4913, %v4911
      %v4966 = vpack.c.b16 %v4914, %v4912
      %v4967 = vpack.c.b16 %v4917, %v4915
      %v4968 = vpack.c.b16 %v4918, %v4916
      %v4969 = vpack.c.b16 %v4921, %v4919
      %v4970 = vpack.c.b16 %v4922, %v4920
      %v4971 = vpack.c.b16 %v4925, %v4923
      %v4972 = vpack.c.b16 %v4926, %v4924
      %v4973 = vpack.c.b16 %v4929, %v4927
      %v4974 = vpack.c.b16 %v4930, %v4928
      %v4975 = vpack.c.b16 %v4933, %v4931
      %v4976 = vpack.c.b16 %v4934, %v4932
      %v4977 = vpack.c.b16 %v4937, %v4935
      %v4978 = vpack.c.b16 %v4938, %v4936
      %v4979 = vpack.c.b16 %v4941, %v4939
      %v4980 = vpack.c.b16 %v4942, %v4940
      %v4981 = vpack.c.b16 %v4945, %v4943
      %v4982 = vpack.c.b16 %v4946, %v4944
      %v4983 = vpack.c.b16 %v4949, %v4947
      %v4984 = vpack.c.b16 %v4950, %v4948
      %v4985 = vpack.c.b16 %v4953, %v4951
      %v4986 = vpack.c.b16 %v4954, %v4952
      %5019 = vmatprep.subr.bf16.mxu0 %v4956
      %5020 = vmatpush1.bf16.msra.mxu0 %v4955
      %5021 = vmatprep.subr.bf16.mxu0 %v4958
      %5022 = vmatpush1.bf16.msra.mxu0 %v4957
      %5023 = vmatprep.subr.bf16.mxu0 %v4960
      %5024 = vmatpush1.bf16.msra.mxu0 %v4959
      %5025 = vmatprep.subr.bf16.mxu0 %v4962
      %5026 = vmatpush1.bf16.msra.mxu0 %v4961
      %5027 = vmatprep.subr.bf16.mxu0 %v4964
      %5028 = vmatpush1.bf16.msra.mxu0 %v4963
      %5029 = vmatprep.subr.bf16.mxu0 %v4966
      %5030 = vmatpush1.bf16.msra.mxu0 %v4965
      %5031 = vmatprep.subr.bf16.mxu0 %v4968
      %5032 = vmatpush1.bf16.msra.mxu0 %v4967
      %5033 = vmatprep.subr.bf16.mxu0 %v4970
      %5034 = vmatpush1.bf16.msra.mxu0 %v4969
      %5035 = vmatprep.subr.bf16.mxu0 %v4972
      %5036 = vmatpush1.bf16.msra.mxu0 %v4971
      %5037 = vmatprep.subr.bf16.mxu0 %v4974
      %5038 = vmatpush1.bf16.msra.mxu0 %v4973
      %5039 = vmatprep.subr.bf16.mxu0 %v4976
      %5040 = vmatpush1.bf16.msra.mxu0 %v4975
      %5041 = vmatprep.subr.bf16.mxu0 %v4978
      %5042 = vmatpush1.bf16.msra.mxu0 %v4977
      %5043 = vmatprep.subr.bf16.mxu0 %v4980
      %5044 = vmatpush1.bf16.msra.mxu0 %v4979
      %5045 = vmatprep.subr.bf16.mxu0 %v4982
      %5046 = vmatpush1.bf16.msra.mxu0 %v4981
      %5047 = vmatprep.subr.bf16.mxu0 %v4984
      %5048 = vmatpush1.bf16.msra.mxu0 %v4983
      %5049 = vmatprep.subr.bf16.mxu0 %v4986
      %5050 = vmatpush1.bf16.msra.mxu0 %v4985
      %5051 = vmatprep.mubr.bf16.mxu0 %v4122
      %5052 = vmatmul.mubr.bf16.gmra.mrb[0].mxu0 %v4121
      %v5053 = vpop.f32.mrb[0].mxu0
      %v5054 = vadd.f32 0.0, %v5053
      %v5055 = vpop.f32.mrb[0].mxu0
      %v5056 = vadd.f32 0.0, %v5055
      %v5057 = vpop.f32.mrb[0].mxu0
      %v5058 = vadd.f32 0.0, %v5057
      %v5059 = vpop.f32.mrb[0].mxu0
      %v5060 = vadd.f32 0.0, %v5059
      %5061 = vmatprep.mubr.bf16.mxu0 %v4124
      %5062 = vmatmul.mubr.bf16.gmra.mrb[0].mxu0 %v4123
      %v5063 = vpop.f32.mrb[0].mxu0
      %v5064 = vadd.f32 0.0, %v5063
      %v5065 = vpop.f32.mrb[0].mxu0
      %v5066 = vadd.f32 0.0, %v5065
      %v5067 = vpop.f32.mrb[0].mxu0
      %v5068 = vadd.f32 0.0, %v5067
      %v5069 = vpop.f32.mrb[0].mxu0
      %v5070 = vadd.f32 0.0, %v5069
      %5071 = vmatprep.mubr.bf16.mxu0 %v4126
      %5072 = vmatmul.mubr.bf16.gmra.mrb[0].mxu0 %v4125
      %v5073 = vpop.f32.mrb[0].mxu0
      %v5074 = vadd.f32 0.0, %v5073
      %v5075 = vpop.f32.mrb[0].mxu0
      %v5076 = vadd.f32 0.0, %v5075
      %v5077 = vpop.f32.mrb[0].mxu0
      %v5078 = vadd.f32 0.0, %v5077
      %v5079 = vpop.f32.mrb[0].mxu0
      %v5080 = vadd.f32 0.0, %v5079
      %5081 = vmatprep.mubr.bf16.mxu0 %v4128
      %5082 = vmatmul.mubr.bf16.gmra.mrb[0].mxu0 %v4127
      %v5083 = vpop.f32.mrb[0].mxu0
      %v5084 = vadd.f32 0.0, %v5083
      %v5085 = vpop.f32.mrb[0].mxu0
      %v5086 = vadd.f32 0.0, %v5085
      %v5087 = vpop.f32.mrb[0].mxu0
      %v5088 = vadd.f32 0.0, %v5087
      %v5089 = vpop.f32.mrb[0].mxu0
      %v5090 = vadd.f32 0.0, %v5089
      %5091 = vmatprep.mubr.bf16.mxu0 %v4130
      %5092 = vmatmul.mubr.bf16.gmra.mrb[0].mxu0 %v4129
      %v5093 = vpop.f32.mrb[0].mxu0
      %v5094 = vadd.f32 0.0, %v5093
      %v5095 = vpop.f32.mrb[0].mxu0
      %v5096 = vadd.f32 0.0, %v5095
      %v5097 = vpop.f32.mrb[0].mxu0
      %v5098 = vadd.f32 0.0, %v5097
      %v5099 = vpop.f32.mrb[0].mxu0
      %v5100 = vadd.f32 0.0, %v5099
      %5101 = vmatprep.mubr.bf16.mxu0 %v4132
      %5102 = vmatmul.mubr.bf16.gmra.mrb[0].mxu0 %v4131
      %v5103 = vpop.f32.mrb[0].mxu0
      %v5104 = vadd.f32 0.0, %v5103
      %v5105 = vpop.f32.mrb[0].mxu0
      %v5106 = vadd.f32 0.0, %v5105
      %v5107 = vpop.f32.mrb[0].mxu0
      %v5108 = vadd.f32 0.0, %v5107
      %v5109 = vpop.f32.mrb[0].mxu0
      %v5110 = vadd.f32 0.0, %v5109
      %5111 = vmatprep.mubr.bf16.mxu0 %v4134
      %5112 = vmatmul.mubr.bf16.gmra.mrb[0].mxu0 %v4133
      %v5113 = vpop.f32.mrb[0].mxu0
      %v5114 = vadd.f32 0.0, %v5113
      %v5115 = vpop.f32.mrb[0].mxu0
      %v5116 = vadd.f32 0.0, %v5115
      %v5117 = vpop.f32.mrb[0].mxu0
      %v5118 = vadd.f32 0.0, %v5117
      %v5119 = vpop.f32.mrb[0].mxu0
      %v5120 = vadd.f32 0.0, %v5119
      %5121 = vmatprep.mubr.bf16.mxu0 %v4136
      %5122 = vmatmul.mubr.bf16.gmra.mrb[0].mxu0 %v4135
      %v5123 = vpop.f32.mrb[0].mxu0
      %v5124 = vadd.f32 0.0, %v5123
      %v5125 = vpop.f32.mrb[0].mxu0
      %v5126 = vadd.f32 0.0, %v5125
      %v5127 = vpop.f32.mrb[0].mxu0
      %v5128 = vadd.f32 0.0, %v5127
      %v5129 = vpop.f32.mrb[0].mxu0
      %v5130 = vadd.f32 0.0, %v5129
      %5131 = vmatprep.mubr.bf16.mxu0 %v4138
      %5132 = vmatmul.mubr.bf16.gmra.mrb[0].mxu0 %v4137
      %v5133 = vpop.f32.mrb[0].mxu0
      %v5134 = vadd.f32 0.0, %v5133
      %v5135 = vpop.f32.mrb[0].mxu0
      %v5136 = vadd.f32 0.0, %v5135
      %v5137 = vpop.f32.mrb[0].mxu0
      %v5138 = vadd.f32 0.0, %v5137
      %v5139 = vpop.f32.mrb[0].mxu0
      %v5140 = vadd.f32 0.0, %v5139
      %5141 = vmatprep.mubr.bf16.mxu0 %v4140
      %5142 = vmatmul.mubr.bf16.gmra.mrb[0].mxu0 %v4139
      %v5143 = vpop.f32.mrb[0].mxu0
      %v5144 = vadd.f32 0.0, %v5143
      %v5145 = vpop.f32.mrb[0].mxu0
      %v5146 = vadd.f32 0.0, %v5145
      %v5147 = vpop.f32.mrb[0].mxu0
      %v5148 = vadd.f32 0.0, %v5147
      %v5149 = vpop.f32.mrb[0].mxu0
      %v5150 = vadd.f32 0.0, %v5149
      %5151 = vmatprep.mubr.bf16.mxu0 %v4142
      %5152 = vmatmul.mubr.bf16.gmra.mrb[0].mxu0 %v4141
      %v5153 = vpop.f32.mrb[0].mxu0
      %v5154 = vadd.f32 0.0, %v5153
      %v5155 = vpop.f32.mrb[0].mxu0
      %v5156 = vadd.f32 0.0, %v5155
      %v5157 = vpop.f32.mrb[0].mxu0
      %v5158 = vadd.f32 0.0, %v5157
      %v5159 = vpop.f32.mrb[0].mxu0
      %v5160 = vadd.f32 0.0, %v5159
      %5161 = vmatprep.mubr.bf16.mxu0 %v4144
      %5162 = vmatmul.mubr.bf16.gmra.mrb[0].mxu0 %v4143
      %v5163 = vpop.f32.mrb[0].mxu0
      %v5164 = vadd.f32 0.0, %v5163
      %v5165 = vpop.f32.mrb[0].mxu0
      %v5166 = vadd.f32 0.0, %v5165
      %v5167 = vpop.f32.mrb[0].mxu0
      %v5168 = vadd.f32 0.0, %v5167
      %v5169 = vpop.f32.mrb[0].mxu0
      %v5170 = vadd.f32 0.0, %v5169
      %5171 = vmatprep.mubr.bf16.mxu0 %v4146
      %5172 = vmatmul.mubr.bf16.gmra.mrb[0].mxu0 %v4145
      %v5173 = vpop.f32.mrb[0].mxu0
      %v5174 = vadd.f32 0.0, %v5173
      %v5175 = vpop.f32.mrb[0].mxu0
      %v5176 = vadd.f32 0.0, %v5175
      %v5177 = vpop.f32.mrb[0].mxu0
      %v5178 = vadd.f32 0.0, %v5177
      %v5179 = vpop.f32.mrb[0].mxu0
      %v5180 = vadd.f32 0.0, %v5179
      %5181 = vmatprep.mubr.bf16.mxu0 %v4148
      %5182 = vmatmul.mubr.bf16.gmra.mrb[0].mxu0 %v4147
      %v5183 = vpop.f32.mrb[0].mxu0
      %v5184 = vadd.f32 0.0, %v5183
      %v5185 = vpop.f32.mrb[0].mxu0
      %v5186 = vadd.f32 0.0, %v5185
      %v5187 = vpop.f32.mrb[0].mxu0
      %v5188 = vadd.f32 0.0, %v5187
      %v5189 = vpop.f32.mrb[0].mxu0
      %v5190 = vadd.f32 0.0, %v5189
      %5191 = vmatprep.mubr.bf16.mxu0 %v4150
      %5192 = vmatmul.mubr.bf16.gmra.mrb[0].mxu0 %v4149
      %v5193 = vpop.f32.mrb[0].mxu0
      %v5194 = vadd.f32 0.0, %v5193
      %v5195 = vpop.f32.mrb[0].mxu0
      %v5196 = vadd.f32 0.0, %v5195
      %v5197 = vpop.f32.mrb[0].mxu0
      %v5198 = vadd.f32 0.0, %v5197
      %v5199 = vpop.f32.mrb[0].mxu0
      %v5200 = vadd.f32 0.0, %v5199
      %5201 = vmatprep.mubr.bf16.mxu0 %v4152
      %5202 = vmatmul.mubr.bf16.gmra.mrb[0].mxu0 %v4151
      %v5203 = vpop.f32.mrb[0].mxu0
      %v5204 = vadd.f32 0.0, %v5203
      %v5205 = vpop.f32.mrb[0].mxu0
      %v5206 = vadd.f32 0.0, %v5205
      %v5207 = vpop.f32.mrb[0].mxu0
      %v5208 = vadd.f32 0.0, %v5207
      %v5209 = vpop.f32.mrb[0].mxu0
      %v5210 = vadd.f32 0.0, %v5209
      %5211 = vdwg.mxu0
      %v5212 = vadd.f32 %v4701, %v5054
      %v5213 = vadd.f32 %v4703, %v5056
      %v5214 = vadd.f32 %v4705, %v5058
      %v5215 = vadd.f32 %v4707, %v5060
      %v5216 = vadd.f32 %v4711, %v5064
      %v5217 = vadd.f32 %v4713, %v5066
      %v5218 = vadd.f32 %v4715, %v5068
      %v5219 = vadd.f32 %v4717, %v5070
      %v5220 = vadd.f32 %v4721, %v5074
      %v5221 = vadd.f32 %v4723, %v5076
      %v5222 = vadd.f32 %v4725, %v5078
      %v5223 = vadd.f32 %v4727, %v5080
      %v5224 = vadd.f32 %v4731, %v5084
      %v5225 = vadd.f32 %v4733, %v5086
      %v5226 = vadd.f32 %v4735, %v5088
      %v5227 = vadd.f32 %v4737, %v5090
      %v5228 = vadd.f32 %v4741, %v5094
      %v5229 = vadd.f32 %v4743, %v5096
      %v5230 = vadd.f32 %v4745, %v5098
      %v5231 = vadd.f32 %v4747, %v5100
      %v5232 = vadd.f32 %v4751, %v5104
      %v5233 = vadd.f32 %v4753, %v5106
      %v5234 = vadd.f32 %v4755, %v5108
      %v5235 = vadd.f32 %v4757, %v5110
      %v5236 = vadd.f32 %v4761, %v5114
      %v5237 = vadd.f32 %v4763, %v5116
      %v5238 = vadd.f32 %v4765, %v5118
      %v5239 = vadd.f32 %v4767, %v5120
      %v5240 = vadd.f32 %v4771, %v5124
      %v5241 = vadd.f32 %v4773, %v5126
      %v5242 = vadd.f32 %v4775, %v5128
      %v5243 = vadd.f32 %v4777, %v5130
      %v5244 = vadd.f32 %v4781, %v5134
      %v5245 = vadd.f32 %v4783, %v5136
      %v5246 = vadd.f32 %v4785, %v5138
      %v5247 = vadd.f32 %v4787, %v5140
      %v5248 = vadd.f32 %v4791, %v5144
      %v5249 = vadd.f32 %v4793, %v5146
      %v5250 = vadd.f32 %v4795, %v5148
      %v5251 = vadd.f32 %v4797, %v5150
      %v5252 = vadd.f32 %v4801, %v5154
      %v5253 = vadd.f32 %v4803, %v5156
      %v5254 = vadd.f32 %v4805, %v5158
      %v5255 = vadd.f32 %v4807, %v5160
      %v5256 = vadd.f32 %v4811, %v5164
      %v5257 = vadd.f32 %v4813, %v5166
      %v5258 = vadd.f32 %v4815, %v5168
      %v5259 = vadd.f32 %v4817, %v5170
      %v5260 = vadd.f32 %v4821, %v5174
      %v5261 = vadd.f32 %v4823, %v5176
      %v5262 = vadd.f32 %v4825, %v5178
      %v5263 = vadd.f32 %v4827, %v5180
      %v5264 = vadd.f32 %v4831, %v5184
      %v5265 = vadd.f32 %v4833, %v5186
      %v5266 = vadd.f32 %v4835, %v5188
      %v5267 = vadd.f32 %v4837, %v5190
      %v5268 = vadd.f32 %v4841, %v5194
      %v5269 = vadd.f32 %v4843, %v5196
      %v5270 = vadd.f32 %v4845, %v5198
      %v5271 = vadd.f32 %v4847, %v5200
      %v5272 = vadd.f32 %v4851, %v5204
      %v5273 = vadd.f32 %v4853, %v5206
      %v5274 = vadd.f32 %v4855, %v5208
      %v5275 = vadd.f32 %v4857, %v5210
      %v5276 = vadd.f32 %v1702, %v5212
      %v5277 = vadd.f32 %v1703, %v5213
      %v5278 = vadd.f32 %v1704, %v5214
      %v5279 = vadd.f32 %v1705, %v5215
      %v5280 = vadd.f32 %v1706, %v5216
      %v5281 = vadd.f32 %v1707, %v5217
      %v5282 = vadd.f32 %v1708, %v5218
      %v5283 = vadd.f32 %v1709, %v5219
      %v5284 = vadd.f32 %v1710, %v5220
      %v5285 = vadd.f32 %v1711, %v5221
      %v5286 = vadd.f32 %v1712, %v5222
      %v5287 = vadd.f32 %v1713, %v5223
      %v5288 = vadd.f32 %v1714, %v5224
      %v5289 = vadd.f32 %v1715, %v5225
      %v5290 = vadd.f32 %v1716, %v5226
      %v5291 = vadd.f32 %v1717, %v5227
      %v5292 = vadd.f32 %v1718, %v5228
      %v5293 = vadd.f32 %v1719, %v5229
      %v5294 = vadd.f32 %v1720, %v5230
      %v5295 = vadd.f32 %v1721, %v5231
      %v5296 = vadd.f32 %v1722, %v5232
      %v5297 = vadd.f32 %v1723, %v5233
      %v5298 = vadd.f32 %v1724, %v5234
      %v5299 = vadd.f32 %v1725, %v5235
      %v5300 = vadd.f32 %v1726, %v5236
      %v5301 = vadd.f32 %v1727, %v5237
      %v5302 = vadd.f32 %v1728, %v5238
      %v5303 = vadd.f32 %v1729, %v5239
      %v5304 = vadd.f32 %v1730, %v5240
      %v5305 = vadd.f32 %v1731, %v5241
      %v5306 = vadd.f32 %v1732, %v5242
      %v5307 = vadd.f32 %v1733, %v5243
      %v5308 = vadd.f32 %v1734, %v5244
      %v5309 = vadd.f32 %v1735, %v5245
      %v5310 = vadd.f32 %v1736, %v5246
      %v5311 = vadd.f32 %v1737, %v5247
      %v5312 = vadd.f32 %v1738, %v5248
      %v5313 = vadd.f32 %v1739, %v5249
      %v5314 = vadd.f32 %v1740, %v5250
      %v5315 = vadd.f32 %v1741, %v5251
      %v5316 = vadd.f32 %v1742, %v5252
      %v5317 = vadd.f32 %v1743, %v5253
      %v5318 = vadd.f32 %v1744, %v5254
      %v5319 = vadd.f32 %v1745, %v5255
      %v5320 = vadd.f32 %v1746, %v5256
      %v5321 = vadd.f32 %v1747, %v5257
      %v5322 = vadd.f32 %v1748, %v5258
      %v5323 = vadd.f32 %v1749, %v5259
      %v5324 = vadd.f32 %v1750, %v5260
      %v5325 = vadd.f32 %v1751, %v5261
      %v5326 = vadd.f32 %v1752, %v5262
      %v5327 = vadd.f32 %v1753, %v5263
      %v5328 = vadd.f32 %v1754, %v5264
      %v5329 = vadd.f32 %v1755, %v5265
      %v5330 = vadd.f32 %v1756, %v5266
      %v5331 = vadd.f32 %v1757, %v5267
      %v5332 = vadd.f32 %v1758, %v5268
      %v5333 = vadd.f32 %v1759, %v5269
      %v5334 = vadd.f32 %v1760, %v5270
      %v5335 = vadd.f32 %v1761, %v5271
      %v5336 = vadd.f32 %v1762, %v5272
      %v5337 = vadd.f32 %v1763, %v5273
      %v5338 = vadd.f32 %v1764, %v5274
      %v5339 = vadd.f32 %v1765, %v5275
      %5340 = vst [vmem:[#allocation2] sm:$0xff] %v5276
      %5341 = vst [vmem:[#allocation2 + $0x8] sm:$0xff] %v5277
      %5342 = vst [vmem:[#allocation2 + $0x10] sm:$0xff] %v5278
      %5343 = vst [vmem:[#allocation2 + $0x18] sm:$0xff] %v5279
      %5344 = vst [vmem:[#allocation2 + $0x20] sm:$0xff] %v5280
      %5345 = vst [vmem:[#allocation2 + $0x28] sm:$0xff] %v5281
      %5346 = vst [vmem:[#allocation2 + $0x30] sm:$0xff] %v5282
      %5347 = vst [vmem:[#allocation2 + $0x38] sm:$0xff] %v5283
      %5348 = vst [vmem:[#allocation2 + $0x40] sm:$0xff] %v5284
      %5349 = vst [vmem:[#allocation2 + $0x48] sm:$0xff] %v5285
      %5350 = vst [vmem:[#allocation2 + $0x50] sm:$0xff] %v5286
      %5351 = vst [vmem:[#allocation2 + $0x58] sm:$0xff] %v5287
      %5352 = vst [vmem:[#allocation2 + $0x60] sm:$0xff] %v5288
      %5353 = vst [vmem:[#allocation2 + $0x68] sm:$0xff] %v5289
      %5354 = vst [vmem:[#allocation2 + $0x70] sm:$0xff] %v5290
      %5355 = vst [vmem:[#allocation2 + $0x78] sm:$0xff] %v5291
      %5356 = vst [vmem:[#allocation2 + $0x80] sm:$0xff] %v5292
      %5357 = vst [vmem:[#allocation2 + $0x88] sm:$0xff] %v5293
      %5358 = vst [vmem:[#allocation2 + $0x90] sm:$0xff] %v5294
      %5359 = vst [vmem:[#allocation2 + $0x98] sm:$0xff] %v5295
      %5360 = vst [vmem:[#allocation2 + $0xa0] sm:$0xff] %v5296
      %5361 = vst [vmem:[#allocation2 + $0xa8] sm:$0xff] %v5297
      %5362 = vst [vmem:[#allocation2 + $0xb0] sm:$0xff] %v5298
      %5363 = vst [vmem:[#allocation2 + $0xb8] sm:$0xff] %v5299
      %5364 = vst [vmem:[#allocation2 + $0xc0] sm:$0xff] %v5300
      %5365 = vst [vmem:[#allocation2 + $0xc8] sm:$0xff] %v5301
      %5366 = vst [vmem:[#allocation2 + $0xd0] sm:$0xff] %v5302
      %5367 = vst [vmem:[#allocation2 + $0xd8] sm:$0xff] %v5303
      %5368 = vst [vmem:[#allocation2 + $0xe0] sm:$0xff] %v5304
      %5369 = vst [vmem:[#allocation2 + $0xe8] sm:$0xff] %v5305
      %5370 = vst [vmem:[#allocation2 + $0xf0] sm:$0xff] %v5306
      %5371 = vst [vmem:[#allocation2 + $0xf8] sm:$0xff] %v5307
      %5372 = vst [vmem:[#allocation2 + $0x100] sm:$0xff] %v5308
      %5373 = vst [vmem:[#allocation2 + $0x108] sm:$0xff] %v5309
      %5374 = vst [vmem:[#allocation2 + $0x110] sm:$0xff] %v5310
      %5375 = vst [vmem:[#allocation2 + $0x118] sm:$0xff] %v5311
      %5376 = vst [vmem:[#allocation2 + $0x120] sm:$0xff] %v5312
      %5377 = vst [vmem:[#allocation2 + $0x128] sm:$0xff] %v5313
      %5378 = vst [vmem:[#allocation2 + $0x130] sm:$0xff] %v5314
      %5379 = vst [vmem:[#allocation2 + $0x138] sm:$0xff] %v5315
      %5380 = vst [vmem:[#allocation2 + $0x140] sm:$0xff] %v5316
      %5381 = vst [vmem:[#allocation2 + $0x148] sm:$0xff] %v5317
      %5382 = vst [vmem:[#allocation2 + $0x150] sm:$0xff] %v5318
      %5383 = vst [vmem:[#allocation2 + $0x158] sm:$0xff] %v5319
      %5384 = vst [vmem:[#allocation2 + $0x160] sm:$0xff] %v5320
      %5385 = vst [vmem:[#allocation2 + $0x168] sm:$0xff] %v5321
      %5386 = vst [vmem:[#allocation2 + $0x170] sm:$0xff] %v5322
      %5387 = vst [vmem:[#allocation2 + $0x178] sm:$0xff] %v5323
      %5388 = vst [vmem:[#allocation2 + $0x180] sm:$0xff] %v5324
      %5389 = vst [vmem:[#allocation2 + $0x188] sm:$0xff] %v5325
      %5390 = vst [vmem:[#allocation2 + $0x190] sm:$0xff] %v5326
      %5391 = vst [vmem:[#allocation2 + $0x198] sm:$0xff] %v5327
      %5392 = vst [vmem:[#allocation2 + $0x1a0] sm:$0xff] %v5328
      %5393 = vst [vmem:[#allocation2 + $0x1a8] sm:$0xff] %v5329
      %5394 = vst [vmem:[#allocation2 + $0x1b0] sm:$0xff] %v5330
      %5395 = vst [vmem:[#allocation2 + $0x1b8] sm:$0xff] %v5331
      %5396 = vst [vmem:[#allocation2 + $0x1c0] sm:$0xff] %v5332
      %5397 = vst [vmem:[#allocation2 + $0x1c8] sm:$0xff] %v5333
      %5398 = vst [vmem:[#allocation2 + $0x1d0] sm:$0xff] %v5334
      %5399 = vst [vmem:[#allocation2 + $0x1d8] sm:$0xff] %v5335
      %5400 = vst [vmem:[#allocation2 + $0x1e0] sm:$0xff] %v5336
      %5401 = vst [vmem:[#allocation2 + $0x1e8] sm:$0xff] %v5337
      %5402 = vst [vmem:[#allocation2 + $0x1f0] sm:$0xff] %v5338
      %5403 = vst [vmem:[#allocation2 + $0x1f8] sm:$0xff] %v5339
    $region102: #{tpu_custom_call.1} parent=1 // loop_footer
      %s1701 = sadd.s32 1, %s1697
    $region103: #{tpu_custom_call.1} parent=1 // loop_footer_branch
      %1696 = sbr.rel target = $region99
    $region104: #{tpu_custom_call.1} parent=1 // loop_exit
      _
    %v5404 = vld [vmem:[#allocation2] sm:$0xff]
    %v5405 = vld [vmem:[#allocation2 + $0x8] sm:$0xff]
    %v5406 = vld [vmem:[#allocation2 + $0x10] sm:$0xff]
    %v5407 = vld [vmem:[#allocation2 + $0x18] sm:$0xff]
    %v5408 = vld [vmem:[#allocation2 + $0x20] sm:$0xff]
    %v5409 = vld [vmem:[#allocation2 + $0x28] sm:$0xff]
    %v5410 = vld [vmem:[#allocation2 + $0x30] sm:$0xff]
    %v5411 = vld [vmem:[#allocation2 + $0x38] sm:$0xff]
    %v5412 = vld [vmem:[#allocation2 + $0x40] sm:$0xff]
    %v5413 = vld [vmem:[#allocation2 + $0x48] sm:$0xff]
    %v5414 = vld [vmem:[#allocation2 + $0x50] sm:$0xff]
    %v5415 = vld [vmem:[#allocation2 + $0x58] sm:$0xff]
    %v5416 = vld [vmem:[#allocation2 + $0x60] sm:$0xff]
    %v5417 = vld [vmem:[#allocation2 + $0x68] sm:$0xff]
    %v5418 = vld [vmem:[#allocation2 + $0x70] sm:$0xff]
    %v5419 = vld [vmem:[#allocation2 + $0x78] sm:$0xff]
    %v5420 = vld [vmem:[#allocation2 + $0x80] sm:$0xff]
    %v5421 = vld [vmem:[#allocation2 + $0x88] sm:$0xff]
    %v5422 = vld [vmem:[#allocation2 + $0x90] sm:$0xff]
    %v5423 = vld [vmem:[#allocation2 + $0x98] sm:$0xff]
    %v5424 = vld [vmem:[#allocation2 + $0xa0] sm:$0xff]
    %v5425 = vld [vmem:[#allocation2 + $0xa8] sm:$0xff]
    %v5426 = vld [vmem:[#allocation2 + $0xb0] sm:$0xff]
    %v5427 = vld [vmem:[#allocation2 + $0xb8] sm:$0xff]
    %v5428 = vld [vmem:[#allocation2 + $0xc0] sm:$0xff]
    %v5429 = vld [vmem:[#allocation2 + $0xc8] sm:$0xff]
    %v5430 = vld [vmem:[#allocation2 + $0xd0] sm:$0xff]
    %v5431 = vld [vmem:[#allocation2 + $0xd8] sm:$0xff]
    %v5432 = vld [vmem:[#allocation2 + $0xe0] sm:$0xff]
    %v5433 = vld [vmem:[#allocation2 + $0xe8] sm:$0xff]
    %v5434 = vld [vmem:[#allocation2 + $0xf0] sm:$0xff]
    %v5435 = vld [vmem:[#allocation2 + $0xf8] sm:$0xff]
    %v5436 = vld [vmem:[#allocation2 + $0x100] sm:$0xff]
    %v5437 = vld [vmem:[#allocation2 + $0x108] sm:$0xff]
    %v5438 = vld [vmem:[#allocation2 + $0x110] sm:$0xff]
    %v5439 = vld [vmem:[#allocation2 + $0x118] sm:$0xff]
    %v5440 = vld [vmem:[#allocation2 + $0x120] sm:$0xff]
    %v5441 = vld [vmem:[#allocation2 + $0x128] sm:$0xff]
    %v5442 = vld [vmem:[#allocation2 + $0x130] sm:$0xff]
    %v5443 = vld [vmem:[#allocation2 + $0x138] sm:$0xff]
    %v5444 = vld [vmem:[#allocation2 + $0x140] sm:$0xff]
    %v5445 = vld [vmem:[#allocation2 + $0x148] sm:$0xff]
    %v5446 = vld [vmem:[#allocation2 + $0x150] sm:$0xff]
    %v5447 = vld [vmem:[#allocation2 + $0x158] sm:$0xff]
    %v5448 = vld [vmem:[#allocation2 + $0x160] sm:$0xff]
    %v5449 = vld [vmem:[#allocation2 + $0x168] sm:$0xff]
    %v5450 = vld [vmem:[#allocation2 + $0x170] sm:$0xff]
    %v5451 = vld [vmem:[#allocation2 + $0x178] sm:$0xff]
    %v5452 = vld [vmem:[#allocation2 + $0x180] sm:$0xff]
    %v5453 = vld [vmem:[#allocation2 + $0x188] sm:$0xff]
    %v5454 = vld [vmem:[#allocation2 + $0x190] sm:$0xff]
    %v5455 = vld [vmem:[#allocation2 + $0x198] sm:$0xff]
    %v5456 = vld [vmem:[#allocation2 + $0x1a0] sm:$0xff]
    %v5457 = vld [vmem:[#allocation2 + $0x1a8] sm:$0xff]
    %v5458 = vld [vmem:[#allocation2 + $0x1b0] sm:$0xff]
    %v5459 = vld [vmem:[#allocation2 + $0x1b8] sm:$0xff]
    %v5460 = vld [vmem:[#allocation2 + $0x1c0] sm:$0xff]
    %v5461 = vld [vmem:[#allocation2 + $0x1c8] sm:$0xff]
    %v5462 = vld [vmem:[#allocation2 + $0x1d0] sm:$0xff]
    %v5463 = vld [vmem:[#allocation2 + $0x1d8] sm:$0xff]
    %v5464 = vld [vmem:[#allocation2 + $0x1e0] sm:$0xff]
    %v5465 = vld [vmem:[#allocation2 + $0x1e8] sm:$0xff]
    %v5466 = vld [vmem:[#allocation2 + $0x1f0] sm:$0xff]
    %v5467 = vld [vmem:[#allocation2 + $0x1f8] sm:$0xff]
    %v5468 = vld [vmem:[%s13] sm:$0x3]
    %v5469 = vld [vmem:[%s14] sm:$0x3]
    %v5470 = vadd.f32 %v5404, %v5406
    %v5471 = vadd.f32 %v5470, %v5408
    %v5472 = vadd.f32 %v5471, %v5410
    %v5473 = vadd.f32 %v5472, %v5412
    %v5474 = vadd.f32 %v5473, %v5414
    %v5475 = vadd.f32 %v5474, %v5416
    %v5476 = vadd.f32 %v5475, %v5418
    %v5477 = vadd.f32 %v5476, %v5420
    %v5478 = vadd.f32 %v5477, %v5422
    %v5479 = vadd.f32 %v5478, %v5424
    %v5480 = vadd.f32 %v5479, %v5426
    %v5481 = vadd.f32 %v5480, %v5428
    %v5482 = vadd.f32 %v5481, %v5430
    %v5483 = vadd.f32 %v5482, %v5432
    %v5484 = vadd.f32 %v5483, %v5434
    %v5485 = vadd.f32 %v5484, %v5436
    %v5486 = vadd.f32 %v5485, %v5438
    %v5487 = vadd.f32 %v5486, %v5440
    %v5488 = vadd.f32 %v5487, %v5442
    %v5489 = vadd.f32 %v5488, %v5444
    %v5490 = vadd.f32 %v5489, %v5446
    %v5491 = vadd.f32 %v5490, %v5448
    %v5492 = vadd.f32 %v5491, %v5450
    %v5493 = vadd.f32 %v5492, %v5452
    %v5494 = vadd.f32 %v5493, %v5454
    %v5495 = vadd.f32 %v5494, %v5456
    %v5496 = vadd.f32 %v5495, %v5458
    %v5497 = vadd.f32 %v5496, %v5460
    %v5498 = vadd.f32 %v5497, %v5462
    %v5499 = vadd.f32 %v5498, %v5464
    %v5500 = vadd.f32 %v5499, %v5466
    %v5501 = vrot.slane %v5500, 4
    %v5502 = vadd.f32 %v5500, %v5501
    %v5503 = vrot.slane %v5502, 2
    %v5504 = vadd.f32 %v5502, %v5503
    %v5505 = vrot.slane %v5504, 1
    %v5506 = vadd.f32 %v5504, %v5505
    %v5507 = vadd.f32 %v5405, %v5407
    %v5508 = vadd.f32 %v5507, %v5409
    %v5509 = vadd.f32 %v5508, %v5411
    %v5510 = vadd.f32 %v5509, %v5413
    %v5511 = vadd.f32 %v5510, %v5415
    %v5512 = vadd.f32 %v5511, %v5417
    %v5513 = vadd.f32 %v5512, %v5419
    %v5514 = vadd.f32 %v5513, %v5421
    %v5515 = vadd.f32 %v5514, %v5423
    %v5516 = vadd.f32 %v5515, %v5425
    %v5517 = vadd.f32 %v5516, %v5427
    %v5518 = vadd.f32 %v5517, %v5429
    %v5519 = vadd.f32 %v5518, %v5431
    %v5520 = vadd.f32 %v5519, %v5433
    %v5521 = vadd.f32 %v5520, %v5435
    %v5522 = vadd.f32 %v5521, %v5437
    %v5523 = vadd.f32 %v5522, %v5439
    %v5524 = vadd.f32 %v5523, %v5441
    %v5525 = vadd.f32 %v5524, %v5443
    %v5526 = vadd.f32 %v5525, %v5445
    %v5527 = vadd.f32 %v5526, %v5447
    %v5528 = vadd.f32 %v5527, %v5449
    %v5529 = vadd.f32 %v5528, %v5451
    %v5530 = vadd.f32 %v5529, %v5453
    %v5531 = vadd.f32 %v5530, %v5455
    %v5532 = vadd.f32 %v5531, %v5457
    %v5533 = vadd.f32 %v5532, %v5459
    %v5534 = vadd.f32 %v5533, %v5461
    %v5535 = vadd.f32 %v5534, %v5463
    %v5536 = vadd.f32 %v5535, %v5465
    %v5537 = vadd.f32 %v5536, %v5467
    %v5538 = vrot.slane %v5537, 4
    %v5539 = vadd.f32 %v5537, %v5538
    %v5540 = vrot.slane %v5539, 2
    %v5541 = vadd.f32 %v5539, %v5540
    %v5542 = vrot.slane %v5541, 1
    %v5543 = vadd.f32 %v5541, %v5542
    %v5544 = vmul.f32 %v5506, 0.00390625
    %v5545 = vmul.f32 %v5543, 0.00390625
    %v5546 = vsub.f32 %v5404, %v5544
    %v5547 = vsub.f32 %v5405, %v5545
    %v5548 = vsub.f32 %v5406, %v5544
    %v5549 = vsub.f32 %v5407, %v5545
    %v5550 = vsub.f32 %v5408, %v5544
    %v5551 = vsub.f32 %v5409, %v5545
    %v5552 = vsub.f32 %v5410, %v5544
    %v5553 = vsub.f32 %v5411, %v5545
    %v5554 = vsub.f32 %v5412, %v5544
    %v5555 = vsub.f32 %v5413, %v5545
    %v5556 = vsub.f32 %v5414, %v5544
    %v5557 = vsub.f32 %v5415, %v5545
    %v5558 = vsub.f32 %v5416, %v5544
    %v5559 = vsub.f32 %v5417, %v5545
    %v5560 = vsub.f32 %v5418, %v5544
    %v5561 = vsub.f32 %v5419, %v5545
    %v5562 = vsub.f32 %v5420, %v5544
    %v5563 = vsub.f32 %v5421, %v5545
    %v5564 = vsub.f32 %v5422, %v5544
    %v5565 = vsub.f32 %v5423, %v5545
    %v5566 = vsub.f32 %v5424, %v5544
    %v5567 = vsub.f32 %v5425, %v5545
    %v5568 = vsub.f32 %v5426, %v5544
    %v5569 = vsub.f32 %v5427, %v5545
    %v5570 = vsub.f32 %v5428, %v5544
    %v5571 = vsub.f32 %v5429, %v5545
    %v5572 = vsub.f32 %v5430, %v5544
    %v5573 = vsub.f32 %v5431, %v5545
    %v5574 = vsub.f32 %v5432, %v5544
    %v5575 = vsub.f32 %v5433, %v5545
    %v5576 = vsub.f32 %v5434, %v5544
    %v5577 = vsub.f32 %v5435, %v5545
    %v5578 = vsub.f32 %v5436, %v5544
    %v5579 = vsub.f32 %v5437, %v5545
    %v5580 = vsub.f32 %v5438, %v5544
    %v5581 = vsub.f32 %v5439, %v5545
    %v5582 = vsub.f32 %v5440, %v5544
    %v5583 = vsub.f32 %v5441, %v5545
    %v5584 = vsub.f32 %v5442, %v5544
    %v5585 = vsub.f32 %v5443, %v5545
    %v5586 = vsub.f32 %v5444, %v5544
    %v5587 = vsub.f32 %v5445, %v5545
    %v5588 = vsub.f32 %v5446, %v5544
    %v5589 = vsub.f32 %v5447, %v5545
    %v5590 = vsub.f32 %v5448, %v5544
    %v5591 = vsub.f32 %v5449, %v5545
    %v5592 = vsub.f32 %v5450, %v5544
    %v5593 = vsub.f32 %v5451, %v5545
    %v5594 = vsub.f32 %v5452, %v5544
    %v5595 = vsub.f32 %v5453, %v5545
    %v5596 = vsub.f32 %v5454, %v5544
    %v5597 = vsub.f32 %v5455, %v5545
    %v5598 = vsub.f32 %v5456, %v5544
    %v5599 = vsub.f32 %v5457, %v5545
    %v5600 = vsub.f32 %v5458, %v5544
    %v5601 = vsub.f32 %v5459, %v5545
    %v5602 = vsub.f32 %v5460, %v5544
    %v5603 = vsub.f32 %v5461, %v5545
    %v5604 = vsub.f32 %v5462, %v5544
    %v5605 = vsub.f32 %v5463, %v5545
    %v5606 = vsub.f32 %v5464, %v5544
    %v5607 = vsub.f32 %v5465, %v5545
    %v5608 = vsub.f32 %v5466, %v5544
    %v5609 = vsub.f32 %v5467, %v5545
    %v5610 = vmul.f32 %v5546, %v5546
    %v5611 = vmul.f32 %v5547, %v5547
    %v5612 = vmul.f32 %v5548, %v5548
    %v5613 = vmul.f32 %v5549, %v5549
    %v5614 = vmul.f32 %v5550, %v5550
    %v5615 = vmul.f32 %v5551, %v5551
    %v5616 = vmul.f32 %v5552, %v5552
    %v5617 = vmul.f32 %v5553, %v5553
    %v5618 = vmul.f32 %v5554, %v5554
    %v5619 = vmul.f32 %v5555, %v5555
    %v5620 = vmul.f32 %v5556, %v5556
    %v5621 = vmul.f32 %v5557, %v5557
    %v5622 = vmul.f32 %v5558, %v5558
    %v5623 = vmul.f32 %v5559, %v5559
    %v5624 = vmul.f32 %v5560, %v5560
    %v5625 = vmul.f32 %v5561, %v5561
    %v5626 = vmul.f32 %v5562, %v5562
    %v5627 = vmul.f32 %v5563, %v5563
    %v5628 = vmul.f32 %v5564, %v5564
    %v5629 = vmul.f32 %v5565, %v5565
    %v5630 = vmul.f32 %v5566, %v5566
    %v5631 = vmul.f32 %v5567, %v5567
    %v5632 = vmul.f32 %v5568, %v5568
    %v5633 = vmul.f32 %v5569, %v5569
    %v5634 = vmul.f32 %v5570, %v5570
    %v5635 = vmul.f32 %v5571, %v5571
    %v5636 = vmul.f32 %v5572, %v5572
    %v5637 = vmul.f32 %v5573, %v5573
    %v5638 = vmul.f32 %v5574, %v5574
    %v5639 = vmul.f32 %v5575, %v5575
    %v5640 = vmul.f32 %v5576, %v5576
    %v5641 = vmul.f32 %v5577, %v5577
    %v5642 = vmul.f32 %v5578, %v5578
    %v5643 = vmul.f32 %v5579, %v5579
    %v5644 = vmul.f32 %v5580, %v5580
    %v5645 = vmul.f32 %v5581, %v5581
    %v5646 = vmul.f32 %v5582, %v5582
    %v5647 = vmul.f32 %v5583, %v5583
    %v5648 = vmul.f32 %v5584, %v5584
    %v5649 = vmul.f32 %v5585, %v5585
    %v5650 = vmul.f32 %v5586, %v5586
    %v5651 = vmul.f32 %v5587, %v5587
    %v5652 = vmul.f32 %v5588, %v5588
    %v5653 = vmul.f32 %v5589, %v5589
    %v5654 = vmul.f32 %v5590, %v5590
    %v5655 = vmul.f32 %v5591, %v5591
    %v5656 = vmul.f32 %v5592, %v5592
    %v5657 = vmul.f32 %v5593, %v5593
    %v5658 = vmul.f32 %v5594, %v5594
    %v5659 = vmul.f32 %v5595, %v5595
    %v5660 = vmul.f32 %v5596, %v5596
    %v5661 = vmul.f32 %v5597, %v5597
    %v5662 = vmul.f32 %v5598, %v5598
    %v5663 = vmul.f32 %v5599, %v5599
    %v5664 = vmul.f32 %v5600, %v5600
    %v5665 = vmul.f32 %v5601, %v5601
    %v5666 = vmul.f32 %v5602, %v5602
    %v5667 = vmul.f32 %v5603, %v5603
    %v5668 = vmul.f32 %v5604, %v5604
    %v5669 = vmul.f32 %v5605, %v5605
    %v5670 = vmul.f32 %v5606, %v5606
    %v5671 = vmul.f32 %v5607, %v5607
    %v5672 = vmul.f32 %v5608, %v5608
    %v5673 = vmul.f32 %v5609, %v5609
    %v5674 = vadd.f32 %v5610, %v5612
    %v5675 = vadd.f32 %v5674, %v5614
    %v5676 = vadd.f32 %v5675, %v5616
    %v5677 = vadd.f32 %v5676, %v5618
    %v5678 = vadd.f32 %v5677, %v5620
    %v5679 = vadd.f32 %v5678, %v5622
    %v5680 = vadd.f32 %v5679, %v5624
    %v5681 = vadd.f32 %v5680, %v5626
    %v5682 = vadd.f32 %v5681, %v5628
    %v5683 = vadd.f32 %v5682, %v5630
    %v5684 = vadd.f32 %v5683, %v5632
    %v5685 = vadd.f32 %v5684, %v5634
    %v5686 = vadd.f32 %v5685, %v5636
    %v5687 = vadd.f32 %v5686, %v5638
    %v5688 = vadd.f32 %v5687, %v5640
    %v5689 = vadd.f32 %v5688, %v5642
    %v5690 = vadd.f32 %v5689, %v5644
    %v5691 = vadd.f32 %v5690, %v5646
    %v5692 = vadd.f32 %v5691, %v5648
    %v5693 = vadd.f32 %v5692, %v5650
    %v5694 = vadd.f32 %v5693, %v5652
    %v5695 = vadd.f32 %v5694, %v5654
    %v5696 = vadd.f32 %v5695, %v5656
    %v5697 = vadd.f32 %v5696, %v5658
    %v5698 = vadd.f32 %v5697, %v5660
    %v5699 = vadd.f32 %v5698, %v5662
    %v5700 = vadd.f32 %v5699, %v5664
    %v5701 = vadd.f32 %v5700, %v5666
    %v5702 = vadd.f32 %v5701, %v5668
    %v5703 = vadd.f32 %v5702, %v5670
    %v5704 = vadd.f32 %v5703, %v5672
    %v5705 = vrot.slane %v5704, 4
    %v5706 = vadd.f32 %v5704, %v5705
    %v5707 = vrot.slane %v5706, 2
    %v5708 = vadd.f32 %v5706, %v5707
    %v5709 = vrot.slane %v5708, 1
    %v5710 = vadd.f32 %v5708, %v5709
    %v5711 = vadd.f32 %v5611, %v5613
    %v5712 = vadd.f32 %v5711, %v5615
    %v5713 = vadd.f32 %v5712, %v5617
    %v5714 = vadd.f32 %v5713, %v5619
    %v5715 = vadd.f32 %v5714, %v5621
    %v5716 = vadd.f32 %v5715, %v5623
    %v5717 = vadd.f32 %v5716, %v5625
    %v5718 = vadd.f32 %v5717, %v5627
    %v5719 = vadd.f32 %v5718, %v5629
    %v5720 = vadd.f32 %v5719, %v5631
    %v5721 = vadd.f32 %v5720, %v5633
    %v5722 = vadd.f32 %v5721, %v5635
    %v5723 = vadd.f32 %v5722, %v5637
    %v5724 = vadd.f32 %v5723, %v5639
    %v5725 = vadd.f32 %v5724, %v5641
    %v5726 = vadd.f32 %v5725, %v5643
    %v5727 = vadd.f32 %v5726, %v5645
    %v5728 = vadd.f32 %v5727, %v5647
    %v5729 = vadd.f32 %v5728, %v5649
    %v5730 = vadd.f32 %v5729, %v5651
    %v5731 = vadd.f32 %v5730, %v5653
    %v5732 = vadd.f32 %v5731, %v5655
    %v5733 = vadd.f32 %v5732, %v5657
    %v5734 = vadd.f32 %v5733, %v5659
    %v5735 = vadd.f32 %v5734, %v5661
    %v5736 = vadd.f32 %v5735, %v5663
    %v5737 = vadd.f32 %v5736, %v5665
    %v5738 = vadd.f32 %v5737, %v5667
    %v5739 = vadd.f32 %v5738, %v5669
    %v5740 = vadd.f32 %v5739, %v5671
    %v5741 = vadd.f32 %v5740, %v5673
    %v5742 = vrot.slane %v5741, 4
    %v5743 = vadd.f32 %v5741, %v5742
    %v5744 = vrot.slane %v5743, 2
    %v5745 = vadd.f32 %v5743, %v5744
    %v5746 = vrot.slane %v5745, 1
    %v5747 = vadd.f32 %v5745, %v5746
    %v5748 = vmul.f32 %v5710, 0.00390625
    %v5749 = vmul.f32 %v5747, 0.00390625
    %v5750 = vadd.f32 %v5748, 1e-05
    %v5751 = vadd.f32 %v5749, 1e-05
    %v5752 = vrsqrt.pop %v5750
    %v5753 = vrsqrt.pop %v5751
    %v5754 = vmul.f32 %v5750, 0.5
    %v5755 = vmul.f32 %v5751, 0.5
    %v5756 = vmul.f32 %v5754, %v5752
    %v5757 = vmul.f32 %v5755, %v5753
    %v5758 = vmul.f32 %v5756, %v5752
    %v5759 = vmul.f32 %v5757, %v5753
    %v5760 = vsub.f32 1.5, %v5758
    %v5761 = vsub.f32 1.5, %v5759
    %v5762 = vmul.f32 %v5752, %v5760
    %v5763 = vmul.f32 %v5753, %v5761
    %v5766 = vcombine.low %v5762, %v5763
    %v5768 = vunpack.c.l.s4 1966171168
    %v5769 = vunpack.c.0.s8 %v5768
    %v5770 = vlaneseq
    %v5771 = vshrl.u32 %v5770, 7
    %v5772 = vsub.s32 %v5769, %v5771
    %v5773 = vrot.slane %v5766, %v5772
    %v5775 = vunpack.c.l.s4 1966171168
    %v5776 = vunpack.c.0.s8 %v5775
    %v5777 = vlaneseq
    %v5778 = vshrl.u32 %v5777, 7
    %v5779 = vsub.s32 %v5776, %v5778
    %v5780 = vrot.slane %v5773, %v5779
    %v5782 = vmul.f32 %v5468, %v5780
    %v5784 = vlaneseq
    %v5785 = vshrl.u32 %v5784, 7
    %v5786 = vsub.s32 0, %v5785
    %v5787 = vrot.slane %v5782, %v5786
    %v5788 = vlaneseq
    %v5789 = vshrl.u32 %v5788, 7
    %v5790 = vsub.s32 1, %v5789
    %v5791 = vrot.slane %v5782, %v5790
    %v5794 = vmul.f32 %v5546, %v5787
    %v5795 = vmul.f32 %v5547, %v5791
    %v5796 = vmul.f32 %v5548, %v5787
    %v5797 = vmul.f32 %v5549, %v5791
    %v5798 = vmul.f32 %v5550, %v5787
    %v5799 = vmul.f32 %v5551, %v5791
    %v5800 = vmul.f32 %v5552, %v5787
    %v5801 = vmul.f32 %v5553, %v5791
    %v5802 = vmul.f32 %v5554, %v5787
    %v5803 = vmul.f32 %v5555, %v5791
    %v5804 = vmul.f32 %v5556, %v5787
    %v5805 = vmul.f32 %v5557, %v5791
    %v5806 = vmul.f32 %v5558, %v5787
    %v5807 = vmul.f32 %v5559, %v5791
    %v5808 = vmul.f32 %v5560, %v5787
    %v5809 = vmul.f32 %v5561, %v5791
    %v5810 = vmul.f32 %v5562, %v5787
    %v5811 = vmul.f32 %v5563, %v5791
    %v5812 = vmul.f32 %v5564, %v5787
    %v5813 = vmul.f32 %v5565, %v5791
    %v5814 = vmul.f32 %v5566, %v5787
    %v5815 = vmul.f32 %v5567, %v5791
    %v5816 = vmul.f32 %v5568, %v5787
    %v5817 = vmul.f32 %v5569, %v5791
    %v5818 = vmul.f32 %v5570, %v5787
    %v5819 = vmul.f32 %v5571, %v5791
    %v5820 = vmul.f32 %v5572, %v5787
    %v5821 = vmul.f32 %v5573, %v5791
    %v5822 = vmul.f32 %v5574, %v5787
    %v5823 = vmul.f32 %v5575, %v5791
    %v5824 = vmul.f32 %v5576, %v5787
    %v5825 = vmul.f32 %v5577, %v5791
    %v5826 = vmul.f32 %v5578, %v5787
    %v5827 = vmul.f32 %v5579, %v5791
    %v5828 = vmul.f32 %v5580, %v5787
    %v5829 = vmul.f32 %v5581, %v5791
    %v5830 = vmul.f32 %v5582, %v5787
    %v5831 = vmul.f32 %v5583, %v5791
    %v5832 = vmul.f32 %v5584, %v5787
    %v5833 = vmul.f32 %v5585, %v5791
    %v5834 = vmul.f32 %v5586, %v5787
    %v5835 = vmul.f32 %v5587, %v5791
    %v5836 = vmul.f32 %v5588, %v5787
    %v5837 = vmul.f32 %v5589, %v5791
    %v5838 = vmul.f32 %v5590, %v5787
    %v5839 = vmul.f32 %v5591, %v5791
    %v5840 = vmul.f32 %v5592, %v5787
    %v5841 = vmul.f32 %v5593, %v5791
    %v5842 = vmul.f32 %v5594, %v5787
    %v5843 = vmul.f32 %v5595, %v5791
    %v5844 = vmul.f32 %v5596, %v5787
    %v5845 = vmul.f32 %v5597, %v5791
    %v5846 = vmul.f32 %v5598, %v5787
    %v5847 = vmul.f32 %v5599, %v5791
    %v5848 = vmul.f32 %v5600, %v5787
    %v5849 = vmul.f32 %v5601, %v5791
    %v5850 = vmul.f32 %v5602, %v5787
    %v5851 = vmul.f32 %v5603, %v5791
    %v5852 = vmul.f32 %v5604, %v5787
    %v5853 = vmul.f32 %v5605, %v5791
    %v5854 = vmul.f32 %v5606, %v5787
    %v5855 = vmul.f32 %v5607, %v5791
    %v5856 = vmul.f32 %v5608, %v5787
    %v5857 = vmul.f32 %v5609, %v5791
    %v5859 = vlaneseq
    %v5860 = vshrl.u32 %v5859, 7
    %v5861 = vsub.s32 0, %v5860
    %v5862 = vrot.slane %v5469, %v5861
    %v5863 = vlaneseq
    %v5864 = vshrl.u32 %v5863, 7
    %v5865 = vsub.s32 1, %v5864
    %v5866 = vrot.slane %v5469, %v5865
    %v5869 = vadd.f32 %v5794, %v5862
    %v5870 = vadd.f32 %v5795, %v5866
    %v5871 = vadd.f32 %v5796, %v5862
    %v5872 = vadd.f32 %v5797, %v5866
    %v5873 = vadd.f32 %v5798, %v5862
    %v5874 = vadd.f32 %v5799, %v5866
    %v5875 = vadd.f32 %v5800, %v5862
    %v5876 = vadd.f32 %v5801, %v5866
    %v5877 = vadd.f32 %v5802, %v5862
    %v5878 = vadd.f32 %v5803, %v5866
    %v5879 = vadd.f32 %v5804, %v5862
    %v5880 = vadd.f32 %v5805, %v5866
    %v5881 = vadd.f32 %v5806, %v5862
    %v5882 = vadd.f32 %v5807, %v5866
    %v5883 = vadd.f32 %v5808, %v5862
    %v5884 = vadd.f32 %v5809, %v5866
    %v5885 = vadd.f32 %v5810, %v5862
    %v5886 = vadd.f32 %v5811, %v5866
    %v5887 = vadd.f32 %v5812, %v5862
    %v5888 = vadd.f32 %v5813, %v5866
    %v5889 = vadd.f32 %v5814, %v5862
    %v5890 = vadd.f32 %v5815, %v5866
    %v5891 = vadd.f32 %v5816, %v5862
    %v5892 = vadd.f32 %v5817, %v5866
    %v5893 = vadd.f32 %v5818, %v5862
    %v5894 = vadd.f32 %v5819, %v5866
    %v5895 = vadd.f32 %v5820, %v5862
    %v5896 = vadd.f32 %v5821, %v5866
    %v5897 = vadd.f32 %v5822, %v5862
    %v5898 = vadd.f32 %v5823, %v5866
    %v5899 = vadd.f32 %v5824, %v5862
    %v5900 = vadd.f32 %v5825, %v5866
    %v5901 = vadd.f32 %v5826, %v5862
    %v5902 = vadd.f32 %v5827, %v5866
    %v5903 = vadd.f32 %v5828, %v5862
    %v5904 = vadd.f32 %v5829, %v5866
    %v5905 = vadd.f32 %v5830, %v5862
    %v5906 = vadd.f32 %v5831, %v5866
    %v5907 = vadd.f32 %v5832, %v5862
    %v5908 = vadd.f32 %v5833, %v5866
    %v5909 = vadd.f32 %v5834, %v5862
    %v5910 = vadd.f32 %v5835, %v5866
    %v5911 = vadd.f32 %v5836, %v5862
    %v5912 = vadd.f32 %v5837, %v5866
    %v5913 = vadd.f32 %v5838, %v5862
    %v5914 = vadd.f32 %v5839, %v5866
    %v5915 = vadd.f32 %v5840, %v5862
    %v5916 = vadd.f32 %v5841, %v5866
    %v5917 = vadd.f32 %v5842, %v5862
    %v5918 = vadd.f32 %v5843, %v5866
    %v5919 = vadd.f32 %v5844, %v5862
    %v5920 = vadd.f32 %v5845, %v5866
    %v5921 = vadd.f32 %v5846, %v5862
    %v5922 = vadd.f32 %v5847, %v5866
    %v5923 = vadd.f32 %v5848, %v5862
    %v5924 = vadd.f32 %v5849, %v5866
    %v5925 = vadd.f32 %v5850, %v5862
    %v5926 = vadd.f32 %v5851, %v5866
    %v5927 = vadd.f32 %v5852, %v5862
    %v5928 = vadd.f32 %v5853, %v5866
    %v5929 = vadd.f32 %v5854, %v5862
    %v5930 = vadd.f32 %v5855, %v5866
    %v5931 = vadd.f32 %v5856, %v5862
    %v5932 = vadd.f32 %v5857, %v5866
    %v5933 = vmax.f32 %v5869, 0.0
    %v5934 = vmax.f32 %v5870, 0.0
    %v5935 = vmax.f32 %v5871, 0.0
    %v5936 = vmax.f32 %v5872, 0.0
    %v5937 = vmax.f32 %v5873, 0.0
    %v5938 = vmax.f32 %v5874, 0.0
    %v5939 = vmax.f32 %v5875, 0.0
    %v5940 = vmax.f32 %v5876, 0.0
    %v5941 = vmax.f32 %v5877, 0.0
    %v5942 = vmax.f32 %v5878, 0.0
    %v5943 = vmax.f32 %v5879, 0.0
    %v5944 = vmax.f32 %v5880, 0.0
    %v5945 = vmax.f32 %v5881, 0.0
    %v5946 = vmax.f32 %v5882, 0.0
    %v5947 = vmax.f32 %v5883, 0.0
    %v5948 = vmax.f32 %v5884, 0.0
    %v5949 = vmax.f32 %v5885, 0.0
    %v5950 = vmax.f32 %v5886, 0.0
    %v5951 = vmax.f32 %v5887, 0.0
    %v5952 = vmax.f32 %v5888, 0.0
    %v5953 = vmax.f32 %v5889, 0.0
    %v5954 = vmax.f32 %v5890, 0.0
    %v5955 = vmax.f32 %v5891, 0.0
    %v5956 = vmax.f32 %v5892, 0.0
    %v5957 = vmax.f32 %v5893, 0.0
    %v5958 = vmax.f32 %v5894, 0.0
    %v5959 = vmax.f32 %v5895, 0.0
    %v5960 = vmax.f32 %v5896, 0.0
    %v5961 = vmax.f32 %v5897, 0.0
    %v5962 = vmax.f32 %v5898, 0.0
    %v5963 = vmax.f32 %v5899, 0.0
    %v5964 = vmax.f32 %v5900, 0.0
    %v5965 = vmax.f32 %v5901, 0.0
    %v5966 = vmax.f32 %v5902, 0.0
    %v5967 = vmax.f32 %v5903, 0.0
    %v5968 = vmax.f32 %v5904, 0.0
    %v5969 = vmax.f32 %v5905, 0.0
    %v5970 = vmax.f32 %v5906, 0.0
    %v5971 = vmax.f32 %v5907, 0.0
    %v5972 = vmax.f32 %v5908, 0.0
    %v5973 = vmax.f32 %v5909, 0.0
    %v5974 = vmax.f32 %v5910, 0.0
    %v5975 = vmax.f32 %v5911, 0.0
    %v5976 = vmax.f32 %v5912, 0.0
    %v5977 = vmax.f32 %v5913, 0.0
    %v5978 = vmax.f32 %v5914, 0.0
    %v5979 = vmax.f32 %v5915, 0.0
    %v5980 = vmax.f32 %v5916, 0.0
    %v5981 = vmax.f32 %v5917, 0.0
    %v5982 = vmax.f32 %v5918, 0.0
    %v5983 = vmax.f32 %v5919, 0.0
    %v5984 = vmax.f32 %v5920, 0.0
    %v5985 = vmax.f32 %v5921, 0.0
    %v5986 = vmax.f32 %v5922, 0.0
    %v5987 = vmax.f32 %v5923, 0.0
    %v5988 = vmax.f32 %v5924, 0.0
    %v5989 = vmax.f32 %v5925, 0.0
    %v5990 = vmax.f32 %v5926, 0.0
    %v5991 = vmax.f32 %v5927, 0.0
    %v5992 = vmax.f32 %v5928, 0.0
    %v5993 = vmax.f32 %v5929, 0.0
    %v5994 = vmax.f32 %v5930, 0.0
    %v5995 = vmax.f32 %v5931, 0.0
    %v5996 = vmax.f32 %v5932, 0.0
    %v5997 = vld [vmem:[%s15] sm:$0x3]
    %v5999 = vlaneseq
    %v6000 = vshrl.u32 %v5999, 7
    %v6001 = vsub.s32 0, %v6000
    %v6002 = vrot.slane %v5997, %v6001
    %v6003 = vlaneseq
    %v6004 = vshrl.u32 %v6003, 7
    %v6005 = vsub.s32 1, %v6004
    %v6006 = vrot.slane %v5997, %v6005
    %v6009 = vmul.f32 %v5933, %v6002
    %v6010 = vmul.f32 %v5934, %v6006
    %v6011 = vmul.f32 %v5935, %v6002
    %v6012 = vmul.f32 %v5936, %v6006
    %v6013 = vmul.f32 %v5937, %v6002
    %v6014 = vmul.f32 %v5938, %v6006
    %v6015 = vmul.f32 %v5939, %v6002
    %v6016 = vmul.f32 %v5940, %v6006
    %v6017 = vmul.f32 %v5941, %v6002
    %v6018 = vmul.f32 %v5942, %v6006
    %v6019 = vmul.f32 %v5943, %v6002
    %v6020 = vmul.f32 %v5944, %v6006
    %v6021 = vmul.f32 %v5945, %v6002
    %v6022 = vmul.f32 %v5946, %v6006
    %v6023 = vmul.f32 %v5947, %v6002
    %v6024 = vmul.f32 %v5948, %v6006
    %v6025 = vmul.f32 %v5949, %v6002
    %v6026 = vmul.f32 %v5950, %v6006
    %v6027 = vmul.f32 %v5951, %v6002
    %v6028 = vmul.f32 %v5952, %v6006
    %v6029 = vmul.f32 %v5953, %v6002
    %v6030 = vmul.f32 %v5954, %v6006
    %v6031 = vmul.f32 %v5955, %v6002
    %v6032 = vmul.f32 %v5956, %v6006
    %v6033 = vmul.f32 %v5957, %v6002
    %v6034 = vmul.f32 %v5958, %v6006
    %v6035 = vmul.f32 %v5959, %v6002
    %v6036 = vmul.f32 %v5960, %v6006
    %v6037 = vmul.f32 %v5961, %v6002
    %v6038 = vmul.f32 %v5962, %v6006
    %v6039 = vmul.f32 %v5963, %v6002
    %v6040 = vmul.f32 %v5964, %v6006
    %v6041 = vmul.f32 %v5965, %v6002
    %v6042 = vmul.f32 %v5966, %v6006
    %v6043 = vmul.f32 %v5967, %v6002
    %v6044 = vmul.f32 %v5968, %v6006
    %v6045 = vmul.f32 %v5969, %v6002
    %v6046 = vmul.f32 %v5970, %v6006
    %v6047 = vmul.f32 %v5971, %v6002
    %v6048 = vmul.f32 %v5972, %v6006
    %v6049 = vmul.f32 %v5973, %v6002
    %v6050 = vmul.f32 %v5974, %v6006
    %v6051 = vmul.f32 %v5975, %v6002
    %v6052 = vmul.f32 %v5976, %v6006
    %v6053 = vmul.f32 %v5977, %v6002
    %v6054 = vmul.f32 %v5978, %v6006
    %v6055 = vmul.f32 %v5979, %v6002
    %v6056 = vmul.f32 %v5980, %v6006
    %v6057 = vmul.f32 %v5981, %v6002
    %v6058 = vmul.f32 %v5982, %v6006
    %v6059 = vmul.f32 %v5983, %v6002
    %v6060 = vmul.f32 %v5984, %v6006
    %v6061 = vmul.f32 %v5985, %v6002
    %v6062 = vmul.f32 %v5986, %v6006
    %v6063 = vmul.f32 %v5987, %v6002
    %v6064 = vmul.f32 %v5988, %v6006
    %v6065 = vmul.f32 %v5989, %v6002
    %v6066 = vmul.f32 %v5990, %v6006
    %v6067 = vmul.f32 %v5991, %v6002
    %v6068 = vmul.f32 %v5992, %v6006
    %v6069 = vmul.f32 %v5993, %v6002
    %v6070 = vmul.f32 %v5994, %v6006
    %v6071 = vmul.f32 %v5995, %v6002
    %v6072 = vmul.f32 %v5996, %v6006
    %v6073 = vadd.f32 %v6009, %v6010
    %6074 = vadd.xlane.f32.xlu0 %v6073
    %v6075 = vpop.xlane.xlu0 %6074
    %v6076 = vadd.f32 %v6011, %v6012
    %6077 = vadd.xlane.f32.xlu0 %v6076
    %v6078 = vpop.xlane.xlu0 %6077
    %v6079 = vadd.f32 %v6013, %v6014
    %6080 = vadd.xlane.f32.xlu0 %v6079
    %v6081 = vpop.xlane.xlu0 %6080
    %v6082 = vadd.f32 %v6015, %v6016
    %6083 = vadd.xlane.f32.xlu0 %v6082
    %v6084 = vpop.xlane.xlu0 %6083
    %v6085 = vadd.f32 %v6017, %v6018
    %6086 = vadd.xlane.f32.xlu0 %v6085
    %v6087 = vpop.xlane.xlu0 %6086
    %v6088 = vadd.f32 %v6019, %v6020
    %6089 = vadd.xlane.f32.xlu0 %v6088
    %v6090 = vpop.xlane.xlu0 %6089
    %v6091 = vadd.f32 %v6021, %v6022
    %6092 = vadd.xlane.f32.xlu0 %v6091
    %v6093 = vpop.xlane.xlu0 %6092
    %v6094 = vadd.f32 %v6023, %v6024
    %6095 = vadd.xlane.f32.xlu0 %v6094
    %v6096 = vpop.xlane.xlu0 %6095
    %v6097 = vadd.f32 %v6025, %v6026
    %6098 = vadd.xlane.f32.xlu0 %v6097
    %v6099 = vpop.xlane.xlu0 %6098
    %v6100 = vadd.f32 %v6027, %v6028
    %6101 = vadd.xlane.f32.xlu0 %v6100
    %v6102 = vpop.xlane.xlu0 %6101
    %v6103 = vadd.f32 %v6029, %v6030
    %6104 = vadd.xlane.f32.xlu0 %v6103
    %v6105 = vpop.xlane.xlu0 %6104
    %v6106 = vadd.f32 %v6031, %v6032
    %6107 = vadd.xlane.f32.xlu0 %v6106
    %v6108 = vpop.xlane.xlu0 %6107
    %v6109 = vadd.f32 %v6033, %v6034
    %6110 = vadd.xlane.f32.xlu0 %v6109
    %v6111 = vpop.xlane.xlu0 %6110
    %v6112 = vadd.f32 %v6035, %v6036
    %6113 = vadd.xlane.f32.xlu0 %v6112
    %v6114 = vpop.xlane.xlu0 %6113
    %v6115 = vadd.f32 %v6037, %v6038
    %6116 = vadd.xlane.f32.xlu0 %v6115
    %v6117 = vpop.xlane.xlu0 %6116
    %v6118 = vadd.f32 %v6039, %v6040
    %6119 = vadd.xlane.f32.xlu0 %v6118
    %v6120 = vpop.xlane.xlu0 %6119
    %v6121 = vadd.f32 %v6041, %v6042
    %6122 = vadd.xlane.f32.xlu0 %v6121
    %v6123 = vpop.xlane.xlu0 %6122
    %v6124 = vadd.f32 %v6043, %v6044
    %6125 = vadd.xlane.f32.xlu0 %v6124
    %v6126 = vpop.xlane.xlu0 %6125
    %v6127 = vadd.f32 %v6045, %v6046
    %6128 = vadd.xlane.f32.xlu0 %v6127
    %v6129 = vpop.xlane.xlu0 %6128
    %v6130 = vadd.f32 %v6047, %v6048
    %6131 = vadd.xlane.f32.xlu0 %v6130
    %v6132 = vpop.xlane.xlu0 %6131
    %v6133 = vadd.f32 %v6049, %v6050
    %6134 = vadd.xlane.f32.xlu0 %v6133
    %v6135 = vpop.xlane.xlu0 %6134
    %v6136 = vadd.f32 %v6051, %v6052
    %6137 = vadd.xlane.f32.xlu0 %v6136
    %v6138 = vpop.xlane.xlu0 %6137
    %v6139 = vadd.f32 %v6053, %v6054
    %6140 = vadd.xlane.f32.xlu0 %v6139
    %v6141 = vpop.xlane.xlu0 %6140
    %v6142 = vadd.f32 %v6055, %v6056
    %6143 = vadd.xlane.f32.xlu0 %v6142
    %v6144 = vpop.xlane.xlu0 %6143
    %v6145 = vadd.f32 %v6057, %v6058
    %6146 = vadd.xlane.f32.xlu0 %v6145
    %v6147 = vpop.xlane.xlu0 %6146
    %v6148 = vadd.f32 %v6059, %v6060
    %6149 = vadd.xlane.f32.xlu0 %v6148
    %v6150 = vpop.xlane.xlu0 %6149
    %v6151 = vadd.f32 %v6061, %v6062
    %6152 = vadd.xlane.f32.xlu0 %v6151
    %v6153 = vpop.xlane.xlu0 %6152
    %v6154 = vadd.f32 %v6063, %v6064
    %6155 = vadd.xlane.f32.xlu0 %v6154
    %v6156 = vpop.xlane.xlu0 %6155
    %v6157 = vadd.f32 %v6065, %v6066
    %6158 = vadd.xlane.f32.xlu0 %v6157
    %v6159 = vpop.xlane.xlu0 %6158
    %v6160 = vadd.f32 %v6067, %v6068
    %6161 = vadd.xlane.f32.xlu0 %v6160
    %v6162 = vpop.xlane.xlu0 %6161
    %v6163 = vadd.f32 %v6069, %v6070
    %6164 = vadd.xlane.f32.xlu0 %v6163
    %v6165 = vpop.xlane.xlu0 %6164
    %v6166 = vadd.f32 %v6071, %v6072
    %6167 = vadd.xlane.f32.xlu0 %v6166
    %v6168 = vpop.xlane.xlu0 %6167
    %s6169 = sld [smem:[#allocation3]]
    %v6170 = vstv %s6169
    %v6171 = vadd.f32 %v6075, %v6170
    %v6172 = vadd.f32 %v6078, %v6170
    %v6173 = vadd.f32 %v6081, %v6170
    %v6174 = vadd.f32 %v6084, %v6170
    %v6175 = vadd.f32 %v6087, %v6170
    %v6176 = vadd.f32 %v6090, %v6170
    %v6177 = vadd.f32 %v6093, %v6170
    %v6178 = vadd.f32 %v6096, %v6170
    %v6179 = vadd.f32 %v6099, %v6170
    %v6180 = vadd.f32 %v6102, %v6170
    %v6181 = vadd.f32 %v6105, %v6170
    %v6182 = vadd.f32 %v6108, %v6170
    %v6183 = vadd.f32 %v6111, %v6170
    %v6184 = vadd.f32 %v6114, %v6170
    %v6185 = vadd.f32 %v6117, %v6170
    %v6186 = vadd.f32 %v6120, %v6170
    %v6187 = vadd.f32 %v6123, %v6170
    %v6188 = vadd.f32 %v6126, %v6170
    %v6189 = vadd.f32 %v6129, %v6170
    %v6190 = vadd.f32 %v6132, %v6170
    %v6191 = vadd.f32 %v6135, %v6170
    %v6192 = vadd.f32 %v6138, %v6170
    %v6193 = vadd.f32 %v6141, %v6170
    %v6194 = vadd.f32 %v6144, %v6170
    %v6195 = vadd.f32 %v6147, %v6170
    %v6196 = vadd.f32 %v6150, %v6170
    %v6197 = vadd.f32 %v6153, %v6170
    %v6198 = vadd.f32 %v6156, %v6170
    %v6199 = vadd.f32 %v6159, %v6170
    %v6200 = vadd.f32 %v6162, %v6170
    %v6201 = vadd.f32 %v6165, %v6170
    %v6202 = vadd.f32 %v6168, %v6170
    %v6235 = vlaneseq
    %v6236 = vand.u32 %v6235, 127
    %v6237 = vlaneseq
    %v6238 = vshrl.u32 %v6237, 7
    %v6239 = vsub.s32 %v6236, %v6238
    %v6240 = vrot.slane %v6171, %v6239
    %v6241 = vadd.s32 %v6236, 4294967288
    %v6242 = vlaneseq
    %v6243 = vshrl.u32 %v6242, 7
    %v6244 = vsub.s32 %v6241, %v6243
    %v6245 = vrot.slane %v6172, %v6244
    %vm6246 = vcmask 130112
    %v6247 = vsel %vm6246, %v6245, %v6240
    %v6248 = vadd.s32 %v6236, 4294967280
    %v6249 = vlaneseq
    %v6250 = vshrl.u32 %v6249, 7
    %v6251 = vsub.s32 %v6248, %v6250
    %v6252 = vrot.slane %v6173, %v6251
    %vm6253 = vcmask 195712
    %v6254 = vsel %vm6253, %v6252, %v6247
    %v6255 = vadd.s32 %v6236, 4294967272
    %v6256 = vlaneseq
    %v6257 = vshrl.u32 %v6256, 7
    %v6258 = vsub.s32 %v6255, %v6257
    %v6259 = vrot.slane %v6174, %v6258
    %vm6260 = vcmask 261312
    %v6261 = vsel %vm6260, %v6259, %v6254
    %v6262 = vadd.s32 %v6236, 4294967264
    %v6263 = vlaneseq
    %v6264 = vshrl.u32 %v6263, 7
    %v6265 = vsub.s32 %v6262, %v6264
    %v6266 = vrot.slane %v6175, %v6265
    %vm6267 = vcmask 326912
    %v6268 = vsel %vm6267, %v6266, %v6261
    %v6269 = vadd.s32 %v6236, 4294967256
    %v6270 = vlaneseq
    %v6271 = vshrl.u32 %v6270, 7
    %v6272 = vsub.s32 %v6269, %v6271
    %v6273 = vrot.slane %v6176, %v6272
    %vm6274 = vcmask 392512
    %v6275 = vsel %vm6274, %v6273, %v6268
    %v6276 = vadd.s32 %v6236, 4294967248
    %v6277 = vlaneseq
    %v6278 = vshrl.u32 %v6277, 7
    %v6279 = vsub.s32 %v6276, %v6278
    %v6280 = vrot.slane %v6177, %v6279
    %vm6281 = vcmask 458112
    %v6282 = vsel %vm6281, %v6280, %v6275
    %v6283 = vadd.s32 %v6236, 4294967240
    %v6284 = vlaneseq
    %v6285 = vshrl.u32 %v6284, 7
    %v6286 = vsub.s32 %v6283, %v6285
    %v6287 = vrot.slane %v6178, %v6286
    %vm6288 = vcmask 523712
    %v6289 = vsel %vm6288, %v6287, %v6282
    %v6290 = vadd.s32 %v6236, 4294967232
    %v6291 = vlaneseq
    %v6292 = vshrl.u32 %v6291, 7
    %v6293 = vsub.s32 %v6290, %v6292
    %v6294 = vrot.slane %v6179, %v6293
    %vm6295 = vcmask 589312
    %v6296 = vsel %vm6295, %v6294, %v6289
    %v6297 = vadd.s32 %v6236, 4294967224
    %v6298 = vlaneseq
    %v6299 = vshrl.u32 %v6298, 7
    %v6300 = vsub.s32 %v6297, %v6299
    %v6301 = vrot.slane %v6180, %v6300
    %vm6302 = vcmask 654912
    %v6303 = vsel %vm6302, %v6301, %v6296
    %v6304 = vadd.s32 %v6236, 4294967216
    %v6305 = vlaneseq
    %v6306 = vshrl.u32 %v6305, 7
    %v6307 = vsub.s32 %v6304, %v6306
    %v6308 = vrot.slane %v6181, %v6307
    %vm6309 = vcmask 720512
    %v6310 = vsel %vm6309, %v6308, %v6303
    %v6311 = vadd.s32 %v6236, 4294967208
    %v6312 = vlaneseq
    %v6313 = vshrl.u32 %v6312, 7
    %v6314 = vsub.s32 %v6311, %v6313
    %v6315 = vrot.slane %v6182, %v6314
    %vm6316 = vcmask 786112
    %v6317 = vsel %vm6316, %v6315, %v6310
    %v6318 = vadd.s32 %v6236, 4294967200
    %v6319 = vlaneseq
    %v6320 = vshrl.u32 %v6319, 7
    %v6321 = vsub.s32 %v6318, %v6320
    %v6322 = vrot.slane %v6183, %v6321
    %vm6323 = vcmask 851712
    %v6324 = vsel %vm6323, %v6322, %v6317
    %v6325 = vadd.s32 %v6236, 4294967192
    %v6326 = vlaneseq
    %v6327 = vshrl.u32 %v6326, 7
    %v6328 = vsub.s32 %v6325, %v6327
    %v6329 = vrot.slane %v6184, %v6328
    %vm6330 = vcmask 917312
    %v6331 = vsel %vm6330, %v6329, %v6324
    %v6332 = vadd.s32 %v6236, 4294967184
    %v6333 = vlaneseq
    %v6334 = vshrl.u32 %v6333, 7
    %v6335 = vsub.s32 %v6332, %v6334
    %v6336 = vrot.slane %v6185, %v6335
    %vm6337 = vcmask 982912
    %v6338 = vsel %vm6337, %v6336, %v6331
    %v6339 = vadd.s32 %v6236, 4294967176
    %v6340 = vlaneseq
    %v6341 = vshrl.u32 %v6340, 7
    %v6342 = vsub.s32 %v6339, %v6341
    %v6343 = vrot.slane %v6186, %v6342
    %vm6344 = vcmask 1048512
    %v6345 = vsel %vm6344, %v6343, %v6338
    %v6346 = vlaneseq
    %v6347 = vshrl.u32 %v6346, 7
    %v6348 = vsub.s32 %v6236, %v6347
    %v6349 = vrot.slane %v6187, %v6348
    %v6350 = vlaneseq
    %v6351 = vshrl.u32 %v6350, 7
    %v6352 = vsub.s32 %v6241, %v6351
    %v6353 = vrot.slane %v6188, %v6352
    %v6354 = vsel %vm6246, %v6353, %v6349
    %v6355 = vlaneseq
    %v6356 = vshrl.u32 %v6355, 7
    %v6357 = vsub.s32 %v6248, %v6356
    %v6358 = vrot.slane %v6189, %v6357
    %v6359 = vsel %vm6253, %v6358, %v6354
    %v6360 = vlaneseq
    %v6361 = vshrl.u32 %v6360, 7
    %v6362 = vsub.s32 %v6255, %v6361
    %v6363 = vrot.slane %v6190, %v6362
    %v6364 = vsel %vm6260, %v6363, %v6359
    %v6365 = vlaneseq
    %v6366 = vshrl.u32 %v6365, 7
    %v6367 = vsub.s32 %v6262, %v6366
    %v6368 = vrot.slane %v6191, %v6367
    %v6369 = vsel %vm6267, %v6368, %v6364
    %v6370 = vlaneseq
    %v6371 = vshrl.u32 %v6370, 7
    %v6372 = vsub.s32 %v6269, %v6371
    %v6373 = vrot.slane %v6192, %v6372
    %v6374 = vsel %vm6274, %v6373, %v6369
    %v6375 = vlaneseq
    %v6376 = vshrl.u32 %v6375, 7
    %v6377 = vsub.s32 %v6276, %v6376
    %v6378 = vrot.slane %v6193, %v6377
    %v6379 = vsel %vm6281, %v6378, %v6374
    %v6380 = vlaneseq
    %v6381 = vshrl.u32 %v6380, 7
    %v6382 = vsub.s32 %v6283, %v6381
    %v6383 = vrot.slane %v6194, %v6382
    %v6384 = vsel %vm6288, %v6383, %v6379
    %v6385 = vlaneseq
    %v6386 = vshrl.u32 %v6385, 7
    %v6387 = vsub.s32 %v6290, %v6386
    %v6388 = vrot.slane %v6195, %v6387
    %v6389 = vsel %vm6295, %v6388, %v6384
    %v6390 = vlaneseq
    %v6391 = vshrl.u32 %v6390, 7
    %v6392 = vsub.s32 %v6297, %v6391
    %v6393 = vrot.slane %v6196, %v6392
    %v6394 = vsel %vm6302, %v6393, %v6389
    %v6395 = vlaneseq
    %v6396 = vshrl.u32 %v6395, 7
    %v6397 = vsub.s32 %v6304, %v6396
    %v6398 = vrot.slane %v6197, %v6397
    %v6399 = vsel %vm6309, %v6398, %v6394
    %v6400 = vlaneseq
    %v6401 = vshrl.u32 %v6400, 7
    %v6402 = vsub.s32 %v6311, %v6401
    %v6403 = vrot.slane %v6198, %v6402
    %v6404 = vsel %vm6316, %v6403, %v6399
    %v6405 = vlaneseq
    %v6406 = vshrl.u32 %v6405, 7
    %v6407 = vsub.s32 %v6318, %v6406
    %v6408 = vrot.slane %v6199, %v6407
    %v6409 = vsel %vm6323, %v6408, %v6404
    %v6410 = vlaneseq
    %v6411 = vshrl.u32 %v6410, 7
    %v6412 = vsub.s32 %v6325, %v6411
    %v6413 = vrot.slane %v6200, %v6412
    %v6414 = vsel %vm6330, %v6413, %v6409
    %v6415 = vlaneseq
    %v6416 = vshrl.u32 %v6415, 7
    %v6417 = vsub.s32 %v6332, %v6416
    %v6418 = vrot.slane %v6201, %v6417
    %v6419 = vsel %vm6337, %v6418, %v6414
    %v6420 = vlaneseq
    %v6421 = vshrl.u32 %v6420, 7
    %v6422 = vsub.s32 %v6339, %v6421
    %v6423 = vrot.slane %v6202, %v6422
    %v6424 = vsel %vm6344, %v6423, %v6419
    %vm6425 = vcmask 1041409
    %v6426 = vsel %vm6425, %v6424, %v6345
    %6428 = vst [vmem:[#allocation16] sm:$0x3] %v6426
    // Predicated region
    $region105: #{tpu_custom_call.1} parent=1 // pred_check
      _
    $region106: #{tpu_custom_call.1} parent=1 // pred_check_branch
      %6430 = sbr.rel (0) target = $region108
    $region107: #{tpu_custom_call.1} parent=1 // pred_region
      %s6432 = ssub.s32 32, 32
      %6433 = vsyncadd [#allocation6], %s6432
      %s6435 = sshll.u32 [#allocation16], 4
      %s6436 = int_to_ptr.vmem [resolvable:$true] %s6435
      %6438 = dma.vmem_to_hbm [thread:$0]  %s6436, 32, %s17, [#allocation6]
    $region108: #{tpu_custom_call.1} parent=1 // pred_fallthru
      _
    // Predicated region
    $region109: #{tpu_custom_call.1} parent=1 // pred_check
      _
    $region110: #{tpu_custom_call.1} parent=1 // pred_check_branch
      %6440 = sbr.rel (0) target = $region112
    $region111: #{tpu_custom_call.1} parent=1 // pred_region
      %6441 = dma.done [#allocation6], 32
    $region112: #{tpu_custom_call.1} parent=1 // pred_fallthru
      _
    %6442 = vsyncpa [#allocation5], 1
    %6443 = vsyncpa [#allocation8], 1
    %6444 = vsyncpa [#allocation11], 1
    %6445 = vsyncpa [#allocation14], 1
    %6446 = vsyncpa [#allocation6], 1

</llo_original>
